<compile_context>
chip_gen: v7x
topology: tpu7x:2x2x1
jax: 0.10.0
libtpu: 0.0.40
codegen_flags: <defaults>
</compile_context>

<pallas_src>
import functools

import jax
import jax.numpy as jnp
from jax import lax
from jax.experimental import pallas as pl
from jax.experimental.pallas import tpu as pltpu

LRELU_SLOPE = 0.2
BN_EPS = 1e-5


def _round_up(x, m):
    return (x + m - 1) // m * m


# ---------------------------------------------------------------------------
# Generation-aware scoped-VMEM budget
# ---------------------------------------------------------------------------
def _vmem_budget_bytes():
    phys = 0
    try:
        info = pltpu.get_tpu_info()
        phys = int(getattr(info, "vmem_capacity_bytes", 0) or 0)
    except Exception:
        phys = 0
    if phys <= 0:
        phys = 64 * 1024 * 1024                      # conservative (v7x-sized)
    return max(32 * 1024 * 1024,
               min(phys - 16 * 1024 * 1024, 100 * 1024 * 1024))


VMEM_BUDGET = _vmem_budget_bytes()


# ---------------------------------------------------------------------------
# Pallas kernels
# ---------------------------------------------------------------------------
def _bias_act(y, b, act):
    y = y + b
    if act == "leaky":
        y = jnp.where(y >= 0, y, LRELU_SLOPE * y)
    elif act == "sigmoid":
        y = 1.0 / (1.0 + jnp.exp(-y))                # exact; layer is negligible
    return y


def _pack_stats(y):
    """Pack per-channel [sum; sum-of-squares; 0...] into an (8, tn) block."""
    s = jnp.sum(y, axis=0, keepdims=True)
    sq = jnp.sum(y * y, axis=0, keepdims=True)
    row = lax.broadcasted_iota(jnp.int32, (8, 1), 0)
    return jnp.where(row == 0, s, jnp.where(row == 1, sq, 0.0))


def _mm_bias_act_single_kernel(x_ref, w_ref, b_ref, o_ref, *, act):
    """Whole-K-resident matmul: no accumulator scratch, fused epilogue."""
    y = jnp.dot(x_ref[...], w_ref[...], preferred_element_type=jnp.float32)
    o_ref[...] = _bias_act(y, b_ref[...], act).astype(o_ref.dtype)


def _mm_bias_act_acc_kernel(x_ref, w_ref, b_ref, o_ref, acc_ref, *, act):
    """K-tiled matmul with f32 accumulator; bias + activation fused at last k."""
    part = jnp.dot(x_ref[...], w_ref[...], preferred_element_type=jnp.float32)
    k = pl.program_id(2)

    @pl.when(k == 0)
    def _():
        acc_ref[...] = part                          # direct write, no zero-init

    @pl.when(k > 0)
    def _():
        acc_ref[...] += part

    @pl.when(k == pl.num_programs(2) - 1)
    def _():
        o_ref[...] = _bias_act(acc_ref[...], b_ref[...], act).astype(o_ref.dtype)


def _mm_stats_single_kernel(x_ref, w_ref, o_ref, stat_ref):
    """Whole-K matmul; per-channel sum / sum-sq fused into the epilogue.

    Conv bias is omitted on BatchNorm layers (a per-channel constant cancels
    exactly under BN's mean subtraction); zero-padded M rows then contribute
    exactly 0 to both partial sums, so mean/var just divide by the real M.
    """
    y = jnp.dot(x_ref[...], w_ref[...], preferred_element_type=jnp.float32)
    o_ref[...] = y.astype(o_ref.dtype)
    stat_ref[...] = _pack_stats(y)


def _mm_stats_acc_kernel(x_ref, w_ref, o_ref, stat_ref, acc_ref):
    part = jnp.dot(x_ref[...], w_ref[...], preferred_element_type=jnp.float32)
    k = pl.program_id(2)

    @pl.when(k == 0)
    def _():
        acc_ref[...] = part

    @pl.when(k > 0)
    def _():
        acc_ref[...] += part

    @pl.when(k == pl.num_programs(2) - 1)
    def _():
        y = acc_ref[...]
        o_ref[...] = y.astype(o_ref.dtype)
        stat_ref[...] = _pack_stats(y)


def _bn_lrelu_kernel(y_ref, scale_ref, shift_ref, o_ref):
    """BatchNorm as a per-channel affine, fused with LeakyReLU (f32 math)."""
    y = y_ref[...].astype(jnp.float32) * scale_ref[...] + shift_ref[...]
    o_ref[...] = jnp.where(y >= 0, y, LRELU_SLOPE * y).astype(o_ref.dtype)


# ---------------------------------------------------------------------------
# Shape-adaptive tile selection
# ---------------------------------------------------------------------------
_TM_CANDS = (1024, 512, 256, 128, 64, 32, 16, 8)
_TK_CANDS = (32768, 16384, 8192, 4096, 2048, 1024, 512, 256, 128)


def _select_tiles(M, K, Cout, out_bytes, with_stats, budget):
    avail = budget - 4 * 1024 * 1024                 # headroom for compiler scratch
    Cfull = _round_up(Cout, 128)
    Kfull = _round_up(K, 16)                         # K = kh*kw*Cin (mult. of 16 here)

    def usage(tm, tn, tk, nk):
        u = 2 * (tm * tk + tk * tn) * 2              # bf16 patch/weight blocks, 2x buf
        u += 2 * tm * tn * out_bytes                 # output blocks, 2x buf
        if nk > 1:
            u += tm * tn * 4                         # f32 accumulator scratch
        if with_stats:
            u += 2 * 8 * tn * 4                      # per-tile stats blocks
        return u

    tm_pref = min(_round_up(M, 8), 1024)             # single M tile when possible:
    tm_opts = [tm_pref] + [t for t in _TM_CANDS if t < tm_pref]   # weights read once
    tn_opts, t = [], min(Cfull, 2048)
    while t >= 128 and t % 128 == 0:
        tn_opts.append(t)
        t //= 2
    tk_opts = [Kfull] + [t for t in _TK_CANDS if t < Kfull]       # Kfull => 1 K step

    choice = None
    for tm in tm_opts:                               # sacrifice tk first, then tn, tm
        for tn in tn_opts:
            for tk in tk_opts:
                nk = _round_up(Kfull, tk) // tk
                if usage(tm, tn, tk, nk) <= avail:
                    choice = (tm, tn, tk)
                    break
            if choice:
                break
        if choice:
            break
    if choice is None:                               # unreachable with >=32MiB budget
        choice = (tm_opts[-1], 128, 128)

    tm, tn, tk = choice
    Mpad = _round_up(M, tm)
    Cpad = _round_up(Cfull, tn)
    Kpad = _round_up(Kfull, tk)
    # If the parallel (M, N) grid collapsed to a single tile, split N in two so
    # v7x's second TensorCore gets work (cost on single-core parts is negligible).
    if (Mpad // tm) * (Cpad // tn) < 2 and tn >= 256 and (tn // 2) % 128 == 0:
        tn //= 2
    return tm, tn, tk, Mpad, Cpad, Kpad


# ---------------------------------------------------------------------------
# pallas_call wrappers
# ---------------------------------------------------------------------------
def _matmul_fused(patches, w2, bias, *, act, with_stats, out_dtype, tm, tn, tk):
    Mpad, Kpad = patches.shape
    Cpad = w2.shape[1]
    nk = Kpad // tk
    grid = (Mpad // tm, Cpad // tn, nk)

    x_spec = pl.BlockSpec((tm, tk), lambda i, j, k: (i, k))
    w_spec = pl.BlockSpec((tk, tn), lambda i, j, k: (k, j))
    y_spec = pl.BlockSpec((tm, tn), lambda i, j, k: (i, j))
    params = pltpu.CompilerParams(
        dimension_semantics=("parallel", "parallel", "arbitrary"),
        vmem_limit_bytes=VMEM_BUDGET)
    scratch = [] if nk == 1 else [pltpu.VMEM((tm, tn), jnp.float32)]

    if with_stats:
        kern = _mm_stats_single_kernel if nk == 1 else _mm_stats_acc_kernel
        return pl.pallas_call(
            kern,
            out_shape=(jax.ShapeDtypeStruct((Mpad, Cpad), out_dtype),
                       jax.ShapeDtypeStruct((grid[0] * 8, Cpad), jnp.float32)),
            grid=grid,
            in_specs=[x_spec, w_spec],
            out_specs=(y_spec, pl.BlockSpec((8, tn), lambda i, j, k: (i, j))),
            scratch_shapes=scratch,
            compiler_params=params,
        )(patches, w2)

    kern = functools.partial(
        _mm_bias_act_single_kernel if nk == 1 else _mm_bias_act_acc_kernel, act=act)
    return pl.pallas_call(
        kern,
        out_shape=jax.ShapeDtypeStruct((Mpad, Cpad), out_dtype),
        grid=grid,
        in_specs=[x_spec, w_spec,
                  pl.BlockSpec((1, tn), lambda i, j, k: (0, j))],
        out_specs=y_spec,
        scratch_shapes=scratch,
        compiler_params=params,
    )(patches, w2, bias)


def _bn_lrelu(y, scale, shift):
    Mpad, Cpad = y.shape
    avail = VMEM_BUDGET - 4 * 1024 * 1024
    ibytes = jnp.dtype(y.dtype).itemsize
    if Cpad <= 4096:
        cn = Cpad                                     # single, lane-dense channel tile
    else:
        cn = next(c for c in (4096, 2048, 1024, 512, 256, 128) if Cpad % c == 0)
    tm = 8
    for c in (Mpad,) + _TM_CANDS:
        if c <= Mpad and Mpad % c == 0 and 4 * c * cn * ibytes + 4 * cn * 4 <= avail:
            tm = c
            break
    grid = (Mpad // tm, Cpad // cn)
    return pl.pallas_call(
        _bn_lrelu_kernel,
        out_shape=jax.ShapeDtypeStruct((Mpad, Cpad), y.dtype),
        grid=grid,
        in_specs=[pl.BlockSpec((tm, cn), lambda i, j: (i, j)),
                  pl.BlockSpec((1, cn), lambda i, j: (0, j)),
                  pl.BlockSpec((1, cn), lambda i, j: (0, j))],
        out_specs=pl.BlockSpec((tm, cn), lambda i, j: (i, j)),
        input_output_aliases={0: 0},      # write BN+LeakyReLU in place over y
        compiler_params=pltpu.CompilerParams(
            dimension_semantics=("parallel", "parallel"),
            vmem_limit_bytes=VMEM_BUDGET),
    )(y, scale, shift)


# ---------------------------------------------------------------------------
# Conv layer = im2col (JAX glue, bf16) + fused Pallas matmul / BN / activation
# ---------------------------------------------------------------------------
def _im2col(x_nhwc, k, stride, pad):
    N, H, W, C = x_nhwc.shape
    xp = jnp.pad(x_nhwc, ((0, 0), (pad, pad), (pad, pad), (0, 0)))
    Ho = (H + 2 * pad - k) // stride + 1
    Wo = (W + 2 * pad - k) // stride + 1
    cols = []
    for i in range(k):
        for j in range(k):
            cols.append(xp[:, i:i + stride * (Ho - 1) + 1:stride,
                            j:j + stride * (Wo - 1) + 1:stride, :])
    patches = jnp.stack(cols, axis=3)                # (N, Ho, Wo, k*k, C)
    patches = patches.reshape(N * Ho * Wo, k * k * C)
    return patches, (N, Ho, Wo)


def _conv_block(x_nhwc, w, b, stride, pad, *, act, bn=None,
                out_dtype=jnp.bfloat16):
    # w: (Cout, Cin, kh, kw), b: (Cout,)  -- PyTorch conv parameter layout
    Cout, Cin, kh, kw = w.shape
    patches, (N, Ho, Wo) = _im2col(x_nhwc.astype(jnp.bfloat16), kh, stride, pad)
    M, K = patches.shape

    with_stats = bn is not None
    store_dtype = jnp.bfloat16 if with_stats else out_dtype
    tm, tn, tk, Mpad, Cpad, Kpad = _select_tiles(
        M, K, Cout, jnp.dtype(store_dtype).itemsize, with_stats, VMEM_BUDGET)

    patches = jnp.pad(patches, ((0, Mpad - M), (0, Kpad - K)))
    w2 = jnp.transpose(w, (2, 3, 1, 0)).reshape(K, Cout).astype(jnp.bfloat16)
    w2 = jnp.pad(w2, ((0, Kpad - K), (0, Cpad - Cout)))

    if bn is None:
        bias = jnp.pad(b, (0, Cpad - Cout)).reshape(1, Cpad).astype(jnp.float32)
        y = _matmul_fused(patches, w2, bias, act=act, with_stats=False,
                          out_dtype=out_dtype, tm=tm, tn=tn, tk=tk)
    else:
        gamma, beta = bn
        # conv bias cancels exactly under BatchNorm -> omitted (see kernel doc)
        y, stats = _matmul_fused(patches, w2, None, act="none",
                                 with_stats=True, out_dtype=jnp.bfloat16,
                                 tm=tm, tn=tn, tk=tk)
        stats = stats.reshape(Mpad // tm, 8, Cpad)
        ch_sum = jnp.sum(stats[:, 0, :], axis=0)
        ch_sq = jnp.sum(stats[:, 1, :], axis=0)
        mean = ch_sum / M                            # padded rows contribute 0
        # TODO(synk): E[x^2]-E[x]^2 cancels badly if channel means get large;
        # switch to shifted/Welford accumulation for trained weights.
        var = jnp.maximum(ch_sq / M - mean * mean, 0.0)
        invstd = lax.rsqrt(var + BN_EPS)
        g = jnp.pad(gamma, (0, Cpad - Cout))         # zero-pad -> padded ch neutral
        be = jnp.pad(beta, (0, Cpad - Cout))
        scale = (g * invstd).reshape(1, Cpad).astype(jnp.float32)
        shift = (be - mean * g * invstd).reshape(1, Cpad).astype(jnp.float32)
        y = _bn_lrelu(y, scale, shift)               # fused BN + LeakyReLU

    return y[:M, :Cout].reshape(N, Ho, Wo, Cout)


# ---------------------------------------------------------------------------
# Full discriminator forward
# ---------------------------------------------------------------------------
def discriminator_forward(params, x_nchw):
    p = params
    x = jnp.transpose(x_nchw, (0, 2, 3, 1))          # NCHW -> NHWC
    x = _conv_block(x, p["w1"], p["b1"], 2, 1, act="leaky")
    x = _conv_block(x, p["w2"], p["b2"], 2, 1, act="leaky", bn=(p["g2"], p["be2"]))
    x = _conv_block(x, p["w3"], p["b3"], 2, 1, act="leaky", bn=(p["g3"], p["be3"]))
    x = _conv_block(x, p["w4"], p["b4"], 2, 1, act="leaky", bn=(p["g4"], p["be4"]))
    x = _conv_block(x, p["w5"], p["b5"], 1, 0, act="sigmoid",
                    out_dtype=jnp.float32)
    return jnp.transpose(x, (0, 3, 1, 2)).astype(jnp.float32)   # NHWC -> NCHW


def init_params(key, d):
    # Same shapes as the PyTorch module (with D_HIDDEN = d), deterministic init:
    # conv weights ~ N(0, 0.02), conv biases = 0, BN gamma = 1, BN beta = 0.
    chans = [(3, d), (d, d * 16), (d * 16, d * 32), (d * 32, d * 64), (d * 64, 1)]
    keys = jax.random.split(key, len(chans))
    params = {}
    for idx, ((cin, cout), k) in enumerate(zip(chans, keys), start=1):
        params[f"w{idx}"] = 0.02 * jax.random.normal(k, (cout, cin, 4, 4), jnp.float32)
        params[f"b{idx}"] = jnp.zeros((cout,), jnp.float32)
    for idx in (2, 3, 4):
        cout = chans[idx - 1][1]
        params[f"g{idx}"] = jnp.ones((cout,), jnp.float32)
        params[f"be{idx}"] = jnp.zeros((cout,), jnp.float32)
    return params


# ---------------------------------------------------------------------------
# Pure-JAX f32 reference (for correctness check)
# ---------------------------------------------------------------------------
def reference_forward(params, x_nchw):
    def conv(x, w, b, stride, pad):
        y = lax.conv_general_dilated(x, w, (stride, stride),
                                     [(pad, pad), (pad, pad)],
                                     dimension_numbers=("NCHW", "OIHW", "NCHW"))
        return y + b[None, :, None, None]

    def bn(y, g, be):
        mean = jnp.mean(y, axis=(0, 2, 3), keepdims=True)
        var = jnp.var(y, axis=(0, 2, 3), keepdims=True)
        return (y - mean) / jnp.sqrt(var + BN_EPS) * g[None, :, None, None] \
               + be[None, :, None, None]

    lrelu = lambda v: jnp.where(v >= 0, v, LRELU_SLOPE * v)
    p = params
    x = lrelu(conv(x_nchw, p["w1"], p["b1"], 2, 1))
    x = lrelu(bn(conv(x, p["w2"], p["b2"], 2, 1), p["g2"], p["be2"]))
    x = lrelu(bn(conv(x, p["w3"], p["b3"], 2, 1), p["g3"], p["be3"]))
    x = lrelu(bn(conv(x, p["w4"], p["b4"], 2, 1), p["g4"], p["be4"]))
    x = jax.nn.sigmoid(conv(x, p["w5"], p["b5"], 1, 0))
    return x


if __name__ == "__main__":
    d = 4  # scaled-down D_HIDDEN (=64 in the original) for a small self-test
    key = jax.random.PRNGKey(0)
    pkey, xkey = jax.random.split(key)
    params = init_params(pkey, d)
    # Input is NCHW like PyTorch: 64x64 spatial is required by the architecture
    # (four stride-2 convs + final 4x4 valid conv -> 1x1 output).
    x = jax.random.normal(xkey, (2, 3, 64, 64), jnp.float32)

    fwd = jax.jit(discriminator_forward)
    out = jax.block_until_ready(fwd(params, x))

    ref = reference_forward(params, x)
    assert out.shape == (2, 1, 1, 1), out.shape
    # bf16 matmul operands / activations (f32 accumulation & epilogue) vs f32
    # reference -> relaxed tolerance.
    err = float(jnp.max(jnp.abs(out - ref)))
    assert jnp.allclose(out, ref, rtol=2e-2, atol=2e-2), err

    # The small model picks single-K-step tiles everywhere; exercise the
    # K-tiled accumulator kernels explicitly against a jnp.dot reference.
    ka, kb = jax.random.split(jax.random.PRNGKey(1))
    a = jax.random.normal(ka, (256, 512), jnp.float32).astype(jnp.bfloat16)
    wq = (0.05 * jax.random.normal(kb, (512, 256), jnp.float32)).astype(jnp.bfloat16)
    bias0 = jnp.zeros((1, 256), jnp.float32)
    ref_mm = jnp.dot(a.astype(jnp.float32), wq.astype(jnp.float32))

    y_acc = _matmul_fused(a, wq, bias0, act="leaky", with_stats=False,
                          out_dtype=jnp.float32, tm=128, tn=128, tk=128)
    ref_act = jnp.where(ref_mm >= 0, ref_mm, LRELU_SLOPE * ref_mm)
    assert jnp.allclose(y_acc, ref_act, rtol=1e-2, atol=1e-2)

    y_st, st = _matmul_fused(a, wq, None, act="none", with_stats=True,
                             out_dtype=jnp.float32, tm=128, tn=128, tk=128)
    st = st.reshape(2, 8, 256)
    assert jnp.allclose(y_st, ref_mm, rtol=1e-2, atol=1e-2)
    assert jnp.allclose(st[:, 0].sum(0), ref_mm.sum(0), rtol=1e-2, atol=1e-1)
    assert jnp.allclose(st[:, 1].sum(0), (ref_mm * ref_mm).sum(0), rtol=1e-2, atol=1e-1)

    print("KERNEL_OK")
</pallas_src>

<mosaic_0001>
module attributes {stable_mosaic.version = 11 : i64} {
  func.func @_mm_bias_act_single_kernel(%arg0: i32, %arg1: i32, %arg2: i32, %arg3: memref<1024x48xbf16, #tpu.memory_space<vmem>>, %arg4: memref<48x128xbf16, #tpu.memory_space<vmem>>, %arg5: memref<1x128xf32, #tpu.memory_space<vmem>>, %arg6: memref<1024x128xbf16, #tpu.memory_space<vmem>>) attributes {dimension_semantics = [#tpu.dimension_semantics<parallel>, #tpu.dimension_semantics<parallel>, #tpu.dimension_semantics<arbitrary>], iteration_bounds = array<i64: 2, 1, 1>, scalar_prefetch = 0 : i64, scratch_operands = 0 : i64, tpu.core_type = #tpu.core_type<tc>, window_params = [{transform_indices = @transform_0, window_bounds = array<i64: 1024, 48>}, {transform_indices = @transform_1, window_bounds = array<i64: 48, 128>}, {transform_indices = @transform_2, window_bounds = array<i64: 1, 128>}, {transform_indices = @transform_3, window_bounds = array<i64: 1024, 128>}]} {
    %c0 = arith.constant 0 : index
    %c0_0 = arith.constant 0 : index
    %0 = vector.load %arg3[%c0, %c0_0] : memref<1024x48xbf16, #tpu.memory_space<vmem>>, vector<1024x48xbf16>
    %c0_1 = arith.constant 0 : index
    %c0_2 = arith.constant 0 : index
    %1 = vector.load %arg4[%c0_1, %c0_2] : memref<48x128xbf16, #tpu.memory_space<vmem>>, vector<48x128xbf16>
    %cst = arith.constant dense<0.000000e+00> : vector<1024x128xf32>
    %2 = tpu.matmul %0, %1, %cst {dimension_numbers = #tpu.dot_dimension_numbers<[1], [0], [0], [1], [0, 0, 1, 1], [], []>} : vector<1024x48xbf16>, vector<48x128xbf16>, vector<1024x128xf32> -> vector<1024x128xf32>
    %c0_3 = arith.constant 0 : index
    %c0_4 = arith.constant 0 : index
    %3 = vector.load %arg5[%c0_3, %c0_4] : memref<1x128xf32, #tpu.memory_space<vmem>>, vector<1x128xf32>
    %4 = vector.broadcast %3 : vector<1x128xf32> to vector<1024x128xf32>
    %5 = arith.addf %2, %4 : vector<1024x128xf32>
    %cst_5 = arith.constant 0.000000e+00 : f32
    %6 = vector.broadcast %cst_5 : f32 to vector<1024x128xf32>
    %7 = arith.cmpf oge, %5, %6 : vector<1024x128xf32>
    %cst_6 = arith.constant 2.000000e-01 : f32
    %8 = vector.broadcast %cst_6 : f32 to vector<1024x128xf32>
    %9 = arith.mulf %8, %5 : vector<1024x128xf32>
    %10 = arith.select %7, %5, %9 : vector<1024x128xi1>, vector<1024x128xf32>
    %11 = arith.truncf %10 : vector<1024x128xf32> to vector<1024x128xbf16>
    %c0_7 = arith.constant 0 : index
    %c0_8 = arith.constant 0 : index
    %12 = vector.load %arg6[%c0_7, %c0_8] : memref<1024x128xbf16, #tpu.memory_space<vmem>>, vector<1024x128xbf16>
    tpu.vector_store %arg6[%c0_7, %c0_8], %11 {strides = array<i32>} : memref<1024x128xbf16, #tpu.memory_space<vmem>>, vector<1024x128xbf16>,
    return
  }
  func.func @transform_0(%arg0: i32, %arg1: i32, %arg2: i32) -> (i32, i32) {
    %c0_i32 = arith.constant 0 : i32
    return %arg0, %arg2 : i32, i32
  }
  func.func @transform_1(%arg0: i32, %arg1: i32, %arg2: i32) -> (i32, i32) {
    %c0_i32 = arith.constant 0 : i32
    return %arg2, %arg1 : i32, i32
  }
  func.func @transform_2(%arg0: i32, %arg1: i32, %arg2: i32) -> (i32, i32) {
    %c0_i32 = arith.constant 0 : i32
    %c0_i32_0 = arith.constant 0 : i32
    return %c0_i32, %arg1 : i32, i32
  }
  func.func @transform_3(%arg0: i32, %arg1: i32, %arg2: i32) -> (i32, i32) {
    %c0_i32 = arith.constant 0 : i32
    return %arg0, %arg1 : i32, i32
  }
}

module attributes {stable_mosaic.version = 11 : i64} {
  func.func @_mm_stats_single_kernel(%arg0: i32, %arg1: i32, %arg2: i32, %arg3: memref<512x64xbf16, #tpu.memory_space<vmem>>, %arg4: memref<64x128xbf16, #tpu.memory_space<vmem>>, %arg5: memref<512x128xbf16, #tpu.memory_space<vmem>>, %arg6: memref<8x128xf32, #tpu.memory_space<vmem>>) attributes {dimension_semantics = [#tpu.dimension_semantics<parallel>, #tpu.dimension_semantics<parallel>, #tpu.dimension_semantics<arbitrary>], iteration_bounds = array<i64: 1, 1, 1>, scalar_prefetch = 0 : i64, scratch_operands = 0 : i64, tpu.core_type = #tpu.core_type<tc>, window_params = [{transform_indices = @transform_0, window_bounds = array<i64: 512, 64>}, {transform_indices = @transform_1, window_bounds = array<i64: 64, 128>}, {transform_indices = @transform_2, window_bounds = array<i64: 512, 128>}, {transform_indices = @transform_3, window_bounds = array<i64: 8, 128>}]} {
    %c0 = arith.constant 0 : index
    %c0_0 = arith.constant 0 : index
    %0 = vector.load %arg3[%c0, %c0_0] : memref<512x64xbf16, #tpu.memory_space<vmem>>, vector<512x64xbf16>
    %c0_1 = arith.constant 0 : index
    %c0_2 = arith.constant 0 : index
    %1 = vector.load %arg4[%c0_1, %c0_2] : memref<64x128xbf16, #tpu.memory_space<vmem>>, vector<64x128xbf16>
    %cst = arith.constant dense<0.000000e+00> : vector<512x128xf32>
    %2 = tpu.matmul %0, %1, %cst {dimension_numbers = #tpu.dot_dimension_numbers<[1], [0], [0], [1], [0, 0, 1, 1], [], []>} : vector<512x64xbf16>, vector<64x128xbf16>, vector<512x128xf32> -> vector<512x128xf32>
    %3 = arith.truncf %2 : vector<512x128xf32> to vector<512x128xbf16>
    %c0_3 = arith.constant 0 : index
    %c0_4 = arith.constant 0 : index
    %4 = vector.load %arg5[%c0_3, %c0_4] : memref<512x128xbf16, #tpu.memory_space<vmem>>, vector<512x128xbf16>
    tpu.vector_store %arg5[%c0_3, %c0_4], %3 {strides = array<i32>} : memref<512x128xbf16, #tpu.memory_space<vmem>>, vector<512x128xbf16>,
    %cst_5 = arith.constant dense<0.000000e+00> : vector<128xf32>
    %5 = vector.multi_reduction <add>, %2, %cst_5 [0] : vector<512x128xf32> to vector<128xf32>
    %6 = vector.shape_cast %5 : vector<128xf32> to vector<1x128xf32>
    %7 = arith.mulf %2, %2 : vector<512x128xf32>
    %cst_6 = arith.constant dense<0.000000e+00> : vector<128xf32>
    %8 = vector.multi_reduction <add>, %7, %cst_6 [0] : vector<512x128xf32> to vector<128xf32>
    %9 = vector.shape_cast %8 : vector<128xf32> to vector<1x128xf32>
    %10 = tpu.iota {dimensions = array<i32: 0>} : vector<8x1xi32>
    %c0_i32 = arith.constant 0 : i32
    %11 = vector.broadcast %c0_i32 : i32 to vector<8x1xi32>
    %12 = arith.cmpi eq, %10, %11 : vector<8x1xi32>
    %c1_i32 = arith.constant 1 : i32
    %13 = vector.broadcast %c1_i32 : i32 to vector<8x1xi32>
    %14 = arith.cmpi eq, %10, %13 : vector<8x1xi32>
    %cst_7 = arith.constant 0.000000e+00 : f32
    %15 = vector.shape_cast %14 : vector<8x1xi1> to vector<8x1xi1>
    %16 = vector.broadcast %15 : vector<8x1xi1> to vector<8x128xi1>
    %17 = vector.shape_cast %9 : vector<1x128xf32> to vector<1x128xf32>
    %18 = vector.broadcast %17 : vector<1x128xf32> to vector<8x128xf32>
    %19 = vector.broadcast %cst_7 : f32 to vector<8x128xf32>
    %20 = arith.select %16, %18, %19 : vector<8x128xi1>, vector<8x128xf32>
    %21 = vector.shape_cast %12 : vector<8x1xi1> to vector<8x1xi1>
    %22 = vector.broadcast %21 : vector<8x1xi1> to vector<8x128xi1>
    %23 = vector.shape_cast %6 : vector<1x128xf32> to vector<1x128xf32>
    %24 = vector.broadcast %23 : vector<1x128xf32> to vector<8x128xf32>
    %25 = arith.select %22, %24, %20 : vector<8x128xi1>, vector<8x128xf32>
    %c0_8 = arith.constant 0 : index
    %c0_9 = arith.constant 0 : index
    %26 = vector.load %arg6[%c0_8, %c0_9] : memref<8x128xf32, #tpu.memory_space<vmem>>, vector<8x128xf32>
    tpu.vector_store %arg6[%c0_8, %c0_9], %25 {strides = array<i32>} : memref<8x128xf32, #tpu.memory_space<vmem>>, vector<8x128xf32>,
    return
  }
  func.func @transform_0(%arg0: i32, %arg1: i32, %arg2: i32) -> (i32, i32) {
    %c0_i32 = arith.constant 0 : i32
    return %arg0, %arg2 : i32, i32
  }
  func.func @transform_1(%arg0: i32, %arg1: i32, %arg2: i32) -> (i32, i32) {
    %c0_i32 = arith.constant 0 : i32
    return %arg2, %arg1 : i32, i32
  }
  func.func @transform_2(%arg0: i32, %arg1: i32, %arg2: i32) -> (i32, i32) {
    %c0_i32 = arith.constant 0 : i32
    return %arg0, %arg1 : i32, i32
  }
  func.func @transform_3(%arg0: i32, %arg1: i32, %arg2: i32) -> (i32, i32) {
    %c0_i32 = arith.constant 0 : i32
    return %arg0, %arg1 : i32, i32
  }
}

module attributes {stable_mosaic.version = 11 : i64} {
  func.func @_bn_lrelu_kernel(%arg0: i32, %arg1: i32, %arg2: memref<512x128xbf16, #tpu.memory_space<vmem>>, %arg3: memref<1x128xf32, #tpu.memory_space<vmem>>, %arg4: memref<1x128xf32, #tpu.memory_space<vmem>>, %arg5: memref<512x128xbf16, #tpu.memory_space<vmem>>) attributes {dimension_semantics = [#tpu.dimension_semantics<parallel>, #tpu.dimension_semantics<parallel>], iteration_bounds = array<i64: 1, 1>, scalar_prefetch = 0 : i64, scratch_operands = 0 : i64, tpu.core_type = #tpu.core_type<tc>, window_params = [{transform_indices = @transform_0, window_bounds = array<i64: 512, 128>}, {transform_indices = @transform_1, window_bounds = array<i64: 1, 128>}, {transform_indices = @transform_2, window_bounds = array<i64: 1, 128>}, {transform_indices = @transform_3, window_bounds = array<i64: 512, 128>}]} {
    %c0 = arith.constant 0 : index
    %c0_0 = arith.constant 0 : index
    %0 = vector.load %arg2[%c0, %c0_0] : memref<512x128xbf16, #tpu.memory_space<vmem>>, vector<512x128xbf16>
    %1 = arith.extf %0 : vector<512x128xbf16> to vector<512x128xf32>
    %c0_1 = arith.constant 0 : index
    %c0_2 = arith.constant 0 : index
    %2 = vector.load %arg3[%c0_1, %c0_2] : memref<1x128xf32, #tpu.memory_space<vmem>>, vector<1x128xf32>
    %3 = vector.broadcast %2 : vector<1x128xf32> to vector<512x128xf32>
    %4 = arith.mulf %1, %3 : vector<512x128xf32>
    %c0_3 = arith.constant 0 : index
    %c0_4 = arith.constant 0 : index
    %5 = vector.load %arg4[%c0_3, %c0_4] : memref<1x128xf32, #tpu.memory_space<vmem>>, vector<1x128xf32>
    %6 = vector.broadcast %5 : vector<1x128xf32> to vector<512x128xf32>
    %7 = arith.addf %4, %6 : vector<512x128xf32>
    %cst = arith.constant 0.000000e+00 : f32
    %8 = vector.broadcast %cst : f32 to vector<512x128xf32>
    %9 = arith.cmpf oge, %7, %8 : vector<512x128xf32>
    %cst_5 = arith.constant 2.000000e-01 : f32
    %10 = vector.broadcast %cst_5 : f32 to vector<512x128xf32>
    %11 = arith.mulf %10, %7 : vector<512x128xf32>
    %12 = arith.select %9, %7, %11 : vector<512x128xi1>, vector<512x128xf32>
    %13 = arith.truncf %12 : vector<512x128xf32> to vector<512x128xbf16>
    %c0_6 = arith.constant 0 : index
    %c0_7 = arith.constant 0 : index
    %14 = vector.load %arg5[%c0_6, %c0_7] : memref<512x128xbf16, #tpu.memory_space<vmem>>, vector<512x128xbf16>
    tpu.vector_store %arg5[%c0_6, %c0_7], %13 {strides = array<i32>} : memref<512x128xbf16, #tpu.memory_space<vmem>>, vector<512x128xbf16>,
    return
  }
  func.func @transform_0(%arg0: i32, %arg1: i32) -> (i32, i32) {
    %c0_i32 = arith.constant 0 : i32
    return %arg0, %arg1 : i32, i32
  }
  func.func @transform_1(%arg0: i32, %arg1: i32) -> (i32, i32) {
    %c0_i32 = arith.constant 0 : i32
    %c0_i32_0 = arith.constant 0 : i32
    return %c0_i32, %arg1 : i32, i32
  }
  func.func @transform_2(%arg0: i32, %arg1: i32) -> (i32, i32) {
    %c0_i32 = arith.constant 0 : i32
    %c0_i32_0 = arith.constant 0 : i32
    return %c0_i32, %arg1 : i32, i32
  }
  func.func @transform_3(%arg0: i32, %arg1: i32) -> (i32, i32) {
    %c0_i32 = arith.constant 0 : i32
    return %arg0, %arg1 : i32, i32
  }
}

module attributes {stable_mosaic.version = 11 : i64} {
  func.func @_mm_stats_single_kernel(%arg0: i32, %arg1: i32, %arg2: i32, %arg3: memref<128x1024xbf16, #tpu.memory_space<vmem>>, %arg4: memref<1024x128xbf16, #tpu.memory_space<vmem>>, %arg5: memref<128x128xbf16, #tpu.memory_space<vmem>>, %arg6: memref<8x128xf32, #tpu.memory_space<vmem>>) attributes {dimension_semantics = [#tpu.dimension_semantics<parallel>, #tpu.dimension_semantics<parallel>, #tpu.dimension_semantics<arbitrary>], iteration_bounds = array<i64: 1, 1, 1>, scalar_prefetch = 0 : i64, scratch_operands = 0 : i64, tpu.core_type = #tpu.core_type<tc>, window_params = [{transform_indices = @transform_0, window_bounds = array<i64: 128, 1024>}, {transform_indices = @transform_1, window_bounds = array<i64: 1024, 128>}, {transform_indices = @transform_2, window_bounds = array<i64: 128, 128>}, {transform_indices = @transform_3, window_bounds = array<i64: 8, 128>}]} {
    %c0 = arith.constant 0 : index
    %c0_0 = arith.constant 0 : index
    %0 = vector.load %arg3[%c0, %c0_0] : memref<128x1024xbf16, #tpu.memory_space<vmem>>, vector<128x1024xbf16>
    %c0_1 = arith.constant 0 : index
    %c0_2 = arith.constant 0 : index
    %1 = vector.load %arg4[%c0_1, %c0_2] : memref<1024x128xbf16, #tpu.memory_space<vmem>>, vector<1024x128xbf16>
    %cst = arith.constant dense<0.000000e+00> : vector<128x128xf32>
    %2 = tpu.matmul %0, %1, %cst {dimension_numbers = #tpu.dot_dimension_numbers<[1], [0], [0], [1], [0, 0, 1, 1], [], []>} : vector<128x1024xbf16>, vector<1024x128xbf16>, vector<128x128xf32> -> vector<128x128xf32>
    %3 = arith.truncf %2 : vector<128x128xf32> to vector<128x128xbf16>
    %c0_3 = arith.constant 0 : index
    %c0_4 = arith.constant 0 : index
    %4 = vector.load %arg5[%c0_3, %c0_4] : memref<128x128xbf16, #tpu.memory_space<vmem>>, vector<128x128xbf16>
    tpu.vector_store %arg5[%c0_3, %c0_4], %3 {strides = array<i32>} : memref<128x128xbf16, #tpu.memory_space<vmem>>, vector<128x128xbf16>,
    %cst_5 = arith.constant dense<0.000000e+00> : vector<128xf32>
    %5 = vector.multi_reduction <add>, %2, %cst_5 [0] : vector<128x128xf32> to vector<128xf32>
    %6 = vector.shape_cast %5 : vector<128xf32> to vector<1x128xf32>
    %7 = arith.mulf %2, %2 : vector<128x128xf32>
    %cst_6 = arith.constant dense<0.000000e+00> : vector<128xf32>
    %8 = vector.multi_reduction <add>, %7, %cst_6 [0] : vector<128x128xf32> to vector<128xf32>
    %9 = vector.shape_cast %8 : vector<128xf32> to vector<1x128xf32>
    %10 = tpu.iota {dimensions = array<i32: 0>} : vector<8x1xi32>
    %c0_i32 = arith.constant 0 : i32
    %11 = vector.broadcast %c0_i32 : i32 to vector<8x1xi32>
    %12 = arith.cmpi eq, %10, %11 : vector<8x1xi32>
    %c1_i32 = arith.constant 1 : i32
    %13 = vector.broadcast %c1_i32 : i32 to vector<8x1xi32>
    %14 = arith.cmpi eq, %10, %13 : vector<8x1xi32>
    %cst_7 = arith.constant 0.000000e+00 : f32
    %15 = vector.shape_cast %14 : vector<8x1xi1> to vector<8x1xi1>
    %16 = vector.broadcast %15 : vector<8x1xi1> to vector<8x128xi1>
    %17 = vector.shape_cast %9 : vector<1x128xf32> to vector<1x128xf32>
    %18 = vector.broadcast %17 : vector<1x128xf32> to vector<8x128xf32>
    %19 = vector.broadcast %cst_7 : f32 to vector<8x128xf32>
    %20 = arith.select %16, %18, %19 : vector<8x128xi1>, vector<8x128xf32>
    %21 = vector.shape_cast %12 : vector<8x1xi1> to vector<8x1xi1>
    %22 = vector.broadcast %21 : vector<8x1xi1> to vector<8x128xi1>
    %23 = vector.shape_cast %6 : vector<1x128xf32> to vector<1x128xf32>
    %24 = vector.broadcast %23 : vector<1x128xf32> to vector<8x128xf32>
    %25 = arith.select %22, %24, %20 : vector<8x128xi1>, vector<8x128xf32>
    %c0_8 = arith.constant 0 : index
    %c0_9 = arith.constant 0 : index
    %26 = vector.load %arg6[%c0_8, %c0_9] : memref<8x128xf32, #tpu.memory_space<vmem>>, vector<8x128xf32>
    tpu.vector_store %arg6[%c0_8, %c0_9], %25 {strides = array<i32>} : memref<8x128xf32, #tpu.memory_space<vmem>>, vector<8x128xf32>,
    return
  }
  func.func @transform_0(%arg0: i32, %arg1: i32, %arg2: i32) -> (i32, i32) {
    %c0_i32 = arith.constant 0 : i32
    return %arg0, %arg2 : i32, i32
  }
  func.func @transform_1(%arg0: i32, %arg1: i32, %arg2: i32) -> (i32, i32) {
    %c0_i32 = arith.constant 0 : i32
    return %arg2, %arg1 : i32, i32
  }
  func.func @transform_2(%arg0: i32, %arg1: i32, %arg2: i32) -> (i32, i32) {
    %c0_i32 = arith.constant 0 : i32
    return %arg0, %arg1 : i32, i32
  }
  func.func @transform_3(%arg0: i32, %arg1: i32, %arg2: i32) -> (i32, i32) {
    %c0_i32 = arith.constant 0 : i32
    return %arg0, %arg1 : i32, i32
  }
}

module attributes {stable_mosaic.version = 11 : i64} {
  func.func @_bn_lrelu_kernel(%arg0: i32, %arg1: i32, %arg2: memref<128x128xbf16, #tpu.memory_space<vmem>>, %arg3: memref<1x128xf32, #tpu.memory_space<vmem>>, %arg4: memref<1x128xf32, #tpu.memory_space<vmem>>, %arg5: memref<128x128xbf16, #tpu.memory_space<vmem>>) attributes {dimension_semantics = [#tpu.dimension_semantics<parallel>, #tpu.dimension_semantics<parallel>], iteration_bounds = array<i64: 1, 1>, scalar_prefetch = 0 : i64, scratch_operands = 0 : i64, tpu.core_type = #tpu.core_type<tc>, window_params = [{transform_indices = @transform_0, window_bounds = array<i64: 128, 128>}, {transform_indices = @transform_1, window_bounds = array<i64: 1, 128>}, {transform_indices = @transform_2, window_bounds = array<i64: 1, 128>}, {transform_indices = @transform_3, window_bounds = array<i64: 128, 128>}]} {
    %c0 = arith.constant 0 : index
    %c0_0 = arith.constant 0 : index
    %0 = vector.load %arg2[%c0, %c0_0] : memref<128x128xbf16, #tpu.memory_space<vmem>>, vector<128x128xbf16>
    %1 = arith.extf %0 : vector<128x128xbf16> to vector<128x128xf32>
    %c0_1 = arith.constant 0 : index
    %c0_2 = arith.constant 0 : index
    %2 = vector.load %arg3[%c0_1, %c0_2] : memref<1x128xf32, #tpu.memory_space<vmem>>, vector<1x128xf32>
    %3 = vector.broadcast %2 : vector<1x128xf32> to vector<128x128xf32>
    %4 = arith.mulf %1, %3 : vector<128x128xf32>
    %c0_3 = arith.constant 0 : index
    %c0_4 = arith.constant 0 : index
    %5 = vector.load %arg4[%c0_3, %c0_4] : memref<1x128xf32, #tpu.memory_space<vmem>>, vector<1x128xf32>
    %6 = vector.broadcast %5 : vector<1x128xf32> to vector<128x128xf32>
    %7 = arith.addf %4, %6 : vector<128x128xf32>
    %cst = arith.constant 0.000000e+00 : f32
    %8 = vector.broadcast %cst : f32 to vector<128x128xf32>
    %9 = arith.cmpf oge, %7, %8 : vector<128x128xf32>
    %cst_5 = arith.constant 2.000000e-01 : f32
    %10 = vector.broadcast %cst_5 : f32 to vector<128x128xf32>
    %11 = arith.mulf %10, %7 : vector<128x128xf32>
    %12 = arith.select %9, %7, %11 : vector<128x128xi1>, vector<128x128xf32>
    %13 = arith.truncf %12 : vector<128x128xf32> to vector<128x128xbf16>
    %c0_6 = arith.constant 0 : index
    %c0_7 = arith.constant 0 : index
    %14 = vector.load %arg5[%c0_6, %c0_7] : memref<128x128xbf16, #tpu.memory_space<vmem>>, vector<128x128xbf16>
    tpu.vector_store %arg5[%c0_6, %c0_7], %13 {strides = array<i32>} : memref<128x128xbf16, #tpu.memory_space<vmem>>, vector<128x128xbf16>,
    return
  }
  func.func @transform_0(%arg0: i32, %arg1: i32) -> (i32, i32) {
    %c0_i32 = arith.constant 0 : i32
    return %arg0, %arg1 : i32, i32
  }
  func.func @transform_1(%arg0: i32, %arg1: i32) -> (i32, i32) {
    %c0_i32 = arith.constant 0 : i32
    %c0_i32_0 = arith.constant 0 : i32
    return %c0_i32, %arg1 : i32, i32
  }
  func.func @transform_2(%arg0: i32, %arg1: i32) -> (i32, i32) {
    %c0_i32 = arith.constant 0 : i32
    %c0_i32_0 = arith.constant 0 : i32
    return %c0_i32, %arg1 : i32, i32
  }
  func.func @transform_3(%arg0: i32, %arg1: i32) -> (i32, i32) {
    %c0_i32 = arith.constant 0 : i32
    return %arg0, %arg1 : i32, i32
  }
}

module attributes {stable_mosaic.version = 11 : i64} {
  func.func @_mm_stats_single_kernel(%arg0: i32, %arg1: i32, %arg2: i32, %arg3: memref<32x2048xbf16, #tpu.memory_space<vmem>>, %arg4: memref<2048x128xbf16, #tpu.memory_space<vmem>>, %arg5: memref<32x128xbf16, #tpu.memory_space<vmem>>, %arg6: memref<8x128xf32, #tpu.memory_space<vmem>>) attributes {dimension_semantics = [#tpu.dimension_semantics<parallel>, #tpu.dimension_semantics<parallel>, #tpu.dimension_semantics<arbitrary>], iteration_bounds = array<i64: 1, 2, 1>, scalar_prefetch = 0 : i64, scratch_operands = 0 : i64, tpu.core_type = #tpu.core_type<tc>, window_params = [{transform_indices = @transform_0, window_bounds = array<i64: 32, 2048>}, {transform_indices = @transform_1, window_bounds = array<i64: 2048, 128>}, {transform_indices = @transform_2, window_bounds = array<i64: 32, 128>}, {transform_indices = @transform_3, window_bounds = array<i64: 8, 128>}]} {
    %c0 = arith.constant 0 : index
    %c0_0 = arith.constant 0 : index
    %0 = vector.load %arg3[%c0, %c0_0] : memref<32x2048xbf16, #tpu.memory_space<vmem>>, vector<32x2048xbf16>
    %c0_1 = arith.constant 0 : index
    %c0_2 = arith.constant 0 : index
    %1 = vector.load %arg4[%c0_1, %c0_2] : memref<2048x128xbf16, #tpu.memory_space<vmem>>, vector<2048x128xbf16>
    %cst = arith.constant dense<0.000000e+00> : vector<32x128xf32>
    %2 = tpu.matmul %0, %1, %cst {dimension_numbers = #tpu.dot_dimension_numbers<[1], [0], [0], [1], [0, 0, 1, 1], [], []>} : vector<32x2048xbf16>, vector<2048x128xbf16>, vector<32x128xf32> -> vector<32x128xf32>
    %3 = arith.truncf %2 : vector<32x128xf32> to vector<32x128xbf16>
    %c0_3 = arith.constant 0 : index
    %c0_4 = arith.constant 0 : index
    %4 = vector.load %arg5[%c0_3, %c0_4] : memref<32x128xbf16, #tpu.memory_space<vmem>>, vector<32x128xbf16>
    tpu.vector_store %arg5[%c0_3, %c0_4], %3 {strides = array<i32>} : memref<32x128xbf16, #tpu.memory_space<vmem>>, vector<32x128xbf16>,
    %cst_5 = arith.constant dense<0.000000e+00> : vector<128xf32>
    %5 = vector.multi_reduction <add>, %2, %cst_5 [0] : vector<32x128xf32> to vector<128xf32>
    %6 = vector.shape_cast %5 : vector<128xf32> to vector<1x128xf32>
    %7 = arith.mulf %2, %2 : vector<32x128xf32>
    %cst_6 = arith.constant dense<0.000000e+00> : vector<128xf32>
    %8 = vector.multi_reduction <add>, %7, %cst_6 [0] : vector<32x128xf32> to vector<128xf32>
    %9 = vector.shape_cast %8 : vector<128xf32> to vector<1x128xf32>
    %10 = tpu.iota {dimensions = array<i32: 0>} : vector<8x1xi32>
    %c0_i32 = arith.constant 0 : i32
    %11 = vector.broadcast %c0_i32 : i32 to vector<8x1xi32>
    %12 = arith.cmpi eq, %10, %11 : vector<8x1xi32>
    %c1_i32 = arith.constant 1 : i32
    %13 = vector.broadcast %c1_i32 : i32 to vector<8x1xi32>
    %14 = arith.cmpi eq, %10, %13 : vector<8x1xi32>
    %cst_7 = arith.constant 0.000000e+00 : f32
    %15 = vector.shape_cast %14 : vector<8x1xi1> to vector<8x1xi1>
    %16 = vector.broadcast %15 : vector<8x1xi1> to vector<8x128xi1>
    %17 = vector.shape_cast %9 : vector<1x128xf32> to vector<1x128xf32>
    %18 = vector.broadcast %17 : vector<1x128xf32> to vector<8x128xf32>
    %19 = vector.broadcast %cst_7 : f32 to vector<8x128xf32>
    %20 = arith.select %16, %18, %19 : vector<8x128xi1>, vector<8x128xf32>
    %21 = vector.shape_cast %12 : vector<8x1xi1> to vector<8x1xi1>
    %22 = vector.broadcast %21 : vector<8x1xi1> to vector<8x128xi1>
    %23 = vector.shape_cast %6 : vector<1x128xf32> to vector<1x128xf32>
    %24 = vector.broadcast %23 : vector<1x128xf32> to vector<8x128xf32>
    %25 = arith.select %22, %24, %20 : vector<8x128xi1>, vector<8x128xf32>
    %c0_8 = arith.constant 0 : index
    %c0_9 = arith.constant 0 : index
    %26 = vector.load %arg6[%c0_8, %c0_9] : memref<8x128xf32, #tpu.memory_space<vmem>>, vector<8x128xf32>
    tpu.vector_store %arg6[%c0_8, %c0_9], %25 {strides = array<i32>} : memref<8x128xf32, #tpu.memory_space<vmem>>, vector<8x128xf32>,
    return
  }
  func.func @transform_0(%arg0: i32, %arg1: i32, %arg2: i32) -> (i32, i32) {
    %c0_i32 = arith.constant 0 : i32
    return %arg0, %arg2 : i32, i32
  }
  func.func @transform_1(%arg0: i32, %arg1: i32, %arg2: i32) -> (i32, i32) {
    %c0_i32 = arith.constant 0 : i32
    return %arg2, %arg1 : i32, i32
  }
  func.func @transform_2(%arg0: i32, %arg1: i32, %arg2: i32) -> (i32, i32) {
    %c0_i32 = arith.constant 0 : i32
    return %arg0, %arg1 : i32, i32
  }
  func.func @transform_3(%arg0: i32, %arg1: i32, %arg2: i32) -> (i32, i32) {
    %c0_i32 = arith.constant 0 : i32
    return %arg0, %arg1 : i32, i32
  }
}

module attributes {stable_mosaic.version = 11 : i64} {
  func.func @_bn_lrelu_kernel(%arg0: i32, %arg1: i32, %arg2: memref<32x256xbf16, #tpu.memory_space<vmem>>, %arg3: memref<1x256xf32, #tpu.memory_space<vmem>>, %arg4: memref<1x256xf32, #tpu.memory_space<vmem>>, %arg5: memref<32x256xbf16, #tpu.memory_space<vmem>>) attributes {dimension_semantics = [#tpu.dimension_semantics<parallel>, #tpu.dimension_semantics<parallel>], iteration_bounds = array<i64: 1, 1>, scalar_prefetch = 0 : i64, scratch_operands = 0 : i64, tpu.core_type = #tpu.core_type<tc>, window_params = [{transform_indices = @transform_0, window_bounds = array<i64: 32, 256>}, {transform_indices = @transform_1, window_bounds = array<i64: 1, 256>}, {transform_indices = @transform_2, window_bounds = array<i64: 1, 256>}, {transform_indices = @transform_3, window_bounds = array<i64: 32, 256>}]} {
    %c0 = arith.constant 0 : index
    %c0_0 = arith.constant 0 : index
    %0 = vector.load %arg2[%c0, %c0_0] : memref<32x256xbf16, #tpu.memory_space<vmem>>, vector<32x256xbf16>
    %1 = arith.extf %0 : vector<32x256xbf16> to vector<32x256xf32>
    %c0_1 = arith.constant 0 : index
    %c0_2 = arith.constant 0 : index
    %2 = vector.load %arg3[%c0_1, %c0_2] : memref<1x256xf32, #tpu.memory_space<vmem>>, vector<1x256xf32>
    %3 = vector.broadcast %2 : vector<1x256xf32> to vector<32x256xf32>
    %4 = arith.mulf %1, %3 : vector<32x256xf32>
    %c0_3 = arith.constant 0 : index
    %c0_4 = arith.constant 0 : index
    %5 = vector.load %arg4[%c0_3, %c0_4] : memref<1x256xf32, #tpu.memory_space<vmem>>, vector<1x256xf32>
    %6 = vector.broadcast %5 : vector<1x256xf32> to vector<32x256xf32>
    %7 = arith.addf %4, %6 : vector<32x256xf32>
    %cst = arith.constant 0.000000e+00 : f32
    %8 = vector.broadcast %cst : f32 to vector<32x256xf32>
    %9 = arith.cmpf oge, %7, %8 : vector<32x256xf32>
    %cst_5 = arith.constant 2.000000e-01 : f32
    %10 = vector.broadcast %cst_5 : f32 to vector<32x256xf32>
    %11 = arith.mulf %10, %7 : vector<32x256xf32>
    %12 = arith.select %9, %7, %11 : vector<32x256xi1>, vector<32x256xf32>
    %13 = arith.truncf %12 : vector<32x256xf32> to vector<32x256xbf16>
    %c0_6 = arith.constant 0 : index
    %c0_7 = arith.constant 0 : index
    %14 = vector.load %arg5[%c0_6, %c0_7] : memref<32x256xbf16, #tpu.memory_space<vmem>>, vector<32x256xbf16>
    tpu.vector_store %arg5[%c0_6, %c0_7], %13 {strides = array<i32>} : memref<32x256xbf16, #tpu.memory_space<vmem>>, vector<32x256xbf16>,
    return
  }
  func.func @transform_0(%arg0: i32, %arg1: i32) -> (i32, i32) {
    %c0_i32 = arith.constant 0 : i32
    return %arg0, %arg1 : i32, i32
  }
  func.func @transform_1(%arg0: i32, %arg1: i32) -> (i32, i32) {
    %c0_i32 = arith.constant 0 : i32
    %c0_i32_0 = arith.constant 0 : i32
    return %c0_i32, %arg1 : i32, i32
  }
  func.func @transform_2(%arg0: i32, %arg1: i32) -> (i32, i32) {
    %c0_i32 = arith.constant 0 : i32
    %c0_i32_0 = arith.constant 0 : i32
    return %c0_i32, %arg1 : i32, i32
  }
  func.func @transform_3(%arg0: i32, %arg1: i32) -> (i32, i32) {
    %c0_i32 = arith.constant 0 : i32
    return %arg0, %arg1 : i32, i32
  }
}

module attributes {stable_mosaic.version = 11 : i64} {
  func.func @_mm_bias_act_single_kernel(%arg0: i32, %arg1: i32, %arg2: i32, %arg3: memref<8x4096xbf16, #tpu.memory_space<vmem>>, %arg4: memref<4096x128xbf16, #tpu.memory_space<vmem>>, %arg5: memref<1x128xf32, #tpu.memory_space<vmem>>, %arg6: memref<8x128xf32, #tpu.memory_space<vmem>>) attributes {dimension_semantics = [#tpu.dimension_semantics<parallel>, #tpu.dimension_semantics<parallel>, #tpu.dimension_semantics<arbitrary>], iteration_bounds = array<i64: 1, 1, 1>, scalar_prefetch = 0 : i64, scratch_operands = 0 : i64, tpu.core_type = #tpu.core_type<tc>, window_params = [{transform_indices = @transform_0, window_bounds = array<i64: 8, 4096>}, {transform_indices = @transform_1, window_bounds = array<i64: 4096, 128>}, {transform_indices = @transform_2, window_bounds = array<i64: 1, 128>}, {transform_indices = @transform_3, window_bounds = array<i64: 8, 128>}]} {
    %c0 = arith.constant 0 : index
    %c0_0 = arith.constant 0 : index
    %0 = vector.load %arg3[%c0, %c0_0] : memref<8x4096xbf16, #tpu.memory_space<vmem>>, vector<8x4096xbf16>
    %c0_1 = arith.constant 0 : index
    %c0_2 = arith.constant 0 : index
    %1 = vector.load %arg4[%c0_1, %c0_2] : memref<4096x128xbf16, #tpu.memory_space<vmem>>, vector<4096x128xbf16>
    %cst = arith.constant dense<0.000000e+00> : vector<8x128xf32>
    %2 = tpu.matmul %0, %1, %cst {dimension_numbers = #tpu.dot_dimension_numbers<[1], [0], [0], [1], [0, 0, 1, 1], [], []>} : vector<8x4096xbf16>, vector<4096x128xbf16>, vector<8x128xf32> -> vector<8x128xf32>
    %c0_3 = arith.constant 0 : index
    %c0_4 = arith.constant 0 : index
    %3 = vector.load %arg5[%c0_3, %c0_4] : memref<1x128xf32, #tpu.memory_space<vmem>>, vector<1x128xf32>
    %4 = vector.broadcast %3 : vector<1x128xf32> to vector<8x128xf32>
    %5 = arith.addf %2, %4 : vector<8x128xf32>
    %cst_5 = arith.constant 0.000000e+00 : f32
    %6 = vector.broadcast %cst_5 : f32 to vector<8x128xf32>
    %7 = arith.subf %6, %5 : vector<8x128xf32>
    %8 = math.exp %7 : vector<8x128xf32>
    %cst_6 = arith.constant 1.000000e+00 : f32
    %9 = vector.broadcast %cst_6 : f32 to vector<8x128xf32>
    %10 = arith.addf %9, %8 : vector<8x128xf32>
    %cst_7 = arith.constant 1.000000e+00 : f32
    %11 = vector.broadcast %cst_7 : f32 to vector<8x128xf32>
    %12 = arith.divf %11, %10 : vector<8x128xf32>
    %c0_8 = arith.constant 0 : index
    %c0_9 = arith.constant 0 : index
    %13 = vector.load %arg6[%c0_8, %c0_9] : memref<8x128xf32, #tpu.memory_space<vmem>>, vector<8x128xf32>
    tpu.vector_store %arg6[%c0_8, %c0_9], %12 {strides = array<i32>} : memref<8x128xf32, #tpu.memory_space<vmem>>, vector<8x128xf32>,
    return
  }
  func.func @transform_0(%arg0: i32, %arg1: i32, %arg2: i32) -> (i32, i32) {
    %c0_i32 = arith.constant 0 : i32
    return %arg0, %arg2 : i32, i32
  }
  func.func @transform_1(%arg0: i32, %arg1: i32, %arg2: i32) -> (i32, i32) {
    %c0_i32 = arith.constant 0 : i32
    return %arg2, %arg1 : i32, i32
  }
  func.func @transform_2(%arg0: i32, %arg1: i32, %arg2: i32) -> (i32, i32) {
    %c0_i32 = arith.constant 0 : i32
    %c0_i32_0 = arith.constant 0 : i32
    return %c0_i32, %arg1 : i32, i32
  }
  func.func @transform_3(%arg0: i32, %arg1: i32, %arg2: i32) -> (i32, i32) {
    %c0_i32 = arith.constant 0 : i32
    return %arg0, %arg1 : i32, i32
  }
}

</mosaic_0001>

<llo_original>
// kernel: discriminator_forward.8
$region0: #{discriminator_forward.8}
  #allocation0 [shape = 'u32[]', space=smem, size = 0x4, offset = 0x4, fixed_abs, tag = 'smem constant byte address 0x4 - core index']
  #allocation1 [shape = 'u32[144,128]{1,0:T(1,128)}', space=vmem, size = 0x12000, scoped, tag = 'internal scratch']
  %s0 = inlined_call_operand.vmem [shape: bf16[2048,48], index: 0, kind: input, shape index: {}]
  %s1 = inlined_call_operand.vmem [shape: bf16[48,128], index: 1, kind: input, shape index: {}]
  %s2 = inlined_call_operand.vmem [shape: f32[1,128], index: 2, kind: input, shape index: {}]
  %s3 = inlined_call_operand.vmem [shape: bf16[2048,128], index: 3, kind: output, shape index: {}]
  %s4 = sld [smem:[#allocation0]]
  $region45: #{discriminator_forward.8} parent=0
    _
  %s6 = ssub.s32 1, %s4
  %s7 = scalar_select 0, %s6, %s4
  loop: start=0, step=1, limit=4
  $region2: #{discriminator_forward.8} parent=0 // loop_pre_header
    _
  $region3: #{discriminator_forward.8} parent=0 // loop_header
    %s9 = sphi 0, %s13
    %p10 = scmp.ge.s32.totalorder %s9, 4
    %s16 = sphi 0, %s35
    %s17 = sphi 0, %s31
    %s18 = sphi 0, %s27
    %s19 = sphi 0, %s16
    %s20 = sphi 0, %s17
    %s21 = sphi 0, %s18
    %s22 = sphi 0, %s19
    %s23 = sphi 0, %s20
    %s24 = sphi 0, %s21
    %s40 = sphi 0, %s42
    %s43 = sphi 0, %s40
    %s44 = sphi 0, %s43
    %s60 = sphi 0, %s44
    %s68 = sphi 0, %s70
    %s71 = sphi 0, %s68
    %s72 = sphi 0, %s71
    %s88 = sphi 0, %s72
    %s94 = sphi 0, %s96
    %s97 = sphi 0, %s94
    %s98 = sphi 0, %s97
    %s114 = sphi 0, %s98
    %s122 = sphi 0, %s124
    %s125 = sphi 0, %s122
    %s126 = sphi 0, %s125
    %s142 = sphi 0, %s126
  $region4: #{discriminator_forward.8} parent=0 // loop_header_branch
    %12 = sbr.rel (%p10) target = $region8
  $region5: #{discriminator_forward.8} parent=0 // loop_body
    %s14 = ssub.s32 %s9, 1
    %s15 = ssub.s32 %s9, 2
    %s25 = sadd.s32 1, %s18
    %p26 = scmp.ge.s32.totalorder %s25, 1
    %s27 = scalar_select %p26, 0, %s25
    %s28 = sadd.s32 1, %s17
    %s29 = scalar_select %p26, %s28, %s17
    %p30 = scmp.ge.s32.totalorder %s29, 1
    %s31 = scalar_select %p30, 0, %s29
    %s32 = sadd.s32 1, %s16
    %s33 = scalar_select %p30, %s32, %s16
    %p34 = scmp.ge.s32.totalorder %s33, 2
    %s35 = scalar_select %p34, 0, %s33
    %s36 = ssub.s32 %s16, %s35
    %s37 = ssub.s32 %s18, %s27
    %s38 = sor.u32 %s36, %s37
    %p39 = scmp.eq.s32.totalorder %s38, 0
    %s41 = sadd.s32 %s40, 1
    %s42 = scalar_select %p39, %s40, %s41
    %p45 = pneg %p39
    %p46 = scmp.eq.s32.totalorder %s9, 1
    %p47 = por %p45, %p46
    %p48 = scmp.ne.s32.totalorder %s40, %s43
    %p49 = scmp.eq.s32.totalorder %s9, 0
    %p50 = por %p48, %p49
    %p51 = scmp.ne.s32.totalorder %s40, %s43
    %p52 = scmp.eq.s32.totalorder %s14, 1
    %p53 = por %p51, %p52
    %p54 = scmp.ne.s32.totalorder %s43, %s44
    %p55 = scmp.eq.s32.totalorder %s14, 0
    %p56 = por %p54, %p55
    %p57 = scmp.ne.s32.totalorder %s43, %s44
    %p58 = scmp.eq.s32.totalorder %s15, 1
    %p59 = por %p57, %p58
    %p61 = scmp.ne.s32.totalorder %s44, %s60
    %p62 = scmp.eq.s32.totalorder %s15, 0
    %p63 = por %p61, %p62
    %s64 = ssub.s32 %s18, %s27
    %s65 = ssub.s32 %s17, %s31
    %s66 = sor.u32 %s64, %s65
    %p67 = scmp.eq.s32.totalorder %s66, 0
    %s69 = sadd.s32 %s68, 1
    %s70 = scalar_select %p67, %s68, %s69
    %p73 = pneg %p67
    %p74 = scmp.eq.s32.totalorder %s9, 1
    %p75 = por %p73, %p74
    %p76 = scmp.ne.s32.totalorder %s68, %s71
    %p77 = scmp.eq.s32.totalorder %s9, 0
    %p78 = por %p76, %p77
    %p79 = scmp.ne.s32.totalorder %s68, %s71
    %p80 = scmp.eq.s32.totalorder %s14, 1
    %p81 = por %p79, %p80
    %p82 = scmp.ne.s32.totalorder %s71, %s72
    %p83 = scmp.eq.s32.totalorder %s14, 0
    %p84 = por %p82, %p83
    %p85 = scmp.ne.s32.totalorder %s71, %s72
    %p86 = scmp.eq.s32.totalorder %s15, 1
    %p87 = por %p85, %p86
    %p89 = scmp.ne.s32.totalorder %s72, %s88
    %p90 = scmp.eq.s32.totalorder %s15, 0
    %p91 = por %p89, %p90
    %s92 = ssub.s32 %s17, %s31
    %p93 = scmp.eq.s32.totalorder %s92, 0
    %s95 = sadd.s32 %s94, 1
    %s96 = scalar_select %p93, %s94, %s95
    %p99 = pneg %p93
    %p100 = scmp.eq.s32.totalorder %s9, 1
    %p101 = por %p99, %p100
    %p102 = scmp.ne.s32.totalorder %s94, %s97
    %p103 = scmp.eq.s32.totalorder %s9, 0
    %p104 = por %p102, %p103
    %p105 = scmp.ne.s32.totalorder %s94, %s97
    %p106 = scmp.eq.s32.totalorder %s14, 1
    %p107 = por %p105, %p106
    %p108 = scmp.ne.s32.totalorder %s97, %s98
    %p109 = scmp.eq.s32.totalorder %s14, 0
    %p110 = por %p108, %p109
    %p111 = scmp.ne.s32.totalorder %s97, %s98
    %p112 = scmp.eq.s32.totalorder %s15, 1
    %p113 = por %p111, %p112
    %p115 = scmp.ne.s32.totalorder %s98, %s114
    %p116 = scmp.eq.s32.totalorder %s15, 0
    %p117 = por %p115, %p116
    %s118 = ssub.s32 %s16, %s35
    %s119 = ssub.s32 %s17, %s31
    %s120 = sor.u32 %s118, %s119
    %p121 = scmp.eq.s32.totalorder %s120, 0
    %s123 = sadd.s32 %s122, 1
    %s124 = scalar_select %p121, %s122, %s123
    %p127 = pneg %p121
    %p128 = scmp.eq.s32.totalorder %s9, 1
    %p129 = por %p127, %p128
    %p130 = scmp.ne.s32.totalorder %s122, %s125
    %p131 = scmp.eq.s32.totalorder %s9, 0
    %p132 = por %p130, %p131
    %p133 = scmp.ne.s32.totalorder %s122, %s125
    %p134 = scmp.eq.s32.totalorder %s14, 1
    %p135 = por %p133, %p134
    %p136 = scmp.ne.s32.totalorder %s125, %s126
    %p137 = scmp.eq.s32.totalorder %s14, 0
    %p138 = por %p136, %p137
    %p139 = scmp.ne.s32.totalorder %s125, %s126
    %p140 = scmp.eq.s32.totalorder %s15, 1
    %p141 = por %p139, %p140
    %p143 = scmp.ne.s32.totalorder %s126, %s142
    %p144 = scmp.eq.s32.totalorder %s15, 0
    %p145 = por %p143, %p144
    %p146 = scmp.le.s32.totalorder 1, %s9
    %p147 = scmp.lt.s32.totalorder %s9, 3
    %p148 = pnand %p146, %p147
    %p149 = pneg %p148
    // Predicated region
    $region9: #{discriminator_forward.8} parent=5 // pred_check
      _
    $region10: #{discriminator_forward.8} parent=5 // pred_check_branch
      %151 = sbr.rel (%p148) target = $region12
    $region11: #{discriminator_forward.8} parent=5 // pred_region
      %s152 = ssub.s32 %s9, 1
      // Predicated region
      $region13: #{discriminator_forward.8} parent=11 // pred_check
        %p153 = pneg %p84
      $region14: #{discriminator_forward.8} parent=11 // pred_check_branch
        %155 = sbr.rel (%p153) target = $region16
      $region15: #{discriminator_forward.8} parent=11 // pred_region
        %s156 = smul.u32 6, %s21
        %p157 = scmp.lt.s32.totalorder %s156, 5
        %s158 = scalar_select %p157, %s156, 5
        %p159 = scmp.lt.s32.totalorder %s20, 0
        %s160 = scalar_select %p159, %s20, 0
        %s161 = sadd.s32 %s160, %s158
        %s162 = smul.addr %s161, 4
        %s163 = scalar_lea.vmem %s1, %s162
        %s164 = smul.u32 6, %s21
      $region16: #{discriminator_forward.8} parent=11 // pred_fallthru
        _
      // Predicated region
      $region17: #{discriminator_forward.8} parent=11 // pred_check
        %p165 = pneg %p110
      $region18: #{discriminator_forward.8} parent=11 // pred_check_branch
        %167 = sbr.rel (%p165) target = $region20
      $region19: #{discriminator_forward.8} parent=11 // pred_region
        %p168 = scmp.lt.s32.totalorder %s20, 0
        %s169 = scalar_select %p168, %s20, 0
        %s170 = scalar_lea.vmem %s2, %s169
      $region20: #{discriminator_forward.8} parent=11 // pred_fallthru
        _
    $region12: #{discriminator_forward.8} parent=5 // pred_fallthru
      _
    %p171 = scmp.lt.s32.totalorder %s9, 2
    // Predicated region
    $region21: #{discriminator_forward.8} parent=5 // pred_check
      %p172 = pneg %p171
    $region22: #{discriminator_forward.8} parent=5 // pred_check_branch
      %174 = sbr.rel (%p172) target = $region24
    $region23: #{discriminator_forward.8} parent=5 // pred_region
      // Predicated region
      $region25: #{discriminator_forward.8} parent=23 // pred_check
        %p175 = pneg %p50
      $region26: #{discriminator_forward.8} parent=23 // pred_check_branch
        %177 = sbr.rel (%p175) target = $region28
      $region27: #{discriminator_forward.8} parent=23 // pred_region
        %s178 = smul.u32 128, %s16
        %p179 = scmp.lt.s32.totalorder %s178, 255
        %s180 = scalar_select %p179, %s178, 255
        %p181 = scmp.lt.s32.totalorder %s18, 0
        %s182 = scalar_select %p181, %s18, 0
        %s183 = sadd.s32 %s182, %s180
        %s184 = smul.addr %s183, 4
        %s185 = scalar_lea.vmem %s0, %s184
        %s186 = smul.u32 128, %s16
      $region28: #{discriminator_forward.8} parent=23 // pred_fallthru
        _
    $region24: #{discriminator_forward.8} parent=5 // pred_fallthru
      _
    %p187 = scmp.le.s32.totalorder 1, %s9
    %p188 = scmp.lt.s32.totalorder %s9, 3
    %p189 = pnand %p187, %p188
    %p190 = pneg %p189
    // Predicated region
    $region29: #{discriminator_forward.8} parent=5 // pred_check
      _
    $region30: #{discriminator_forward.8} parent=5 // pred_check_branch
      %192 = sbr.rel (%p189) target = $region32
    $region31: #{discriminator_forward.8} parent=5 // pred_region
      %s193 = ssub.s32 %s9, 1
      %s194 = smul.u32 128, %s19
      %p195 = scmp.lt.s32.totalorder %s194, 255
      %s196 = scalar_select %p195, %s194, 255
      %p197 = scmp.lt.s32.totalorder %s21, 0
      %s198 = scalar_select %p197, %s21, 0
      %s199 = sadd.s32 %s198, %s196
      %s200 = smul.addr %s199, 4
      %s201 = scalar_lea.vmem %s0, %s200
      %p202 = pneg %p56
      %p203 = pneg %p53
      %s204 = smul.u32 6, %s21
      %p205 = scmp.lt.s32.totalorder %s204, 5
      %s206 = scalar_select %p205, %s204, 5
      %p207 = scmp.lt.s32.totalorder %s20, 0
      %s208 = scalar_select %p207, %s20, 0
      %s209 = sadd.s32 %s208, %s206
      %s210 = smul.addr %s209, 4
      %s211 = scalar_lea.vmem %s1, %s210
      %p212 = pneg %p84
      %p213 = pneg %p81
      %p214 = scmp.lt.s32.totalorder %s20, 0
      %s215 = scalar_select %p214, %s20, 0
      %s216 = scalar_lea.vmem %s2, %s215
      %p217 = pneg %p110
      %p218 = pneg %p107
      %p219 = pneg %p138
      %p220 = pneg %p135
      %s221 = smul.u32 128, %s19
      %p222 = scmp.lt.s32.totalorder %s221, 255
      %s223 = scalar_select %p222, %s221, 255
      %p224 = scmp.lt.s32.totalorder %s20, 0
      %s225 = scalar_select %p224, %s20, 0
      %s226 = sadd.s32 %s225, %s223
      %s227 = smul.addr %s226, 4
      %s228 = scalar_lea.vmem %s3, %s227
      %s229 = smul.u32 128, %s19
      %p230 = scmp.lt.s32.totalorder %s229, 255
      %s231 = scalar_select %p230, %s229, 255
      %p232 = scmp.lt.s32.totalorder %s21, 0
      %s233 = scalar_select %p232, %s21, 0
      %s234 = sadd.s32 %s233, %s231
      %s235 = smul.addr %s234, 4
      %s236 = scalar_lea.vmem %s0, %s235
      %s237 = smul.u32 128, %s19
      %s238 = smul.u32 6, %s21
      %p239 = scmp.lt.s32.totalorder %s238, 5
      %s240 = scalar_select %p239, %s238, 5
      %p241 = scmp.lt.s32.totalorder %s20, 0
      %s242 = scalar_select %p241, %s20, 0
      %s243 = sadd.s32 %s242, %s240
      %s244 = smul.addr %s243, 4
      %s245 = scalar_lea.vmem %s1, %s244
      %s246 = smul.u32 6, %s21
      %p247 = scmp.lt.s32.totalorder %s20, 0
      %s248 = scalar_select %p247, %s20, 0
      %s249 = scalar_lea.vmem %s2, %s248
      %s250 = smul.u32 128, %s19
      %p251 = scmp.lt.s32.totalorder %s250, 255
      %s252 = scalar_select %p251, %s250, 255
      %p253 = scmp.lt.s32.totalorder %s20, 0
      %s254 = scalar_select %p253, %s20, 0
      %s255 = sadd.s32 %s254, %s252
      %s256 = smul.addr %s255, 4
      %s257 = scalar_lea.vmem %s3, %s256
      %s258 = smul.u32 128, %s19
      %v260 = vld [vmem:[%s236] sm:$0xf]
      %v261 = vld [vmem:[%s236 + $0x4] sm:$0xf]
      %v262 = vld [vmem:[%s236 + $0x8] sm:$0xf]
      %v263 = vld [vmem:[%s236 + $0xc] sm:$0xf]
      %v264 = vld [vmem:[%s236 + $0x10] sm:$0xf]
      %v265 = vld [vmem:[%s236 + $0x14] sm:$0xf]
      %v266 = vld [vmem:[%s236 + $0x18] sm:$0xf]
      %v267 = vld [vmem:[%s236 + $0x1c] sm:$0xf]
      %v268 = vld [vmem:[%s236 + $0x20] sm:$0xf]
      %v269 = vld [vmem:[%s236 + $0x24] sm:$0xf]
      %v270 = vld [vmem:[%s236 + $0x28] sm:$0xf]
      %v271 = vld [vmem:[%s236 + $0x2c] sm:$0xf]
      %v272 = vld [vmem:[%s236 + $0x30] sm:$0xf]
      %v273 = vld [vmem:[%s236 + $0x34] sm:$0xf]
      %v274 = vld [vmem:[%s236 + $0x38] sm:$0xf]
      %v275 = vld [vmem:[%s236 + $0x3c] sm:$0xf]
      %v276 = vld [vmem:[%s236 + $0x40] sm:$0xf]
      %v277 = vld [vmem:[%s236 + $0x44] sm:$0xf]
      %v278 = vld [vmem:[%s236 + $0x48] sm:$0xf]
      %v279 = vld [vmem:[%s236 + $0x4c] sm:$0xf]
      %v280 = vld [vmem:[%s236 + $0x50] sm:$0xf]
      %v281 = vld [vmem:[%s236 + $0x54] sm:$0xf]
      %v282 = vld [vmem:[%s236 + $0x58] sm:$0xf]
      %v283 = vld [vmem:[%s236 + $0x5c] sm:$0xf]
      %v284 = vld [vmem:[%s236 + $0x60] sm:$0xf]
      %v285 = vld [vmem:[%s236 + $0x64] sm:$0xf]
      %v286 = vld [vmem:[%s236 + $0x68] sm:$0xf]
      %v287 = vld [vmem:[%s236 + $0x6c] sm:$0xf]
      %v288 = vld [vmem:[%s236 + $0x70] sm:$0xf]
      %v289 = vld [vmem:[%s236 + $0x74] sm:$0xf]
      %v290 = vld [vmem:[%s236 + $0x78] sm:$0xf]
      %v291 = vld [vmem:[%s236 + $0x7c] sm:$0xf]
      %v292 = vld [vmem:[%s236 + $0x80] sm:$0xf]
      %v293 = vld [vmem:[%s236 + $0x84] sm:$0xf]
      %v294 = vld [vmem:[%s236 + $0x88] sm:$0xf]
      %v295 = vld [vmem:[%s236 + $0x8c] sm:$0xf]
      %v296 = vld [vmem:[%s236 + $0x90] sm:$0xf]
      %v297 = vld [vmem:[%s236 + $0x94] sm:$0xf]
      %v298 = vld [vmem:[%s236 + $0x98] sm:$0xf]
      %v299 = vld [vmem:[%s236 + $0x9c] sm:$0xf]
      %v300 = vld [vmem:[%s236 + $0xa0] sm:$0xf]
      %v301 = vld [vmem:[%s236 + $0xa4] sm:$0xf]
      %v302 = vld [vmem:[%s236 + $0xa8] sm:$0xf]
      %v303 = vld [vmem:[%s236 + $0xac] sm:$0xf]
      %v304 = vld [vmem:[%s236 + $0xb0] sm:$0xf]
      %v305 = vld [vmem:[%s236 + $0xb4] sm:$0xf]
      %v306 = vld [vmem:[%s236 + $0xb8] sm:$0xf]
      %v307 = vld [vmem:[%s236 + $0xbc] sm:$0xf]
      %v308 = vld [vmem:[%s236 + $0xc0] sm:$0xf]
      %v309 = vld [vmem:[%s236 + $0xc4] sm:$0xf]
      %v310 = vld [vmem:[%s236 + $0xc8] sm:$0xf]
      %v311 = vld [vmem:[%s236 + $0xcc] sm:$0xf]
      %v312 = vld [vmem:[%s236 + $0xd0] sm:$0xf]
      %v313 = vld [vmem:[%s236 + $0xd4] sm:$0xf]
      %v314 = vld [vmem:[%s236 + $0xd8] sm:$0xf]
      %v315 = vld [vmem:[%s236 + $0xdc] sm:$0xf]
      %v316 = vld [vmem:[%s236 + $0xe0] sm:$0xf]
      %v317 = vld [vmem:[%s236 + $0xe4] sm:$0xf]
      %v318 = vld [vmem:[%s236 + $0xe8] sm:$0xf]
      %v319 = vld [vmem:[%s236 + $0xec] sm:$0xf]
      %v320 = vld [vmem:[%s236 + $0xf0] sm:$0xf]
      %v321 = vld [vmem:[%s236 + $0xf4] sm:$0xf]
      %v322 = vld [vmem:[%s236 + $0xf8] sm:$0xf]
      %v323 = vld [vmem:[%s236 + $0xfc] sm:$0xf]
      %v324 = vld [vmem:[%s236 + $0x100] sm:$0xf]
      %v325 = vld [vmem:[%s236 + $0x104] sm:$0xf]
      %v326 = vld [vmem:[%s236 + $0x108] sm:$0xf]
      %v327 = vld [vmem:[%s236 + $0x10c] sm:$0xf]
      %v328 = vld [vmem:[%s236 + $0x110] sm:$0xf]
      %v329 = vld [vmem:[%s236 + $0x114] sm:$0xf]
      %v330 = vld [vmem:[%s236 + $0x118] sm:$0xf]
      %v331 = vld [vmem:[%s236 + $0x11c] sm:$0xf]
      %v332 = vld [vmem:[%s236 + $0x120] sm:$0xf]
      %v333 = vld [vmem:[%s236 + $0x124] sm:$0xf]
      %v334 = vld [vmem:[%s236 + $0x128] sm:$0xf]
      %v335 = vld [vmem:[%s236 + $0x12c] sm:$0xf]
      %v336 = vld [vmem:[%s236 + $0x130] sm:$0xf]
      %v337 = vld [vmem:[%s236 + $0x134] sm:$0xf]
      %v338 = vld [vmem:[%s236 + $0x138] sm:$0xf]
      %v339 = vld [vmem:[%s236 + $0x13c] sm:$0xf]
      %v340 = vld [vmem:[%s236 + $0x140] sm:$0xf]
      %v341 = vld [vmem:[%s236 + $0x144] sm:$0xf]
      %v342 = vld [vmem:[%s236 + $0x148] sm:$0xf]
      %v343 = vld [vmem:[%s236 + $0x14c] sm:$0xf]
      %v344 = vld [vmem:[%s236 + $0x150] sm:$0xf]
      %v345 = vld [vmem:[%s236 + $0x154] sm:$0xf]
      %v346 = vld [vmem:[%s236 + $0x158] sm:$0xf]
      %v347 = vld [vmem:[%s236 + $0x15c] sm:$0xf]
      %v348 = vld [vmem:[%s236 + $0x160] sm:$0xf]
      %v349 = vld [vmem:[%s236 + $0x164] sm:$0xf]
      %v350 = vld [vmem:[%s236 + $0x168] sm:$0xf]
      %v351 = vld [vmem:[%s236 + $0x16c] sm:$0xf]
      %v352 = vld [vmem:[%s236 + $0x170] sm:$0xf]
      %v353 = vld [vmem:[%s236 + $0x174] sm:$0xf]
      %v354 = vld [vmem:[%s236 + $0x178] sm:$0xf]
      %v355 = vld [vmem:[%s236 + $0x17c] sm:$0xf]
      %v356 = vld [vmem:[%s236 + $0x180] sm:$0xf]
      %v357 = vld [vmem:[%s236 + $0x184] sm:$0xf]
      %v358 = vld [vmem:[%s236 + $0x188] sm:$0xf]
      %v359 = vld [vmem:[%s236 + $0x18c] sm:$0xf]
      %v360 = vld [vmem:[%s236 + $0x190] sm:$0xf]
      %v361 = vld [vmem:[%s236 + $0x194] sm:$0xf]
      %v362 = vld [vmem:[%s236 + $0x198] sm:$0xf]
      %v363 = vld [vmem:[%s236 + $0x19c] sm:$0xf]
      %v364 = vld [vmem:[%s236 + $0x1a0] sm:$0xf]
      %v365 = vld [vmem:[%s236 + $0x1a4] sm:$0xf]
      %v366 = vld [vmem:[%s236 + $0x1a8] sm:$0xf]
      %v367 = vld [vmem:[%s236 + $0x1ac] sm:$0xf]
      %v368 = vld [vmem:[%s236 + $0x1b0] sm:$0xf]
      %v369 = vld [vmem:[%s236 + $0x1b4] sm:$0xf]
      %v370 = vld [vmem:[%s236 + $0x1b8] sm:$0xf]
      %v371 = vld [vmem:[%s236 + $0x1bc] sm:$0xf]
      %v372 = vld [vmem:[%s236 + $0x1c0] sm:$0xf]
      %v373 = vld [vmem:[%s236 + $0x1c4] sm:$0xf]
      %v374 = vld [vmem:[%s236 + $0x1c8] sm:$0xf]
      %v375 = vld [vmem:[%s236 + $0x1cc] sm:$0xf]
      %v376 = vld [vmem:[%s236 + $0x1d0] sm:$0xf]
      %v377 = vld [vmem:[%s236 + $0x1d4] sm:$0xf]
      %v378 = vld [vmem:[%s236 + $0x1d8] sm:$0xf]
      %v379 = vld [vmem:[%s236 + $0x1dc] sm:$0xf]
      %v380 = vld [vmem:[%s236 + $0x1e0] sm:$0xf]
      %v381 = vld [vmem:[%s236 + $0x1e4] sm:$0xf]
      %v382 = vld [vmem:[%s236 + $0x1e8] sm:$0xf]
      %v383 = vld [vmem:[%s236 + $0x1ec] sm:$0xf]
      %v384 = vld [vmem:[%s236 + $0x1f0] sm:$0xf]
      %v385 = vld [vmem:[%s236 + $0x1f4] sm:$0xf]
      %v386 = vld [vmem:[%s236 + $0x1f8] sm:$0xf]
      %v387 = vld [vmem:[%s236 + $0x1fc] sm:$0xf]
      %v388 = vld [vmem:[%s245] sm:$0xf]
      %v389 = vld [vmem:[%s245 + $0x4] sm:$0xf]
      %v390 = vld [vmem:[%s245 + $0x8] sm:$0xf]
      %v391 = vld [vmem:[%s245 + $0xc] sm:$0xf]
      %v392 = vld [vmem:[%s245 + $0x10] sm:$0xf]
      %v393 = vld [vmem:[%s245 + $0x14] sm:$0xf]
      %v394 = vld [vmem:[%s249] sm:$0x1]
      %v396 = vlaneseq
      %v397 = vshrl.u32 %v396, 7
      %v398 = vsub.s32 0, %v397
      %v399 = vrot.slane %v394, %v398
      %v529 = vunpack.c.l.b16 %v260
      %v530 = vunpack.c.l.b16 %v261
      %v531 = vunpack.c.l.b16 %v262
      %v532 = vunpack.c.l.b16 %v263
      %v533 = vunpack.c.l.b16 %v264
      %v534 = vunpack.c.l.b16 %v265
      %v535 = vunpack.c.l.b16 %v266
      %v536 = vunpack.c.l.b16 %v267
      %v537 = vunpack.c.l.b16 %v268
      %v538 = vunpack.c.l.b16 %v269
      %v539 = vunpack.c.l.b16 %v270
      %v540 = vunpack.c.l.b16 %v271
      %v541 = vunpack.c.l.b16 %v272
      %v542 = vunpack.c.l.b16 %v273
      %v543 = vunpack.c.l.b16 %v274
      %v544 = vunpack.c.l.b16 %v275
      %v545 = vunpack.c.l.b16 %v276
      %v546 = vunpack.c.l.b16 %v277
      %v547 = vunpack.c.l.b16 %v278
      %v548 = vunpack.c.l.b16 %v279
      %v549 = vunpack.c.l.b16 %v280
      %v550 = vunpack.c.l.b16 %v281
      %v551 = vunpack.c.l.b16 %v282
      %v552 = vunpack.c.l.b16 %v283
      %v553 = vunpack.c.l.b16 %v284
      %v554 = vunpack.c.l.b16 %v285
      %v555 = vunpack.c.l.b16 %v286
      %v556 = vunpack.c.l.b16 %v287
      %v557 = vunpack.c.l.b16 %v288
      %v558 = vunpack.c.l.b16 %v289
      %v559 = vunpack.c.l.b16 %v290
      %v560 = vunpack.c.l.b16 %v291
      %v561 = vunpack.c.l.b16 %v292
      %v562 = vunpack.c.l.b16 %v293
      %v563 = vunpack.c.l.b16 %v294
      %v564 = vunpack.c.l.b16 %v295
      %v565 = vunpack.c.l.b16 %v296
      %v566 = vunpack.c.l.b16 %v297
      %v567 = vunpack.c.l.b16 %v298
      %v568 = vunpack.c.l.b16 %v299
      %v569 = vunpack.c.l.b16 %v300
      %v570 = vunpack.c.l.b16 %v301
      %v571 = vunpack.c.l.b16 %v302
      %v572 = vunpack.c.l.b16 %v303
      %v573 = vunpack.c.l.b16 %v304
      %v574 = vunpack.c.l.b16 %v305
      %v575 = vunpack.c.l.b16 %v306
      %v576 = vunpack.c.l.b16 %v307
      %v577 = vunpack.c.l.b16 %v308
      %v578 = vunpack.c.l.b16 %v309
      %v579 = vunpack.c.l.b16 %v310
      %v580 = vunpack.c.l.b16 %v311
      %v581 = vunpack.c.l.b16 %v312
      %v582 = vunpack.c.l.b16 %v313
      %v583 = vunpack.c.l.b16 %v314
      %v584 = vunpack.c.l.b16 %v315
      %v585 = vunpack.c.l.b16 %v316
      %v586 = vunpack.c.l.b16 %v317
      %v587 = vunpack.c.l.b16 %v318
      %v588 = vunpack.c.l.b16 %v319
      %v589 = vunpack.c.l.b16 %v320
      %v590 = vunpack.c.l.b16 %v321
      %v591 = vunpack.c.l.b16 %v322
      %v592 = vunpack.c.l.b16 %v323
      %v593 = vunpack.c.l.b16 %v324
      %v594 = vunpack.c.l.b16 %v325
      %v595 = vunpack.c.l.b16 %v326
      %v596 = vunpack.c.l.b16 %v327
      %v597 = vunpack.c.l.b16 %v328
      %v598 = vunpack.c.l.b16 %v329
      %v599 = vunpack.c.l.b16 %v330
      %v600 = vunpack.c.l.b16 %v331
      %v601 = vunpack.c.l.b16 %v332
      %v602 = vunpack.c.l.b16 %v333
      %v603 = vunpack.c.l.b16 %v334
      %v604 = vunpack.c.l.b16 %v335
      %v605 = vunpack.c.l.b16 %v336
      %v606 = vunpack.c.l.b16 %v337
      %v607 = vunpack.c.l.b16 %v338
      %v608 = vunpack.c.l.b16 %v339
      %v609 = vunpack.c.l.b16 %v340
      %v610 = vunpack.c.l.b16 %v341
      %v611 = vunpack.c.l.b16 %v342
      %v612 = vunpack.c.l.b16 %v343
      %v613 = vunpack.c.l.b16 %v344
      %v614 = vunpack.c.l.b16 %v345
      %v615 = vunpack.c.l.b16 %v346
      %v616 = vunpack.c.l.b16 %v347
      %v617 = vunpack.c.l.b16 %v348
      %v618 = vunpack.c.l.b16 %v349
      %v619 = vunpack.c.l.b16 %v350
      %v620 = vunpack.c.l.b16 %v351
      %v621 = vunpack.c.l.b16 %v352
      %v622 = vunpack.c.l.b16 %v353
      %v623 = vunpack.c.l.b16 %v354
      %v624 = vunpack.c.l.b16 %v355
      %v625 = vunpack.c.l.b16 %v356
      %v626 = vunpack.c.l.b16 %v357
      %v627 = vunpack.c.l.b16 %v358
      %v628 = vunpack.c.l.b16 %v359
      %v629 = vunpack.c.l.b16 %v360
      %v630 = vunpack.c.l.b16 %v361
      %v631 = vunpack.c.l.b16 %v362
      %v632 = vunpack.c.l.b16 %v363
      %v633 = vunpack.c.l.b16 %v364
      %v634 = vunpack.c.l.b16 %v365
      %v635 = vunpack.c.l.b16 %v366
      %v636 = vunpack.c.l.b16 %v367
      %v637 = vunpack.c.l.b16 %v368
      %v638 = vunpack.c.l.b16 %v369
      %v639 = vunpack.c.l.b16 %v370
      %v640 = vunpack.c.l.b16 %v371
      %v641 = vunpack.c.l.b16 %v372
      %v642 = vunpack.c.l.b16 %v373
      %v643 = vunpack.c.l.b16 %v374
      %v644 = vunpack.c.l.b16 %v375
      %v645 = vunpack.c.l.b16 %v376
      %v646 = vunpack.c.l.b16 %v377
      %v647 = vunpack.c.l.b16 %v378
      %v648 = vunpack.c.l.b16 %v379
      %v649 = vunpack.c.l.b16 %v380
      %v650 = vunpack.c.l.b16 %v381
      %v651 = vunpack.c.l.b16 %v382
      %v652 = vunpack.c.l.b16 %v383
      %v653 = vunpack.c.l.b16 %v384
      %v654 = vunpack.c.l.b16 %v385
      %v655 = vunpack.c.l.b16 %v386
      %v656 = vunpack.c.l.b16 %v387
      %v657 = vpack.c.b16 %v530, %v529
      %v658 = vpack.c.b16 %v532, %v531
      %v659 = vpack.c.b16 %v534, %v533
      %v660 = vpack.c.b16 %v536, %v535
      %v661 = vpack.c.b16 %v538, %v537
      %v662 = vpack.c.b16 %v540, %v539
      %v663 = vpack.c.b16 %v542, %v541
      %v664 = vpack.c.b16 %v544, %v543
      %v665 = vpack.c.b16 %v546, %v545
      %v666 = vpack.c.b16 %v548, %v547
      %v667 = vpack.c.b16 %v550, %v549
      %v668 = vpack.c.b16 %v552, %v551
      %v669 = vpack.c.b16 %v554, %v553
      %v670 = vpack.c.b16 %v556, %v555
      %v671 = vpack.c.b16 %v558, %v557
      %v672 = vpack.c.b16 %v560, %v559
      %v673 = vpack.c.b16 %v562, %v561
      %v674 = vpack.c.b16 %v564, %v563
      %v675 = vpack.c.b16 %v566, %v565
      %v676 = vpack.c.b16 %v568, %v567
      %v677 = vpack.c.b16 %v570, %v569
      %v678 = vpack.c.b16 %v572, %v571
      %v679 = vpack.c.b16 %v574, %v573
      %v680 = vpack.c.b16 %v576, %v575
      %v681 = vpack.c.b16 %v578, %v577
      %v682 = vpack.c.b16 %v580, %v579
      %v683 = vpack.c.b16 %v582, %v581
      %v684 = vpack.c.b16 %v584, %v583
      %v685 = vpack.c.b16 %v586, %v585
      %v686 = vpack.c.b16 %v588, %v587
      %v687 = vpack.c.b16 %v590, %v589
      %v688 = vpack.c.b16 %v592, %v591
      %v689 = vpack.c.b16 %v594, %v593
      %v690 = vpack.c.b16 %v596, %v595
      %v691 = vpack.c.b16 %v598, %v597
      %v692 = vpack.c.b16 %v600, %v599
      %v693 = vpack.c.b16 %v602, %v601
      %v694 = vpack.c.b16 %v604, %v603
      %v695 = vpack.c.b16 %v606, %v605
      %v696 = vpack.c.b16 %v608, %v607
      %v697 = vpack.c.b16 %v610, %v609
      %v698 = vpack.c.b16 %v612, %v611
      %v699 = vpack.c.b16 %v614, %v613
      %v700 = vpack.c.b16 %v616, %v615
      %v701 = vpack.c.b16 %v618, %v617
      %v702 = vpack.c.b16 %v620, %v619
      %v703 = vpack.c.b16 %v622, %v621
      %v704 = vpack.c.b16 %v624, %v623
      %v705 = vpack.c.b16 %v626, %v625
      %v706 = vpack.c.b16 %v628, %v627
      %v707 = vpack.c.b16 %v630, %v629
      %v708 = vpack.c.b16 %v632, %v631
      %v709 = vpack.c.b16 %v634, %v633
      %v710 = vpack.c.b16 %v636, %v635
      %v711 = vpack.c.b16 %v638, %v637
      %v712 = vpack.c.b16 %v640, %v639
      %v713 = vpack.c.b16 %v642, %v641
      %v714 = vpack.c.b16 %v644, %v643
      %v715 = vpack.c.b16 %v646, %v645
      %v716 = vpack.c.b16 %v648, %v647
      %v717 = vpack.c.b16 %v650, %v649
      %v718 = vpack.c.b16 %v652, %v651
      %v719 = vpack.c.b16 %v654, %v653
      %v720 = vpack.c.b16 %v656, %v655
      %v727 = vunpack.c.l.b16 %v388
      %v728 = vunpack.c.l.b16 %v389
      %v729 = vunpack.c.l.b16 %v390
      %v730 = vunpack.c.l.b16 %v391
      %v731 = vunpack.c.l.b16 %v392
      %v732 = vunpack.c.l.b16 %v393
      %v733 = vpack.c.b16 %v728, %v727
      %v734 = vpack.c.b16 %v730, %v729
      %v735 = vpack.c.b16 %v732, %v731
      %vm739 = vcmask 392192
      %v741 = vsel %vm739, %v657, 0
      %v744 = vsel %vm739, %v658, 0
      %v747 = vsel %vm739, %v659, 0
      %v750 = vsel %vm739, %v660, 0
      %v753 = vsel %vm739, %v661, 0
      %v756 = vsel %vm739, %v662, 0
      %v759 = vsel %vm739, %v663, 0
      %v762 = vsel %vm739, %v664, 0
      %v765 = vsel %vm739, %v665, 0
      %v768 = vsel %vm739, %v666, 0
      %v771 = vsel %vm739, %v667, 0
      %v774 = vsel %vm739, %v668, 0
      %v777 = vsel %vm739, %v669, 0
      %v780 = vsel %vm739, %v670, 0
      %v783 = vsel %vm739, %v671, 0
      %v786 = vsel %vm739, %v672, 0
      %v789 = vsel %vm739, %v673, 0
      %v792 = vsel %vm739, %v674, 0
      %v795 = vsel %vm739, %v675, 0
      %v798 = vsel %vm739, %v676, 0
      %v801 = vsel %vm739, %v677, 0
      %v804 = vsel %vm739, %v678, 0
      %v807 = vsel %vm739, %v679, 0
      %v810 = vsel %vm739, %v680, 0
      %v813 = vsel %vm739, %v681, 0
      %v816 = vsel %vm739, %v682, 0
      %v819 = vsel %vm739, %v683, 0
      %v822 = vsel %vm739, %v684, 0
      %v825 = vsel %vm739, %v685, 0
      %v828 = vsel %vm739, %v686, 0
      %v831 = vsel %vm739, %v687, 0
      %v834 = vsel %vm739, %v688, 0
      %v837 = vsel %vm739, %v689, 0
      %v840 = vsel %vm739, %v690, 0
      %v843 = vsel %vm739, %v691, 0
      %v846 = vsel %vm739, %v692, 0
      %v849 = vsel %vm739, %v693, 0
      %v852 = vsel %vm739, %v694, 0
      %v855 = vsel %vm739, %v695, 0
      %v858 = vsel %vm739, %v696, 0
      %v861 = vsel %vm739, %v697, 0
      %v864 = vsel %vm739, %v698, 0
      %v867 = vsel %vm739, %v699, 0
      %v870 = vsel %vm739, %v700, 0
      %v873 = vsel %vm739, %v701, 0
      %v876 = vsel %vm739, %v702, 0
      %v879 = vsel %vm739, %v703, 0
      %v882 = vsel %vm739, %v704, 0
      %v885 = vsel %vm739, %v705, 0
      %v888 = vsel %vm739, %v706, 0
      %v891 = vsel %vm739, %v707, 0
      %v894 = vsel %vm739, %v708, 0
      %v897 = vsel %vm739, %v709, 0
      %v900 = vsel %vm739, %v710, 0
      %v903 = vsel %vm739, %v711, 0
      %v906 = vsel %vm739, %v712, 0
      %v909 = vsel %vm739, %v713, 0
      %v912 = vsel %vm739, %v714, 0
      %v915 = vsel %vm739, %v715, 0
      %v918 = vsel %vm739, %v716, 0
      %v921 = vsel %vm739, %v717, 0
      %v924 = vsel %vm739, %v718, 0
      %v927 = vsel %vm739, %v719, 0
      %v930 = vsel %vm739, %v720, 0
      %932 = vmatprep.subr.bf16.mxu0 0
      %933 = vmatpush1.bf16.msra.mxu0 %v733
      %934 = vmatprep.subr.bf16.mxu0 0
      %935 = vmatpush1.bf16.msra.mxu0 %v734
      %936 = vmatprep.subr.bf16.mxu0 0
      %937 = vmatpush1.bf16.msra.mxu0 %v735
      %938 = vmatprep.subr.bf16.mxu0 0
      %939 = vmatpush1.bf16.msra.mxu0 0
      %940 = vmatprep.subr.bf16.mxu0 0
      %941 = vmatpush1.bf16.msra.mxu0 0
      %942 = vmatprep.subr.bf16.mxu0 0
      %943 = vmatpush1.bf16.msra.mxu0 0
      %944 = vmatprep.subr.bf16.mxu0 0
      %945 = vmatpush1.bf16.msra.mxu0 0
      %946 = vmatprep.subr.bf16.mxu0 0
      %947 = vmatpush1.bf16.msra.mxu0 0
      %948 = vmatprep.subr.bf16.mxu0 0
      %949 = vmatpush1.bf16.msra.mxu0 0
      %950 = vmatprep.subr.bf16.mxu0 0
      %951 = vmatpush1.bf16.msra.mxu0 0
      %952 = vmatprep.subr.bf16.mxu0 0
      %953 = vmatpush1.bf16.msra.mxu0 0
      %954 = vmatprep.subr.bf16.mxu0 0
      %955 = vmatpush1.bf16.msra.mxu0 0
      %956 = vmatprep.subr.bf16.mxu0 0
      %957 = vmatpush1.bf16.msra.mxu0 0
      %958 = vmatprep.subr.bf16.mxu0 0
      %959 = vmatpush1.bf16.msra.mxu0 0
      %960 = vmatprep.subr.bf16.mxu0 0
      %961 = vmatpush1.bf16.msra.mxu0 0
      %962 = vmatprep.subr.bf16.mxu0 0
      %963 = vmatpush1.bf16.msra.mxu0 0
      %964 = vmatprep.mubr.bf16.mxu0 0
      %965 = vmatmul.mubr.bf16.gmra.mrb[0].mxu0 %v741
      %v966 = vpop.f32.mrb[0].mxu0
      %v967 = vadd.f32 %v399, %v966
      %v968 = vpop.f32.mrb[0].mxu0
      %v969 = vpop.f32.mrb[0].mxu0
      %v970 = vadd.f32 %v399, %v969
      %v971 = vpop.f32.mrb[0].mxu0
      %972 = vmatprep.mubr.bf16.mxu0 0
      %973 = vmatmul.mubr.bf16.gmra.mrb[0].mxu0 %v744
      %v974 = vpop.f32.mrb[0].mxu0
      %v975 = vadd.f32 %v399, %v974
      %v976 = vpop.f32.mrb[0].mxu0
      %v977 = vpop.f32.mrb[0].mxu0
      %v978 = vadd.f32 %v399, %v977
      %v979 = vpop.f32.mrb[0].mxu0
      %980 = vmatprep.mubr.bf16.mxu0 0
      %981 = vmatmul.mubr.bf16.gmra.mrb[0].mxu0 %v747
      %v982 = vpop.f32.mrb[0].mxu0
      %v983 = vadd.f32 %v399, %v982
      %v984 = vpop.f32.mrb[0].mxu0
      %v985 = vpop.f32.mrb[0].mxu0
      %v986 = vadd.f32 %v399, %v985
      %v987 = vpop.f32.mrb[0].mxu0
      %988 = vmatprep.mubr.bf16.mxu0 0
      %989 = vmatmul.mubr.bf16.gmra.mrb[0].mxu0 %v750
      %v990 = vpop.f32.mrb[0].mxu0
      %v991 = vadd.f32 %v399, %v990
      %v992 = vpop.f32.mrb[0].mxu0
      %v993 = vpop.f32.mrb[0].mxu0
      %v994 = vadd.f32 %v399, %v993
      %v995 = vpop.f32.mrb[0].mxu0
      %996 = vmatprep.mubr.bf16.mxu0 0
      %997 = vmatmul.mubr.bf16.gmra.mrb[0].mxu0 %v753
      %v998 = vpop.f32.mrb[0].mxu0
      %v999 = vadd.f32 %v399, %v998
      %v1000 = vpop.f32.mrb[0].mxu0
      %v1001 = vpop.f32.mrb[0].mxu0
      %v1002 = vadd.f32 %v399, %v1001
      %v1003 = vpop.f32.mrb[0].mxu0
      %1004 = vmatprep.mubr.bf16.mxu0 0
      %1005 = vmatmul.mubr.bf16.gmra.mrb[0].mxu0 %v756
      %v1006 = vpop.f32.mrb[0].mxu0
      %v1007 = vadd.f32 %v399, %v1006
      %v1008 = vpop.f32.mrb[0].mxu0
      %v1009 = vpop.f32.mrb[0].mxu0
      %v1010 = vadd.f32 %v399, %v1009
      %v1011 = vpop.f32.mrb[0].mxu0
      %1012 = vmatprep.mubr.bf16.mxu0 0
      %1013 = vmatmul.mubr.bf16.gmra.mrb[0].mxu0 %v759
      %v1014 = vpop.f32.mrb[0].mxu0
      %v1015 = vadd.f32 %v399, %v1014
      %v1016 = vpop.f32.mrb[0].mxu0
      %v1017 = vpop.f32.mrb[0].mxu0
      %v1018 = vadd.f32 %v399, %v1017
      %v1019 = vpop.f32.mrb[0].mxu0
      %1020 = vmatprep.mubr.bf16.mxu0 0
      %1021 = vmatmul.mubr.bf16.gmra.mrb[0].mxu0 %v762
      %v1022 = vpop.f32.mrb[0].mxu0
      %v1023 = vadd.f32 %v399, %v1022
      %v1024 = vpop.f32.mrb[0].mxu0
      %v1025 = vpop.f32.mrb[0].mxu0
      %v1026 = vadd.f32 %v399, %v1025
      %v1027 = vpop.f32.mrb[0].mxu0
      %1028 = vmatprep.mubr.bf16.mxu0 0
      %1029 = vmatmul.mubr.bf16.gmra.mrb[0].mxu0 %v765
      %v1030 = vpop.f32.mrb[0].mxu0
      %v1031 = vadd.f32 %v399, %v1030
      %v1032 = vpop.f32.mrb[0].mxu0
      %v1033 = vpop.f32.mrb[0].mxu0
      %v1034 = vadd.f32 %v399, %v1033
      %v1035 = vpop.f32.mrb[0].mxu0
      %1036 = vmatprep.mubr.bf16.mxu0 0
      %1037 = vmatmul.mubr.bf16.gmra.mrb[0].mxu0 %v768
      %v1038 = vpop.f32.mrb[0].mxu0
      %v1039 = vadd.f32 %v399, %v1038
      %v1040 = vpop.f32.mrb[0].mxu0
      %v1041 = vpop.f32.mrb[0].mxu0
      %v1042 = vadd.f32 %v399, %v1041
      %v1043 = vpop.f32.mrb[0].mxu0
      %1044 = vmatprep.mubr.bf16.mxu0 0
      %1045 = vmatmul.mubr.bf16.gmra.mrb[0].mxu0 %v771
      %v1046 = vpop.f32.mrb[0].mxu0
      %v1047 = vadd.f32 %v399, %v1046
      %v1048 = vpop.f32.mrb[0].mxu0
      %v1049 = vpop.f32.mrb[0].mxu0
      %v1050 = vadd.f32 %v399, %v1049
      %v1051 = vpop.f32.mrb[0].mxu0
      %1052 = vmatprep.mubr.bf16.mxu0 0
      %1053 = vmatmul.mubr.bf16.gmra.mrb[0].mxu0 %v774
      %v1054 = vpop.f32.mrb[0].mxu0
      %v1055 = vadd.f32 %v399, %v1054
      %v1056 = vpop.f32.mrb[0].mxu0
      %v1057 = vpop.f32.mrb[0].mxu0
      %v1058 = vadd.f32 %v399, %v1057
      %v1059 = vpop.f32.mrb[0].mxu0
      %1060 = vmatprep.mubr.bf16.mxu0 0
      %1061 = vmatmul.mubr.bf16.gmra.mrb[0].mxu0 %v777
      %v1062 = vpop.f32.mrb[0].mxu0
      %v1063 = vadd.f32 %v399, %v1062
      %v1064 = vpop.f32.mrb[0].mxu0
      %v1065 = vpop.f32.mrb[0].mxu0
      %v1066 = vadd.f32 %v399, %v1065
      %v1067 = vpop.f32.mrb[0].mxu0
      %1068 = vmatprep.mubr.bf16.mxu0 0
      %1069 = vmatmul.mubr.bf16.gmra.mrb[0].mxu0 %v780
      %v1070 = vpop.f32.mrb[0].mxu0
      %v1071 = vadd.f32 %v399, %v1070
      %v1072 = vpop.f32.mrb[0].mxu0
      %v1073 = vpop.f32.mrb[0].mxu0
      %v1074 = vadd.f32 %v399, %v1073
      %v1075 = vpop.f32.mrb[0].mxu0
      %1076 = vmatprep.mubr.bf16.mxu0 0
      %1077 = vmatmul.mubr.bf16.gmra.mrb[0].mxu0 %v783
      %v1078 = vpop.f32.mrb[0].mxu0
      %v1079 = vadd.f32 %v399, %v1078
      %v1080 = vpop.f32.mrb[0].mxu0
      %v1081 = vpop.f32.mrb[0].mxu0
      %v1082 = vadd.f32 %v399, %v1081
      %v1083 = vpop.f32.mrb[0].mxu0
      %1084 = vmatprep.mubr.bf16.mxu0 0
      %1085 = vmatmul.mubr.bf16.gmra.mrb[0].mxu0 %v786
      %v1086 = vpop.f32.mrb[0].mxu0
      %v1087 = vadd.f32 %v399, %v1086
      %v1088 = vpop.f32.mrb[0].mxu0
      %v1089 = vpop.f32.mrb[0].mxu0
      %v1090 = vadd.f32 %v399, %v1089
      %v1091 = vpop.f32.mrb[0].mxu0
      %1092 = vmatprep.mubr.bf16.mxu0 0
      %1093 = vmatmul.mubr.bf16.gmra.mrb[0].mxu0 %v789
      %v1094 = vpop.f32.mrb[0].mxu0
      %v1095 = vadd.f32 %v399, %v1094
      %v1096 = vpop.f32.mrb[0].mxu0
      %v1097 = vpop.f32.mrb[0].mxu0
      %v1098 = vadd.f32 %v399, %v1097
      %v1099 = vpop.f32.mrb[0].mxu0
      %1100 = vmatprep.mubr.bf16.mxu0 0
      %1101 = vmatmul.mubr.bf16.gmra.mrb[0].mxu0 %v792
      %v1102 = vpop.f32.mrb[0].mxu0
      %v1103 = vadd.f32 %v399, %v1102
      %v1104 = vpop.f32.mrb[0].mxu0
      %v1105 = vpop.f32.mrb[0].mxu0
      %v1106 = vadd.f32 %v399, %v1105
      %v1107 = vpop.f32.mrb[0].mxu0
      %1108 = vmatprep.mubr.bf16.mxu0 0
      %1109 = vmatmul.mubr.bf16.gmra.mrb[0].mxu0 %v795
      %v1110 = vpop.f32.mrb[0].mxu0
      %v1111 = vadd.f32 %v399, %v1110
      %v1112 = vpop.f32.mrb[0].mxu0
      %v1113 = vpop.f32.mrb[0].mxu0
      %v1114 = vadd.f32 %v399, %v1113
      %v1115 = vpop.f32.mrb[0].mxu0
      %1116 = vmatprep.mubr.bf16.mxu0 0
      %1117 = vmatmul.mubr.bf16.gmra.mrb[0].mxu0 %v798
      %v1118 = vpop.f32.mrb[0].mxu0
      %v1119 = vadd.f32 %v399, %v1118
      %v1120 = vpop.f32.mrb[0].mxu0
      %v1121 = vpop.f32.mrb[0].mxu0
      %v1122 = vadd.f32 %v399, %v1121
      %v1123 = vpop.f32.mrb[0].mxu0
      %1124 = vmatprep.mubr.bf16.mxu0 0
      %1125 = vmatmul.mubr.bf16.gmra.mrb[0].mxu0 %v801
      %v1126 = vpop.f32.mrb[0].mxu0
      %v1127 = vadd.f32 %v399, %v1126
      %v1128 = vpop.f32.mrb[0].mxu0
      %v1129 = vpop.f32.mrb[0].mxu0
      %v1130 = vadd.f32 %v399, %v1129
      %v1131 = vpop.f32.mrb[0].mxu0
      %1132 = vmatprep.mubr.bf16.mxu0 0
      %1133 = vmatmul.mubr.bf16.gmra.mrb[0].mxu0 %v804
      %v1134 = vpop.f32.mrb[0].mxu0
      %v1135 = vadd.f32 %v399, %v1134
      %v1136 = vpop.f32.mrb[0].mxu0
      %v1137 = vpop.f32.mrb[0].mxu0
      %v1138 = vadd.f32 %v399, %v1137
      %v1139 = vpop.f32.mrb[0].mxu0
      %1140 = vmatprep.mubr.bf16.mxu0 0
      %1141 = vmatmul.mubr.bf16.gmra.mrb[0].mxu0 %v807
      %v1142 = vpop.f32.mrb[0].mxu0
      %v1143 = vadd.f32 %v399, %v1142
      %v1144 = vpop.f32.mrb[0].mxu0
      %v1145 = vpop.f32.mrb[0].mxu0
      %v1146 = vadd.f32 %v399, %v1145
      %v1147 = vpop.f32.mrb[0].mxu0
      %1148 = vmatprep.mubr.bf16.mxu0 0
      %1149 = vmatmul.mubr.bf16.gmra.mrb[0].mxu0 %v810
      %v1150 = vpop.f32.mrb[0].mxu0
      %v1151 = vadd.f32 %v399, %v1150
      %v1152 = vpop.f32.mrb[0].mxu0
      %v1153 = vpop.f32.mrb[0].mxu0
      %v1154 = vadd.f32 %v399, %v1153
      %v1155 = vpop.f32.mrb[0].mxu0
      %1156 = vmatprep.mubr.bf16.mxu0 0
      %1157 = vmatmul.mubr.bf16.gmra.mrb[0].mxu0 %v813
      %v1158 = vpop.f32.mrb[0].mxu0
      %v1159 = vadd.f32 %v399, %v1158
      %v1160 = vpop.f32.mrb[0].mxu0
      %v1161 = vpop.f32.mrb[0].mxu0
      %v1162 = vadd.f32 %v399, %v1161
      %v1163 = vpop.f32.mrb[0].mxu0
      %1164 = vmatprep.mubr.bf16.mxu0 0
      %1165 = vmatmul.mubr.bf16.gmra.mrb[0].mxu0 %v816
      %v1166 = vpop.f32.mrb[0].mxu0
      %v1167 = vadd.f32 %v399, %v1166
      %v1168 = vpop.f32.mrb[0].mxu0
      %v1169 = vpop.f32.mrb[0].mxu0
      %v1170 = vadd.f32 %v399, %v1169
      %v1171 = vpop.f32.mrb[0].mxu0
      %1172 = vmatprep.mubr.bf16.mxu0 0
      %1173 = vmatmul.mubr.bf16.gmra.mrb[0].mxu0 %v819
      %v1174 = vpop.f32.mrb[0].mxu0
      %v1175 = vadd.f32 %v399, %v1174
      %v1176 = vpop.f32.mrb[0].mxu0
      %v1177 = vpop.f32.mrb[0].mxu0
      %v1178 = vadd.f32 %v399, %v1177
      %v1179 = vpop.f32.mrb[0].mxu0
      %1180 = vmatprep.mubr.bf16.mxu0 0
      %1181 = vmatmul.mubr.bf16.gmra.mrb[0].mxu0 %v822
      %v1182 = vpop.f32.mrb[0].mxu0
      %v1183 = vadd.f32 %v399, %v1182
      %v1184 = vpop.f32.mrb[0].mxu0
      %v1185 = vpop.f32.mrb[0].mxu0
      %v1186 = vadd.f32 %v399, %v1185
      %v1187 = vpop.f32.mrb[0].mxu0
      %1188 = vmatprep.mubr.bf16.mxu0 0
      %1189 = vmatmul.mubr.bf16.gmra.mrb[0].mxu0 %v825
      %v1190 = vpop.f32.mrb[0].mxu0
      %v1191 = vadd.f32 %v399, %v1190
      %v1192 = vpop.f32.mrb[0].mxu0
      %v1193 = vpop.f32.mrb[0].mxu0
      %v1194 = vadd.f32 %v399, %v1193
      %v1195 = vpop.f32.mrb[0].mxu0
      %1196 = vmatprep.mubr.bf16.mxu0 0
      %1197 = vmatmul.mubr.bf16.gmra.mrb[0].mxu0 %v828
      %v1198 = vpop.f32.mrb[0].mxu0
      %v1199 = vadd.f32 %v399, %v1198
      %v1200 = vpop.f32.mrb[0].mxu0
      %v1201 = vpop.f32.mrb[0].mxu0
      %v1202 = vadd.f32 %v399, %v1201
      %v1203 = vpop.f32.mrb[0].mxu0
      %1204 = vmatprep.mubr.bf16.mxu0 0
      %1205 = vmatmul.mubr.bf16.gmra.mrb[0].mxu0 %v831
      %v1206 = vpop.f32.mrb[0].mxu0
      %v1207 = vadd.f32 %v399, %v1206
      %v1208 = vpop.f32.mrb[0].mxu0
      %v1209 = vpop.f32.mrb[0].mxu0
      %v1210 = vadd.f32 %v399, %v1209
      %v1211 = vpop.f32.mrb[0].mxu0
      %1212 = vmatprep.mubr.bf16.mxu0 0
      %1213 = vmatmul.mubr.bf16.gmra.mrb[0].mxu0 %v834
      %v1214 = vpop.f32.mrb[0].mxu0
      %v1215 = vadd.f32 %v399, %v1214
      %v1216 = vpop.f32.mrb[0].mxu0
      %v1217 = vpop.f32.mrb[0].mxu0
      %v1218 = vadd.f32 %v399, %v1217
      %v1219 = vpop.f32.mrb[0].mxu0
      %1220 = vmatprep.mubr.bf16.mxu0 0
      %1221 = vmatmul.mubr.bf16.gmra.mrb[0].mxu0 %v837
      %v1222 = vpop.f32.mrb[0].mxu0
      %v1223 = vadd.f32 %v399, %v1222
      %v1224 = vpop.f32.mrb[0].mxu0
      %v1225 = vpop.f32.mrb[0].mxu0
      %v1226 = vadd.f32 %v399, %v1225
      %v1227 = vpop.f32.mrb[0].mxu0
      %1228 = vmatprep.mubr.bf16.mxu0 0
      %1229 = vmatmul.mubr.bf16.gmra.mrb[0].mxu0 %v840
      %v1230 = vpop.f32.mrb[0].mxu0
      %v1231 = vadd.f32 %v399, %v1230
      %v1232 = vpop.f32.mrb[0].mxu0
      %v1233 = vpop.f32.mrb[0].mxu0
      %v1234 = vadd.f32 %v399, %v1233
      %v1235 = vpop.f32.mrb[0].mxu0
      %1236 = vmatprep.mubr.bf16.mxu0 0
      %1237 = vmatmul.mubr.bf16.gmra.mrb[0].mxu0 %v843
      %v1238 = vpop.f32.mrb[0].mxu0
      %v1239 = vadd.f32 %v399, %v1238
      %v1240 = vpop.f32.mrb[0].mxu0
      %v1241 = vpop.f32.mrb[0].mxu0
      %v1242 = vadd.f32 %v399, %v1241
      %v1243 = vpop.f32.mrb[0].mxu0
      %1244 = vmatprep.mubr.bf16.mxu0 0
      %1245 = vmatmul.mubr.bf16.gmra.mrb[0].mxu0 %v846
      %v1246 = vpop.f32.mrb[0].mxu0
      %v1247 = vadd.f32 %v399, %v1246
      %v1248 = vpop.f32.mrb[0].mxu0
      %v1249 = vpop.f32.mrb[0].mxu0
      %v1250 = vadd.f32 %v399, %v1249
      %v1251 = vpop.f32.mrb[0].mxu0
      %1252 = vmatprep.mubr.bf16.mxu0 0
      %1253 = vmatmul.mubr.bf16.gmra.mrb[0].mxu0 %v849
      %v1254 = vpop.f32.mrb[0].mxu0
      %v1255 = vadd.f32 %v399, %v1254
      %v1256 = vpop.f32.mrb[0].mxu0
      %v1257 = vpop.f32.mrb[0].mxu0
      %v1258 = vadd.f32 %v399, %v1257
      %v1259 = vpop.f32.mrb[0].mxu0
      %1260 = vmatprep.mubr.bf16.mxu0 0
      %1261 = vmatmul.mubr.bf16.gmra.mrb[0].mxu0 %v852
      %v1262 = vpop.f32.mrb[0].mxu0
      %v1263 = vadd.f32 %v399, %v1262
      %v1264 = vpop.f32.mrb[0].mxu0
      %v1265 = vpop.f32.mrb[0].mxu0
      %v1266 = vadd.f32 %v399, %v1265
      %v1267 = vpop.f32.mrb[0].mxu0
      %1268 = vmatprep.mubr.bf16.mxu0 0
      %1269 = vmatmul.mubr.bf16.gmra.mrb[0].mxu0 %v855
      %v1270 = vpop.f32.mrb[0].mxu0
      %v1271 = vadd.f32 %v399, %v1270
      %v1272 = vpop.f32.mrb[0].mxu0
      %v1273 = vpop.f32.mrb[0].mxu0
      %v1274 = vadd.f32 %v399, %v1273
      %v1275 = vpop.f32.mrb[0].mxu0
      %1276 = vmatprep.mubr.bf16.mxu0 0
      %1277 = vmatmul.mubr.bf16.gmra.mrb[0].mxu0 %v858
      %v1278 = vpop.f32.mrb[0].mxu0
      %v1279 = vadd.f32 %v399, %v1278
      %v1280 = vpop.f32.mrb[0].mxu0
      %v1281 = vpop.f32.mrb[0].mxu0
      %v1282 = vadd.f32 %v399, %v1281
      %v1283 = vpop.f32.mrb[0].mxu0
      %1284 = vmatprep.mubr.bf16.mxu0 0
      %1285 = vmatmul.mubr.bf16.gmra.mrb[0].mxu0 %v861
      %v1286 = vpop.f32.mrb[0].mxu0
      %v1287 = vadd.f32 %v399, %v1286
      %v1288 = vpop.f32.mrb[0].mxu0
      %v1289 = vpop.f32.mrb[0].mxu0
      %v1290 = vadd.f32 %v399, %v1289
      %v1291 = vpop.f32.mrb[0].mxu0
      %1292 = vmatprep.mubr.bf16.mxu0 0
      %1293 = vmatmul.mubr.bf16.gmra.mrb[0].mxu0 %v864
      %v1294 = vpop.f32.mrb[0].mxu0
      %v1295 = vadd.f32 %v399, %v1294
      %v1296 = vpop.f32.mrb[0].mxu0
      %v1297 = vpop.f32.mrb[0].mxu0
      %v1298 = vadd.f32 %v399, %v1297
      %v1299 = vpop.f32.mrb[0].mxu0
      %1300 = vmatprep.mubr.bf16.mxu0 0
      %1301 = vmatmul.mubr.bf16.gmra.mrb[0].mxu0 %v867
      %v1302 = vpop.f32.mrb[0].mxu0
      %v1303 = vadd.f32 %v399, %v1302
      %v1304 = vpop.f32.mrb[0].mxu0
      %v1305 = vpop.f32.mrb[0].mxu0
      %v1306 = vadd.f32 %v399, %v1305
      %v1307 = vpop.f32.mrb[0].mxu0
      %1308 = vmatprep.mubr.bf16.mxu0 0
      %1309 = vmatmul.mubr.bf16.gmra.mrb[0].mxu0 %v870
      %v1310 = vpop.f32.mrb[0].mxu0
      %v1311 = vadd.f32 %v399, %v1310
      %v1312 = vpop.f32.mrb[0].mxu0
      %v1313 = vpop.f32.mrb[0].mxu0
      %v1314 = vadd.f32 %v399, %v1313
      %v1315 = vpop.f32.mrb[0].mxu0
      %1316 = vmatprep.mubr.bf16.mxu0 0
      %1317 = vmatmul.mubr.bf16.gmra.mrb[0].mxu0 %v873
      %v1318 = vpop.f32.mrb[0].mxu0
      %v1319 = vadd.f32 %v399, %v1318
      %v1320 = vpop.f32.mrb[0].mxu0
      %v1321 = vpop.f32.mrb[0].mxu0
      %v1322 = vadd.f32 %v399, %v1321
      %v1323 = vpop.f32.mrb[0].mxu0
      %1324 = vmatprep.mubr.bf16.mxu0 0
      %1325 = vmatmul.mubr.bf16.gmra.mrb[0].mxu0 %v876
      %v1326 = vpop.f32.mrb[0].mxu0
      %v1327 = vadd.f32 %v399, %v1326
      %v1328 = vpop.f32.mrb[0].mxu0
      %v1329 = vpop.f32.mrb[0].mxu0
      %v1330 = vadd.f32 %v399, %v1329
      %v1331 = vpop.f32.mrb[0].mxu0
      %1332 = vmatprep.mubr.bf16.mxu0 0
      %1333 = vmatmul.mubr.bf16.gmra.mrb[0].mxu0 %v879
      %v1334 = vpop.f32.mrb[0].mxu0
      %v1335 = vadd.f32 %v399, %v1334
      %v1336 = vpop.f32.mrb[0].mxu0
      %v1337 = vpop.f32.mrb[0].mxu0
      %v1338 = vadd.f32 %v399, %v1337
      %v1339 = vpop.f32.mrb[0].mxu0
      %1340 = vmatprep.mubr.bf16.mxu0 0
      %1341 = vmatmul.mubr.bf16.gmra.mrb[0].mxu0 %v882
      %v1342 = vpop.f32.mrb[0].mxu0
      %v1343 = vadd.f32 %v399, %v1342
      %v1344 = vpop.f32.mrb[0].mxu0
      %v1345 = vpop.f32.mrb[0].mxu0
      %v1346 = vadd.f32 %v399, %v1345
      %v1347 = vpop.f32.mrb[0].mxu0
      %1348 = vmatprep.mubr.bf16.mxu0 0
      %1349 = vmatmul.mubr.bf16.gmra.mrb[0].mxu0 %v885
      %v1350 = vpop.f32.mrb[0].mxu0
      %v1351 = vadd.f32 %v399, %v1350
      %v1352 = vpop.f32.mrb[0].mxu0
      %v1353 = vpop.f32.mrb[0].mxu0
      %v1354 = vadd.f32 %v399, %v1353
      %v1355 = vpop.f32.mrb[0].mxu0
      %1356 = vmatprep.mubr.bf16.mxu0 0
      %1357 = vmatmul.mubr.bf16.gmra.mrb[0].mxu0 %v888
      %v1358 = vpop.f32.mrb[0].mxu0
      %v1359 = vadd.f32 %v399, %v1358
      %v1360 = vpop.f32.mrb[0].mxu0
      %v1361 = vpop.f32.mrb[0].mxu0
      %v1362 = vadd.f32 %v399, %v1361
      %v1363 = vpop.f32.mrb[0].mxu0
      %1364 = vmatprep.mubr.bf16.mxu0 0
      %1365 = vmatmul.mubr.bf16.gmra.mrb[0].mxu0 %v891
      %v1366 = vpop.f32.mrb[0].mxu0
      %v1367 = vadd.f32 %v399, %v1366
      %v1368 = vpop.f32.mrb[0].mxu0
      %v1369 = vpop.f32.mrb[0].mxu0
      %v1370 = vadd.f32 %v399, %v1369
      %v1371 = vpop.f32.mrb[0].mxu0
      %1372 = vmatprep.mubr.bf16.mxu0 0
      %1373 = vmatmul.mubr.bf16.gmra.mrb[0].mxu0 %v894
      %v1374 = vpop.f32.mrb[0].mxu0
      %v1375 = vadd.f32 %v399, %v1374
      %v1376 = vpop.f32.mrb[0].mxu0
      %v1377 = vpop.f32.mrb[0].mxu0
      %v1378 = vadd.f32 %v399, %v1377
      %v1379 = vpop.f32.mrb[0].mxu0
      %1380 = vmatprep.mubr.bf16.mxu0 0
      %1381 = vmatmul.mubr.bf16.gmra.mrb[0].mxu0 %v897
      %v1382 = vpop.f32.mrb[0].mxu0
      %v1383 = vadd.f32 %v399, %v1382
      %v1384 = vpop.f32.mrb[0].mxu0
      %v1385 = vpop.f32.mrb[0].mxu0
      %v1386 = vadd.f32 %v399, %v1385
      %v1387 = vpop.f32.mrb[0].mxu0
      %1388 = vmatprep.mubr.bf16.mxu0 0
      %1389 = vmatmul.mubr.bf16.gmra.mrb[0].mxu0 %v900
      %v1390 = vpop.f32.mrb[0].mxu0
      %v1391 = vadd.f32 %v399, %v1390
      %v1392 = vpop.f32.mrb[0].mxu0
      %v1393 = vpop.f32.mrb[0].mxu0
      %v1394 = vadd.f32 %v399, %v1393
      %v1395 = vpop.f32.mrb[0].mxu0
      %1396 = vmatprep.mubr.bf16.mxu0 0
      %1397 = vmatmul.mubr.bf16.gmra.mrb[0].mxu0 %v903
      %v1398 = vpop.f32.mrb[0].mxu0
      %v1399 = vadd.f32 %v399, %v1398
      %v1400 = vpop.f32.mrb[0].mxu0
      %v1401 = vpop.f32.mrb[0].mxu0
      %v1402 = vadd.f32 %v399, %v1401
      %v1403 = vpop.f32.mrb[0].mxu0
      %1404 = vmatprep.mubr.bf16.mxu0 0
      %1405 = vmatmul.mubr.bf16.gmra.mrb[0].mxu0 %v906
      %v1406 = vpop.f32.mrb[0].mxu0
      %v1407 = vadd.f32 %v399, %v1406
      %v1408 = vpop.f32.mrb[0].mxu0
      %v1409 = vpop.f32.mrb[0].mxu0
      %v1410 = vadd.f32 %v399, %v1409
      %v1411 = vpop.f32.mrb[0].mxu0
      %1412 = vmatprep.mubr.bf16.mxu0 0
      %1413 = vmatmul.mubr.bf16.gmra.mrb[0].mxu0 %v909
      %v1414 = vpop.f32.mrb[0].mxu0
      %v1415 = vadd.f32 %v399, %v1414
      %v1416 = vpop.f32.mrb[0].mxu0
      %v1417 = vpop.f32.mrb[0].mxu0
      %v1418 = vadd.f32 %v399, %v1417
      %v1419 = vpop.f32.mrb[0].mxu0
      %1420 = vmatprep.mubr.bf16.mxu0 0
      %1421 = vmatmul.mubr.bf16.gmra.mrb[0].mxu0 %v912
      %v1422 = vpop.f32.mrb[0].mxu0
      %v1423 = vadd.f32 %v399, %v1422
      %v1424 = vpop.f32.mrb[0].mxu0
      %v1425 = vpop.f32.mrb[0].mxu0
      %v1426 = vadd.f32 %v399, %v1425
      %v1427 = vpop.f32.mrb[0].mxu0
      %1428 = vmatprep.mubr.bf16.mxu0 0
      %1429 = vmatmul.mubr.bf16.gmra.mrb[0].mxu0 %v915
      %v1430 = vpop.f32.mrb[0].mxu0
      %v1431 = vadd.f32 %v399, %v1430
      %v1432 = vpop.f32.mrb[0].mxu0
      %v1433 = vpop.f32.mrb[0].mxu0
      %v1434 = vadd.f32 %v399, %v1433
      %v1435 = vpop.f32.mrb[0].mxu0
      %1436 = vmatprep.mubr.bf16.mxu0 0
      %1437 = vmatmul.mubr.bf16.gmra.mrb[0].mxu0 %v918
      %v1438 = vpop.f32.mrb[0].mxu0
      %v1439 = vadd.f32 %v399, %v1438
      %v1440 = vpop.f32.mrb[0].mxu0
      %v1441 = vpop.f32.mrb[0].mxu0
      %v1442 = vadd.f32 %v399, %v1441
      %v1443 = vpop.f32.mrb[0].mxu0
      %1444 = vmatprep.mubr.bf16.mxu0 0
      %1445 = vmatmul.mubr.bf16.gmra.mrb[0].mxu0 %v921
      %v1446 = vpop.f32.mrb[0].mxu0
      %v1447 = vadd.f32 %v399, %v1446
      %v1448 = vpop.f32.mrb[0].mxu0
      %v1449 = vpop.f32.mrb[0].mxu0
      %v1450 = vadd.f32 %v399, %v1449
      %v1451 = vpop.f32.mrb[0].mxu0
      %1452 = vmatprep.mubr.bf16.mxu0 0
      %1453 = vmatmul.mubr.bf16.gmra.mrb[0].mxu0 %v924
      %v1454 = vpop.f32.mrb[0].mxu0
      %v1455 = vadd.f32 %v399, %v1454
      %v1456 = vpop.f32.mrb[0].mxu0
      %v1457 = vpop.f32.mrb[0].mxu0
      %v1458 = vadd.f32 %v399, %v1457
      %v1459 = vpop.f32.mrb[0].mxu0
      %1460 = vmatprep.mubr.bf16.mxu0 0
      %1461 = vmatmul.mubr.bf16.gmra.mrb[0].mxu0 %v927
      %v1462 = vpop.f32.mrb[0].mxu0
      %v1463 = vadd.f32 %v399, %v1462
      %v1464 = vpop.f32.mrb[0].mxu0
      %v1465 = vpop.f32.mrb[0].mxu0
      %v1466 = vadd.f32 %v399, %v1465
      %v1467 = vpop.f32.mrb[0].mxu0
      %1468 = vmatprep.mubr.bf16.mxu0 0
      %1469 = vmatmul.mubr.bf16.gmra.mrb[0].mxu0 %v930
      %v1470 = vpop.f32.mrb[0].mxu0
      %v1471 = vadd.f32 %v399, %v1470
      %v1472 = vpop.f32.mrb[0].mxu0
      %v1473 = vpop.f32.mrb[0].mxu0
      %v1474 = vadd.f32 %v399, %v1473
      %v1475 = vpop.f32.mrb[0].mxu0
      %1476 = vdwg.mxu0
      %vm1477 = vcmp.ge.f32.partialorder %v967, 0.0
      %vm1478 = vcmp.ge.f32.partialorder %v970, 0.0
      %vm1479 = vcmp.ge.f32.partialorder %v975, 0.0
      %vm1480 = vcmp.ge.f32.partialorder %v978, 0.0
      %vm1481 = vcmp.ge.f32.partialorder %v983, 0.0
      %vm1482 = vcmp.ge.f32.partialorder %v986, 0.0
      %vm1483 = vcmp.ge.f32.partialorder %v991, 0.0
      %vm1484 = vcmp.ge.f32.partialorder %v994, 0.0
      %vm1485 = vcmp.ge.f32.partialorder %v999, 0.0
      %vm1486 = vcmp.ge.f32.partialorder %v1002, 0.0
      %vm1487 = vcmp.ge.f32.partialorder %v1007, 0.0
      %vm1488 = vcmp.ge.f32.partialorder %v1010, 0.0
      %vm1489 = vcmp.ge.f32.partialorder %v1015, 0.0
      %vm1490 = vcmp.ge.f32.partialorder %v1018, 0.0
      %vm1491 = vcmp.ge.f32.partialorder %v1023, 0.0
      %vm1492 = vcmp.ge.f32.partialorder %v1026, 0.0
      %vm1493 = vcmp.ge.f32.partialorder %v1031, 0.0
      %vm1494 = vcmp.ge.f32.partialorder %v1034, 0.0
      %vm1495 = vcmp.ge.f32.partialorder %v1039, 0.0
      %vm1496 = vcmp.ge.f32.partialorder %v1042, 0.0
      %vm1497 = vcmp.ge.f32.partialorder %v1047, 0.0
      %vm1498 = vcmp.ge.f32.partialorder %v1050, 0.0
      %vm1499 = vcmp.ge.f32.partialorder %v1055, 0.0
      %vm1500 = vcmp.ge.f32.partialorder %v1058, 0.0
      %vm1501 = vcmp.ge.f32.partialorder %v1063, 0.0
      %vm1502 = vcmp.ge.f32.partialorder %v1066, 0.0
      %vm1503 = vcmp.ge.f32.partialorder %v1071, 0.0
      %vm1504 = vcmp.ge.f32.partialorder %v1074, 0.0
      %vm1505 = vcmp.ge.f32.partialorder %v1079, 0.0
      %vm1506 = vcmp.ge.f32.partialorder %v1082, 0.0
      %vm1507 = vcmp.ge.f32.partialorder %v1087, 0.0
      %vm1508 = vcmp.ge.f32.partialorder %v1090, 0.0
      %vm1509 = vcmp.ge.f32.partialorder %v1095, 0.0
      %vm1510 = vcmp.ge.f32.partialorder %v1098, 0.0
      %vm1511 = vcmp.ge.f32.partialorder %v1103, 0.0
      %vm1512 = vcmp.ge.f32.partialorder %v1106, 0.0
      %vm1513 = vcmp.ge.f32.partialorder %v1111, 0.0
      %vm1514 = vcmp.ge.f32.partialorder %v1114, 0.0
      %vm1515 = vcmp.ge.f32.partialorder %v1119, 0.0
      %vm1516 = vcmp.ge.f32.partialorder %v1122, 0.0
      %vm1517 = vcmp.ge.f32.partialorder %v1127, 0.0
      %vm1518 = vcmp.ge.f32.partialorder %v1130, 0.0
      %vm1519 = vcmp.ge.f32.partialorder %v1135, 0.0
      %vm1520 = vcmp.ge.f32.partialorder %v1138, 0.0
      %vm1521 = vcmp.ge.f32.partialorder %v1143, 0.0
      %vm1522 = vcmp.ge.f32.partialorder %v1146, 0.0
      %vm1523 = vcmp.ge.f32.partialorder %v1151, 0.0
      %vm1524 = vcmp.ge.f32.partialorder %v1154, 0.0
      %vm1525 = vcmp.ge.f32.partialorder %v1159, 0.0
      %vm1526 = vcmp.ge.f32.partialorder %v1162, 0.0
      %vm1527 = vcmp.ge.f32.partialorder %v1167, 0.0
      %vm1528 = vcmp.ge.f32.partialorder %v1170, 0.0
      %vm1529 = vcmp.ge.f32.partialorder %v1175, 0.0
      %vm1530 = vcmp.ge.f32.partialorder %v1178, 0.0
      %vm1531 = vcmp.ge.f32.partialorder %v1183, 0.0
      %vm1532 = vcmp.ge.f32.partialorder %v1186, 0.0
      %vm1533 = vcmp.ge.f32.partialorder %v1191, 0.0
      %vm1534 = vcmp.ge.f32.partialorder %v1194, 0.0
      %vm1535 = vcmp.ge.f32.partialorder %v1199, 0.0
      %vm1536 = vcmp.ge.f32.partialorder %v1202, 0.0
      %vm1537 = vcmp.ge.f32.partialorder %v1207, 0.0
      %vm1538 = vcmp.ge.f32.partialorder %v1210, 0.0
      %vm1539 = vcmp.ge.f32.partialorder %v1215, 0.0
      %vm1540 = vcmp.ge.f32.partialorder %v1218, 0.0
      %vm1541 = vcmp.ge.f32.partialorder %v1223, 0.0
      %vm1542 = vcmp.ge.f32.partialorder %v1226, 0.0
      %vm1543 = vcmp.ge.f32.partialorder %v1231, 0.0
      %vm1544 = vcmp.ge.f32.partialorder %v1234, 0.0
      %vm1545 = vcmp.ge.f32.partialorder %v1239, 0.0
      %vm1546 = vcmp.ge.f32.partialorder %v1242, 0.0
      %vm1547 = vcmp.ge.f32.partialorder %v1247, 0.0
      %vm1548 = vcmp.ge.f32.partialorder %v1250, 0.0
      %vm1549 = vcmp.ge.f32.partialorder %v1255, 0.0
      %vm1550 = vcmp.ge.f32.partialorder %v1258, 0.0
      %vm1551 = vcmp.ge.f32.partialorder %v1263, 0.0
      %vm1552 = vcmp.ge.f32.partialorder %v1266, 0.0
      %vm1553 = vcmp.ge.f32.partialorder %v1271, 0.0
      %vm1554 = vcmp.ge.f32.partialorder %v1274, 0.0
      %vm1555 = vcmp.ge.f32.partialorder %v1279, 0.0
      %vm1556 = vcmp.ge.f32.partialorder %v1282, 0.0
      %vm1557 = vcmp.ge.f32.partialorder %v1287, 0.0
      %vm1558 = vcmp.ge.f32.partialorder %v1290, 0.0
      %vm1559 = vcmp.ge.f32.partialorder %v1295, 0.0
      %vm1560 = vcmp.ge.f32.partialorder %v1298, 0.0
      %vm1561 = vcmp.ge.f32.partialorder %v1303, 0.0
      %vm1562 = vcmp.ge.f32.partialorder %v1306, 0.0
      %vm1563 = vcmp.ge.f32.partialorder %v1311, 0.0
      %vm1564 = vcmp.ge.f32.partialorder %v1314, 0.0
      %vm1565 = vcmp.ge.f32.partialorder %v1319, 0.0
      %vm1566 = vcmp.ge.f32.partialorder %v1322, 0.0
      %vm1567 = vcmp.ge.f32.partialorder %v1327, 0.0
      %vm1568 = vcmp.ge.f32.partialorder %v1330, 0.0
      %vm1569 = vcmp.ge.f32.partialorder %v1335, 0.0
      %vm1570 = vcmp.ge.f32.partialorder %v1338, 0.0
      %vm1571 = vcmp.ge.f32.partialorder %v1343, 0.0
      %vm1572 = vcmp.ge.f32.partialorder %v1346, 0.0
      %vm1573 = vcmp.ge.f32.partialorder %v1351, 0.0
      %vm1574 = vcmp.ge.f32.partialorder %v1354, 0.0
      %vm1575 = vcmp.ge.f32.partialorder %v1359, 0.0
      %vm1576 = vcmp.ge.f32.partialorder %v1362, 0.0
      %vm1577 = vcmp.ge.f32.partialorder %v1367, 0.0
      %vm1578 = vcmp.ge.f32.partialorder %v1370, 0.0
      %vm1579 = vcmp.ge.f32.partialorder %v1375, 0.0
      %vm1580 = vcmp.ge.f32.partialorder %v1378, 0.0
      %vm1581 = vcmp.ge.f32.partialorder %v1383, 0.0
      %vm1582 = vcmp.ge.f32.partialorder %v1386, 0.0
      %vm1583 = vcmp.ge.f32.partialorder %v1391, 0.0
      %vm1584 = vcmp.ge.f32.partialorder %v1394, 0.0
      %vm1585 = vcmp.ge.f32.partialorder %v1399, 0.0
      %vm1586 = vcmp.ge.f32.partialorder %v1402, 0.0
      %vm1587 = vcmp.ge.f32.partialorder %v1407, 0.0
      %vm1588 = vcmp.ge.f32.partialorder %v1410, 0.0
      %vm1589 = vcmp.ge.f32.partialorder %v1415, 0.0
      %vm1590 = vcmp.ge.f32.partialorder %v1418, 0.0
      %vm1591 = vcmp.ge.f32.partialorder %v1423, 0.0
      %vm1592 = vcmp.ge.f32.partialorder %v1426, 0.0
      %vm1593 = vcmp.ge.f32.partialorder %v1431, 0.0
      %vm1594 = vcmp.ge.f32.partialorder %v1434, 0.0
      %vm1595 = vcmp.ge.f32.partialorder %v1439, 0.0
      %vm1596 = vcmp.ge.f32.partialorder %v1442, 0.0
      %vm1597 = vcmp.ge.f32.partialorder %v1447, 0.0
      %vm1598 = vcmp.ge.f32.partialorder %v1450, 0.0
      %vm1599 = vcmp.ge.f32.partialorder %v1455, 0.0
      %vm1600 = vcmp.ge.f32.partialorder %v1458, 0.0
      %vm1601 = vcmp.ge.f32.partialorder %v1463, 0.0
      %vm1602 = vcmp.ge.f32.partialorder %v1466, 0.0
      %vm1603 = vcmp.ge.f32.partialorder %v1471, 0.0
      %vm1604 = vcmp.ge.f32.partialorder %v1474, 0.0
      %v1605 = vmul.f32 %v967, 0.2
      %v1606 = vmul.f32 %v970, 0.2
      %v1607 = vmul.f32 %v975, 0.2
      %v1608 = vmul.f32 %v978, 0.2
      %v1609 = vmul.f32 %v983, 0.2
      %v1610 = vmul.f32 %v986, 0.2
      %v1611 = vmul.f32 %v991, 0.2
      %v1612 = vmul.f32 %v994, 0.2
      %v1613 = vmul.f32 %v999, 0.2
      %v1614 = vmul.f32 %v1002, 0.2
      %v1615 = vmul.f32 %v1007, 0.2
      %v1616 = vmul.f32 %v1010, 0.2
      %v1617 = vmul.f32 %v1015, 0.2
      %v1618 = vmul.f32 %v1018, 0.2
      %v1619 = vmul.f32 %v1023, 0.2
      %v1620 = vmul.f32 %v1026, 0.2
      %v1621 = vmul.f32 %v1031, 0.2
      %v1622 = vmul.f32 %v1034, 0.2
      %v1623 = vmul.f32 %v1039, 0.2
      %v1624 = vmul.f32 %v1042, 0.2
      %v1625 = vmul.f32 %v1047, 0.2
      %v1626 = vmul.f32 %v1050, 0.2
      %v1627 = vmul.f32 %v1055, 0.2
      %v1628 = vmul.f32 %v1058, 0.2
      %v1629 = vmul.f32 %v1063, 0.2
      %v1630 = vmul.f32 %v1066, 0.2
      %v1631 = vmul.f32 %v1071, 0.2
      %v1632 = vmul.f32 %v1074, 0.2
      %v1633 = vmul.f32 %v1079, 0.2
      %v1634 = vmul.f32 %v1082, 0.2
      %v1635 = vmul.f32 %v1087, 0.2
      %v1636 = vmul.f32 %v1090, 0.2
      %v1637 = vmul.f32 %v1095, 0.2
      %v1638 = vmul.f32 %v1098, 0.2
      %v1639 = vmul.f32 %v1103, 0.2
      %v1640 = vmul.f32 %v1106, 0.2
      %v1641 = vmul.f32 %v1111, 0.2
      %v1642 = vmul.f32 %v1114, 0.2
      %v1643 = vmul.f32 %v1119, 0.2
      %v1644 = vmul.f32 %v1122, 0.2
      %v1645 = vmul.f32 %v1127, 0.2
      %v1646 = vmul.f32 %v1130, 0.2
      %v1647 = vmul.f32 %v1135, 0.2
      %v1648 = vmul.f32 %v1138, 0.2
      %v1649 = vmul.f32 %v1143, 0.2
      %v1650 = vmul.f32 %v1146, 0.2
      %v1651 = vmul.f32 %v1151, 0.2
      %v1652 = vmul.f32 %v1154, 0.2
      %v1653 = vmul.f32 %v1159, 0.2
      %v1654 = vmul.f32 %v1162, 0.2
      %v1655 = vmul.f32 %v1167, 0.2
      %v1656 = vmul.f32 %v1170, 0.2
      %v1657 = vmul.f32 %v1175, 0.2
      %v1658 = vmul.f32 %v1178, 0.2
      %v1659 = vmul.f32 %v1183, 0.2
      %v1660 = vmul.f32 %v1186, 0.2
      %v1661 = vmul.f32 %v1191, 0.2
      %v1662 = vmul.f32 %v1194, 0.2
      %v1663 = vmul.f32 %v1199, 0.2
      %v1664 = vmul.f32 %v1202, 0.2
      %v1665 = vmul.f32 %v1207, 0.2
      %v1666 = vmul.f32 %v1210, 0.2
      %v1667 = vmul.f32 %v1215, 0.2
      %v1668 = vmul.f32 %v1218, 0.2
      %v1669 = vmul.f32 %v1223, 0.2
      %v1670 = vmul.f32 %v1226, 0.2
      %v1671 = vmul.f32 %v1231, 0.2
      %v1672 = vmul.f32 %v1234, 0.2
      %v1673 = vmul.f32 %v1239, 0.2
      %v1674 = vmul.f32 %v1242, 0.2
      %v1675 = vmul.f32 %v1247, 0.2
      %v1676 = vmul.f32 %v1250, 0.2
      %v1677 = vmul.f32 %v1255, 0.2
      %v1678 = vmul.f32 %v1258, 0.2
      %v1679 = vmul.f32 %v1263, 0.2
      %v1680 = vmul.f32 %v1266, 0.2
      %v1681 = vmul.f32 %v1271, 0.2
      %v1682 = vmul.f32 %v1274, 0.2
      %v1683 = vmul.f32 %v1279, 0.2
      %v1684 = vmul.f32 %v1282, 0.2
      %v1685 = vmul.f32 %v1287, 0.2
      %v1686 = vmul.f32 %v1290, 0.2
      %v1687 = vmul.f32 %v1295, 0.2
      %v1688 = vmul.f32 %v1298, 0.2
      %v1689 = vmul.f32 %v1303, 0.2
      %v1690 = vmul.f32 %v1306, 0.2
      %v1691 = vmul.f32 %v1311, 0.2
      %v1692 = vmul.f32 %v1314, 0.2
      %v1693 = vmul.f32 %v1319, 0.2
      %v1694 = vmul.f32 %v1322, 0.2
      %v1695 = vmul.f32 %v1327, 0.2
      %v1696 = vmul.f32 %v1330, 0.2
      %v1697 = vmul.f32 %v1335, 0.2
      %v1698 = vmul.f32 %v1338, 0.2
      %v1699 = vmul.f32 %v1343, 0.2
      %v1700 = vmul.f32 %v1346, 0.2
      %v1701 = vmul.f32 %v1351, 0.2
      %v1702 = vmul.f32 %v1354, 0.2
      %v1703 = vmul.f32 %v1359, 0.2
      %v1704 = vmul.f32 %v1362, 0.2
      %v1705 = vmul.f32 %v1367, 0.2
      %v1706 = vmul.f32 %v1370, 0.2
      %v1707 = vmul.f32 %v1375, 0.2
      %v1708 = vmul.f32 %v1378, 0.2
      %v1709 = vmul.f32 %v1383, 0.2
      %v1710 = vmul.f32 %v1386, 0.2
      %v1711 = vmul.f32 %v1391, 0.2
      %v1712 = vmul.f32 %v1394, 0.2
      %v1713 = vmul.f32 %v1399, 0.2
      %v1714 = vmul.f32 %v1402, 0.2
      %v1715 = vmul.f32 %v1407, 0.2
      %v1716 = vmul.f32 %v1410, 0.2
      %v1717 = vmul.f32 %v1415, 0.2
      %v1718 = vmul.f32 %v1418, 0.2
      %v1719 = vmul.f32 %v1423, 0.2
      %v1720 = vmul.f32 %v1426, 0.2
      %v1721 = vmul.f32 %v1431, 0.2
      %v1722 = vmul.f32 %v1434, 0.2
      %v1723 = vmul.f32 %v1439, 0.2
      %v1724 = vmul.f32 %v1442, 0.2
      %v1725 = vmul.f32 %v1447, 0.2
      %v1726 = vmul.f32 %v1450, 0.2
      %v1727 = vmul.f32 %v1455, 0.2
      %v1728 = vmul.f32 %v1458, 0.2
      %v1729 = vmul.f32 %v1463, 0.2
      %v1730 = vmul.f32 %v1466, 0.2
      %v1731 = vmul.f32 %v1471, 0.2
      %v1732 = vmul.f32 %v1474, 0.2
      %v1733 = vsel %vm1477, %v967, %v1605
      %v1734 = vsel %vm1478, %v970, %v1606
      %v1735 = vsel %vm1479, %v975, %v1607
      %v1736 = vsel %vm1480, %v978, %v1608
      %v1737 = vsel %vm1481, %v983, %v1609
      %v1738 = vsel %vm1482, %v986, %v1610
      %v1739 = vsel %vm1483, %v991, %v1611
      %v1740 = vsel %vm1484, %v994, %v1612
      %v1741 = vsel %vm1485, %v999, %v1613
      %v1742 = vsel %vm1486, %v1002, %v1614
      %v1743 = vsel %vm1487, %v1007, %v1615
      %v1744 = vsel %vm1488, %v1010, %v1616
      %v1745 = vsel %vm1489, %v1015, %v1617
      %v1746 = vsel %vm1490, %v1018, %v1618
      %v1747 = vsel %vm1491, %v1023, %v1619
      %v1748 = vsel %vm1492, %v1026, %v1620
      %v1749 = vsel %vm1493, %v1031, %v1621
      %v1750 = vsel %vm1494, %v1034, %v1622
      %v1751 = vsel %vm1495, %v1039, %v1623
      %v1752 = vsel %vm1496, %v1042, %v1624
      %v1753 = vsel %vm1497, %v1047, %v1625
      %v1754 = vsel %vm1498, %v1050, %v1626
      %v1755 = vsel %vm1499, %v1055, %v1627
      %v1756 = vsel %vm1500, %v1058, %v1628
      %v1757 = vsel %vm1501, %v1063, %v1629
      %v1758 = vsel %vm1502, %v1066, %v1630
      %v1759 = vsel %vm1503, %v1071, %v1631
      %v1760 = vsel %vm1504, %v1074, %v1632
      %v1761 = vsel %vm1505, %v1079, %v1633
      %v1762 = vsel %vm1506, %v1082, %v1634
      %v1763 = vsel %vm1507, %v1087, %v1635
      %v1764 = vsel %vm1508, %v1090, %v1636
      %v1765 = vsel %vm1509, %v1095, %v1637
      %v1766 = vsel %vm1510, %v1098, %v1638
      %v1767 = vsel %vm1511, %v1103, %v1639
      %v1768 = vsel %vm1512, %v1106, %v1640
      %v1769 = vsel %vm1513, %v1111, %v1641
      %v1770 = vsel %vm1514, %v1114, %v1642
      %v1771 = vsel %vm1515, %v1119, %v1643
      %v1772 = vsel %vm1516, %v1122, %v1644
      %v1773 = vsel %vm1517, %v1127, %v1645
      %v1774 = vsel %vm1518, %v1130, %v1646
      %v1775 = vsel %vm1519, %v1135, %v1647
      %v1776 = vsel %vm1520, %v1138, %v1648
      %v1777 = vsel %vm1521, %v1143, %v1649
      %v1778 = vsel %vm1522, %v1146, %v1650
      %v1779 = vsel %vm1523, %v1151, %v1651
      %v1780 = vsel %vm1524, %v1154, %v1652
      %v1781 = vsel %vm1525, %v1159, %v1653
      %v1782 = vsel %vm1526, %v1162, %v1654
      %v1783 = vsel %vm1527, %v1167, %v1655
      %v1784 = vsel %vm1528, %v1170, %v1656
      %v1785 = vsel %vm1529, %v1175, %v1657
      %v1786 = vsel %vm1530, %v1178, %v1658
      %v1787 = vsel %vm1531, %v1183, %v1659
      %v1788 = vsel %vm1532, %v1186, %v1660
      %v1789 = vsel %vm1533, %v1191, %v1661
      %v1790 = vsel %vm1534, %v1194, %v1662
      %v1791 = vsel %vm1535, %v1199, %v1663
      %v1792 = vsel %vm1536, %v1202, %v1664
      %v1793 = vsel %vm1537, %v1207, %v1665
      %v1794 = vsel %vm1538, %v1210, %v1666
      %v1795 = vsel %vm1539, %v1215, %v1667
      %v1796 = vsel %vm1540, %v1218, %v1668
      %v1797 = vsel %vm1541, %v1223, %v1669
      %v1798 = vsel %vm1542, %v1226, %v1670
      %v1799 = vsel %vm1543, %v1231, %v1671
      %v1800 = vsel %vm1544, %v1234, %v1672
      %v1801 = vsel %vm1545, %v1239, %v1673
      %v1802 = vsel %vm1546, %v1242, %v1674
      %v1803 = vsel %vm1547, %v1247, %v1675
      %v1804 = vsel %vm1548, %v1250, %v1676
      %v1805 = vsel %vm1549, %v1255, %v1677
      %v1806 = vsel %vm1550, %v1258, %v1678
      %v1807 = vsel %vm1551, %v1263, %v1679
      %v1808 = vsel %vm1552, %v1266, %v1680
      %v1809 = vsel %vm1553, %v1271, %v1681
      %v1810 = vsel %vm1554, %v1274, %v1682
      %v1811 = vsel %vm1555, %v1279, %v1683
      %v1812 = vsel %vm1556, %v1282, %v1684
      %v1813 = vsel %vm1557, %v1287, %v1685
      %v1814 = vsel %vm1558, %v1290, %v1686
      %v1815 = vsel %vm1559, %v1295, %v1687
      %v1816 = vsel %vm1560, %v1298, %v1688
      %v1817 = vsel %vm1561, %v1303, %v1689
      %v1818 = vsel %vm1562, %v1306, %v1690
      %v1819 = vsel %vm1563, %v1311, %v1691
      %v1820 = vsel %vm1564, %v1314, %v1692
      %v1821 = vsel %vm1565, %v1319, %v1693
      %v1822 = vsel %vm1566, %v1322, %v1694
      %v1823 = vsel %vm1567, %v1327, %v1695
      %v1824 = vsel %vm1568, %v1330, %v1696
      %v1825 = vsel %vm1569, %v1335, %v1697
      %v1826 = vsel %vm1570, %v1338, %v1698
      %v1827 = vsel %vm1571, %v1343, %v1699
      %v1828 = vsel %vm1572, %v1346, %v1700
      %v1829 = vsel %vm1573, %v1351, %v1701
      %v1830 = vsel %vm1574, %v1354, %v1702
      %v1831 = vsel %vm1575, %v1359, %v1703
      %v1832 = vsel %vm1576, %v1362, %v1704
      %v1833 = vsel %vm1577, %v1367, %v1705
      %v1834 = vsel %vm1578, %v1370, %v1706
      %v1835 = vsel %vm1579, %v1375, %v1707
      %v1836 = vsel %vm1580, %v1378, %v1708
      %v1837 = vsel %vm1581, %v1383, %v1709
      %v1838 = vsel %vm1582, %v1386, %v1710
      %v1839 = vsel %vm1583, %v1391, %v1711
      %v1840 = vsel %vm1584, %v1394, %v1712
      %v1841 = vsel %vm1585, %v1399, %v1713
      %v1842 = vsel %vm1586, %v1402, %v1714
      %v1843 = vsel %vm1587, %v1407, %v1715
      %v1844 = vsel %vm1588, %v1410, %v1716
      %v1845 = vsel %vm1589, %v1415, %v1717
      %v1846 = vsel %vm1590, %v1418, %v1718
      %v1847 = vsel %vm1591, %v1423, %v1719
      %v1848 = vsel %vm1592, %v1426, %v1720
      %v1849 = vsel %vm1593, %v1431, %v1721
      %v1850 = vsel %vm1594, %v1434, %v1722
      %v1851 = vsel %vm1595, %v1439, %v1723
      %v1852 = vsel %vm1596, %v1442, %v1724
      %v1853 = vsel %vm1597, %v1447, %v1725
      %v1854 = vsel %vm1598, %v1450, %v1726
      %v1855 = vsel %vm1599, %v1455, %v1727
      %v1856 = vsel %vm1600, %v1458, %v1728
      %v1857 = vsel %vm1601, %v1463, %v1729
      %v1858 = vsel %vm1602, %v1466, %v1730
      %v1859 = vsel %vm1603, %v1471, %v1731
      %v1860 = vsel %vm1604, %v1474, %v1732
      %v1861 = vpack.c.bf16 %v1734, %v1733
      %v1862 = vpack.c.bf16 %v1736, %v1735
      %v1863 = vpack.c.bf16 %v1738, %v1737
      %v1864 = vpack.c.bf16 %v1740, %v1739
      %v1865 = vpack.c.bf16 %v1742, %v1741
      %v1866 = vpack.c.bf16 %v1744, %v1743
      %v1867 = vpack.c.bf16 %v1746, %v1745
      %v1868 = vpack.c.bf16 %v1748, %v1747
      %v1869 = vpack.c.bf16 %v1750, %v1749
      %v1870 = vpack.c.bf16 %v1752, %v1751
      %v1871 = vpack.c.bf16 %v1754, %v1753
      %v1872 = vpack.c.bf16 %v1756, %v1755
      %v1873 = vpack.c.bf16 %v1758, %v1757
      %v1874 = vpack.c.bf16 %v1760, %v1759
      %v1875 = vpack.c.bf16 %v1762, %v1761
      %v1876 = vpack.c.bf16 %v1764, %v1763
      %v1877 = vpack.c.bf16 %v1766, %v1765
      %v1878 = vpack.c.bf16 %v1768, %v1767
      %v1879 = vpack.c.bf16 %v1770, %v1769
      %v1880 = vpack.c.bf16 %v1772, %v1771
      %v1881 = vpack.c.bf16 %v1774, %v1773
      %v1882 = vpack.c.bf16 %v1776, %v1775
      %v1883 = vpack.c.bf16 %v1778, %v1777
      %v1884 = vpack.c.bf16 %v1780, %v1779
      %v1885 = vpack.c.bf16 %v1782, %v1781
      %v1886 = vpack.c.bf16 %v1784, %v1783
      %v1887 = vpack.c.bf16 %v1786, %v1785
      %v1888 = vpack.c.bf16 %v1788, %v1787
      %v1889 = vpack.c.bf16 %v1790, %v1789
      %v1890 = vpack.c.bf16 %v1792, %v1791
      %v1891 = vpack.c.bf16 %v1794, %v1793
      %v1892 = vpack.c.bf16 %v1796, %v1795
      %v1893 = vpack.c.bf16 %v1798, %v1797
      %v1894 = vpack.c.bf16 %v1800, %v1799
      %v1895 = vpack.c.bf16 %v1802, %v1801
      %v1896 = vpack.c.bf16 %v1804, %v1803
      %v1897 = vpack.c.bf16 %v1806, %v1805
      %v1898 = vpack.c.bf16 %v1808, %v1807
      %v1899 = vpack.c.bf16 %v1810, %v1809
      %v1900 = vpack.c.bf16 %v1812, %v1811
      %v1901 = vpack.c.bf16 %v1814, %v1813
      %v1902 = vpack.c.bf16 %v1816, %v1815
      %v1903 = vpack.c.bf16 %v1818, %v1817
      %v1904 = vpack.c.bf16 %v1820, %v1819
      %v1905 = vpack.c.bf16 %v1822, %v1821
      %v1906 = vpack.c.bf16 %v1824, %v1823
      %v1907 = vpack.c.bf16 %v1826, %v1825
      %v1908 = vpack.c.bf16 %v1828, %v1827
      %v1909 = vpack.c.bf16 %v1830, %v1829
      %v1910 = vpack.c.bf16 %v1832, %v1831
      %v1911 = vpack.c.bf16 %v1834, %v1833
      %v1912 = vpack.c.bf16 %v1836, %v1835
      %v1913 = vpack.c.bf16 %v1838, %v1837
      %v1914 = vpack.c.bf16 %v1840, %v1839
      %v1915 = vpack.c.bf16 %v1842, %v1841
      %v1916 = vpack.c.bf16 %v1844, %v1843
      %v1917 = vpack.c.bf16 %v1846, %v1845
      %v1918 = vpack.c.bf16 %v1848, %v1847
      %v1919 = vpack.c.bf16 %v1850, %v1849
      %v1920 = vpack.c.bf16 %v1852, %v1851
      %v1921 = vpack.c.bf16 %v1854, %v1853
      %v1922 = vpack.c.bf16 %v1856, %v1855
      %v1923 = vpack.c.bf16 %v1858, %v1857
      %v1924 = vpack.c.bf16 %v1860, %v1859
      %v1989 = vunpack.c.l.b16 %v1861
      %v1990 = vunpack.c.h.b16 %v1861
      %v1991 = vunpack.c.l.b16 %v1862
      %v1992 = vunpack.c.h.b16 %v1862
      %v1993 = vunpack.c.l.b16 %v1863
      %v1994 = vunpack.c.h.b16 %v1863
      %v1995 = vunpack.c.l.b16 %v1864
      %v1996 = vunpack.c.h.b16 %v1864
      %v1997 = vunpack.c.l.b16 %v1865
      %v1998 = vunpack.c.h.b16 %v1865
      %v1999 = vunpack.c.l.b16 %v1866
      %v2000 = vunpack.c.h.b16 %v1866
      %v2001 = vunpack.c.l.b16 %v1867
      %v2002 = vunpack.c.h.b16 %v1867
      %v2003 = vunpack.c.l.b16 %v1868
      %v2004 = vunpack.c.h.b16 %v1868
      %v2005 = vunpack.c.l.b16 %v1869
      %v2006 = vunpack.c.h.b16 %v1869
      %v2007 = vunpack.c.l.b16 %v1870
      %v2008 = vunpack.c.h.b16 %v1870
      %v2009 = vunpack.c.l.b16 %v1871
      %v2010 = vunpack.c.h.b16 %v1871
      %v2011 = vunpack.c.l.b16 %v1872
      %v2012 = vunpack.c.h.b16 %v1872
      %v2013 = vunpack.c.l.b16 %v1873
      %v2014 = vunpack.c.h.b16 %v1873
      %v2015 = vunpack.c.l.b16 %v1874
      %v2016 = vunpack.c.h.b16 %v1874
      %v2017 = vunpack.c.l.b16 %v1875
      %v2018 = vunpack.c.h.b16 %v1875
      %v2019 = vunpack.c.l.b16 %v1876
      %v2020 = vunpack.c.h.b16 %v1876
      %v2021 = vunpack.c.l.b16 %v1877
      %v2022 = vunpack.c.h.b16 %v1877
      %v2023 = vunpack.c.l.b16 %v1878
      %v2024 = vunpack.c.h.b16 %v1878
      %v2025 = vunpack.c.l.b16 %v1879
      %v2026 = vunpack.c.h.b16 %v1879
      %v2027 = vunpack.c.l.b16 %v1880
      %v2028 = vunpack.c.h.b16 %v1880
      %v2029 = vunpack.c.l.b16 %v1881
      %v2030 = vunpack.c.h.b16 %v1881
      %v2031 = vunpack.c.l.b16 %v1882
      %v2032 = vunpack.c.h.b16 %v1882
      %v2033 = vunpack.c.l.b16 %v1883
      %v2034 = vunpack.c.h.b16 %v1883
      %v2035 = vunpack.c.l.b16 %v1884
      %v2036 = vunpack.c.h.b16 %v1884
      %v2037 = vunpack.c.l.b16 %v1885
      %v2038 = vunpack.c.h.b16 %v1885
      %v2039 = vunpack.c.l.b16 %v1886
      %v2040 = vunpack.c.h.b16 %v1886
      %v2041 = vunpack.c.l.b16 %v1887
      %v2042 = vunpack.c.h.b16 %v1887
      %v2043 = vunpack.c.l.b16 %v1888
      %v2044 = vunpack.c.h.b16 %v1888
      %v2045 = vunpack.c.l.b16 %v1889
      %v2046 = vunpack.c.h.b16 %v1889
      %v2047 = vunpack.c.l.b16 %v1890
      %v2048 = vunpack.c.h.b16 %v1890
      %v2049 = vunpack.c.l.b16 %v1891
      %v2050 = vunpack.c.h.b16 %v1891
      %v2051 = vunpack.c.l.b16 %v1892
      %v2052 = vunpack.c.h.b16 %v1892
      %v2053 = vunpack.c.l.b16 %v1893
      %v2054 = vunpack.c.h.b16 %v1893
      %v2055 = vunpack.c.l.b16 %v1894
      %v2056 = vunpack.c.h.b16 %v1894
      %v2057 = vunpack.c.l.b16 %v1895
      %v2058 = vunpack.c.h.b16 %v1895
      %v2059 = vunpack.c.l.b16 %v1896
      %v2060 = vunpack.c.h.b16 %v1896
      %v2061 = vunpack.c.l.b16 %v1897
      %v2062 = vunpack.c.h.b16 %v1897
      %v2063 = vunpack.c.l.b16 %v1898
      %v2064 = vunpack.c.h.b16 %v1898
      %v2065 = vunpack.c.l.b16 %v1899
      %v2066 = vunpack.c.h.b16 %v1899
      %v2067 = vunpack.c.l.b16 %v1900
      %v2068 = vunpack.c.h.b16 %v1900
      %v2069 = vunpack.c.l.b16 %v1901
      %v2070 = vunpack.c.h.b16 %v1901
      %v2071 = vunpack.c.l.b16 %v1902
      %v2072 = vunpack.c.h.b16 %v1902
      %v2073 = vunpack.c.l.b16 %v1903
      %v2074 = vunpack.c.h.b16 %v1903
      %v2075 = vunpack.c.l.b16 %v1904
      %v2076 = vunpack.c.h.b16 %v1904
      %v2077 = vunpack.c.l.b16 %v1905
      %v2078 = vunpack.c.h.b16 %v1905
      %v2079 = vunpack.c.l.b16 %v1906
      %v2080 = vunpack.c.h.b16 %v1906
      %v2081 = vunpack.c.l.b16 %v1907
      %v2082 = vunpack.c.h.b16 %v1907
      %v2083 = vunpack.c.l.b16 %v1908
      %v2084 = vunpack.c.h.b16 %v1908
      %v2085 = vunpack.c.l.b16 %v1909
      %v2086 = vunpack.c.h.b16 %v1909
      %v2087 = vunpack.c.l.b16 %v1910
      %v2088 = vunpack.c.h.b16 %v1910
      %v2089 = vunpack.c.l.b16 %v1911
      %v2090 = vunpack.c.h.b16 %v1911
      %v2091 = vunpack.c.l.b16 %v1912
      %v2092 = vunpack.c.h.b16 %v1912
      %v2093 = vunpack.c.l.b16 %v1913
      %v2094 = vunpack.c.h.b16 %v1913
      %v2095 = vunpack.c.l.b16 %v1914
      %v2096 = vunpack.c.h.b16 %v1914
      %v2097 = vunpack.c.l.b16 %v1915
      %v2098 = vunpack.c.h.b16 %v1915
      %v2099 = vunpack.c.l.b16 %v1916
      %v2100 = vunpack.c.h.b16 %v1916
      %v2101 = vunpack.c.l.b16 %v1917
      %v2102 = vunpack.c.h.b16 %v1917
      %v2103 = vunpack.c.l.b16 %v1918
      %v2104 = vunpack.c.h.b16 %v1918
      %v2105 = vunpack.c.l.b16 %v1919
      %v2106 = vunpack.c.h.b16 %v1919
      %v2107 = vunpack.c.l.b16 %v1920
      %v2108 = vunpack.c.h.b16 %v1920
      %v2109 = vunpack.c.l.b16 %v1921
      %v2110 = vunpack.c.h.b16 %v1921
      %v2111 = vunpack.c.l.b16 %v1922
      %v2112 = vunpack.c.h.b16 %v1922
      %v2113 = vunpack.c.l.b16 %v1923
      %v2114 = vunpack.c.h.b16 %v1923
      %v2115 = vunpack.c.l.b16 %v1924
      %v2116 = vunpack.c.h.b16 %v1924
      %v2117 = vpack.c.b16 %v1989, %v1989
      %v2118 = vpack.c.b16 %v1990, %v1990
      %v2119 = vpack.c.b16 %v1991, %v1991
      %v2120 = vpack.c.b16 %v1992, %v1992
      %v2121 = vpack.c.b16 %v1993, %v1993
      %v2122 = vpack.c.b16 %v1994, %v1994
      %v2123 = vpack.c.b16 %v1995, %v1995
      %v2124 = vpack.c.b16 %v1996, %v1996
      %v2125 = vpack.c.b16 %v1997, %v1997
      %v2126 = vpack.c.b16 %v1998, %v1998
      %v2127 = vpack.c.b16 %v1999, %v1999
      %v2128 = vpack.c.b16 %v2000, %v2000
      %v2129 = vpack.c.b16 %v2001, %v2001
      %v2130 = vpack.c.b16 %v2002, %v2002
      %v2131 = vpack.c.b16 %v2003, %v2003
      %v2132 = vpack.c.b16 %v2004, %v2004
      %v2133 = vpack.c.b16 %v2005, %v2005
      %v2134 = vpack.c.b16 %v2006, %v2006
      %v2135 = vpack.c.b16 %v2007, %v2007
      %v2136 = vpack.c.b16 %v2008, %v2008
      %v2137 = vpack.c.b16 %v2009, %v2009
      %v2138 = vpack.c.b16 %v2010, %v2010
      %v2139 = vpack.c.b16 %v2011, %v2011
      %v2140 = vpack.c.b16 %v2012, %v2012
      %v2141 = vpack.c.b16 %v2013, %v2013
      %v2142 = vpack.c.b16 %v2014, %v2014
      %v2143 = vpack.c.b16 %v2015, %v2015
      %v2144 = vpack.c.b16 %v2016, %v2016
      %v2145 = vpack.c.b16 %v2017, %v2017
      %v2146 = vpack.c.b16 %v2018, %v2018
      %v2147 = vpack.c.b16 %v2019, %v2019
      %v2148 = vpack.c.b16 %v2020, %v2020
      %v2149 = vpack.c.b16 %v2021, %v2021
      %v2150 = vpack.c.b16 %v2022, %v2022
      %v2151 = vpack.c.b16 %v2023, %v2023
      %v2152 = vpack.c.b16 %v2024, %v2024
      %v2153 = vpack.c.b16 %v2025, %v2025
      %v2154 = vpack.c.b16 %v2026, %v2026
      %v2155 = vpack.c.b16 %v2027, %v2027
      %v2156 = vpack.c.b16 %v2028, %v2028
      %v2157 = vpack.c.b16 %v2029, %v2029
      %v2158 = vpack.c.b16 %v2030, %v2030
      %v2159 = vpack.c.b16 %v2031, %v2031
      %v2160 = vpack.c.b16 %v2032, %v2032
      %v2161 = vpack.c.b16 %v2033, %v2033
      %v2162 = vpack.c.b16 %v2034, %v2034
      %v2163 = vpack.c.b16 %v2035, %v2035
      %v2164 = vpack.c.b16 %v2036, %v2036
      %v2165 = vpack.c.b16 %v2037, %v2037
      %v2166 = vpack.c.b16 %v2038, %v2038
      %v2167 = vpack.c.b16 %v2039, %v2039
      %v2168 = vpack.c.b16 %v2040, %v2040
      %v2169 = vpack.c.b16 %v2041, %v2041
      %v2170 = vpack.c.b16 %v2042, %v2042
      %v2171 = vpack.c.b16 %v2043, %v2043
      %v2172 = vpack.c.b16 %v2044, %v2044
      %v2173 = vpack.c.b16 %v2045, %v2045
      %v2174 = vpack.c.b16 %v2046, %v2046
      %v2175 = vpack.c.b16 %v2047, %v2047
      %v2176 = vpack.c.b16 %v2048, %v2048
      %v2177 = vpack.c.b16 %v2049, %v2049
      %v2178 = vpack.c.b16 %v2050, %v2050
      %v2179 = vpack.c.b16 %v2051, %v2051
      %v2180 = vpack.c.b16 %v2052, %v2052
      %v2181 = vpack.c.b16 %v2053, %v2053
      %v2182 = vpack.c.b16 %v2054, %v2054
      %v2183 = vpack.c.b16 %v2055, %v2055
      %v2184 = vpack.c.b16 %v2056, %v2056
      %v2185 = vpack.c.b16 %v2057, %v2057
      %v2186 = vpack.c.b16 %v2058, %v2058
      %v2187 = vpack.c.b16 %v2059, %v2059
      %v2188 = vpack.c.b16 %v2060, %v2060
      %v2189 = vpack.c.b16 %v2061, %v2061
      %v2190 = vpack.c.b16 %v2062, %v2062
      %v2191 = vpack.c.b16 %v2063, %v2063
      %v2192 = vpack.c.b16 %v2064, %v2064
      %v2193 = vpack.c.b16 %v2065, %v2065
      %v2194 = vpack.c.b16 %v2066, %v2066
      %v2195 = vpack.c.b16 %v2067, %v2067
      %v2196 = vpack.c.b16 %v2068, %v2068
      %v2197 = vpack.c.b16 %v2069, %v2069
      %v2198 = vpack.c.b16 %v2070, %v2070
      %v2199 = vpack.c.b16 %v2071, %v2071
      %v2200 = vpack.c.b16 %v2072, %v2072
      %v2201 = vpack.c.b16 %v2073, %v2073
      %v2202 = vpack.c.b16 %v2074, %v2074
      %v2203 = vpack.c.b16 %v2075, %v2075
      %v2204 = vpack.c.b16 %v2076, %v2076
      %v2205 = vpack.c.b16 %v2077, %v2077
      %v2206 = vpack.c.b16 %v2078, %v2078
      %v2207 = vpack.c.b16 %v2079, %v2079
      %v2208 = vpack.c.b16 %v2080, %v2080
      %v2209 = vpack.c.b16 %v2081, %v2081
      %v2210 = vpack.c.b16 %v2082, %v2082
      %v2211 = vpack.c.b16 %v2083, %v2083
      %v2212 = vpack.c.b16 %v2084, %v2084
      %v2213 = vpack.c.b16 %v2085, %v2085
      %v2214 = vpack.c.b16 %v2086, %v2086
      %v2215 = vpack.c.b16 %v2087, %v2087
      %v2216 = vpack.c.b16 %v2088, %v2088
      %v2217 = vpack.c.b16 %v2089, %v2089
      %v2218 = vpack.c.b16 %v2090, %v2090
      %v2219 = vpack.c.b16 %v2091, %v2091
      %v2220 = vpack.c.b16 %v2092, %v2092
      %v2221 = vpack.c.b16 %v2093, %v2093
      %v2222 = vpack.c.b16 %v2094, %v2094
      %v2223 = vpack.c.b16 %v2095, %v2095
      %v2224 = vpack.c.b16 %v2096, %v2096
      %v2225 = vpack.c.b16 %v2097, %v2097
      %v2226 = vpack.c.b16 %v2098, %v2098
      %v2227 = vpack.c.b16 %v2099, %v2099
      %v2228 = vpack.c.b16 %v2100, %v2100
      %v2229 = vpack.c.b16 %v2101, %v2101
      %v2230 = vpack.c.b16 %v2102, %v2102
      %v2231 = vpack.c.b16 %v2103, %v2103
      %v2232 = vpack.c.b16 %v2104, %v2104
      %v2233 = vpack.c.b16 %v2105, %v2105
      %v2234 = vpack.c.b16 %v2106, %v2106
      %v2235 = vpack.c.b16 %v2107, %v2107
      %v2236 = vpack.c.b16 %v2108, %v2108
      %v2237 = vpack.c.b16 %v2109, %v2109
      %v2238 = vpack.c.b16 %v2110, %v2110
      %v2239 = vpack.c.b16 %v2111, %v2111
      %v2240 = vpack.c.b16 %v2112, %v2112
      %v2241 = vpack.c.b16 %v2113, %v2113
      %v2242 = vpack.c.b16 %v2114, %v2114
      %v2243 = vpack.c.b16 %v2115, %v2115
      %v2244 = vpack.c.b16 %v2116, %v2116
      %2373 = vst [vmem:[%s257] sm:$0xf] %v2117
      %2374 = vst [vmem:[%s257 + $0x4] sm:$0xf] %v2118
      %2375 = vst [vmem:[%s257 + $0x8] sm:$0xf] %v2119
      %2376 = vst [vmem:[%s257 + $0xc] sm:$0xf] %v2120
      %2377 = vst [vmem:[%s257 + $0x10] sm:$0xf] %v2121
      %2378 = vst [vmem:[%s257 + $0x14] sm:$0xf] %v2122
      %2379 = vst [vmem:[%s257 + $0x18] sm:$0xf] %v2123
      %2380 = vst [vmem:[%s257 + $0x1c] sm:$0xf] %v2124
      %2381 = vst [vmem:[%s257 + $0x20] sm:$0xf] %v2125
      %2382 = vst [vmem:[%s257 + $0x24] sm:$0xf] %v2126
      %2383 = vst [vmem:[%s257 + $0x28] sm:$0xf] %v2127
      %2384 = vst [vmem:[%s257 + $0x2c] sm:$0xf] %v2128
      %2385 = vst [vmem:[%s257 + $0x30] sm:$0xf] %v2129
      %2386 = vst [vmem:[%s257 + $0x34] sm:$0xf] %v2130
      %2387 = vst [vmem:[%s257 + $0x38] sm:$0xf] %v2131
      %2388 = vst [vmem:[%s257 + $0x3c] sm:$0xf] %v2132
      %2389 = vst [vmem:[%s257 + $0x40] sm:$0xf] %v2133
      %2390 = vst [vmem:[%s257 + $0x44] sm:$0xf] %v2134
      %2391 = vst [vmem:[%s257 + $0x48] sm:$0xf] %v2135
      %2392 = vst [vmem:[%s257 + $0x4c] sm:$0xf] %v2136
      %2393 = vst [vmem:[%s257 + $0x50] sm:$0xf] %v2137
      %2394 = vst [vmem:[%s257 + $0x54] sm:$0xf] %v2138
      %2395 = vst [vmem:[%s257 + $0x58] sm:$0xf] %v2139
      %2396 = vst [vmem:[%s257 + $0x5c] sm:$0xf] %v2140
      %2397 = vst [vmem:[%s257 + $0x60] sm:$0xf] %v2141
      %2398 = vst [vmem:[%s257 + $0x64] sm:$0xf] %v2142
      %2399 = vst [vmem:[%s257 + $0x68] sm:$0xf] %v2143
      %2400 = vst [vmem:[%s257 + $0x6c] sm:$0xf] %v2144
      %2401 = vst [vmem:[%s257 + $0x70] sm:$0xf] %v2145
      %2402 = vst [vmem:[%s257 + $0x74] sm:$0xf] %v2146
      %2403 = vst [vmem:[%s257 + $0x78] sm:$0xf] %v2147
      %2404 = vst [vmem:[%s257 + $0x7c] sm:$0xf] %v2148
      %2405 = vst [vmem:[%s257 + $0x80] sm:$0xf] %v2149
      %2406 = vst [vmem:[%s257 + $0x84] sm:$0xf] %v2150
      %2407 = vst [vmem:[%s257 + $0x88] sm:$0xf] %v2151
      %2408 = vst [vmem:[%s257 + $0x8c] sm:$0xf] %v2152
      %2409 = vst [vmem:[%s257 + $0x90] sm:$0xf] %v2153
      %2410 = vst [vmem:[%s257 + $0x94] sm:$0xf] %v2154
      %2411 = vst [vmem:[%s257 + $0x98] sm:$0xf] %v2155
      %2412 = vst [vmem:[%s257 + $0x9c] sm:$0xf] %v2156
      %2413 = vst [vmem:[%s257 + $0xa0] sm:$0xf] %v2157
      %2414 = vst [vmem:[%s257 + $0xa4] sm:$0xf] %v2158
      %2415 = vst [vmem:[%s257 + $0xa8] sm:$0xf] %v2159
      %2416 = vst [vmem:[%s257 + $0xac] sm:$0xf] %v2160
      %2417 = vst [vmem:[%s257 + $0xb0] sm:$0xf] %v2161
      %2418 = vst [vmem:[%s257 + $0xb4] sm:$0xf] %v2162
      %2419 = vst [vmem:[%s257 + $0xb8] sm:$0xf] %v2163
      %2420 = vst [vmem:[%s257 + $0xbc] sm:$0xf] %v2164
      %2421 = vst [vmem:[%s257 + $0xc0] sm:$0xf] %v2165
      %2422 = vst [vmem:[%s257 + $0xc4] sm:$0xf] %v2166
      %2423 = vst [vmem:[%s257 + $0xc8] sm:$0xf] %v2167
      %2424 = vst [vmem:[%s257 + $0xcc] sm:$0xf] %v2168
      %2425 = vst [vmem:[%s257 + $0xd0] sm:$0xf] %v2169
      %2426 = vst [vmem:[%s257 + $0xd4] sm:$0xf] %v2170
      %2427 = vst [vmem:[%s257 + $0xd8] sm:$0xf] %v2171
      %2428 = vst [vmem:[%s257 + $0xdc] sm:$0xf] %v2172
      %2429 = vst [vmem:[%s257 + $0xe0] sm:$0xf] %v2173
      %2430 = vst [vmem:[%s257 + $0xe4] sm:$0xf] %v2174
      %2431 = vst [vmem:[%s257 + $0xe8] sm:$0xf] %v2175
      %2432 = vst [vmem:[%s257 + $0xec] sm:$0xf] %v2176
      %2433 = vst [vmem:[%s257 + $0xf0] sm:$0xf] %v2177
      %2434 = vst [vmem:[%s257 + $0xf4] sm:$0xf] %v2178
      %2435 = vst [vmem:[%s257 + $0xf8] sm:$0xf] %v2179
      %2436 = vst [vmem:[%s257 + $0xfc] sm:$0xf] %v2180
      %2437 = vst [vmem:[%s257 + $0x100] sm:$0xf] %v2181
      %2438 = vst [vmem:[%s257 + $0x104] sm:$0xf] %v2182
      %2439 = vst [vmem:[%s257 + $0x108] sm:$0xf] %v2183
      %2440 = vst [vmem:[%s257 + $0x10c] sm:$0xf] %v2184
      %2441 = vst [vmem:[%s257 + $0x110] sm:$0xf] %v2185
      %2442 = vst [vmem:[%s257 + $0x114] sm:$0xf] %v2186
      %2443 = vst [vmem:[%s257 + $0x118] sm:$0xf] %v2187
      %2444 = vst [vmem:[%s257 + $0x11c] sm:$0xf] %v2188
      %2445 = vst [vmem:[%s257 + $0x120] sm:$0xf] %v2189
      %2446 = vst [vmem:[%s257 + $0x124] sm:$0xf] %v2190
      %2447 = vst [vmem:[%s257 + $0x128] sm:$0xf] %v2191
      %2448 = vst [vmem:[%s257 + $0x12c] sm:$0xf] %v2192
      %2449 = vst [vmem:[%s257 + $0x130] sm:$0xf] %v2193
      %2450 = vst [vmem:[%s257 + $0x134] sm:$0xf] %v2194
      %2451 = vst [vmem:[%s257 + $0x138] sm:$0xf] %v2195
      %2452 = vst [vmem:[%s257 + $0x13c] sm:$0xf] %v2196
      %2453 = vst [vmem:[%s257 + $0x140] sm:$0xf] %v2197
      %2454 = vst [vmem:[%s257 + $0x144] sm:$0xf] %v2198
      %2455 = vst [vmem:[%s257 + $0x148] sm:$0xf] %v2199
      %2456 = vst [vmem:[%s257 + $0x14c] sm:$0xf] %v2200
      %2457 = vst [vmem:[%s257 + $0x150] sm:$0xf] %v2201
      %2458 = vst [vmem:[%s257 + $0x154] sm:$0xf] %v2202
      %2459 = vst [vmem:[%s257 + $0x158] sm:$0xf] %v2203
      %2460 = vst [vmem:[%s257 + $0x15c] sm:$0xf] %v2204
      %2461 = vst [vmem:[%s257 + $0x160] sm:$0xf] %v2205
      %2462 = vst [vmem:[%s257 + $0x164] sm:$0xf] %v2206
      %2463 = vst [vmem:[%s257 + $0x168] sm:$0xf] %v2207
      %2464 = vst [vmem:[%s257 + $0x16c] sm:$0xf] %v2208
      %2465 = vst [vmem:[%s257 + $0x170] sm:$0xf] %v2209
      %2466 = vst [vmem:[%s257 + $0x174] sm:$0xf] %v2210
      %2467 = vst [vmem:[%s257 + $0x178] sm:$0xf] %v2211
      %2468 = vst [vmem:[%s257 + $0x17c] sm:$0xf] %v2212
      %2469 = vst [vmem:[%s257 + $0x180] sm:$0xf] %v2213
      %2470 = vst [vmem:[%s257 + $0x184] sm:$0xf] %v2214
      %2471 = vst [vmem:[%s257 + $0x188] sm:$0xf] %v2215
      %2472 = vst [vmem:[%s257 + $0x18c] sm:$0xf] %v2216
      %2473 = vst [vmem:[%s257 + $0x190] sm:$0xf] %v2217
      %2474 = vst [vmem:[%s257 + $0x194] sm:$0xf] %v2218
      %2475 = vst [vmem:[%s257 + $0x198] sm:$0xf] %v2219
      %2476 = vst [vmem:[%s257 + $0x19c] sm:$0xf] %v2220
      %2477 = vst [vmem:[%s257 + $0x1a0] sm:$0xf] %v2221
      %2478 = vst [vmem:[%s257 + $0x1a4] sm:$0xf] %v2222
      %2479 = vst [vmem:[%s257 + $0x1a8] sm:$0xf] %v2223
      %2480 = vst [vmem:[%s257 + $0x1ac] sm:$0xf] %v2224
      %2481 = vst [vmem:[%s257 + $0x1b0] sm:$0xf] %v2225
      %2482 = vst [vmem:[%s257 + $0x1b4] sm:$0xf] %v2226
      %2483 = vst [vmem:[%s257 + $0x1b8] sm:$0xf] %v2227
      %2484 = vst [vmem:[%s257 + $0x1bc] sm:$0xf] %v2228
      %2485 = vst [vmem:[%s257 + $0x1c0] sm:$0xf] %v2229
      %2486 = vst [vmem:[%s257 + $0x1c4] sm:$0xf] %v2230
      %2487 = vst [vmem:[%s257 + $0x1c8] sm:$0xf] %v2231
      %2488 = vst [vmem:[%s257 + $0x1cc] sm:$0xf] %v2232
      %2489 = vst [vmem:[%s257 + $0x1d0] sm:$0xf] %v2233
      %2490 = vst [vmem:[%s257 + $0x1d4] sm:$0xf] %v2234
      %2491 = vst [vmem:[%s257 + $0x1d8] sm:$0xf] %v2235
      %2492 = vst [vmem:[%s257 + $0x1dc] sm:$0xf] %v2236
      %2493 = vst [vmem:[%s257 + $0x1e0] sm:$0xf] %v2237
      %2494 = vst [vmem:[%s257 + $0x1e4] sm:$0xf] %v2238
      %2495 = vst [vmem:[%s257 + $0x1e8] sm:$0xf] %v2239
      %2496 = vst [vmem:[%s257 + $0x1ec] sm:$0xf] %v2240
      %2497 = vst [vmem:[%s257 + $0x1f0] sm:$0xf] %v2241
      %2498 = vst [vmem:[%s257 + $0x1f4] sm:$0xf] %v2242
      %2499 = vst [vmem:[%s257 + $0x1f8] sm:$0xf] %v2243
      %2500 = vst [vmem:[%s257 + $0x1fc] sm:$0xf] %v2244
      %s2501 = smul.u32 128, %s19
      %p2502 = scmp.lt.s32.totalorder %s2501, 255
      %s2503 = scalar_select %p2502, %s2501, 255
      %p2504 = scmp.lt.s32.totalorder %s20, 0
      %s2505 = scalar_select %p2504, %s20, 0
      %s2506 = sadd.s32 %s2505, %s2503
      %s2507 = smul.addr %s2506, 4
      %s2508 = scalar_lea.vmem %s3, %s2507
      // Predicated region
      $region33: #{discriminator_forward.8} parent=31 // pred_check
        %p2509 = pneg %p135
      $region34: #{discriminator_forward.8} parent=31 // pred_check_branch
        %2511 = sbr.rel (%p2509) target = $region36
      $region35: #{discriminator_forward.8} parent=31 // pred_region
        %s2512 = smul.u32 128, %s19
      $region36: #{discriminator_forward.8} parent=31 // pred_fallthru
        _
    $region32: #{discriminator_forward.8} parent=5 // pred_fallthru
      _
    %p2513 = scmp.le.s32.totalorder 2, %s9
    // Predicated region
    $region37: #{discriminator_forward.8} parent=5 // pred_check
      %p2514 = pneg %p2513
    $region38: #{discriminator_forward.8} parent=5 // pred_check_branch
      %2516 = sbr.rel (%p2514) target = $region40
    $region39: #{discriminator_forward.8} parent=5 // pred_region
      %s2517 = ssub.s32 %s9, 2
      // Predicated region
      $region41: #{discriminator_forward.8} parent=39 // pred_check
        %p2518 = pneg %p141
      $region42: #{discriminator_forward.8} parent=39 // pred_check_branch
        %2520 = sbr.rel (%p2518) target = $region44
      $region43: #{discriminator_forward.8} parent=39 // pred_region
        %s2521 = smul.u32 128, %s22
        %p2522 = scmp.lt.s32.totalorder %s2521, 255
        %s2523 = scalar_select %p2522, %s2521, 255
        %p2524 = scmp.lt.s32.totalorder %s23, 0
        %s2525 = scalar_select %p2524, %s23, 0
        %s2526 = sadd.s32 %s2525, %s2523
        %s2527 = smul.addr %s2526, 4
        %s2528 = scalar_lea.vmem %s3, %s2527
      $region44: #{discriminator_forward.8} parent=39 // pred_fallthru
        _
    $region40: #{discriminator_forward.8} parent=5 // pred_fallthru
      _
  $region6: #{discriminator_forward.8} parent=0 // loop_footer
    %s13 = sadd.s32 1, %s9
  $region7: #{discriminator_forward.8} parent=0 // loop_footer_branch
    %8 = sbr.rel target = $region3
  $region8: #{discriminator_forward.8} parent=0 // loop_exit
    _

// kernel: discriminator_forward.10
$region0: #{discriminator_forward.10}
  #allocation0 [shape = 'u32[]', space=smem, size = 0x4, offset = 0x4, fixed_abs, tag = 'smem constant byte address 0x4 - core index']
  #allocation1 [shape = 'u32[144,128]{1,0:T(1,128)}', space=vmem, size = 0x12000, scoped, tag = 'internal scratch']
  %s0 = inlined_call_operand.vmem [shape: bf16[512,128], index: 0, kind: input, shape index: {}, may-alias: {0,3}]
  %s1 = inlined_call_operand.vmem [shape: f32[1,128], index: 1, kind: input, shape index: {}]
  %s2 = inlined_call_operand.vmem [shape: f32[1,128], index: 2, kind: input, shape index: {}]
  %s3 = inlined_call_operand.vmem [shape: bf16[512,128], index: 3, kind: output, shape index: {}, may-alias: {0,3}]
  %s4 = sld [smem:[#allocation0]]
  $region22: #{discriminator_forward.10} parent=0
    _
  %s6 = ssub.s32 1, %s4
  %s7 = scalar_select 0, %s6, %s4
  // Predicated region
  $region2: #{discriminator_forward.10} parent=0 // pred_check
    _
  $region3: #{discriminator_forward.10} parent=0 // pred_check_branch
    %9 = sbr.rel (0) target = $region5
  $region4: #{discriminator_forward.10} parent=0 // pred_region
    _
  $region5: #{discriminator_forward.10} parent=0 // pred_fallthru
    _
  // Predicated region
  $region6: #{discriminator_forward.10} parent=0 // pred_check
    _
  $region7: #{discriminator_forward.10} parent=0 // pred_check_branch
    %11 = sbr.rel (0) target = $region9
  $region8: #{discriminator_forward.10} parent=0 // pred_region
    _
  $region9: #{discriminator_forward.10} parent=0 // pred_fallthru
    _
  // Predicated region
  $region10: #{discriminator_forward.10} parent=0 // pred_check
    _
  $region11: #{discriminator_forward.10} parent=0 // pred_check_branch
    %13 = sbr.rel (0) target = $region13
  $region12: #{discriminator_forward.10} parent=0 // pred_region
    _
  $region13: #{discriminator_forward.10} parent=0 // pred_fallthru
    _
  %v14 = vld [vmem:[%s0] sm:$0xf]
  %v15 = vld [vmem:[%s0 + $0x4] sm:$0xf]
  %v16 = vld [vmem:[%s0 + $0x8] sm:$0xf]
  %v17 = vld [vmem:[%s0 + $0xc] sm:$0xf]
  %v18 = vld [vmem:[%s0 + $0x10] sm:$0xf]
  %v19 = vld [vmem:[%s0 + $0x14] sm:$0xf]
  %v20 = vld [vmem:[%s0 + $0x18] sm:$0xf]
  %v21 = vld [vmem:[%s0 + $0x1c] sm:$0xf]
  %v22 = vld [vmem:[%s0 + $0x20] sm:$0xf]
  %v23 = vld [vmem:[%s0 + $0x24] sm:$0xf]
  %v24 = vld [vmem:[%s0 + $0x28] sm:$0xf]
  %v25 = vld [vmem:[%s0 + $0x2c] sm:$0xf]
  %v26 = vld [vmem:[%s0 + $0x30] sm:$0xf]
  %v27 = vld [vmem:[%s0 + $0x34] sm:$0xf]
  %v28 = vld [vmem:[%s0 + $0x38] sm:$0xf]
  %v29 = vld [vmem:[%s0 + $0x3c] sm:$0xf]
  %v30 = vld [vmem:[%s0 + $0x40] sm:$0xf]
  %v31 = vld [vmem:[%s0 + $0x44] sm:$0xf]
  %v32 = vld [vmem:[%s0 + $0x48] sm:$0xf]
  %v33 = vld [vmem:[%s0 + $0x4c] sm:$0xf]
  %v34 = vld [vmem:[%s0 + $0x50] sm:$0xf]
  %v35 = vld [vmem:[%s0 + $0x54] sm:$0xf]
  %v36 = vld [vmem:[%s0 + $0x58] sm:$0xf]
  %v37 = vld [vmem:[%s0 + $0x5c] sm:$0xf]
  %v38 = vld [vmem:[%s0 + $0x60] sm:$0xf]
  %v39 = vld [vmem:[%s0 + $0x64] sm:$0xf]
  %v40 = vld [vmem:[%s0 + $0x68] sm:$0xf]
  %v41 = vld [vmem:[%s0 + $0x6c] sm:$0xf]
  %v42 = vld [vmem:[%s0 + $0x70] sm:$0xf]
  %v43 = vld [vmem:[%s0 + $0x74] sm:$0xf]
  %v44 = vld [vmem:[%s0 + $0x78] sm:$0xf]
  %v45 = vld [vmem:[%s0 + $0x7c] sm:$0xf]
  %v46 = vld [vmem:[%s0 + $0x80] sm:$0xf]
  %v47 = vld [vmem:[%s0 + $0x84] sm:$0xf]
  %v48 = vld [vmem:[%s0 + $0x88] sm:$0xf]
  %v49 = vld [vmem:[%s0 + $0x8c] sm:$0xf]
  %v50 = vld [vmem:[%s0 + $0x90] sm:$0xf]
  %v51 = vld [vmem:[%s0 + $0x94] sm:$0xf]
  %v52 = vld [vmem:[%s0 + $0x98] sm:$0xf]
  %v53 = vld [vmem:[%s0 + $0x9c] sm:$0xf]
  %v54 = vld [vmem:[%s0 + $0xa0] sm:$0xf]
  %v55 = vld [vmem:[%s0 + $0xa4] sm:$0xf]
  %v56 = vld [vmem:[%s0 + $0xa8] sm:$0xf]
  %v57 = vld [vmem:[%s0 + $0xac] sm:$0xf]
  %v58 = vld [vmem:[%s0 + $0xb0] sm:$0xf]
  %v59 = vld [vmem:[%s0 + $0xb4] sm:$0xf]
  %v60 = vld [vmem:[%s0 + $0xb8] sm:$0xf]
  %v61 = vld [vmem:[%s0 + $0xbc] sm:$0xf]
  %v62 = vld [vmem:[%s0 + $0xc0] sm:$0xf]
  %v63 = vld [vmem:[%s0 + $0xc4] sm:$0xf]
  %v64 = vld [vmem:[%s0 + $0xc8] sm:$0xf]
  %v65 = vld [vmem:[%s0 + $0xcc] sm:$0xf]
  %v66 = vld [vmem:[%s0 + $0xd0] sm:$0xf]
  %v67 = vld [vmem:[%s0 + $0xd4] sm:$0xf]
  %v68 = vld [vmem:[%s0 + $0xd8] sm:$0xf]
  %v69 = vld [vmem:[%s0 + $0xdc] sm:$0xf]
  %v70 = vld [vmem:[%s0 + $0xe0] sm:$0xf]
  %v71 = vld [vmem:[%s0 + $0xe4] sm:$0xf]
  %v72 = vld [vmem:[%s0 + $0xe8] sm:$0xf]
  %v73 = vld [vmem:[%s0 + $0xec] sm:$0xf]
  %v74 = vld [vmem:[%s0 + $0xf0] sm:$0xf]
  %v75 = vld [vmem:[%s0 + $0xf4] sm:$0xf]
  %v76 = vld [vmem:[%s0 + $0xf8] sm:$0xf]
  %v77 = vld [vmem:[%s0 + $0xfc] sm:$0xf]
  %v78 = vunpack.c.l.bf16 %v14
  %v79 = vunpack.c.l.bf16 %v15
  %v80 = vunpack.c.l.bf16 %v16
  %v81 = vunpack.c.l.bf16 %v17
  %v82 = vunpack.c.l.bf16 %v18
  %v83 = vunpack.c.l.bf16 %v19
  %v84 = vunpack.c.l.bf16 %v20
  %v85 = vunpack.c.l.bf16 %v21
  %v86 = vunpack.c.l.bf16 %v22
  %v87 = vunpack.c.l.bf16 %v23
  %v88 = vunpack.c.l.bf16 %v24
  %v89 = vunpack.c.l.bf16 %v25
  %v90 = vunpack.c.l.bf16 %v26
  %v91 = vunpack.c.l.bf16 %v27
  %v92 = vunpack.c.l.bf16 %v28
  %v93 = vunpack.c.l.bf16 %v29
  %v94 = vunpack.c.l.bf16 %v30
  %v95 = vunpack.c.l.bf16 %v31
  %v96 = vunpack.c.l.bf16 %v32
  %v97 = vunpack.c.l.bf16 %v33
  %v98 = vunpack.c.l.bf16 %v34
  %v99 = vunpack.c.l.bf16 %v35
  %v100 = vunpack.c.l.bf16 %v36
  %v101 = vunpack.c.l.bf16 %v37
  %v102 = vunpack.c.l.bf16 %v38
  %v103 = vunpack.c.l.bf16 %v39
  %v104 = vunpack.c.l.bf16 %v40
  %v105 = vunpack.c.l.bf16 %v41
  %v106 = vunpack.c.l.bf16 %v42
  %v107 = vunpack.c.l.bf16 %v43
  %v108 = vunpack.c.l.bf16 %v44
  %v109 = vunpack.c.l.bf16 %v45
  %v110 = vunpack.c.l.bf16 %v46
  %v111 = vunpack.c.l.bf16 %v47
  %v112 = vunpack.c.l.bf16 %v48
  %v113 = vunpack.c.l.bf16 %v49
  %v114 = vunpack.c.l.bf16 %v50
  %v115 = vunpack.c.l.bf16 %v51
  %v116 = vunpack.c.l.bf16 %v52
  %v117 = vunpack.c.l.bf16 %v53
  %v118 = vunpack.c.l.bf16 %v54
  %v119 = vunpack.c.l.bf16 %v55
  %v120 = vunpack.c.l.bf16 %v56
  %v121 = vunpack.c.l.bf16 %v57
  %v122 = vunpack.c.l.bf16 %v58
  %v123 = vunpack.c.l.bf16 %v59
  %v124 = vunpack.c.l.bf16 %v60
  %v125 = vunpack.c.l.bf16 %v61
  %v126 = vunpack.c.l.bf16 %v62
  %v127 = vunpack.c.l.bf16 %v63
  %v128 = vunpack.c.l.bf16 %v64
  %v129 = vunpack.c.l.bf16 %v65
  %v130 = vunpack.c.l.bf16 %v66
  %v131 = vunpack.c.l.bf16 %v67
  %v132 = vunpack.c.l.bf16 %v68
  %v133 = vunpack.c.l.bf16 %v69
  %v134 = vunpack.c.l.bf16 %v70
  %v135 = vunpack.c.l.bf16 %v71
  %v136 = vunpack.c.l.bf16 %v72
  %v137 = vunpack.c.l.bf16 %v73
  %v138 = vunpack.c.l.bf16 %v74
  %v139 = vunpack.c.l.bf16 %v75
  %v140 = vunpack.c.l.bf16 %v76
  %v141 = vunpack.c.l.bf16 %v77
  %v142 = vld [vmem:[%s1] sm:$0x1]
  %v144 = vlaneseq
  %v145 = vshrl.u32 %v144, 7
  %v146 = vsub.s32 0, %v145
  %v147 = vrot.slane %v142, %v146
  %v149 = vmul.f32 %v78, %v147
  %v150 = vmul.f32 %v79, %v147
  %v151 = vmul.f32 %v80, %v147
  %v152 = vmul.f32 %v81, %v147
  %v153 = vmul.f32 %v82, %v147
  %v154 = vmul.f32 %v83, %v147
  %v155 = vmul.f32 %v84, %v147
  %v156 = vmul.f32 %v85, %v147
  %v157 = vmul.f32 %v86, %v147
  %v158 = vmul.f32 %v87, %v147
  %v159 = vmul.f32 %v88, %v147
  %v160 = vmul.f32 %v89, %v147
  %v161 = vmul.f32 %v90, %v147
  %v162 = vmul.f32 %v91, %v147
  %v163 = vmul.f32 %v92, %v147
  %v164 = vmul.f32 %v93, %v147
  %v165 = vmul.f32 %v94, %v147
  %v166 = vmul.f32 %v95, %v147
  %v167 = vmul.f32 %v96, %v147
  %v168 = vmul.f32 %v97, %v147
  %v169 = vmul.f32 %v98, %v147
  %v170 = vmul.f32 %v99, %v147
  %v171 = vmul.f32 %v100, %v147
  %v172 = vmul.f32 %v101, %v147
  %v173 = vmul.f32 %v102, %v147
  %v174 = vmul.f32 %v103, %v147
  %v175 = vmul.f32 %v104, %v147
  %v176 = vmul.f32 %v105, %v147
  %v177 = vmul.f32 %v106, %v147
  %v178 = vmul.f32 %v107, %v147
  %v179 = vmul.f32 %v108, %v147
  %v180 = vmul.f32 %v109, %v147
  %v181 = vmul.f32 %v110, %v147
  %v182 = vmul.f32 %v111, %v147
  %v183 = vmul.f32 %v112, %v147
  %v184 = vmul.f32 %v113, %v147
  %v185 = vmul.f32 %v114, %v147
  %v186 = vmul.f32 %v115, %v147
  %v187 = vmul.f32 %v116, %v147
  %v188 = vmul.f32 %v117, %v147
  %v189 = vmul.f32 %v118, %v147
  %v190 = vmul.f32 %v119, %v147
  %v191 = vmul.f32 %v120, %v147
  %v192 = vmul.f32 %v121, %v147
  %v193 = vmul.f32 %v122, %v147
  %v194 = vmul.f32 %v123, %v147
  %v195 = vmul.f32 %v124, %v147
  %v196 = vmul.f32 %v125, %v147
  %v197 = vmul.f32 %v126, %v147
  %v198 = vmul.f32 %v127, %v147
  %v199 = vmul.f32 %v128, %v147
  %v200 = vmul.f32 %v129, %v147
  %v201 = vmul.f32 %v130, %v147
  %v202 = vmul.f32 %v131, %v147
  %v203 = vmul.f32 %v132, %v147
  %v204 = vmul.f32 %v133, %v147
  %v205 = vmul.f32 %v134, %v147
  %v206 = vmul.f32 %v135, %v147
  %v207 = vmul.f32 %v136, %v147
  %v208 = vmul.f32 %v137, %v147
  %v209 = vmul.f32 %v138, %v147
  %v210 = vmul.f32 %v139, %v147
  %v211 = vmul.f32 %v140, %v147
  %v212 = vmul.f32 %v141, %v147
  %v213 = vld [vmem:[%s2] sm:$0x1]
  %v215 = vlaneseq
  %v216 = vshrl.u32 %v215, 7
  %v217 = vsub.s32 0, %v216
  %v218 = vrot.slane %v213, %v217
  %v220 = vadd.f32 %v149, %v218
  %v221 = vadd.f32 %v150, %v218
  %v222 = vadd.f32 %v151, %v218
  %v223 = vadd.f32 %v152, %v218
  %v224 = vadd.f32 %v153, %v218
  %v225 = vadd.f32 %v154, %v218
  %v226 = vadd.f32 %v155, %v218
  %v227 = vadd.f32 %v156, %v218
  %v228 = vadd.f32 %v157, %v218
  %v229 = vadd.f32 %v158, %v218
  %v230 = vadd.f32 %v159, %v218
  %v231 = vadd.f32 %v160, %v218
  %v232 = vadd.f32 %v161, %v218
  %v233 = vadd.f32 %v162, %v218
  %v234 = vadd.f32 %v163, %v218
  %v235 = vadd.f32 %v164, %v218
  %v236 = vadd.f32 %v165, %v218
  %v237 = vadd.f32 %v166, %v218
  %v238 = vadd.f32 %v167, %v218
  %v239 = vadd.f32 %v168, %v218
  %v240 = vadd.f32 %v169, %v218
  %v241 = vadd.f32 %v170, %v218
  %v242 = vadd.f32 %v171, %v218
  %v243 = vadd.f32 %v172, %v218
  %v244 = vadd.f32 %v173, %v218
  %v245 = vadd.f32 %v174, %v218
  %v246 = vadd.f32 %v175, %v218
  %v247 = vadd.f32 %v176, %v218
  %v248 = vadd.f32 %v177, %v218
  %v249 = vadd.f32 %v178, %v218
  %v250 = vadd.f32 %v179, %v218
  %v251 = vadd.f32 %v180, %v218
  %v252 = vadd.f32 %v181, %v218
  %v253 = vadd.f32 %v182, %v218
  %v254 = vadd.f32 %v183, %v218
  %v255 = vadd.f32 %v184, %v218
  %v256 = vadd.f32 %v185, %v218
  %v257 = vadd.f32 %v186, %v218
  %v258 = vadd.f32 %v187, %v218
  %v259 = vadd.f32 %v188, %v218
  %v260 = vadd.f32 %v189, %v218
  %v261 = vadd.f32 %v190, %v218
  %v262 = vadd.f32 %v191, %v218
  %v263 = vadd.f32 %v192, %v218
  %v264 = vadd.f32 %v193, %v218
  %v265 = vadd.f32 %v194, %v218
  %v266 = vadd.f32 %v195, %v218
  %v267 = vadd.f32 %v196, %v218
  %v268 = vadd.f32 %v197, %v218
  %v269 = vadd.f32 %v198, %v218
  %v270 = vadd.f32 %v199, %v218
  %v271 = vadd.f32 %v200, %v218
  %v272 = vadd.f32 %v201, %v218
  %v273 = vadd.f32 %v202, %v218
  %v274 = vadd.f32 %v203, %v218
  %v275 = vadd.f32 %v204, %v218
  %v276 = vadd.f32 %v205, %v218
  %v277 = vadd.f32 %v206, %v218
  %v278 = vadd.f32 %v207, %v218
  %v279 = vadd.f32 %v208, %v218
  %v280 = vadd.f32 %v209, %v218
  %v281 = vadd.f32 %v210, %v218
  %v282 = vadd.f32 %v211, %v218
  %v283 = vadd.f32 %v212, %v218
  %vm284 = vcmp.ge.f32.partialorder %v220, 0.0
  %vm285 = vcmp.ge.f32.partialorder %v221, 0.0
  %vm286 = vcmp.ge.f32.partialorder %v222, 0.0
  %vm287 = vcmp.ge.f32.partialorder %v223, 0.0
  %vm288 = vcmp.ge.f32.partialorder %v224, 0.0
  %vm289 = vcmp.ge.f32.partialorder %v225, 0.0
  %vm290 = vcmp.ge.f32.partialorder %v226, 0.0
  %vm291 = vcmp.ge.f32.partialorder %v227, 0.0
  %vm292 = vcmp.ge.f32.partialorder %v228, 0.0
  %vm293 = vcmp.ge.f32.partialorder %v229, 0.0
  %vm294 = vcmp.ge.f32.partialorder %v230, 0.0
  %vm295 = vcmp.ge.f32.partialorder %v231, 0.0
  %vm296 = vcmp.ge.f32.partialorder %v232, 0.0
  %vm297 = vcmp.ge.f32.partialorder %v233, 0.0
  %vm298 = vcmp.ge.f32.partialorder %v234, 0.0
  %vm299 = vcmp.ge.f32.partialorder %v235, 0.0
  %vm300 = vcmp.ge.f32.partialorder %v236, 0.0
  %vm301 = vcmp.ge.f32.partialorder %v237, 0.0
  %vm302 = vcmp.ge.f32.partialorder %v238, 0.0
  %vm303 = vcmp.ge.f32.partialorder %v239, 0.0
  %vm304 = vcmp.ge.f32.partialorder %v240, 0.0
  %vm305 = vcmp.ge.f32.partialorder %v241, 0.0
  %vm306 = vcmp.ge.f32.partialorder %v242, 0.0
  %vm307 = vcmp.ge.f32.partialorder %v243, 0.0
  %vm308 = vcmp.ge.f32.partialorder %v244, 0.0
  %vm309 = vcmp.ge.f32.partialorder %v245, 0.0
  %vm310 = vcmp.ge.f32.partialorder %v246, 0.0
  %vm311 = vcmp.ge.f32.partialorder %v247, 0.0
  %vm312 = vcmp.ge.f32.partialorder %v248, 0.0
  %vm313 = vcmp.ge.f32.partialorder %v249, 0.0
  %vm314 = vcmp.ge.f32.partialorder %v250, 0.0
  %vm315 = vcmp.ge.f32.partialorder %v251, 0.0
  %vm316 = vcmp.ge.f32.partialorder %v252, 0.0
  %vm317 = vcmp.ge.f32.partialorder %v253, 0.0
  %vm318 = vcmp.ge.f32.partialorder %v254, 0.0
  %vm319 = vcmp.ge.f32.partialorder %v255, 0.0
  %vm320 = vcmp.ge.f32.partialorder %v256, 0.0
  %vm321 = vcmp.ge.f32.partialorder %v257, 0.0
  %vm322 = vcmp.ge.f32.partialorder %v258, 0.0
  %vm323 = vcmp.ge.f32.partialorder %v259, 0.0
  %vm324 = vcmp.ge.f32.partialorder %v260, 0.0
  %vm325 = vcmp.ge.f32.partialorder %v261, 0.0
  %vm326 = vcmp.ge.f32.partialorder %v262, 0.0
  %vm327 = vcmp.ge.f32.partialorder %v263, 0.0
  %vm328 = vcmp.ge.f32.partialorder %v264, 0.0
  %vm329 = vcmp.ge.f32.partialorder %v265, 0.0
  %vm330 = vcmp.ge.f32.partialorder %v266, 0.0
  %vm331 = vcmp.ge.f32.partialorder %v267, 0.0
  %vm332 = vcmp.ge.f32.partialorder %v268, 0.0
  %vm333 = vcmp.ge.f32.partialorder %v269, 0.0
  %vm334 = vcmp.ge.f32.partialorder %v270, 0.0
  %vm335 = vcmp.ge.f32.partialorder %v271, 0.0
  %vm336 = vcmp.ge.f32.partialorder %v272, 0.0
  %vm337 = vcmp.ge.f32.partialorder %v273, 0.0
  %vm338 = vcmp.ge.f32.partialorder %v274, 0.0
  %vm339 = vcmp.ge.f32.partialorder %v275, 0.0
  %vm340 = vcmp.ge.f32.partialorder %v276, 0.0
  %vm341 = vcmp.ge.f32.partialorder %v277, 0.0
  %vm342 = vcmp.ge.f32.partialorder %v278, 0.0
  %vm343 = vcmp.ge.f32.partialorder %v279, 0.0
  %vm344 = vcmp.ge.f32.partialorder %v280, 0.0
  %vm345 = vcmp.ge.f32.partialorder %v281, 0.0
  %vm346 = vcmp.ge.f32.partialorder %v282, 0.0
  %vm347 = vcmp.ge.f32.partialorder %v283, 0.0
  %v348 = vmul.f32 %v220, 0.2
  %v349 = vmul.f32 %v221, 0.2
  %v350 = vmul.f32 %v222, 0.2
  %v351 = vmul.f32 %v223, 0.2
  %v352 = vmul.f32 %v224, 0.2
  %v353 = vmul.f32 %v225, 0.2
  %v354 = vmul.f32 %v226, 0.2
  %v355 = vmul.f32 %v227, 0.2
  %v356 = vmul.f32 %v228, 0.2
  %v357 = vmul.f32 %v229, 0.2
  %v358 = vmul.f32 %v230, 0.2
  %v359 = vmul.f32 %v231, 0.2
  %v360 = vmul.f32 %v232, 0.2
  %v361 = vmul.f32 %v233, 0.2
  %v362 = vmul.f32 %v234, 0.2
  %v363 = vmul.f32 %v235, 0.2
  %v364 = vmul.f32 %v236, 0.2
  %v365 = vmul.f32 %v237, 0.2
  %v366 = vmul.f32 %v238, 0.2
  %v367 = vmul.f32 %v239, 0.2
  %v368 = vmul.f32 %v240, 0.2
  %v369 = vmul.f32 %v241, 0.2
  %v370 = vmul.f32 %v242, 0.2
  %v371 = vmul.f32 %v243, 0.2
  %v372 = vmul.f32 %v244, 0.2
  %v373 = vmul.f32 %v245, 0.2
  %v374 = vmul.f32 %v246, 0.2
  %v375 = vmul.f32 %v247, 0.2
  %v376 = vmul.f32 %v248, 0.2
  %v377 = vmul.f32 %v249, 0.2
  %v378 = vmul.f32 %v250, 0.2
  %v379 = vmul.f32 %v251, 0.2
  %v380 = vmul.f32 %v252, 0.2
  %v381 = vmul.f32 %v253, 0.2
  %v382 = vmul.f32 %v254, 0.2
  %v383 = vmul.f32 %v255, 0.2
  %v384 = vmul.f32 %v256, 0.2
  %v385 = vmul.f32 %v257, 0.2
  %v386 = vmul.f32 %v258, 0.2
  %v387 = vmul.f32 %v259, 0.2
  %v388 = vmul.f32 %v260, 0.2
  %v389 = vmul.f32 %v261, 0.2
  %v390 = vmul.f32 %v262, 0.2
  %v391 = vmul.f32 %v263, 0.2
  %v392 = vmul.f32 %v264, 0.2
  %v393 = vmul.f32 %v265, 0.2
  %v394 = vmul.f32 %v266, 0.2
  %v395 = vmul.f32 %v267, 0.2
  %v396 = vmul.f32 %v268, 0.2
  %v397 = vmul.f32 %v269, 0.2
  %v398 = vmul.f32 %v270, 0.2
  %v399 = vmul.f32 %v271, 0.2
  %v400 = vmul.f32 %v272, 0.2
  %v401 = vmul.f32 %v273, 0.2
  %v402 = vmul.f32 %v274, 0.2
  %v403 = vmul.f32 %v275, 0.2
  %v404 = vmul.f32 %v276, 0.2
  %v405 = vmul.f32 %v277, 0.2
  %v406 = vmul.f32 %v278, 0.2
  %v407 = vmul.f32 %v279, 0.2
  %v408 = vmul.f32 %v280, 0.2
  %v409 = vmul.f32 %v281, 0.2
  %v410 = vmul.f32 %v282, 0.2
  %v411 = vmul.f32 %v283, 0.2
  %v412 = vsel %vm284, %v220, %v348
  %v413 = vsel %vm285, %v221, %v349
  %v414 = vsel %vm286, %v222, %v350
  %v415 = vsel %vm287, %v223, %v351
  %v416 = vsel %vm288, %v224, %v352
  %v417 = vsel %vm289, %v225, %v353
  %v418 = vsel %vm290, %v226, %v354
  %v419 = vsel %vm291, %v227, %v355
  %v420 = vsel %vm292, %v228, %v356
  %v421 = vsel %vm293, %v229, %v357
  %v422 = vsel %vm294, %v230, %v358
  %v423 = vsel %vm295, %v231, %v359
  %v424 = vsel %vm296, %v232, %v360
  %v425 = vsel %vm297, %v233, %v361
  %v426 = vsel %vm298, %v234, %v362
  %v427 = vsel %vm299, %v235, %v363
  %v428 = vsel %vm300, %v236, %v364
  %v429 = vsel %vm301, %v237, %v365
  %v430 = vsel %vm302, %v238, %v366
  %v431 = vsel %vm303, %v239, %v367
  %v432 = vsel %vm304, %v240, %v368
  %v433 = vsel %vm305, %v241, %v369
  %v434 = vsel %vm306, %v242, %v370
  %v435 = vsel %vm307, %v243, %v371
  %v436 = vsel %vm308, %v244, %v372
  %v437 = vsel %vm309, %v245, %v373
  %v438 = vsel %vm310, %v246, %v374
  %v439 = vsel %vm311, %v247, %v375
  %v440 = vsel %vm312, %v248, %v376
  %v441 = vsel %vm313, %v249, %v377
  %v442 = vsel %vm314, %v250, %v378
  %v443 = vsel %vm315, %v251, %v379
  %v444 = vsel %vm316, %v252, %v380
  %v445 = vsel %vm317, %v253, %v381
  %v446 = vsel %vm318, %v254, %v382
  %v447 = vsel %vm319, %v255, %v383
  %v448 = vsel %vm320, %v256, %v384
  %v449 = vsel %vm321, %v257, %v385
  %v450 = vsel %vm322, %v258, %v386
  %v451 = vsel %vm323, %v259, %v387
  %v452 = vsel %vm324, %v260, %v388
  %v453 = vsel %vm325, %v261, %v389
  %v454 = vsel %vm326, %v262, %v390
  %v455 = vsel %vm327, %v263, %v391
  %v456 = vsel %vm328, %v264, %v392
  %v457 = vsel %vm329, %v265, %v393
  %v458 = vsel %vm330, %v266, %v394
  %v459 = vsel %vm331, %v267, %v395
  %v460 = vsel %vm332, %v268, %v396
  %v461 = vsel %vm333, %v269, %v397
  %v462 = vsel %vm334, %v270, %v398
  %v463 = vsel %vm335, %v271, %v399
  %v464 = vsel %vm336, %v272, %v400
  %v465 = vsel %vm337, %v273, %v401
  %v466 = vsel %vm338, %v274, %v402
  %v467 = vsel %vm339, %v275, %v403
  %v468 = vsel %vm340, %v276, %v404
  %v469 = vsel %vm341, %v277, %v405
  %v470 = vsel %vm342, %v278, %v406
  %v471 = vsel %vm343, %v279, %v407
  %v472 = vsel %vm344, %v280, %v408
  %v473 = vsel %vm345, %v281, %v409
  %v474 = vsel %vm346, %v282, %v410
  %v475 = vsel %vm347, %v283, %v411
  %v476 = vpack.c.bf16 %v413, %v412
  %v477 = vpack.c.bf16 %v415, %v414
  %v478 = vpack.c.bf16 %v417, %v416
  %v479 = vpack.c.bf16 %v419, %v418
  %v480 = vpack.c.bf16 %v421, %v420
  %v481 = vpack.c.bf16 %v423, %v422
  %v482 = vpack.c.bf16 %v425, %v424
  %v483 = vpack.c.bf16 %v427, %v426
  %v484 = vpack.c.bf16 %v429, %v428
  %v485 = vpack.c.bf16 %v431, %v430
  %v486 = vpack.c.bf16 %v433, %v432
  %v487 = vpack.c.bf16 %v435, %v434
  %v488 = vpack.c.bf16 %v437, %v436
  %v489 = vpack.c.bf16 %v439, %v438
  %v490 = vpack.c.bf16 %v441, %v440
  %v491 = vpack.c.bf16 %v443, %v442
  %v492 = vpack.c.bf16 %v445, %v444
  %v493 = vpack.c.bf16 %v447, %v446
  %v494 = vpack.c.bf16 %v449, %v448
  %v495 = vpack.c.bf16 %v451, %v450
  %v496 = vpack.c.bf16 %v453, %v452
  %v497 = vpack.c.bf16 %v455, %v454
  %v498 = vpack.c.bf16 %v457, %v456
  %v499 = vpack.c.bf16 %v459, %v458
  %v500 = vpack.c.bf16 %v461, %v460
  %v501 = vpack.c.bf16 %v463, %v462
  %v502 = vpack.c.bf16 %v465, %v464
  %v503 = vpack.c.bf16 %v467, %v466
  %v504 = vpack.c.bf16 %v469, %v468
  %v505 = vpack.c.bf16 %v471, %v470
  %v506 = vpack.c.bf16 %v473, %v472
  %v507 = vpack.c.bf16 %v475, %v474
  %v540 = vunpack.c.l.b16 %v476
  %v541 = vunpack.c.h.b16 %v476
  %v542 = vunpack.c.l.b16 %v477
  %v543 = vunpack.c.h.b16 %v477
  %v544 = vunpack.c.l.b16 %v478
  %v545 = vunpack.c.h.b16 %v478
  %v546 = vunpack.c.l.b16 %v479
  %v547 = vunpack.c.h.b16 %v479
  %v548 = vunpack.c.l.b16 %v480
  %v549 = vunpack.c.h.b16 %v480
  %v550 = vunpack.c.l.b16 %v481
  %v551 = vunpack.c.h.b16 %v481
  %v552 = vunpack.c.l.b16 %v482
  %v553 = vunpack.c.h.b16 %v482
  %v554 = vunpack.c.l.b16 %v483
  %v555 = vunpack.c.h.b16 %v483
  %v556 = vunpack.c.l.b16 %v484
  %v557 = vunpack.c.h.b16 %v484
  %v558 = vunpack.c.l.b16 %v485
  %v559 = vunpack.c.h.b16 %v485
  %v560 = vunpack.c.l.b16 %v486
  %v561 = vunpack.c.h.b16 %v486
  %v562 = vunpack.c.l.b16 %v487
  %v563 = vunpack.c.h.b16 %v487
  %v564 = vunpack.c.l.b16 %v488
  %v565 = vunpack.c.h.b16 %v488
  %v566 = vunpack.c.l.b16 %v489
  %v567 = vunpack.c.h.b16 %v489
  %v568 = vunpack.c.l.b16 %v490
  %v569 = vunpack.c.h.b16 %v490
  %v570 = vunpack.c.l.b16 %v491
  %v571 = vunpack.c.h.b16 %v491
  %v572 = vunpack.c.l.b16 %v492
  %v573 = vunpack.c.h.b16 %v492
  %v574 = vunpack.c.l.b16 %v493
  %v575 = vunpack.c.h.b16 %v493
  %v576 = vunpack.c.l.b16 %v494
  %v577 = vunpack.c.h.b16 %v494
  %v578 = vunpack.c.l.b16 %v495
  %v579 = vunpack.c.h.b16 %v495
  %v580 = vunpack.c.l.b16 %v496
  %v581 = vunpack.c.h.b16 %v496
  %v582 = vunpack.c.l.b16 %v497
  %v583 = vunpack.c.h.b16 %v497
  %v584 = vunpack.c.l.b16 %v498
  %v585 = vunpack.c.h.b16 %v498
  %v586 = vunpack.c.l.b16 %v499
  %v587 = vunpack.c.h.b16 %v499
  %v588 = vunpack.c.l.b16 %v500
  %v589 = vunpack.c.h.b16 %v500
  %v590 = vunpack.c.l.b16 %v501
  %v591 = vunpack.c.h.b16 %v501
  %v592 = vunpack.c.l.b16 %v502
  %v593 = vunpack.c.h.b16 %v502
  %v594 = vunpack.c.l.b16 %v503
  %v595 = vunpack.c.h.b16 %v503
  %v596 = vunpack.c.l.b16 %v504
  %v597 = vunpack.c.h.b16 %v504
  %v598 = vunpack.c.l.b16 %v505
  %v599 = vunpack.c.h.b16 %v505
  %v600 = vunpack.c.l.b16 %v506
  %v601 = vunpack.c.h.b16 %v506
  %v602 = vunpack.c.l.b16 %v507
  %v603 = vunpack.c.h.b16 %v507
  %v604 = vpack.c.b16 %v540, %v540
  %v605 = vpack.c.b16 %v541, %v541
  %v606 = vpack.c.b16 %v542, %v542
  %v607 = vpack.c.b16 %v543, %v543
  %v608 = vpack.c.b16 %v544, %v544
  %v609 = vpack.c.b16 %v545, %v545
  %v610 = vpack.c.b16 %v546, %v546
  %v611 = vpack.c.b16 %v547, %v547
  %v612 = vpack.c.b16 %v548, %v548
  %v613 = vpack.c.b16 %v549, %v549
  %v614 = vpack.c.b16 %v550, %v550
  %v615 = vpack.c.b16 %v551, %v551
  %v616 = vpack.c.b16 %v552, %v552
  %v617 = vpack.c.b16 %v553, %v553
  %v618 = vpack.c.b16 %v554, %v554
  %v619 = vpack.c.b16 %v555, %v555
  %v620 = vpack.c.b16 %v556, %v556
  %v621 = vpack.c.b16 %v557, %v557
  %v622 = vpack.c.b16 %v558, %v558
  %v623 = vpack.c.b16 %v559, %v559
  %v624 = vpack.c.b16 %v560, %v560
  %v625 = vpack.c.b16 %v561, %v561
  %v626 = vpack.c.b16 %v562, %v562
  %v627 = vpack.c.b16 %v563, %v563
  %v628 = vpack.c.b16 %v564, %v564
  %v629 = vpack.c.b16 %v565, %v565
  %v630 = vpack.c.b16 %v566, %v566
  %v631 = vpack.c.b16 %v567, %v567
  %v632 = vpack.c.b16 %v568, %v568
  %v633 = vpack.c.b16 %v569, %v569
  %v634 = vpack.c.b16 %v570, %v570
  %v635 = vpack.c.b16 %v571, %v571
  %v636 = vpack.c.b16 %v572, %v572
  %v637 = vpack.c.b16 %v573, %v573
  %v638 = vpack.c.b16 %v574, %v574
  %v639 = vpack.c.b16 %v575, %v575
  %v640 = vpack.c.b16 %v576, %v576
  %v641 = vpack.c.b16 %v577, %v577
  %v642 = vpack.c.b16 %v578, %v578
  %v643 = vpack.c.b16 %v579, %v579
  %v644 = vpack.c.b16 %v580, %v580
  %v645 = vpack.c.b16 %v581, %v581
  %v646 = vpack.c.b16 %v582, %v582
  %v647 = vpack.c.b16 %v583, %v583
  %v648 = vpack.c.b16 %v584, %v584
  %v649 = vpack.c.b16 %v585, %v585
  %v650 = vpack.c.b16 %v586, %v586
  %v651 = vpack.c.b16 %v587, %v587
  %v652 = vpack.c.b16 %v588, %v588
  %v653 = vpack.c.b16 %v589, %v589
  %v654 = vpack.c.b16 %v590, %v590
  %v655 = vpack.c.b16 %v591, %v591
  %v656 = vpack.c.b16 %v592, %v592
  %v657 = vpack.c.b16 %v593, %v593
  %v658 = vpack.c.b16 %v594, %v594
  %v659 = vpack.c.b16 %v595, %v595
  %v660 = vpack.c.b16 %v596, %v596
  %v661 = vpack.c.b16 %v597, %v597
  %v662 = vpack.c.b16 %v598, %v598
  %v663 = vpack.c.b16 %v599, %v599
  %v664 = vpack.c.b16 %v600, %v600
  %v665 = vpack.c.b16 %v601, %v601
  %v666 = vpack.c.b16 %v602, %v602
  %v667 = vpack.c.b16 %v603, %v603
  %732 = vst [vmem:[%s3] sm:$0xf] %v604
  %733 = vst [vmem:[%s3 + $0x4] sm:$0xf] %v605
  %734 = vst [vmem:[%s3 + $0x8] sm:$0xf] %v606
  %735 = vst [vmem:[%s3 + $0xc] sm:$0xf] %v607
  %736 = vst [vmem:[%s3 + $0x10] sm:$0xf] %v608
  %737 = vst [vmem:[%s3 + $0x14] sm:$0xf] %v609
  %738 = vst [vmem:[%s3 + $0x18] sm:$0xf] %v610
  %739 = vst [vmem:[%s3 + $0x1c] sm:$0xf] %v611
  %740 = vst [vmem:[%s3 + $0x20] sm:$0xf] %v612
  %741 = vst [vmem:[%s3 + $0x24] sm:$0xf] %v613
  %742 = vst [vmem:[%s3 + $0x28] sm:$0xf] %v614
  %743 = vst [vmem:[%s3 + $0x2c] sm:$0xf] %v615
  %744 = vst [vmem:[%s3 + $0x30] sm:$0xf] %v616
  %745 = vst [vmem:[%s3 + $0x34] sm:$0xf] %v617
  %746 = vst [vmem:[%s3 + $0x38] sm:$0xf] %v618
  %747 = vst [vmem:[%s3 + $0x3c] sm:$0xf] %v619
  %748 = vst [vmem:[%s3 + $0x40] sm:$0xf] %v620
  %749 = vst [vmem:[%s3 + $0x44] sm:$0xf] %v621
  %750 = vst [vmem:[%s3 + $0x48] sm:$0xf] %v622
  %751 = vst [vmem:[%s3 + $0x4c] sm:$0xf] %v623
  %752 = vst [vmem:[%s3 + $0x50] sm:$0xf] %v624
  %753 = vst [vmem:[%s3 + $0x54] sm:$0xf] %v625
  %754 = vst [vmem:[%s3 + $0x58] sm:$0xf] %v626
  %755 = vst [vmem:[%s3 + $0x5c] sm:$0xf] %v627
  %756 = vst [vmem:[%s3 + $0x60] sm:$0xf] %v628
  %757 = vst [vmem:[%s3 + $0x64] sm:$0xf] %v629
  %758 = vst [vmem:[%s3 + $0x68] sm:$0xf] %v630
  %759 = vst [vmem:[%s3 + $0x6c] sm:$0xf] %v631
  %760 = vst [vmem:[%s3 + $0x70] sm:$0xf] %v632
  %761 = vst [vmem:[%s3 + $0x74] sm:$0xf] %v633
  %762 = vst [vmem:[%s3 + $0x78] sm:$0xf] %v634
  %763 = vst [vmem:[%s3 + $0x7c] sm:$0xf] %v635
  %764 = vst [vmem:[%s3 + $0x80] sm:$0xf] %v636
  %765 = vst [vmem:[%s3 + $0x84] sm:$0xf] %v637
  %766 = vst [vmem:[%s3 + $0x88] sm:$0xf] %v638
  %767 = vst [vmem:[%s3 + $0x8c] sm:$0xf] %v639
  %768 = vst [vmem:[%s3 + $0x90] sm:$0xf] %v640
  %769 = vst [vmem:[%s3 + $0x94] sm:$0xf] %v641
  %770 = vst [vmem:[%s3 + $0x98] sm:$0xf] %v642
  %771 = vst [vmem:[%s3 + $0x9c] sm:$0xf] %v643
  %772 = vst [vmem:[%s3 + $0xa0] sm:$0xf] %v644
  %773 = vst [vmem:[%s3 + $0xa4] sm:$0xf] %v645
  %774 = vst [vmem:[%s3 + $0xa8] sm:$0xf] %v646
  %775 = vst [vmem:[%s3 + $0xac] sm:$0xf] %v647
  %776 = vst [vmem:[%s3 + $0xb0] sm:$0xf] %v648
  %777 = vst [vmem:[%s3 + $0xb4] sm:$0xf] %v649
  %778 = vst [vmem:[%s3 + $0xb8] sm:$0xf] %v650
  %779 = vst [vmem:[%s3 + $0xbc] sm:$0xf] %v651
  %780 = vst [vmem:[%s3 + $0xc0] sm:$0xf] %v652
  %781 = vst [vmem:[%s3 + $0xc4] sm:$0xf] %v653
  %782 = vst [vmem:[%s3 + $0xc8] sm:$0xf] %v654
  %783 = vst [vmem:[%s3 + $0xcc] sm:$0xf] %v655
  %784 = vst [vmem:[%s3 + $0xd0] sm:$0xf] %v656
  %785 = vst [vmem:[%s3 + $0xd4] sm:$0xf] %v657
  %786 = vst [vmem:[%s3 + $0xd8] sm:$0xf] %v658
  %787 = vst [vmem:[%s3 + $0xdc] sm:$0xf] %v659
  %788 = vst [vmem:[%s3 + $0xe0] sm:$0xf] %v660
  %789 = vst [vmem:[%s3 + $0xe4] sm:$0xf] %v661
  %790 = vst [vmem:[%s3 + $0xe8] sm:$0xf] %v662
  %791 = vst [vmem:[%s3 + $0xec] sm:$0xf] %v663
  %792 = vst [vmem:[%s3 + $0xf0] sm:$0xf] %v664
  %793 = vst [vmem:[%s3 + $0xf4] sm:$0xf] %v665
  %794 = vst [vmem:[%s3 + $0xf8] sm:$0xf] %v666
  %795 = vst [vmem:[%s3 + $0xfc] sm:$0xf] %v667
  // Predicated region
  $region14: #{discriminator_forward.10} parent=0 // pred_check
    _
  $region15: #{discriminator_forward.10} parent=0 // pred_check_branch
    %797 = sbr.rel (0) target = $region17
  $region16: #{discriminator_forward.10} parent=0 // pred_region
    _
  $region17: #{discriminator_forward.10} parent=0 // pred_fallthru
    _
  // Predicated region
  $region18: #{discriminator_forward.10} parent=0 // pred_check
    _
  $region19: #{discriminator_forward.10} parent=0 // pred_check_branch
    %799 = sbr.rel (0) target = $region21
  $region20: #{discriminator_forward.10} parent=0 // pred_region
    _
  $region21: #{discriminator_forward.10} parent=0 // pred_fallthru
    _

// kernel: discriminator_forward.9
$region0: #{discriminator_forward.9}
  #allocation0 [shape = 'u32[]', space=smem, size = 0x4, offset = 0x4, fixed_abs, tag = 'smem constant byte address 0x4 - core index']
  #allocation1 [shape = 'u32[144,128]{1,0:T(1,128)}', space=vmem, size = 0x12000, scoped, tag = 'internal scratch']
  %s0 = inlined_call_operand.vmem [shape: bf16[512,64], index: 0, kind: input, shape index: {}]
  %s1 = inlined_call_operand.vmem [shape: bf16[64,128], index: 1, kind: input, shape index: {}]
  %s2 = inlined_call_operand.vmem [shape: bf16[512,128], index: 2, kind: output, shape index: {0}]
  %s3 = inlined_call_operand.vmem [shape: f32[8,128], index: 3, kind: output, shape index: {1}]
  %4 = xla_tuple %s2, %s3
  %s5 = sld [smem:[#allocation0]]
  $region26: #{discriminator_forward.9} parent=0
    _
  %s7 = ssub.s32 1, %s5
  %s8 = scalar_select 0, %s7, %s5
  // Predicated region
  $region2: #{discriminator_forward.9} parent=0 // pred_check
    _
  $region3: #{discriminator_forward.9} parent=0 // pred_check_branch
    %10 = sbr.rel (0) target = $region5
  $region4: #{discriminator_forward.9} parent=0 // pred_region
    _
  $region5: #{discriminator_forward.9} parent=0 // pred_fallthru
    _
  // Predicated region
  $region6: #{discriminator_forward.9} parent=0 // pred_check
    _
  $region7: #{discriminator_forward.9} parent=0 // pred_check_branch
    %12 = sbr.rel (0) target = $region9
  $region8: #{discriminator_forward.9} parent=0 // pred_region
    _
  $region9: #{discriminator_forward.9} parent=0 // pred_fallthru
    _
  %v14 = vld [vmem:[%s0] sm:$0xf]
  %v15 = vld [vmem:[%s0 + $0x4] sm:$0xf]
  %v16 = vld [vmem:[%s0 + $0x8] sm:$0xf]
  %v17 = vld [vmem:[%s0 + $0xc] sm:$0xf]
  %v18 = vld [vmem:[%s0 + $0x10] sm:$0xf]
  %v19 = vld [vmem:[%s0 + $0x14] sm:$0xf]
  %v20 = vld [vmem:[%s0 + $0x18] sm:$0xf]
  %v21 = vld [vmem:[%s0 + $0x1c] sm:$0xf]
  %v22 = vld [vmem:[%s0 + $0x20] sm:$0xf]
  %v23 = vld [vmem:[%s0 + $0x24] sm:$0xf]
  %v24 = vld [vmem:[%s0 + $0x28] sm:$0xf]
  %v25 = vld [vmem:[%s0 + $0x2c] sm:$0xf]
  %v26 = vld [vmem:[%s0 + $0x30] sm:$0xf]
  %v27 = vld [vmem:[%s0 + $0x34] sm:$0xf]
  %v28 = vld [vmem:[%s0 + $0x38] sm:$0xf]
  %v29 = vld [vmem:[%s0 + $0x3c] sm:$0xf]
  %v30 = vld [vmem:[%s0 + $0x40] sm:$0xf]
  %v31 = vld [vmem:[%s0 + $0x44] sm:$0xf]
  %v32 = vld [vmem:[%s0 + $0x48] sm:$0xf]
  %v33 = vld [vmem:[%s0 + $0x4c] sm:$0xf]
  %v34 = vld [vmem:[%s0 + $0x50] sm:$0xf]
  %v35 = vld [vmem:[%s0 + $0x54] sm:$0xf]
  %v36 = vld [vmem:[%s0 + $0x58] sm:$0xf]
  %v37 = vld [vmem:[%s0 + $0x5c] sm:$0xf]
  %v38 = vld [vmem:[%s0 + $0x60] sm:$0xf]
  %v39 = vld [vmem:[%s0 + $0x64] sm:$0xf]
  %v40 = vld [vmem:[%s0 + $0x68] sm:$0xf]
  %v41 = vld [vmem:[%s0 + $0x6c] sm:$0xf]
  %v42 = vld [vmem:[%s0 + $0x70] sm:$0xf]
  %v43 = vld [vmem:[%s0 + $0x74] sm:$0xf]
  %v44 = vld [vmem:[%s0 + $0x78] sm:$0xf]
  %v45 = vld [vmem:[%s0 + $0x7c] sm:$0xf]
  %v46 = vld [vmem:[%s0 + $0x80] sm:$0xf]
  %v47 = vld [vmem:[%s0 + $0x84] sm:$0xf]
  %v48 = vld [vmem:[%s0 + $0x88] sm:$0xf]
  %v49 = vld [vmem:[%s0 + $0x8c] sm:$0xf]
  %v50 = vld [vmem:[%s0 + $0x90] sm:$0xf]
  %v51 = vld [vmem:[%s0 + $0x94] sm:$0xf]
  %v52 = vld [vmem:[%s0 + $0x98] sm:$0xf]
  %v53 = vld [vmem:[%s0 + $0x9c] sm:$0xf]
  %v54 = vld [vmem:[%s0 + $0xa0] sm:$0xf]
  %v55 = vld [vmem:[%s0 + $0xa4] sm:$0xf]
  %v56 = vld [vmem:[%s0 + $0xa8] sm:$0xf]
  %v57 = vld [vmem:[%s0 + $0xac] sm:$0xf]
  %v58 = vld [vmem:[%s0 + $0xb0] sm:$0xf]
  %v59 = vld [vmem:[%s0 + $0xb4] sm:$0xf]
  %v60 = vld [vmem:[%s0 + $0xb8] sm:$0xf]
  %v61 = vld [vmem:[%s0 + $0xbc] sm:$0xf]
  %v62 = vld [vmem:[%s0 + $0xc0] sm:$0xf]
  %v63 = vld [vmem:[%s0 + $0xc4] sm:$0xf]
  %v64 = vld [vmem:[%s0 + $0xc8] sm:$0xf]
  %v65 = vld [vmem:[%s0 + $0xcc] sm:$0xf]
  %v66 = vld [vmem:[%s0 + $0xd0] sm:$0xf]
  %v67 = vld [vmem:[%s0 + $0xd4] sm:$0xf]
  %v68 = vld [vmem:[%s0 + $0xd8] sm:$0xf]
  %v69 = vld [vmem:[%s0 + $0xdc] sm:$0xf]
  %v70 = vld [vmem:[%s0 + $0xe0] sm:$0xf]
  %v71 = vld [vmem:[%s0 + $0xe4] sm:$0xf]
  %v72 = vld [vmem:[%s0 + $0xe8] sm:$0xf]
  %v73 = vld [vmem:[%s0 + $0xec] sm:$0xf]
  %v74 = vld [vmem:[%s0 + $0xf0] sm:$0xf]
  %v75 = vld [vmem:[%s0 + $0xf4] sm:$0xf]
  %v76 = vld [vmem:[%s0 + $0xf8] sm:$0xf]
  %v77 = vld [vmem:[%s0 + $0xfc] sm:$0xf]
  %v78 = vld [vmem:[%s1] sm:$0xf]
  %v79 = vld [vmem:[%s1 + $0x4] sm:$0xf]
  %v80 = vld [vmem:[%s1 + $0x8] sm:$0xf]
  %v81 = vld [vmem:[%s1 + $0xc] sm:$0xf]
  %v82 = vld [vmem:[%s1 + $0x10] sm:$0xf]
  %v83 = vld [vmem:[%s1 + $0x14] sm:$0xf]
  %v84 = vld [vmem:[%s1 + $0x18] sm:$0xf]
  %v85 = vld [vmem:[%s1 + $0x1c] sm:$0xf]
  %v150 = vunpack.c.l.b16 %v14
  %v151 = vunpack.c.l.b16 %v15
  %v152 = vunpack.c.l.b16 %v16
  %v153 = vunpack.c.l.b16 %v17
  %v154 = vunpack.c.l.b16 %v18
  %v155 = vunpack.c.l.b16 %v19
  %v156 = vunpack.c.l.b16 %v20
  %v157 = vunpack.c.l.b16 %v21
  %v158 = vunpack.c.l.b16 %v22
  %v159 = vunpack.c.l.b16 %v23
  %v160 = vunpack.c.l.b16 %v24
  %v161 = vunpack.c.l.b16 %v25
  %v162 = vunpack.c.l.b16 %v26
  %v163 = vunpack.c.l.b16 %v27
  %v164 = vunpack.c.l.b16 %v28
  %v165 = vunpack.c.l.b16 %v29
  %v166 = vunpack.c.l.b16 %v30
  %v167 = vunpack.c.l.b16 %v31
  %v168 = vunpack.c.l.b16 %v32
  %v169 = vunpack.c.l.b16 %v33
  %v170 = vunpack.c.l.b16 %v34
  %v171 = vunpack.c.l.b16 %v35
  %v172 = vunpack.c.l.b16 %v36
  %v173 = vunpack.c.l.b16 %v37
  %v174 = vunpack.c.l.b16 %v38
  %v175 = vunpack.c.l.b16 %v39
  %v176 = vunpack.c.l.b16 %v40
  %v177 = vunpack.c.l.b16 %v41
  %v178 = vunpack.c.l.b16 %v42
  %v179 = vunpack.c.l.b16 %v43
  %v180 = vunpack.c.l.b16 %v44
  %v181 = vunpack.c.l.b16 %v45
  %v182 = vunpack.c.l.b16 %v46
  %v183 = vunpack.c.l.b16 %v47
  %v184 = vunpack.c.l.b16 %v48
  %v185 = vunpack.c.l.b16 %v49
  %v186 = vunpack.c.l.b16 %v50
  %v187 = vunpack.c.l.b16 %v51
  %v188 = vunpack.c.l.b16 %v52
  %v189 = vunpack.c.l.b16 %v53
  %v190 = vunpack.c.l.b16 %v54
  %v191 = vunpack.c.l.b16 %v55
  %v192 = vunpack.c.l.b16 %v56
  %v193 = vunpack.c.l.b16 %v57
  %v194 = vunpack.c.l.b16 %v58
  %v195 = vunpack.c.l.b16 %v59
  %v196 = vunpack.c.l.b16 %v60
  %v197 = vunpack.c.l.b16 %v61
  %v198 = vunpack.c.l.b16 %v62
  %v199 = vunpack.c.l.b16 %v63
  %v200 = vunpack.c.l.b16 %v64
  %v201 = vunpack.c.l.b16 %v65
  %v202 = vunpack.c.l.b16 %v66
  %v203 = vunpack.c.l.b16 %v67
  %v204 = vunpack.c.l.b16 %v68
  %v205 = vunpack.c.l.b16 %v69
  %v206 = vunpack.c.l.b16 %v70
  %v207 = vunpack.c.l.b16 %v71
  %v208 = vunpack.c.l.b16 %v72
  %v209 = vunpack.c.l.b16 %v73
  %v210 = vunpack.c.l.b16 %v74
  %v211 = vunpack.c.l.b16 %v75
  %v212 = vunpack.c.l.b16 %v76
  %v213 = vunpack.c.l.b16 %v77
  %v214 = vpack.c.b16 %v151, %v150
  %v215 = vpack.c.b16 %v153, %v152
  %v216 = vpack.c.b16 %v155, %v154
  %v217 = vpack.c.b16 %v157, %v156
  %v218 = vpack.c.b16 %v159, %v158
  %v219 = vpack.c.b16 %v161, %v160
  %v220 = vpack.c.b16 %v163, %v162
  %v221 = vpack.c.b16 %v165, %v164
  %v222 = vpack.c.b16 %v167, %v166
  %v223 = vpack.c.b16 %v169, %v168
  %v224 = vpack.c.b16 %v171, %v170
  %v225 = vpack.c.b16 %v173, %v172
  %v226 = vpack.c.b16 %v175, %v174
  %v227 = vpack.c.b16 %v177, %v176
  %v228 = vpack.c.b16 %v179, %v178
  %v229 = vpack.c.b16 %v181, %v180
  %v230 = vpack.c.b16 %v183, %v182
  %v231 = vpack.c.b16 %v185, %v184
  %v232 = vpack.c.b16 %v187, %v186
  %v233 = vpack.c.b16 %v189, %v188
  %v234 = vpack.c.b16 %v191, %v190
  %v235 = vpack.c.b16 %v193, %v192
  %v236 = vpack.c.b16 %v195, %v194
  %v237 = vpack.c.b16 %v197, %v196
  %v238 = vpack.c.b16 %v199, %v198
  %v239 = vpack.c.b16 %v201, %v200
  %v240 = vpack.c.b16 %v203, %v202
  %v241 = vpack.c.b16 %v205, %v204
  %v242 = vpack.c.b16 %v207, %v206
  %v243 = vpack.c.b16 %v209, %v208
  %v244 = vpack.c.b16 %v211, %v210
  %v245 = vpack.c.b16 %v213, %v212
  %v254 = vunpack.c.l.b16 %v78
  %v255 = vunpack.c.l.b16 %v79
  %v256 = vunpack.c.l.b16 %v80
  %v257 = vunpack.c.l.b16 %v81
  %v258 = vunpack.c.l.b16 %v82
  %v259 = vunpack.c.l.b16 %v83
  %v260 = vunpack.c.l.b16 %v84
  %v261 = vunpack.c.l.b16 %v85
  %v262 = vpack.c.b16 %v255, %v254
  %v263 = vpack.c.b16 %v257, %v256
  %v264 = vpack.c.b16 %v259, %v258
  %v265 = vpack.c.b16 %v261, %v260
  %vm270 = vcmask 523264
  %v272 = vsel %vm270, %v214, 0
  %v275 = vsel %vm270, %v215, 0
  %v278 = vsel %vm270, %v216, 0
  %v281 = vsel %vm270, %v217, 0
  %v284 = vsel %vm270, %v218, 0
  %v287 = vsel %vm270, %v219, 0
  %v290 = vsel %vm270, %v220, 0
  %v293 = vsel %vm270, %v221, 0
  %v296 = vsel %vm270, %v222, 0
  %v299 = vsel %vm270, %v223, 0
  %v302 = vsel %vm270, %v224, 0
  %v305 = vsel %vm270, %v225, 0
  %v308 = vsel %vm270, %v226, 0
  %v311 = vsel %vm270, %v227, 0
  %v314 = vsel %vm270, %v228, 0
  %v317 = vsel %vm270, %v229, 0
  %v320 = vsel %vm270, %v230, 0
  %v323 = vsel %vm270, %v231, 0
  %v326 = vsel %vm270, %v232, 0
  %v329 = vsel %vm270, %v233, 0
  %v332 = vsel %vm270, %v234, 0
  %v335 = vsel %vm270, %v235, 0
  %v338 = vsel %vm270, %v236, 0
  %v341 = vsel %vm270, %v237, 0
  %v344 = vsel %vm270, %v238, 0
  %v347 = vsel %vm270, %v239, 0
  %v350 = vsel %vm270, %v240, 0
  %v353 = vsel %vm270, %v241, 0
  %v356 = vsel %vm270, %v242, 0
  %v359 = vsel %vm270, %v243, 0
  %v362 = vsel %vm270, %v244, 0
  %v365 = vsel %vm270, %v245, 0
  %367 = vmatprep.subr.bf16.mxu0 0
  %368 = vmatpush1.bf16.msra.mxu0 %v262
  %369 = vmatprep.subr.bf16.mxu0 0
  %370 = vmatpush1.bf16.msra.mxu0 %v263
  %371 = vmatprep.subr.bf16.mxu0 0
  %372 = vmatpush1.bf16.msra.mxu0 %v264
  %373 = vmatprep.subr.bf16.mxu0 0
  %374 = vmatpush1.bf16.msra.mxu0 %v265
  %375 = vmatprep.subr.bf16.mxu0 0
  %376 = vmatpush1.bf16.msra.mxu0 0
  %377 = vmatprep.subr.bf16.mxu0 0
  %378 = vmatpush1.bf16.msra.mxu0 0
  %379 = vmatprep.subr.bf16.mxu0 0
  %380 = vmatpush1.bf16.msra.mxu0 0
  %381 = vmatprep.subr.bf16.mxu0 0
  %382 = vmatpush1.bf16.msra.mxu0 0
  %383 = vmatprep.subr.bf16.mxu0 0
  %384 = vmatpush1.bf16.msra.mxu0 0
  %385 = vmatprep.subr.bf16.mxu0 0
  %386 = vmatpush1.bf16.msra.mxu0 0
  %387 = vmatprep.subr.bf16.mxu0 0
  %388 = vmatpush1.bf16.msra.mxu0 0
  %389 = vmatprep.subr.bf16.mxu0 0
  %390 = vmatpush1.bf16.msra.mxu0 0
  %391 = vmatprep.subr.bf16.mxu0 0
  %392 = vmatpush1.bf16.msra.mxu0 0
  %393 = vmatprep.subr.bf16.mxu0 0
  %394 = vmatpush1.bf16.msra.mxu0 0
  %395 = vmatprep.subr.bf16.mxu0 0
  %396 = vmatpush1.bf16.msra.mxu0 0
  %397 = vmatprep.subr.bf16.mxu0 0
  %398 = vmatpush1.bf16.msra.mxu0 0
  %399 = vmatprep.mubr.bf16.mxu0 0
  %400 = vmatmul.mubr.bf16.gmra.mrb[0].mxu0 %v272
  %v401 = vpop.f32.mrb[0].mxu0
  %v402 = vadd.f32 0.0, %v401
  %v403 = vpop.f32.mrb[0].mxu0
  %v404 = vpop.f32.mrb[0].mxu0
  %v405 = vadd.f32 0.0, %v404
  %v406 = vpop.f32.mrb[0].mxu0
  %407 = vmatprep.mubr.bf16.mxu0 0
  %408 = vmatmul.mubr.bf16.gmra.mrb[0].mxu0 %v275
  %v409 = vpop.f32.mrb[0].mxu0
  %v410 = vadd.f32 0.0, %v409
  %v411 = vpop.f32.mrb[0].mxu0
  %v412 = vpop.f32.mrb[0].mxu0
  %v413 = vadd.f32 0.0, %v412
  %v414 = vpop.f32.mrb[0].mxu0
  %415 = vmatprep.mubr.bf16.mxu0 0
  %416 = vmatmul.mubr.bf16.gmra.mrb[0].mxu0 %v278
  %v417 = vpop.f32.mrb[0].mxu0
  %v418 = vadd.f32 0.0, %v417
  %v419 = vpop.f32.mrb[0].mxu0
  %v420 = vpop.f32.mrb[0].mxu0
  %v421 = vadd.f32 0.0, %v420
  %v422 = vpop.f32.mrb[0].mxu0
  %423 = vmatprep.mubr.bf16.mxu0 0
  %424 = vmatmul.mubr.bf16.gmra.mrb[0].mxu0 %v281
  %v425 = vpop.f32.mrb[0].mxu0
  %v426 = vadd.f32 0.0, %v425
  %v427 = vpop.f32.mrb[0].mxu0
  %v428 = vpop.f32.mrb[0].mxu0
  %v429 = vadd.f32 0.0, %v428
  %v430 = vpop.f32.mrb[0].mxu0
  %431 = vmatprep.mubr.bf16.mxu0 0
  %432 = vmatmul.mubr.bf16.gmra.mrb[0].mxu0 %v284
  %v433 = vpop.f32.mrb[0].mxu0
  %v434 = vadd.f32 0.0, %v433
  %v435 = vpop.f32.mrb[0].mxu0
  %v436 = vpop.f32.mrb[0].mxu0
  %v437 = vadd.f32 0.0, %v436
  %v438 = vpop.f32.mrb[0].mxu0
  %439 = vmatprep.mubr.bf16.mxu0 0
  %440 = vmatmul.mubr.bf16.gmra.mrb[0].mxu0 %v287
  %v441 = vpop.f32.mrb[0].mxu0
  %v442 = vadd.f32 0.0, %v441
  %v443 = vpop.f32.mrb[0].mxu0
  %v444 = vpop.f32.mrb[0].mxu0
  %v445 = vadd.f32 0.0, %v444
  %v446 = vpop.f32.mrb[0].mxu0
  %447 = vmatprep.mubr.bf16.mxu0 0
  %448 = vmatmul.mubr.bf16.gmra.mrb[0].mxu0 %v290
  %v449 = vpop.f32.mrb[0].mxu0
  %v450 = vadd.f32 0.0, %v449
  %v451 = vpop.f32.mrb[0].mxu0
  %v452 = vpop.f32.mrb[0].mxu0
  %v453 = vadd.f32 0.0, %v452
  %v454 = vpop.f32.mrb[0].mxu0
  %455 = vmatprep.mubr.bf16.mxu0 0
  %456 = vmatmul.mubr.bf16.gmra.mrb[0].mxu0 %v293
  %v457 = vpop.f32.mrb[0].mxu0
  %v458 = vadd.f32 0.0, %v457
  %v459 = vpop.f32.mrb[0].mxu0
  %v460 = vpop.f32.mrb[0].mxu0
  %v461 = vadd.f32 0.0, %v460
  %v462 = vpop.f32.mrb[0].mxu0
  %463 = vmatprep.mubr.bf16.mxu0 0
  %464 = vmatmul.mubr.bf16.gmra.mrb[0].mxu0 %v296
  %v465 = vpop.f32.mrb[0].mxu0
  %v466 = vadd.f32 0.0, %v465
  %v467 = vpop.f32.mrb[0].mxu0
  %v468 = vpop.f32.mrb[0].mxu0
  %v469 = vadd.f32 0.0, %v468
  %v470 = vpop.f32.mrb[0].mxu0
  %471 = vmatprep.mubr.bf16.mxu0 0
  %472 = vmatmul.mubr.bf16.gmra.mrb[0].mxu0 %v299
  %v473 = vpop.f32.mrb[0].mxu0
  %v474 = vadd.f32 0.0, %v473
  %v475 = vpop.f32.mrb[0].mxu0
  %v476 = vpop.f32.mrb[0].mxu0
  %v477 = vadd.f32 0.0, %v476
  %v478 = vpop.f32.mrb[0].mxu0
  %479 = vmatprep.mubr.bf16.mxu0 0
  %480 = vmatmul.mubr.bf16.gmra.mrb[0].mxu0 %v302
  %v481 = vpop.f32.mrb[0].mxu0
  %v482 = vadd.f32 0.0, %v481
  %v483 = vpop.f32.mrb[0].mxu0
  %v484 = vpop.f32.mrb[0].mxu0
  %v485 = vadd.f32 0.0, %v484
  %v486 = vpop.f32.mrb[0].mxu0
  %487 = vmatprep.mubr.bf16.mxu0 0
  %488 = vmatmul.mubr.bf16.gmra.mrb[0].mxu0 %v305
  %v489 = vpop.f32.mrb[0].mxu0
  %v490 = vadd.f32 0.0, %v489
  %v491 = vpop.f32.mrb[0].mxu0
  %v492 = vpop.f32.mrb[0].mxu0
  %v493 = vadd.f32 0.0, %v492
  %v494 = vpop.f32.mrb[0].mxu0
  %495 = vmatprep.mubr.bf16.mxu0 0
  %496 = vmatmul.mubr.bf16.gmra.mrb[0].mxu0 %v308
  %v497 = vpop.f32.mrb[0].mxu0
  %v498 = vadd.f32 0.0, %v497
  %v499 = vpop.f32.mrb[0].mxu0
  %v500 = vpop.f32.mrb[0].mxu0
  %v501 = vadd.f32 0.0, %v500
  %v502 = vpop.f32.mrb[0].mxu0
  %503 = vmatprep.mubr.bf16.mxu0 0
  %504 = vmatmul.mubr.bf16.gmra.mrb[0].mxu0 %v311
  %v505 = vpop.f32.mrb[0].mxu0
  %v506 = vadd.f32 0.0, %v505
  %v507 = vpop.f32.mrb[0].mxu0
  %v508 = vpop.f32.mrb[0].mxu0
  %v509 = vadd.f32 0.0, %v508
  %v510 = vpop.f32.mrb[0].mxu0
  %511 = vmatprep.mubr.bf16.mxu0 0
  %512 = vmatmul.mubr.bf16.gmra.mrb[0].mxu0 %v314
  %v513 = vpop.f32.mrb[0].mxu0
  %v514 = vadd.f32 0.0, %v513
  %v515 = vpop.f32.mrb[0].mxu0
  %v516 = vpop.f32.mrb[0].mxu0
  %v517 = vadd.f32 0.0, %v516
  %v518 = vpop.f32.mrb[0].mxu0
  %519 = vmatprep.mubr.bf16.mxu0 0
  %520 = vmatmul.mubr.bf16.gmra.mrb[0].mxu0 %v317
  %v521 = vpop.f32.mrb[0].mxu0
  %v522 = vadd.f32 0.0, %v521
  %v523 = vpop.f32.mrb[0].mxu0
  %v524 = vpop.f32.mrb[0].mxu0
  %v525 = vadd.f32 0.0, %v524
  %v526 = vpop.f32.mrb[0].mxu0
  %527 = vmatprep.mubr.bf16.mxu0 0
  %528 = vmatmul.mubr.bf16.gmra.mrb[0].mxu0 %v320
  %v529 = vpop.f32.mrb[0].mxu0
  %v530 = vadd.f32 0.0, %v529
  %v531 = vpop.f32.mrb[0].mxu0
  %v532 = vpop.f32.mrb[0].mxu0
  %v533 = vadd.f32 0.0, %v532
  %v534 = vpop.f32.mrb[0].mxu0
  %535 = vmatprep.mubr.bf16.mxu0 0
  %536 = vmatmul.mubr.bf16.gmra.mrb[0].mxu0 %v323
  %v537 = vpop.f32.mrb[0].mxu0
  %v538 = vadd.f32 0.0, %v537
  %v539 = vpop.f32.mrb[0].mxu0
  %v540 = vpop.f32.mrb[0].mxu0
  %v541 = vadd.f32 0.0, %v540
  %v542 = vpop.f32.mrb[0].mxu0
  %543 = vmatprep.mubr.bf16.mxu0 0
  %544 = vmatmul.mubr.bf16.gmra.mrb[0].mxu0 %v326
  %v545 = vpop.f32.mrb[0].mxu0
  %v546 = vadd.f32 0.0, %v545
  %v547 = vpop.f32.mrb[0].mxu0
  %v548 = vpop.f32.mrb[0].mxu0
  %v549 = vadd.f32 0.0, %v548
  %v550 = vpop.f32.mrb[0].mxu0
  %551 = vmatprep.mubr.bf16.mxu0 0
  %552 = vmatmul.mubr.bf16.gmra.mrb[0].mxu0 %v329
  %v553 = vpop.f32.mrb[0].mxu0
  %v554 = vadd.f32 0.0, %v553
  %v555 = vpop.f32.mrb[0].mxu0
  %v556 = vpop.f32.mrb[0].mxu0
  %v557 = vadd.f32 0.0, %v556
  %v558 = vpop.f32.mrb[0].mxu0
  %559 = vmatprep.mubr.bf16.mxu0 0
  %560 = vmatmul.mubr.bf16.gmra.mrb[0].mxu0 %v332
  %v561 = vpop.f32.mrb[0].mxu0
  %v562 = vadd.f32 0.0, %v561
  %v563 = vpop.f32.mrb[0].mxu0
  %v564 = vpop.f32.mrb[0].mxu0
  %v565 = vadd.f32 0.0, %v564
  %v566 = vpop.f32.mrb[0].mxu0
  %567 = vmatprep.mubr.bf16.mxu0 0
  %568 = vmatmul.mubr.bf16.gmra.mrb[0].mxu0 %v335
  %v569 = vpop.f32.mrb[0].mxu0
  %v570 = vadd.f32 0.0, %v569
  %v571 = vpop.f32.mrb[0].mxu0
  %v572 = vpop.f32.mrb[0].mxu0
  %v573 = vadd.f32 0.0, %v572
  %v574 = vpop.f32.mrb[0].mxu0
  %575 = vmatprep.mubr.bf16.mxu0 0
  %576 = vmatmul.mubr.bf16.gmra.mrb[0].mxu0 %v338
  %v577 = vpop.f32.mrb[0].mxu0
  %v578 = vadd.f32 0.0, %v577
  %v579 = vpop.f32.mrb[0].mxu0
  %v580 = vpop.f32.mrb[0].mxu0
  %v581 = vadd.f32 0.0, %v580
  %v582 = vpop.f32.mrb[0].mxu0
  %583 = vmatprep.mubr.bf16.mxu0 0
  %584 = vmatmul.mubr.bf16.gmra.mrb[0].mxu0 %v341
  %v585 = vpop.f32.mrb[0].mxu0
  %v586 = vadd.f32 0.0, %v585
  %v587 = vpop.f32.mrb[0].mxu0
  %v588 = vpop.f32.mrb[0].mxu0
  %v589 = vadd.f32 0.0, %v588
  %v590 = vpop.f32.mrb[0].mxu0
  %591 = vmatprep.mubr.bf16.mxu0 0
  %592 = vmatmul.mubr.bf16.gmra.mrb[0].mxu0 %v344
  %v593 = vpop.f32.mrb[0].mxu0
  %v594 = vadd.f32 0.0, %v593
  %v595 = vpop.f32.mrb[0].mxu0
  %v596 = vpop.f32.mrb[0].mxu0
  %v597 = vadd.f32 0.0, %v596
  %v598 = vpop.f32.mrb[0].mxu0
  %599 = vmatprep.mubr.bf16.mxu0 0
  %600 = vmatmul.mubr.bf16.gmra.mrb[0].mxu0 %v347
  %v601 = vpop.f32.mrb[0].mxu0
  %v602 = vadd.f32 0.0, %v601
  %v603 = vpop.f32.mrb[0].mxu0
  %v604 = vpop.f32.mrb[0].mxu0
  %v605 = vadd.f32 0.0, %v604
  %v606 = vpop.f32.mrb[0].mxu0
  %607 = vmatprep.mubr.bf16.mxu0 0
  %608 = vmatmul.mubr.bf16.gmra.mrb[0].mxu0 %v350
  %v609 = vpop.f32.mrb[0].mxu0
  %v610 = vadd.f32 0.0, %v609
  %v611 = vpop.f32.mrb[0].mxu0
  %v612 = vpop.f32.mrb[0].mxu0
  %v613 = vadd.f32 0.0, %v612
  %v614 = vpop.f32.mrb[0].mxu0
  %615 = vmatprep.mubr.bf16.mxu0 0
  %616 = vmatmul.mubr.bf16.gmra.mrb[0].mxu0 %v353
  %v617 = vpop.f32.mrb[0].mxu0
  %v618 = vadd.f32 0.0, %v617
  %v619 = vpop.f32.mrb[0].mxu0
  %v620 = vpop.f32.mrb[0].mxu0
  %v621 = vadd.f32 0.0, %v620
  %v622 = vpop.f32.mrb[0].mxu0
  %623 = vmatprep.mubr.bf16.mxu0 0
  %624 = vmatmul.mubr.bf16.gmra.mrb[0].mxu0 %v356
  %v625 = vpop.f32.mrb[0].mxu0
  %v626 = vadd.f32 0.0, %v625
  %v627 = vpop.f32.mrb[0].mxu0
  %v628 = vpop.f32.mrb[0].mxu0
  %v629 = vadd.f32 0.0, %v628
  %v630 = vpop.f32.mrb[0].mxu0
  %631 = vmatprep.mubr.bf16.mxu0 0
  %632 = vmatmul.mubr.bf16.gmra.mrb[0].mxu0 %v359
  %v633 = vpop.f32.mrb[0].mxu0
  %v634 = vadd.f32 0.0, %v633
  %v635 = vpop.f32.mrb[0].mxu0
  %v636 = vpop.f32.mrb[0].mxu0
  %v637 = vadd.f32 0.0, %v636
  %v638 = vpop.f32.mrb[0].mxu0
  %639 = vmatprep.mubr.bf16.mxu0 0
  %640 = vmatmul.mubr.bf16.gmra.mrb[0].mxu0 %v362
  %v641 = vpop.f32.mrb[0].mxu0
  %v642 = vadd.f32 0.0, %v641
  %v643 = vpop.f32.mrb[0].mxu0
  %v644 = vpop.f32.mrb[0].mxu0
  %v645 = vadd.f32 0.0, %v644
  %v646 = vpop.f32.mrb[0].mxu0
  %647 = vmatprep.mubr.bf16.mxu0 0
  %648 = vmatmul.mubr.bf16.gmra.mrb[0].mxu0 %v365
  %v649 = vpop.f32.mrb[0].mxu0
  %v650 = vadd.f32 0.0, %v649
  %v651 = vpop.f32.mrb[0].mxu0
  %v652 = vpop.f32.mrb[0].mxu0
  %v653 = vadd.f32 0.0, %v652
  %v654 = vpop.f32.mrb[0].mxu0
  %655 = vdwg.mxu0
  %v656 = vpack.c.bf16 %v405, %v402
  %v657 = vpack.c.bf16 %v413, %v410
  %v658 = vpack.c.bf16 %v421, %v418
  %v659 = vpack.c.bf16 %v429, %v426
  %v660 = vpack.c.bf16 %v437, %v434
  %v661 = vpack.c.bf16 %v445, %v442
  %v662 = vpack.c.bf16 %v453, %v450
  %v663 = vpack.c.bf16 %v461, %v458
  %v664 = vpack.c.bf16 %v469, %v466
  %v665 = vpack.c.bf16 %v477, %v474
  %v666 = vpack.c.bf16 %v485, %v482
  %v667 = vpack.c.bf16 %v493, %v490
  %v668 = vpack.c.bf16 %v501, %v498
  %v669 = vpack.c.bf16 %v509, %v506
  %v670 = vpack.c.bf16 %v517, %v514
  %v671 = vpack.c.bf16 %v525, %v522
  %v672 = vpack.c.bf16 %v533, %v530
  %v673 = vpack.c.bf16 %v541, %v538
  %v674 = vpack.c.bf16 %v549, %v546
  %v675 = vpack.c.bf16 %v557, %v554
  %v676 = vpack.c.bf16 %v565, %v562
  %v677 = vpack.c.bf16 %v573, %v570
  %v678 = vpack.c.bf16 %v581, %v578
  %v679 = vpack.c.bf16 %v589, %v586
  %v680 = vpack.c.bf16 %v597, %v594
  %v681 = vpack.c.bf16 %v605, %v602
  %v682 = vpack.c.bf16 %v613, %v610
  %v683 = vpack.c.bf16 %v621, %v618
  %v684 = vpack.c.bf16 %v629, %v626
  %v685 = vpack.c.bf16 %v637, %v634
  %v686 = vpack.c.bf16 %v645, %v642
  %v687 = vpack.c.bf16 %v653, %v650
  %v720 = vunpack.c.l.b16 %v656
  %v721 = vunpack.c.h.b16 %v656
  %v722 = vunpack.c.l.b16 %v657
  %v723 = vunpack.c.h.b16 %v657
  %v724 = vunpack.c.l.b16 %v658
  %v725 = vunpack.c.h.b16 %v658
  %v726 = vunpack.c.l.b16 %v659
  %v727 = vunpack.c.h.b16 %v659
  %v728 = vunpack.c.l.b16 %v660
  %v729 = vunpack.c.h.b16 %v660
  %v730 = vunpack.c.l.b16 %v661
  %v731 = vunpack.c.h.b16 %v661
  %v732 = vunpack.c.l.b16 %v662
  %v733 = vunpack.c.h.b16 %v662
  %v734 = vunpack.c.l.b16 %v663
  %v735 = vunpack.c.h.b16 %v663
  %v736 = vunpack.c.l.b16 %v664
  %v737 = vunpack.c.h.b16 %v664
  %v738 = vunpack.c.l.b16 %v665
  %v739 = vunpack.c.h.b16 %v665
  %v740 = vunpack.c.l.b16 %v666
  %v741 = vunpack.c.h.b16 %v666
  %v742 = vunpack.c.l.b16 %v667
  %v743 = vunpack.c.h.b16 %v667
  %v744 = vunpack.c.l.b16 %v668
  %v745 = vunpack.c.h.b16 %v668
  %v746 = vunpack.c.l.b16 %v669
  %v747 = vunpack.c.h.b16 %v669
  %v748 = vunpack.c.l.b16 %v670
  %v749 = vunpack.c.h.b16 %v670
  %v750 = vunpack.c.l.b16 %v671
  %v751 = vunpack.c.h.b16 %v671
  %v752 = vunpack.c.l.b16 %v672
  %v753 = vunpack.c.h.b16 %v672
  %v754 = vunpack.c.l.b16 %v673
  %v755 = vunpack.c.h.b16 %v673
  %v756 = vunpack.c.l.b16 %v674
  %v757 = vunpack.c.h.b16 %v674
  %v758 = vunpack.c.l.b16 %v675
  %v759 = vunpack.c.h.b16 %v675
  %v760 = vunpack.c.l.b16 %v676
  %v761 = vunpack.c.h.b16 %v676
  %v762 = vunpack.c.l.b16 %v677
  %v763 = vunpack.c.h.b16 %v677
  %v764 = vunpack.c.l.b16 %v678
  %v765 = vunpack.c.h.b16 %v678
  %v766 = vunpack.c.l.b16 %v679
  %v767 = vunpack.c.h.b16 %v679
  %v768 = vunpack.c.l.b16 %v680
  %v769 = vunpack.c.h.b16 %v680
  %v770 = vunpack.c.l.b16 %v681
  %v771 = vunpack.c.h.b16 %v681
  %v772 = vunpack.c.l.b16 %v682
  %v773 = vunpack.c.h.b16 %v682
  %v774 = vunpack.c.l.b16 %v683
  %v775 = vunpack.c.h.b16 %v683
  %v776 = vunpack.c.l.b16 %v684
  %v777 = vunpack.c.h.b16 %v684
  %v778 = vunpack.c.l.b16 %v685
  %v779 = vunpack.c.h.b16 %v685
  %v780 = vunpack.c.l.b16 %v686
  %v781 = vunpack.c.h.b16 %v686
  %v782 = vunpack.c.l.b16 %v687
  %v783 = vunpack.c.h.b16 %v687
  %v784 = vpack.c.b16 %v720, %v720
  %v785 = vpack.c.b16 %v721, %v721
  %v786 = vpack.c.b16 %v722, %v722
  %v787 = vpack.c.b16 %v723, %v723
  %v788 = vpack.c.b16 %v724, %v724
  %v789 = vpack.c.b16 %v725, %v725
  %v790 = vpack.c.b16 %v726, %v726
  %v791 = vpack.c.b16 %v727, %v727
  %v792 = vpack.c.b16 %v728, %v728
  %v793 = vpack.c.b16 %v729, %v729
  %v794 = vpack.c.b16 %v730, %v730
  %v795 = vpack.c.b16 %v731, %v731
  %v796 = vpack.c.b16 %v732, %v732
  %v797 = vpack.c.b16 %v733, %v733
  %v798 = vpack.c.b16 %v734, %v734
  %v799 = vpack.c.b16 %v735, %v735
  %v800 = vpack.c.b16 %v736, %v736
  %v801 = vpack.c.b16 %v737, %v737
  %v802 = vpack.c.b16 %v738, %v738
  %v803 = vpack.c.b16 %v739, %v739
  %v804 = vpack.c.b16 %v740, %v740
  %v805 = vpack.c.b16 %v741, %v741
  %v806 = vpack.c.b16 %v742, %v742
  %v807 = vpack.c.b16 %v743, %v743
  %v808 = vpack.c.b16 %v744, %v744
  %v809 = vpack.c.b16 %v745, %v745
  %v810 = vpack.c.b16 %v746, %v746
  %v811 = vpack.c.b16 %v747, %v747
  %v812 = vpack.c.b16 %v748, %v748
  %v813 = vpack.c.b16 %v749, %v749
  %v814 = vpack.c.b16 %v750, %v750
  %v815 = vpack.c.b16 %v751, %v751
  %v816 = vpack.c.b16 %v752, %v752
  %v817 = vpack.c.b16 %v753, %v753
  %v818 = vpack.c.b16 %v754, %v754
  %v819 = vpack.c.b16 %v755, %v755
  %v820 = vpack.c.b16 %v756, %v756
  %v821 = vpack.c.b16 %v757, %v757
  %v822 = vpack.c.b16 %v758, %v758
  %v823 = vpack.c.b16 %v759, %v759
  %v824 = vpack.c.b16 %v760, %v760
  %v825 = vpack.c.b16 %v761, %v761
  %v826 = vpack.c.b16 %v762, %v762
  %v827 = vpack.c.b16 %v763, %v763
  %v828 = vpack.c.b16 %v764, %v764
  %v829 = vpack.c.b16 %v765, %v765
  %v830 = vpack.c.b16 %v766, %v766
  %v831 = vpack.c.b16 %v767, %v767
  %v832 = vpack.c.b16 %v768, %v768
  %v833 = vpack.c.b16 %v769, %v769
  %v834 = vpack.c.b16 %v770, %v770
  %v835 = vpack.c.b16 %v771, %v771
  %v836 = vpack.c.b16 %v772, %v772
  %v837 = vpack.c.b16 %v773, %v773
  %v838 = vpack.c.b16 %v774, %v774
  %v839 = vpack.c.b16 %v775, %v775
  %v840 = vpack.c.b16 %v776, %v776
  %v841 = vpack.c.b16 %v777, %v777
  %v842 = vpack.c.b16 %v778, %v778
  %v843 = vpack.c.b16 %v779, %v779
  %v844 = vpack.c.b16 %v780, %v780
  %v845 = vpack.c.b16 %v781, %v781
  %v846 = vpack.c.b16 %v782, %v782
  %v847 = vpack.c.b16 %v783, %v783
  %912 = vst [vmem:[%s2] sm:$0xf] %v784
  %913 = vst [vmem:[%s2 + $0x4] sm:$0xf] %v785
  %914 = vst [vmem:[%s2 + $0x8] sm:$0xf] %v786
  %915 = vst [vmem:[%s2 + $0xc] sm:$0xf] %v787
  %916 = vst [vmem:[%s2 + $0x10] sm:$0xf] %v788
  %917 = vst [vmem:[%s2 + $0x14] sm:$0xf] %v789
  %918 = vst [vmem:[%s2 + $0x18] sm:$0xf] %v790
  %919 = vst [vmem:[%s2 + $0x1c] sm:$0xf] %v791
  %920 = vst [vmem:[%s2 + $0x20] sm:$0xf] %v792
  %921 = vst [vmem:[%s2 + $0x24] sm:$0xf] %v793
  %922 = vst [vmem:[%s2 + $0x28] sm:$0xf] %v794
  %923 = vst [vmem:[%s2 + $0x2c] sm:$0xf] %v795
  %924 = vst [vmem:[%s2 + $0x30] sm:$0xf] %v796
  %925 = vst [vmem:[%s2 + $0x34] sm:$0xf] %v797
  %926 = vst [vmem:[%s2 + $0x38] sm:$0xf] %v798
  %927 = vst [vmem:[%s2 + $0x3c] sm:$0xf] %v799
  %928 = vst [vmem:[%s2 + $0x40] sm:$0xf] %v800
  %929 = vst [vmem:[%s2 + $0x44] sm:$0xf] %v801
  %930 = vst [vmem:[%s2 + $0x48] sm:$0xf] %v802
  %931 = vst [vmem:[%s2 + $0x4c] sm:$0xf] %v803
  %932 = vst [vmem:[%s2 + $0x50] sm:$0xf] %v804
  %933 = vst [vmem:[%s2 + $0x54] sm:$0xf] %v805
  %934 = vst [vmem:[%s2 + $0x58] sm:$0xf] %v806
  %935 = vst [vmem:[%s2 + $0x5c] sm:$0xf] %v807
  %936 = vst [vmem:[%s2 + $0x60] sm:$0xf] %v808
  %937 = vst [vmem:[%s2 + $0x64] sm:$0xf] %v809
  %938 = vst [vmem:[%s2 + $0x68] sm:$0xf] %v810
  %939 = vst [vmem:[%s2 + $0x6c] sm:$0xf] %v811
  %940 = vst [vmem:[%s2 + $0x70] sm:$0xf] %v812
  %941 = vst [vmem:[%s2 + $0x74] sm:$0xf] %v813
  %942 = vst [vmem:[%s2 + $0x78] sm:$0xf] %v814
  %943 = vst [vmem:[%s2 + $0x7c] sm:$0xf] %v815
  %944 = vst [vmem:[%s2 + $0x80] sm:$0xf] %v816
  %945 = vst [vmem:[%s2 + $0x84] sm:$0xf] %v817
  %946 = vst [vmem:[%s2 + $0x88] sm:$0xf] %v818
  %947 = vst [vmem:[%s2 + $0x8c] sm:$0xf] %v819
  %948 = vst [vmem:[%s2 + $0x90] sm:$0xf] %v820
  %949 = vst [vmem:[%s2 + $0x94] sm:$0xf] %v821
  %950 = vst [vmem:[%s2 + $0x98] sm:$0xf] %v822
  %951 = vst [vmem:[%s2 + $0x9c] sm:$0xf] %v823
  %952 = vst [vmem:[%s2 + $0xa0] sm:$0xf] %v824
  %953 = vst [vmem:[%s2 + $0xa4] sm:$0xf] %v825
  %954 = vst [vmem:[%s2 + $0xa8] sm:$0xf] %v826
  %955 = vst [vmem:[%s2 + $0xac] sm:$0xf] %v827
  %956 = vst [vmem:[%s2 + $0xb0] sm:$0xf] %v828
  %957 = vst [vmem:[%s2 + $0xb4] sm:$0xf] %v829
  %958 = vst [vmem:[%s2 + $0xb8] sm:$0xf] %v830
  %959 = vst [vmem:[%s2 + $0xbc] sm:$0xf] %v831
  %960 = vst [vmem:[%s2 + $0xc0] sm:$0xf] %v832
  %961 = vst [vmem:[%s2 + $0xc4] sm:$0xf] %v833
  %962 = vst [vmem:[%s2 + $0xc8] sm:$0xf] %v834
  %963 = vst [vmem:[%s2 + $0xcc] sm:$0xf] %v835
  %964 = vst [vmem:[%s2 + $0xd0] sm:$0xf] %v836
  %965 = vst [vmem:[%s2 + $0xd4] sm:$0xf] %v837
  %966 = vst [vmem:[%s2 + $0xd8] sm:$0xf] %v838
  %967 = vst [vmem:[%s2 + $0xdc] sm:$0xf] %v839
  %968 = vst [vmem:[%s2 + $0xe0] sm:$0xf] %v840
  %969 = vst [vmem:[%s2 + $0xe4] sm:$0xf] %v841
  %970 = vst [vmem:[%s2 + $0xe8] sm:$0xf] %v842
  %971 = vst [vmem:[%s2 + $0xec] sm:$0xf] %v843
  %972 = vst [vmem:[%s2 + $0xf0] sm:$0xf] %v844
  %973 = vst [vmem:[%s2 + $0xf4] sm:$0xf] %v845
  %974 = vst [vmem:[%s2 + $0xf8] sm:$0xf] %v846
  %975 = vst [vmem:[%s2 + $0xfc] sm:$0xf] %v847
  %v976 = vadd.f32 %v402, %v405
  %v977 = vadd.f32 %v976, %v410
  %v978 = vadd.f32 %v977, %v413
  %v979 = vadd.f32 %v978, %v418
  %v980 = vadd.f32 %v979, %v421
  %v981 = vadd.f32 %v980, %v426
  %v982 = vadd.f32 %v981, %v429
  %v983 = vadd.f32 %v982, %v434
  %v984 = vadd.f32 %v983, %v437
  %v985 = vadd.f32 %v984, %v442
  %v986 = vadd.f32 %v985, %v445
  %v987 = vadd.f32 %v986, %v450
  %v988 = vadd.f32 %v987, %v453
  %v989 = vadd.f32 %v988, %v458
  %v990 = vadd.f32 %v989, %v461
  %v991 = vadd.f32 %v990, %v466
  %v992 = vadd.f32 %v991, %v469
  %v993 = vadd.f32 %v992, %v474
  %v994 = vadd.f32 %v993, %v477
  %v995 = vadd.f32 %v994, %v482
  %v996 = vadd.f32 %v995, %v485
  %v997 = vadd.f32 %v996, %v490
  %v998 = vadd.f32 %v997, %v493
  %v999 = vadd.f32 %v998, %v498
  %v1000 = vadd.f32 %v999, %v501
  %v1001 = vadd.f32 %v1000, %v506
  %v1002 = vadd.f32 %v1001, %v509
  %v1003 = vadd.f32 %v1002, %v514
  %v1004 = vadd.f32 %v1003, %v517
  %v1005 = vadd.f32 %v1004, %v522
  %v1006 = vadd.f32 %v1005, %v525
  %v1007 = vadd.f32 %v1006, %v530
  %v1008 = vadd.f32 %v1007, %v533
  %v1009 = vadd.f32 %v1008, %v538
  %v1010 = vadd.f32 %v1009, %v541
  %v1011 = vadd.f32 %v1010, %v546
  %v1012 = vadd.f32 %v1011, %v549
  %v1013 = vadd.f32 %v1012, %v554
  %v1014 = vadd.f32 %v1013, %v557
  %v1015 = vadd.f32 %v1014, %v562
  %v1016 = vadd.f32 %v1015, %v565
  %v1017 = vadd.f32 %v1016, %v570
  %v1018 = vadd.f32 %v1017, %v573
  %v1019 = vadd.f32 %v1018, %v578
  %v1020 = vadd.f32 %v1019, %v581
  %v1021 = vadd.f32 %v1020, %v586
  %v1022 = vadd.f32 %v1021, %v589
  %v1023 = vadd.f32 %v1022, %v594
  %v1024 = vadd.f32 %v1023, %v597
  %v1025 = vadd.f32 %v1024, %v602
  %v1026 = vadd.f32 %v1025, %v605
  %v1027 = vadd.f32 %v1026, %v610
  %v1028 = vadd.f32 %v1027, %v613
  %v1029 = vadd.f32 %v1028, %v618
  %v1030 = vadd.f32 %v1029, %v621
  %v1031 = vadd.f32 %v1030, %v626
  %v1032 = vadd.f32 %v1031, %v629
  %v1033 = vadd.f32 %v1032, %v634
  %v1034 = vadd.f32 %v1033, %v637
  %v1035 = vadd.f32 %v1034, %v642
  %v1036 = vadd.f32 %v1035, %v645
  %v1037 = vadd.f32 %v1036, %v650
  %v1038 = vadd.f32 %v1037, %v653
  %v1039 = vrot.slane %v1038, 4
  %v1040 = vadd.f32 %v1038, %v1039
  %v1041 = vrot.slane %v1040, 2
  %v1042 = vadd.f32 %v1040, %v1041
  %v1043 = vrot.slane %v1042, 1
  %v1044 = vadd.f32 %v1042, %v1043
  %v1045 = vmul.f32 %v402, %v402
  %v1046 = vmul.f32 %v405, %v405
  %v1047 = vmul.f32 %v410, %v410
  %v1048 = vmul.f32 %v413, %v413
  %v1049 = vmul.f32 %v418, %v418
  %v1050 = vmul.f32 %v421, %v421
  %v1051 = vmul.f32 %v426, %v426
  %v1052 = vmul.f32 %v429, %v429
  %v1053 = vmul.f32 %v434, %v434
  %v1054 = vmul.f32 %v437, %v437
  %v1055 = vmul.f32 %v442, %v442
  %v1056 = vmul.f32 %v445, %v445
  %v1057 = vmul.f32 %v450, %v450
  %v1058 = vmul.f32 %v453, %v453
  %v1059 = vmul.f32 %v458, %v458
  %v1060 = vmul.f32 %v461, %v461
  %v1061 = vmul.f32 %v466, %v466
  %v1062 = vmul.f32 %v469, %v469
  %v1063 = vmul.f32 %v474, %v474
  %v1064 = vmul.f32 %v477, %v477
  %v1065 = vmul.f32 %v482, %v482
  %v1066 = vmul.f32 %v485, %v485
  %v1067 = vmul.f32 %v490, %v490
  %v1068 = vmul.f32 %v493, %v493
  %v1069 = vmul.f32 %v498, %v498
  %v1070 = vmul.f32 %v501, %v501
  %v1071 = vmul.f32 %v506, %v506
  %v1072 = vmul.f32 %v509, %v509
  %v1073 = vmul.f32 %v514, %v514
  %v1074 = vmul.f32 %v517, %v517
  %v1075 = vmul.f32 %v522, %v522
  %v1076 = vmul.f32 %v525, %v525
  %v1077 = vmul.f32 %v530, %v530
  %v1078 = vmul.f32 %v533, %v533
  %v1079 = vmul.f32 %v538, %v538
  %v1080 = vmul.f32 %v541, %v541
  %v1081 = vmul.f32 %v546, %v546
  %v1082 = vmul.f32 %v549, %v549
  %v1083 = vmul.f32 %v554, %v554
  %v1084 = vmul.f32 %v557, %v557
  %v1085 = vmul.f32 %v562, %v562
  %v1086 = vmul.f32 %v565, %v565
  %v1087 = vmul.f32 %v570, %v570
  %v1088 = vmul.f32 %v573, %v573
  %v1089 = vmul.f32 %v578, %v578
  %v1090 = vmul.f32 %v581, %v581
  %v1091 = vmul.f32 %v586, %v586
  %v1092 = vmul.f32 %v589, %v589
  %v1093 = vmul.f32 %v594, %v594
  %v1094 = vmul.f32 %v597, %v597
  %v1095 = vmul.f32 %v602, %v602
  %v1096 = vmul.f32 %v605, %v605
  %v1097 = vmul.f32 %v610, %v610
  %v1098 = vmul.f32 %v613, %v613
  %v1099 = vmul.f32 %v618, %v618
  %v1100 = vmul.f32 %v621, %v621
  %v1101 = vmul.f32 %v626, %v626
  %v1102 = vmul.f32 %v629, %v629
  %v1103 = vmul.f32 %v634, %v634
  %v1104 = vmul.f32 %v637, %v637
  %v1105 = vmul.f32 %v642, %v642
  %v1106 = vmul.f32 %v645, %v645
  %v1107 = vmul.f32 %v650, %v650
  %v1108 = vmul.f32 %v653, %v653
  %v1109 = vadd.f32 %v1045, %v1046
  %v1110 = vadd.f32 %v1109, %v1047
  %v1111 = vadd.f32 %v1110, %v1048
  %v1112 = vadd.f32 %v1111, %v1049
  %v1113 = vadd.f32 %v1112, %v1050
  %v1114 = vadd.f32 %v1113, %v1051
  %v1115 = vadd.f32 %v1114, %v1052
  %v1116 = vadd.f32 %v1115, %v1053
  %v1117 = vadd.f32 %v1116, %v1054
  %v1118 = vadd.f32 %v1117, %v1055
  %v1119 = vadd.f32 %v1118, %v1056
  %v1120 = vadd.f32 %v1119, %v1057
  %v1121 = vadd.f32 %v1120, %v1058
  %v1122 = vadd.f32 %v1121, %v1059
  %v1123 = vadd.f32 %v1122, %v1060
  %v1124 = vadd.f32 %v1123, %v1061
  %v1125 = vadd.f32 %v1124, %v1062
  %v1126 = vadd.f32 %v1125, %v1063
  %v1127 = vadd.f32 %v1126, %v1064
  %v1128 = vadd.f32 %v1127, %v1065
  %v1129 = vadd.f32 %v1128, %v1066
  %v1130 = vadd.f32 %v1129, %v1067
  %v1131 = vadd.f32 %v1130, %v1068
  %v1132 = vadd.f32 %v1131, %v1069
  %v1133 = vadd.f32 %v1132, %v1070
  %v1134 = vadd.f32 %v1133, %v1071
  %v1135 = vadd.f32 %v1134, %v1072
  %v1136 = vadd.f32 %v1135, %v1073
  %v1137 = vadd.f32 %v1136, %v1074
  %v1138 = vadd.f32 %v1137, %v1075
  %v1139 = vadd.f32 %v1138, %v1076
  %v1140 = vadd.f32 %v1139, %v1077
  %v1141 = vadd.f32 %v1140, %v1078
  %v1142 = vadd.f32 %v1141, %v1079
  %v1143 = vadd.f32 %v1142, %v1080
  %v1144 = vadd.f32 %v1143, %v1081
  %v1145 = vadd.f32 %v1144, %v1082
  %v1146 = vadd.f32 %v1145, %v1083
  %v1147 = vadd.f32 %v1146, %v1084
  %v1148 = vadd.f32 %v1147, %v1085
  %v1149 = vadd.f32 %v1148, %v1086
  %v1150 = vadd.f32 %v1149, %v1087
  %v1151 = vadd.f32 %v1150, %v1088
  %v1152 = vadd.f32 %v1151, %v1089
  %v1153 = vadd.f32 %v1152, %v1090
  %v1154 = vadd.f32 %v1153, %v1091
  %v1155 = vadd.f32 %v1154, %v1092
  %v1156 = vadd.f32 %v1155, %v1093
  %v1157 = vadd.f32 %v1156, %v1094
  %v1158 = vadd.f32 %v1157, %v1095
  %v1159 = vadd.f32 %v1158, %v1096
  %v1160 = vadd.f32 %v1159, %v1097
  %v1161 = vadd.f32 %v1160, %v1098
  %v1162 = vadd.f32 %v1161, %v1099
  %v1163 = vadd.f32 %v1162, %v1100
  %v1164 = vadd.f32 %v1163, %v1101
  %v1165 = vadd.f32 %v1164, %v1102
  %v1166 = vadd.f32 %v1165, %v1103
  %v1167 = vadd.f32 %v1166, %v1104
  %v1168 = vadd.f32 %v1167, %v1105
  %v1169 = vadd.f32 %v1168, %v1106
  %v1170 = vadd.f32 %v1169, %v1107
  %v1171 = vadd.f32 %v1170, %v1108
  %v1172 = vrot.slane %v1171, 4
  %v1173 = vadd.f32 %v1171, %v1172
  %v1174 = vrot.slane %v1173, 2
  %v1175 = vadd.f32 %v1173, %v1174
  %v1176 = vrot.slane %v1175, 1
  %v1177 = vadd.f32 %v1175, %v1176
  %v1178 = vlaneseq
  %v1179 = vshrl.u32 %v1178, 7
  %vm1180 = vcmp.eq.s32.totalorder %v1179, 0
  %vm1181 = vcmp.eq.s32.totalorder %v1179, 1
  %v1182 = vsel %vm1181, 1, 0
  %vm1183 = vcmp.eq.s32.totalorder %v1182, 1
  %v1184 = vsel %vm1183, %v1177, 0.0
  %v1185 = vsel %vm1180, 1, 0
  %vm1186 = vcmp.eq.s32.totalorder %v1185, 1
  %v1187 = vsel %vm1186, %v1044, %v1184
  %1188 = vst [vmem:[%s3] sm:$0xff] %v1187
  // Predicated region
  $region10: #{discriminator_forward.9} parent=0 // pred_check
    _
  $region11: #{discriminator_forward.9} parent=0 // pred_check_branch
    %1190 = sbr.rel (0) target = $region13
  $region12: #{discriminator_forward.9} parent=0 // pred_region
    _
  $region13: #{discriminator_forward.9} parent=0 // pred_fallthru
    _
  // Predicated region
  $region14: #{discriminator_forward.9} parent=0 // pred_check
    _
  $region15: #{discriminator_forward.9} parent=0 // pred_check_branch
    %1192 = sbr.rel (0) target = $region17
  $region16: #{discriminator_forward.9} parent=0 // pred_region
    _
  $region17: #{discriminator_forward.9} parent=0 // pred_fallthru
    _
  // Predicated region
  $region18: #{discriminator_forward.9} parent=0 // pred_check
    _
  $region19: #{discriminator_forward.9} parent=0 // pred_check_branch
    %1194 = sbr.rel (0) target = $region21
  $region20: #{discriminator_forward.9} parent=0 // pred_region
    _
  $region21: #{discriminator_forward.9} parent=0 // pred_fallthru
    _
  // Predicated region
  $region22: #{discriminator_forward.9} parent=0 // pred_check
    _
  $region23: #{discriminator_forward.9} parent=0 // pred_check_branch
    %1196 = sbr.rel (0) target = $region25
  $region24: #{discriminator_forward.9} parent=0 // pred_region
    _
  $region25: #{discriminator_forward.9} parent=0 // pred_fallthru
    _

// kernel: discriminator_forward.12
$region0: #{discriminator_forward.12}
  #allocation0 [shape = 'u32[]', space=smem, size = 0x4, offset = 0x4, fixed_abs, tag = 'smem constant byte address 0x4 - core index']
  #allocation1 [shape = 'u32[144,128]{1,0:T(1,128)}', space=vmem, size = 0x12000, scoped, tag = 'internal scratch']
  %s0 = inlined_call_operand.vmem [shape: bf16[128,128], index: 0, kind: input, shape index: {}, may-alias: {0,3}]
  %s1 = inlined_call_operand.vmem [shape: f32[1,128], index: 1, kind: input, shape index: {}]
  %s2 = inlined_call_operand.vmem [shape: f32[1,128], index: 2, kind: input, shape index: {}]
  %s3 = inlined_call_operand.vmem [shape: bf16[128,128], index: 3, kind: output, shape index: {}, may-alias: {0,3}]
  %s4 = sld [smem:[#allocation0]]
  $region22: #{discriminator_forward.12} parent=0
    _
  %s6 = ssub.s32 1, %s4
  %s7 = scalar_select 0, %s6, %s4
  // Predicated region
  $region2: #{discriminator_forward.12} parent=0 // pred_check
    _
  $region3: #{discriminator_forward.12} parent=0 // pred_check_branch
    %9 = sbr.rel (0) target = $region5
  $region4: #{discriminator_forward.12} parent=0 // pred_region
    _
  $region5: #{discriminator_forward.12} parent=0 // pred_fallthru
    _
  // Predicated region
  $region6: #{discriminator_forward.12} parent=0 // pred_check
    _
  $region7: #{discriminator_forward.12} parent=0 // pred_check_branch
    %11 = sbr.rel (0) target = $region9
  $region8: #{discriminator_forward.12} parent=0 // pred_region
    _
  $region9: #{discriminator_forward.12} parent=0 // pred_fallthru
    _
  // Predicated region
  $region10: #{discriminator_forward.12} parent=0 // pred_check
    _
  $region11: #{discriminator_forward.12} parent=0 // pred_check_branch
    %13 = sbr.rel (0) target = $region13
  $region12: #{discriminator_forward.12} parent=0 // pred_region
    _
  $region13: #{discriminator_forward.12} parent=0 // pred_fallthru
    _
  %v14 = vld [vmem:[%s0] sm:$0xf]
  %v15 = vld [vmem:[%s0 + $0x4] sm:$0xf]
  %v16 = vld [vmem:[%s0 + $0x8] sm:$0xf]
  %v17 = vld [vmem:[%s0 + $0xc] sm:$0xf]
  %v18 = vld [vmem:[%s0 + $0x10] sm:$0xf]
  %v19 = vld [vmem:[%s0 + $0x14] sm:$0xf]
  %v20 = vld [vmem:[%s0 + $0x18] sm:$0xf]
  %v21 = vld [vmem:[%s0 + $0x1c] sm:$0xf]
  %v22 = vld [vmem:[%s0 + $0x20] sm:$0xf]
  %v23 = vld [vmem:[%s0 + $0x24] sm:$0xf]
  %v24 = vld [vmem:[%s0 + $0x28] sm:$0xf]
  %v25 = vld [vmem:[%s0 + $0x2c] sm:$0xf]
  %v26 = vld [vmem:[%s0 + $0x30] sm:$0xf]
  %v27 = vld [vmem:[%s0 + $0x34] sm:$0xf]
  %v28 = vld [vmem:[%s0 + $0x38] sm:$0xf]
  %v29 = vld [vmem:[%s0 + $0x3c] sm:$0xf]
  %v30 = vunpack.c.l.bf16 %v14
  %v31 = vunpack.c.l.bf16 %v15
  %v32 = vunpack.c.l.bf16 %v16
  %v33 = vunpack.c.l.bf16 %v17
  %v34 = vunpack.c.l.bf16 %v18
  %v35 = vunpack.c.l.bf16 %v19
  %v36 = vunpack.c.l.bf16 %v20
  %v37 = vunpack.c.l.bf16 %v21
  %v38 = vunpack.c.l.bf16 %v22
  %v39 = vunpack.c.l.bf16 %v23
  %v40 = vunpack.c.l.bf16 %v24
  %v41 = vunpack.c.l.bf16 %v25
  %v42 = vunpack.c.l.bf16 %v26
  %v43 = vunpack.c.l.bf16 %v27
  %v44 = vunpack.c.l.bf16 %v28
  %v45 = vunpack.c.l.bf16 %v29
  %v46 = vld [vmem:[%s1] sm:$0x1]
  %v48 = vlaneseq
  %v49 = vshrl.u32 %v48, 7
  %v50 = vsub.s32 0, %v49
  %v51 = vrot.slane %v46, %v50
  %v53 = vmul.f32 %v30, %v51
  %v54 = vmul.f32 %v31, %v51
  %v55 = vmul.f32 %v32, %v51
  %v56 = vmul.f32 %v33, %v51
  %v57 = vmul.f32 %v34, %v51
  %v58 = vmul.f32 %v35, %v51
  %v59 = vmul.f32 %v36, %v51
  %v60 = vmul.f32 %v37, %v51
  %v61 = vmul.f32 %v38, %v51
  %v62 = vmul.f32 %v39, %v51
  %v63 = vmul.f32 %v40, %v51
  %v64 = vmul.f32 %v41, %v51
  %v65 = vmul.f32 %v42, %v51
  %v66 = vmul.f32 %v43, %v51
  %v67 = vmul.f32 %v44, %v51
  %v68 = vmul.f32 %v45, %v51
  %v69 = vld [vmem:[%s2] sm:$0x1]
  %v71 = vlaneseq
  %v72 = vshrl.u32 %v71, 7
  %v73 = vsub.s32 0, %v72
  %v74 = vrot.slane %v69, %v73
  %v76 = vadd.f32 %v53, %v74
  %v77 = vadd.f32 %v54, %v74
  %v78 = vadd.f32 %v55, %v74
  %v79 = vadd.f32 %v56, %v74
  %v80 = vadd.f32 %v57, %v74
  %v81 = vadd.f32 %v58, %v74
  %v82 = vadd.f32 %v59, %v74
  %v83 = vadd.f32 %v60, %v74
  %v84 = vadd.f32 %v61, %v74
  %v85 = vadd.f32 %v62, %v74
  %v86 = vadd.f32 %v63, %v74
  %v87 = vadd.f32 %v64, %v74
  %v88 = vadd.f32 %v65, %v74
  %v89 = vadd.f32 %v66, %v74
  %v90 = vadd.f32 %v67, %v74
  %v91 = vadd.f32 %v68, %v74
  %vm92 = vcmp.ge.f32.partialorder %v76, 0.0
  %vm93 = vcmp.ge.f32.partialorder %v77, 0.0
  %vm94 = vcmp.ge.f32.partialorder %v78, 0.0
  %vm95 = vcmp.ge.f32.partialorder %v79, 0.0
  %vm96 = vcmp.ge.f32.partialorder %v80, 0.0
  %vm97 = vcmp.ge.f32.partialorder %v81, 0.0
  %vm98 = vcmp.ge.f32.partialorder %v82, 0.0
  %vm99 = vcmp.ge.f32.partialorder %v83, 0.0
  %vm100 = vcmp.ge.f32.partialorder %v84, 0.0
  %vm101 = vcmp.ge.f32.partialorder %v85, 0.0
  %vm102 = vcmp.ge.f32.partialorder %v86, 0.0
  %vm103 = vcmp.ge.f32.partialorder %v87, 0.0
  %vm104 = vcmp.ge.f32.partialorder %v88, 0.0
  %vm105 = vcmp.ge.f32.partialorder %v89, 0.0
  %vm106 = vcmp.ge.f32.partialorder %v90, 0.0
  %vm107 = vcmp.ge.f32.partialorder %v91, 0.0
  %v108 = vmul.f32 %v76, 0.2
  %v109 = vmul.f32 %v77, 0.2
  %v110 = vmul.f32 %v78, 0.2
  %v111 = vmul.f32 %v79, 0.2
  %v112 = vmul.f32 %v80, 0.2
  %v113 = vmul.f32 %v81, 0.2
  %v114 = vmul.f32 %v82, 0.2
  %v115 = vmul.f32 %v83, 0.2
  %v116 = vmul.f32 %v84, 0.2
  %v117 = vmul.f32 %v85, 0.2
  %v118 = vmul.f32 %v86, 0.2
  %v119 = vmul.f32 %v87, 0.2
  %v120 = vmul.f32 %v88, 0.2
  %v121 = vmul.f32 %v89, 0.2
  %v122 = vmul.f32 %v90, 0.2
  %v123 = vmul.f32 %v91, 0.2
  %v124 = vsel %vm92, %v76, %v108
  %v125 = vsel %vm93, %v77, %v109
  %v126 = vsel %vm94, %v78, %v110
  %v127 = vsel %vm95, %v79, %v111
  %v128 = vsel %vm96, %v80, %v112
  %v129 = vsel %vm97, %v81, %v113
  %v130 = vsel %vm98, %v82, %v114
  %v131 = vsel %vm99, %v83, %v115
  %v132 = vsel %vm100, %v84, %v116
  %v133 = vsel %vm101, %v85, %v117
  %v134 = vsel %vm102, %v86, %v118
  %v135 = vsel %vm103, %v87, %v119
  %v136 = vsel %vm104, %v88, %v120
  %v137 = vsel %vm105, %v89, %v121
  %v138 = vsel %vm106, %v90, %v122
  %v139 = vsel %vm107, %v91, %v123
  %v140 = vpack.c.bf16 %v125, %v124
  %v141 = vpack.c.bf16 %v127, %v126
  %v142 = vpack.c.bf16 %v129, %v128
  %v143 = vpack.c.bf16 %v131, %v130
  %v144 = vpack.c.bf16 %v133, %v132
  %v145 = vpack.c.bf16 %v135, %v134
  %v146 = vpack.c.bf16 %v137, %v136
  %v147 = vpack.c.bf16 %v139, %v138
  %v156 = vunpack.c.l.b16 %v140
  %v157 = vunpack.c.h.b16 %v140
  %v158 = vunpack.c.l.b16 %v141
  %v159 = vunpack.c.h.b16 %v141
  %v160 = vunpack.c.l.b16 %v142
  %v161 = vunpack.c.h.b16 %v142
  %v162 = vunpack.c.l.b16 %v143
  %v163 = vunpack.c.h.b16 %v143
  %v164 = vunpack.c.l.b16 %v144
  %v165 = vunpack.c.h.b16 %v144
  %v166 = vunpack.c.l.b16 %v145
  %v167 = vunpack.c.h.b16 %v145
  %v168 = vunpack.c.l.b16 %v146
  %v169 = vunpack.c.h.b16 %v146
  %v170 = vunpack.c.l.b16 %v147
  %v171 = vunpack.c.h.b16 %v147
  %v172 = vpack.c.b16 %v156, %v156
  %v173 = vpack.c.b16 %v157, %v157
  %v174 = vpack.c.b16 %v158, %v158
  %v175 = vpack.c.b16 %v159, %v159
  %v176 = vpack.c.b16 %v160, %v160
  %v177 = vpack.c.b16 %v161, %v161
  %v178 = vpack.c.b16 %v162, %v162
  %v179 = vpack.c.b16 %v163, %v163
  %v180 = vpack.c.b16 %v164, %v164
  %v181 = vpack.c.b16 %v165, %v165
  %v182 = vpack.c.b16 %v166, %v166
  %v183 = vpack.c.b16 %v167, %v167
  %v184 = vpack.c.b16 %v168, %v168
  %v185 = vpack.c.b16 %v169, %v169
  %v186 = vpack.c.b16 %v170, %v170
  %v187 = vpack.c.b16 %v171, %v171
  %204 = vst [vmem:[%s3] sm:$0xf] %v172
  %205 = vst [vmem:[%s3 + $0x4] sm:$0xf] %v173
  %206 = vst [vmem:[%s3 + $0x8] sm:$0xf] %v174
  %207 = vst [vmem:[%s3 + $0xc] sm:$0xf] %v175
  %208 = vst [vmem:[%s3 + $0x10] sm:$0xf] %v176
  %209 = vst [vmem:[%s3 + $0x14] sm:$0xf] %v177
  %210 = vst [vmem:[%s3 + $0x18] sm:$0xf] %v178
  %211 = vst [vmem:[%s3 + $0x1c] sm:$0xf] %v179
  %212 = vst [vmem:[%s3 + $0x20] sm:$0xf] %v180
  %213 = vst [vmem:[%s3 + $0x24] sm:$0xf] %v181
  %214 = vst [vmem:[%s3 + $0x28] sm:$0xf] %v182
  %215 = vst [vmem:[%s3 + $0x2c] sm:$0xf] %v183
  %216 = vst [vmem:[%s3 + $0x30] sm:$0xf] %v184
  %217 = vst [vmem:[%s3 + $0x34] sm:$0xf] %v185
  %218 = vst [vmem:[%s3 + $0x38] sm:$0xf] %v186
  %219 = vst [vmem:[%s3 + $0x3c] sm:$0xf] %v187
  // Predicated region
  $region14: #{discriminator_forward.12} parent=0 // pred_check
    _
  $region15: #{discriminator_forward.12} parent=0 // pred_check_branch
    %221 = sbr.rel (0) target = $region17
  $region16: #{discriminator_forward.12} parent=0 // pred_region
    _
  $region17: #{discriminator_forward.12} parent=0 // pred_fallthru
    _
  // Predicated region
  $region18: #{discriminator_forward.12} parent=0 // pred_check
    _
  $region19: #{discriminator_forward.12} parent=0 // pred_check_branch
    %223 = sbr.rel (0) target = $region21
  $region20: #{discriminator_forward.12} parent=0 // pred_region
    _
  $region21: #{discriminator_forward.12} parent=0 // pred_fallthru
    _

// kernel: discriminator_forward.11
$region0: #{discriminator_forward.11}
  #allocation0 [shape = 'u32[]', space=smem, size = 0x4, offset = 0x4, fixed_abs, tag = 'smem constant byte address 0x4 - core index']
  #allocation1 [shape = 'u32[144,128]{1,0:T(1,128)}', space=vmem, size = 0x12000, scoped, tag = 'internal scratch']
  %s0 = inlined_call_operand.vmem [shape: bf16[128,1024], index: 0, kind: input, shape index: {}]
  %s1 = inlined_call_operand.vmem [shape: bf16[1024,128], index: 1, kind: input, shape index: {}]
  %s2 = inlined_call_operand.vmem [shape: bf16[128,128], index: 2, kind: output, shape index: {0}]
  %s3 = inlined_call_operand.vmem [shape: f32[8,128], index: 3, kind: output, shape index: {1}]
  %4 = xla_tuple %s2, %s3
  %s5 = sld [smem:[#allocation0]]
  $region26: #{discriminator_forward.11} parent=0
    _
  %s7 = ssub.s32 1, %s5
  %s8 = scalar_select 0, %s7, %s5
  // Predicated region
  $region2: #{discriminator_forward.11} parent=0 // pred_check
    _
  $region3: #{discriminator_forward.11} parent=0 // pred_check_branch
    %10 = sbr.rel (0) target = $region5
  $region4: #{discriminator_forward.11} parent=0 // pred_region
    _
  $region5: #{discriminator_forward.11} parent=0 // pred_fallthru
    _
  // Predicated region
  $region6: #{discriminator_forward.11} parent=0 // pred_check
    _
  $region7: #{discriminator_forward.11} parent=0 // pred_check_branch
    %12 = sbr.rel (0) target = $region9
  $region8: #{discriminator_forward.11} parent=0 // pred_region
    _
  $region9: #{discriminator_forward.11} parent=0 // pred_fallthru
    _
  %v14 = vld [vmem:[%s0] sm:$0xff]
  %v15 = vld [vmem:[%s0 + $0x8] sm:$0xff]
  %v16 = vld [vmem:[%s0 + $0x10] sm:$0xff]
  %v17 = vld [vmem:[%s0 + $0x18] sm:$0xff]
  %v18 = vld [vmem:[%s0 + $0x20] sm:$0xff]
  %v19 = vld [vmem:[%s0 + $0x28] sm:$0xff]
  %v20 = vld [vmem:[%s0 + $0x30] sm:$0xff]
  %v21 = vld [vmem:[%s0 + $0x38] sm:$0xff]
  %v22 = vld [vmem:[%s0 + $0x40] sm:$0xff]
  %v23 = vld [vmem:[%s0 + $0x48] sm:$0xff]
  %v24 = vld [vmem:[%s0 + $0x50] sm:$0xff]
  %v25 = vld [vmem:[%s0 + $0x58] sm:$0xff]
  %v26 = vld [vmem:[%s0 + $0x60] sm:$0xff]
  %v27 = vld [vmem:[%s0 + $0x68] sm:$0xff]
  %v28 = vld [vmem:[%s0 + $0x70] sm:$0xff]
  %v29 = vld [vmem:[%s0 + $0x78] sm:$0xff]
  %v30 = vld [vmem:[%s0 + $0x80] sm:$0xff]
  %v31 = vld [vmem:[%s0 + $0x88] sm:$0xff]
  %v32 = vld [vmem:[%s0 + $0x90] sm:$0xff]
  %v33 = vld [vmem:[%s0 + $0x98] sm:$0xff]
  %v34 = vld [vmem:[%s0 + $0xa0] sm:$0xff]
  %v35 = vld [vmem:[%s0 + $0xa8] sm:$0xff]
  %v36 = vld [vmem:[%s0 + $0xb0] sm:$0xff]
  %v37 = vld [vmem:[%s0 + $0xb8] sm:$0xff]
  %v38 = vld [vmem:[%s0 + $0xc0] sm:$0xff]
  %v39 = vld [vmem:[%s0 + $0xc8] sm:$0xff]
  %v40 = vld [vmem:[%s0 + $0xd0] sm:$0xff]
  %v41 = vld [vmem:[%s0 + $0xd8] sm:$0xff]
  %v42 = vld [vmem:[%s0 + $0xe0] sm:$0xff]
  %v43 = vld [vmem:[%s0 + $0xe8] sm:$0xff]
  %v44 = vld [vmem:[%s0 + $0xf0] sm:$0xff]
  %v45 = vld [vmem:[%s0 + $0xf8] sm:$0xff]
  %v46 = vld [vmem:[%s0 + $0x100] sm:$0xff]
  %v47 = vld [vmem:[%s0 + $0x108] sm:$0xff]
  %v48 = vld [vmem:[%s0 + $0x110] sm:$0xff]
  %v49 = vld [vmem:[%s0 + $0x118] sm:$0xff]
  %v50 = vld [vmem:[%s0 + $0x120] sm:$0xff]
  %v51 = vld [vmem:[%s0 + $0x128] sm:$0xff]
  %v52 = vld [vmem:[%s0 + $0x130] sm:$0xff]
  %v53 = vld [vmem:[%s0 + $0x138] sm:$0xff]
  %v54 = vld [vmem:[%s0 + $0x140] sm:$0xff]
  %v55 = vld [vmem:[%s0 + $0x148] sm:$0xff]
  %v56 = vld [vmem:[%s0 + $0x150] sm:$0xff]
  %v57 = vld [vmem:[%s0 + $0x158] sm:$0xff]
  %v58 = vld [vmem:[%s0 + $0x160] sm:$0xff]
  %v59 = vld [vmem:[%s0 + $0x168] sm:$0xff]
  %v60 = vld [vmem:[%s0 + $0x170] sm:$0xff]
  %v61 = vld [vmem:[%s0 + $0x178] sm:$0xff]
  %v62 = vld [vmem:[%s0 + $0x180] sm:$0xff]
  %v63 = vld [vmem:[%s0 + $0x188] sm:$0xff]
  %v64 = vld [vmem:[%s0 + $0x190] sm:$0xff]
  %v65 = vld [vmem:[%s0 + $0x198] sm:$0xff]
  %v66 = vld [vmem:[%s0 + $0x1a0] sm:$0xff]
  %v67 = vld [vmem:[%s0 + $0x1a8] sm:$0xff]
  %v68 = vld [vmem:[%s0 + $0x1b0] sm:$0xff]
  %v69 = vld [vmem:[%s0 + $0x1b8] sm:$0xff]
  %v70 = vld [vmem:[%s0 + $0x1c0] sm:$0xff]
  %v71 = vld [vmem:[%s0 + $0x1c8] sm:$0xff]
  %v72 = vld [vmem:[%s0 + $0x1d0] sm:$0xff]
  %v73 = vld [vmem:[%s0 + $0x1d8] sm:$0xff]
  %v74 = vld [vmem:[%s0 + $0x1e0] sm:$0xff]
  %v75 = vld [vmem:[%s0 + $0x1e8] sm:$0xff]
  %v76 = vld [vmem:[%s0 + $0x1f0] sm:$0xff]
  %v77 = vld [vmem:[%s0 + $0x1f8] sm:$0xff]
  %v78 = vld [vmem:[%s1] sm:$0xf]
  %v79 = vld [vmem:[%s1 + $0x4] sm:$0xf]
  %v80 = vld [vmem:[%s1 + $0x8] sm:$0xf]
  %v81 = vld [vmem:[%s1 + $0xc] sm:$0xf]
  %v82 = vld [vmem:[%s1 + $0x10] sm:$0xf]
  %v83 = vld [vmem:[%s1 + $0x14] sm:$0xf]
  %v84 = vld [vmem:[%s1 + $0x18] sm:$0xf]
  %v85 = vld [vmem:[%s1 + $0x1c] sm:$0xf]
  %v86 = vld [vmem:[%s1 + $0x20] sm:$0xf]
  %v87 = vld [vmem:[%s1 + $0x24] sm:$0xf]
  %v88 = vld [vmem:[%s1 + $0x28] sm:$0xf]
  %v89 = vld [vmem:[%s1 + $0x2c] sm:$0xf]
  %v90 = vld [vmem:[%s1 + $0x30] sm:$0xf]
  %v91 = vld [vmem:[%s1 + $0x34] sm:$0xf]
  %v92 = vld [vmem:[%s1 + $0x38] sm:$0xf]
  %v93 = vld [vmem:[%s1 + $0x3c] sm:$0xf]
  %v94 = vld [vmem:[%s1 + $0x40] sm:$0xf]
  %v95 = vld [vmem:[%s1 + $0x44] sm:$0xf]
  %v96 = vld [vmem:[%s1 + $0x48] sm:$0xf]
  %v97 = vld [vmem:[%s1 + $0x4c] sm:$0xf]
  %v98 = vld [vmem:[%s1 + $0x50] sm:$0xf]
  %v99 = vld [vmem:[%s1 + $0x54] sm:$0xf]
  %v100 = vld [vmem:[%s1 + $0x58] sm:$0xf]
  %v101 = vld [vmem:[%s1 + $0x5c] sm:$0xf]
  %v102 = vld [vmem:[%s1 + $0x60] sm:$0xf]
  %v103 = vld [vmem:[%s1 + $0x64] sm:$0xf]
  %v104 = vld [vmem:[%s1 + $0x68] sm:$0xf]
  %v105 = vld [vmem:[%s1 + $0x6c] sm:$0xf]
  %v106 = vld [vmem:[%s1 + $0x70] sm:$0xf]
  %v107 = vld [vmem:[%s1 + $0x74] sm:$0xf]
  %v108 = vld [vmem:[%s1 + $0x78] sm:$0xf]
  %v109 = vld [vmem:[%s1 + $0x7c] sm:$0xf]
  %v110 = vld [vmem:[%s1 + $0x80] sm:$0xf]
  %v111 = vld [vmem:[%s1 + $0x84] sm:$0xf]
  %v112 = vld [vmem:[%s1 + $0x88] sm:$0xf]
  %v113 = vld [vmem:[%s1 + $0x8c] sm:$0xf]
  %v114 = vld [vmem:[%s1 + $0x90] sm:$0xf]
  %v115 = vld [vmem:[%s1 + $0x94] sm:$0xf]
  %v116 = vld [vmem:[%s1 + $0x98] sm:$0xf]
  %v117 = vld [vmem:[%s1 + $0x9c] sm:$0xf]
  %v118 = vld [vmem:[%s1 + $0xa0] sm:$0xf]
  %v119 = vld [vmem:[%s1 + $0xa4] sm:$0xf]
  %v120 = vld [vmem:[%s1 + $0xa8] sm:$0xf]
  %v121 = vld [vmem:[%s1 + $0xac] sm:$0xf]
  %v122 = vld [vmem:[%s1 + $0xb0] sm:$0xf]
  %v123 = vld [vmem:[%s1 + $0xb4] sm:$0xf]
  %v124 = vld [vmem:[%s1 + $0xb8] sm:$0xf]
  %v125 = vld [vmem:[%s1 + $0xbc] sm:$0xf]
  %v126 = vld [vmem:[%s1 + $0xc0] sm:$0xf]
  %v127 = vld [vmem:[%s1 + $0xc4] sm:$0xf]
  %v128 = vld [vmem:[%s1 + $0xc8] sm:$0xf]
  %v129 = vld [vmem:[%s1 + $0xcc] sm:$0xf]
  %v130 = vld [vmem:[%s1 + $0xd0] sm:$0xf]
  %v131 = vld [vmem:[%s1 + $0xd4] sm:$0xf]
  %v132 = vld [vmem:[%s1 + $0xd8] sm:$0xf]
  %v133 = vld [vmem:[%s1 + $0xdc] sm:$0xf]
  %v134 = vld [vmem:[%s1 + $0xe0] sm:$0xf]
  %v135 = vld [vmem:[%s1 + $0xe4] sm:$0xf]
  %v136 = vld [vmem:[%s1 + $0xe8] sm:$0xf]
  %v137 = vld [vmem:[%s1 + $0xec] sm:$0xf]
  %v138 = vld [vmem:[%s1 + $0xf0] sm:$0xf]
  %v139 = vld [vmem:[%s1 + $0xf4] sm:$0xf]
  %v140 = vld [vmem:[%s1 + $0xf8] sm:$0xf]
  %v141 = vld [vmem:[%s1 + $0xfc] sm:$0xf]
  %v142 = vld [vmem:[%s1 + $0x100] sm:$0xf]
  %v143 = vld [vmem:[%s1 + $0x104] sm:$0xf]
  %v144 = vld [vmem:[%s1 + $0x108] sm:$0xf]
  %v145 = vld [vmem:[%s1 + $0x10c] sm:$0xf]
  %v146 = vld [vmem:[%s1 + $0x110] sm:$0xf]
  %v147 = vld [vmem:[%s1 + $0x114] sm:$0xf]
  %v148 = vld [vmem:[%s1 + $0x118] sm:$0xf]
  %v149 = vld [vmem:[%s1 + $0x11c] sm:$0xf]
  %v150 = vld [vmem:[%s1 + $0x120] sm:$0xf]
  %v151 = vld [vmem:[%s1 + $0x124] sm:$0xf]
  %v152 = vld [vmem:[%s1 + $0x128] sm:$0xf]
  %v153 = vld [vmem:[%s1 + $0x12c] sm:$0xf]
  %v154 = vld [vmem:[%s1 + $0x130] sm:$0xf]
  %v155 = vld [vmem:[%s1 + $0x134] sm:$0xf]
  %v156 = vld [vmem:[%s1 + $0x138] sm:$0xf]
  %v157 = vld [vmem:[%s1 + $0x13c] sm:$0xf]
  %v158 = vld [vmem:[%s1 + $0x140] sm:$0xf]
  %v159 = vld [vmem:[%s1 + $0x144] sm:$0xf]
  %v160 = vld [vmem:[%s1 + $0x148] sm:$0xf]
  %v161 = vld [vmem:[%s1 + $0x14c] sm:$0xf]
  %v162 = vld [vmem:[%s1 + $0x150] sm:$0xf]
  %v163 = vld [vmem:[%s1 + $0x154] sm:$0xf]
  %v164 = vld [vmem:[%s1 + $0x158] sm:$0xf]
  %v165 = vld [vmem:[%s1 + $0x15c] sm:$0xf]
  %v166 = vld [vmem:[%s1 + $0x160] sm:$0xf]
  %v167 = vld [vmem:[%s1 + $0x164] sm:$0xf]
  %v168 = vld [vmem:[%s1 + $0x168] sm:$0xf]
  %v169 = vld [vmem:[%s1 + $0x16c] sm:$0xf]
  %v170 = vld [vmem:[%s1 + $0x170] sm:$0xf]
  %v171 = vld [vmem:[%s1 + $0x174] sm:$0xf]
  %v172 = vld [vmem:[%s1 + $0x178] sm:$0xf]
  %v173 = vld [vmem:[%s1 + $0x17c] sm:$0xf]
  %v174 = vld [vmem:[%s1 + $0x180] sm:$0xf]
  %v175 = vld [vmem:[%s1 + $0x184] sm:$0xf]
  %v176 = vld [vmem:[%s1 + $0x188] sm:$0xf]
  %v177 = vld [vmem:[%s1 + $0x18c] sm:$0xf]
  %v178 = vld [vmem:[%s1 + $0x190] sm:$0xf]
  %v179 = vld [vmem:[%s1 + $0x194] sm:$0xf]
  %v180 = vld [vmem:[%s1 + $0x198] sm:$0xf]
  %v181 = vld [vmem:[%s1 + $0x19c] sm:$0xf]
  %v182 = vld [vmem:[%s1 + $0x1a0] sm:$0xf]
  %v183 = vld [vmem:[%s1 + $0x1a4] sm:$0xf]
  %v184 = vld [vmem:[%s1 + $0x1a8] sm:$0xf]
  %v185 = vld [vmem:[%s1 + $0x1ac] sm:$0xf]
  %v186 = vld [vmem:[%s1 + $0x1b0] sm:$0xf]
  %v187 = vld [vmem:[%s1 + $0x1b4] sm:$0xf]
  %v188 = vld [vmem:[%s1 + $0x1b8] sm:$0xf]
  %v189 = vld [vmem:[%s1 + $0x1bc] sm:$0xf]
  %v190 = vld [vmem:[%s1 + $0x1c0] sm:$0xf]
  %v191 = vld [vmem:[%s1 + $0x1c4] sm:$0xf]
  %v192 = vld [vmem:[%s1 + $0x1c8] sm:$0xf]
  %v193 = vld [vmem:[%s1 + $0x1cc] sm:$0xf]
  %v194 = vld [vmem:[%s1 + $0x1d0] sm:$0xf]
  %v195 = vld [vmem:[%s1 + $0x1d4] sm:$0xf]
  %v196 = vld [vmem:[%s1 + $0x1d8] sm:$0xf]
  %v197 = vld [vmem:[%s1 + $0x1dc] sm:$0xf]
  %v198 = vld [vmem:[%s1 + $0x1e0] sm:$0xf]
  %v199 = vld [vmem:[%s1 + $0x1e4] sm:$0xf]
  %v200 = vld [vmem:[%s1 + $0x1e8] sm:$0xf]
  %v201 = vld [vmem:[%s1 + $0x1ec] sm:$0xf]
  %v202 = vld [vmem:[%s1 + $0x1f0] sm:$0xf]
  %v203 = vld [vmem:[%s1 + $0x1f4] sm:$0xf]
  %v204 = vld [vmem:[%s1 + $0x1f8] sm:$0xf]
  %v205 = vld [vmem:[%s1 + $0x1fc] sm:$0xf]
  %v270 = vunpack.c.l.b16 %v14
  %v271 = vunpack.c.h.b16 %v14
  %v272 = vunpack.c.l.b16 %v15
  %v273 = vunpack.c.h.b16 %v15
  %v274 = vunpack.c.l.b16 %v16
  %v275 = vunpack.c.h.b16 %v16
  %v276 = vunpack.c.l.b16 %v17
  %v277 = vunpack.c.h.b16 %v17
  %v278 = vunpack.c.l.b16 %v18
  %v279 = vunpack.c.h.b16 %v18
  %v280 = vunpack.c.l.b16 %v19
  %v281 = vunpack.c.h.b16 %v19
  %v282 = vunpack.c.l.b16 %v20
  %v283 = vunpack.c.h.b16 %v20
  %v284 = vunpack.c.l.b16 %v21
  %v285 = vunpack.c.h.b16 %v21
  %v286 = vunpack.c.l.b16 %v22
  %v287 = vunpack.c.h.b16 %v22
  %v288 = vunpack.c.l.b16 %v23
  %v289 = vunpack.c.h.b16 %v23
  %v290 = vunpack.c.l.b16 %v24
  %v291 = vunpack.c.h.b16 %v24
  %v292 = vunpack.c.l.b16 %v25
  %v293 = vunpack.c.h.b16 %v25
  %v294 = vunpack.c.l.b16 %v26
  %v295 = vunpack.c.h.b16 %v26
  %v296 = vunpack.c.l.b16 %v27
  %v297 = vunpack.c.h.b16 %v27
  %v298 = vunpack.c.l.b16 %v28
  %v299 = vunpack.c.h.b16 %v28
  %v300 = vunpack.c.l.b16 %v29
  %v301 = vunpack.c.h.b16 %v29
  %v302 = vunpack.c.l.b16 %v30
  %v303 = vunpack.c.h.b16 %v30
  %v304 = vunpack.c.l.b16 %v31
  %v305 = vunpack.c.h.b16 %v31
  %v306 = vunpack.c.l.b16 %v32
  %v307 = vunpack.c.h.b16 %v32
  %v308 = vunpack.c.l.b16 %v33
  %v309 = vunpack.c.h.b16 %v33
  %v310 = vunpack.c.l.b16 %v34
  %v311 = vunpack.c.h.b16 %v34
  %v312 = vunpack.c.l.b16 %v35
  %v313 = vunpack.c.h.b16 %v35
  %v314 = vunpack.c.l.b16 %v36
  %v315 = vunpack.c.h.b16 %v36
  %v316 = vunpack.c.l.b16 %v37
  %v317 = vunpack.c.h.b16 %v37
  %v318 = vunpack.c.l.b16 %v38
  %v319 = vunpack.c.h.b16 %v38
  %v320 = vunpack.c.l.b16 %v39
  %v321 = vunpack.c.h.b16 %v39
  %v322 = vunpack.c.l.b16 %v40
  %v323 = vunpack.c.h.b16 %v40
  %v324 = vunpack.c.l.b16 %v41
  %v325 = vunpack.c.h.b16 %v41
  %v326 = vunpack.c.l.b16 %v42
  %v327 = vunpack.c.h.b16 %v42
  %v328 = vunpack.c.l.b16 %v43
  %v329 = vunpack.c.h.b16 %v43
  %v330 = vunpack.c.l.b16 %v44
  %v331 = vunpack.c.h.b16 %v44
  %v332 = vunpack.c.l.b16 %v45
  %v333 = vunpack.c.h.b16 %v45
  %v334 = vunpack.c.l.b16 %v46
  %v335 = vunpack.c.h.b16 %v46
  %v336 = vunpack.c.l.b16 %v47
  %v337 = vunpack.c.h.b16 %v47
  %v338 = vunpack.c.l.b16 %v48
  %v339 = vunpack.c.h.b16 %v48
  %v340 = vunpack.c.l.b16 %v49
  %v341 = vunpack.c.h.b16 %v49
  %v342 = vunpack.c.l.b16 %v50
  %v343 = vunpack.c.h.b16 %v50
  %v344 = vunpack.c.l.b16 %v51
  %v345 = vunpack.c.h.b16 %v51
  %v346 = vunpack.c.l.b16 %v52
  %v347 = vunpack.c.h.b16 %v52
  %v348 = vunpack.c.l.b16 %v53
  %v349 = vunpack.c.h.b16 %v53
  %v350 = vunpack.c.l.b16 %v54
  %v351 = vunpack.c.h.b16 %v54
  %v352 = vunpack.c.l.b16 %v55
  %v353 = vunpack.c.h.b16 %v55
  %v354 = vunpack.c.l.b16 %v56
  %v355 = vunpack.c.h.b16 %v56
  %v356 = vunpack.c.l.b16 %v57
  %v357 = vunpack.c.h.b16 %v57
  %v358 = vunpack.c.l.b16 %v58
  %v359 = vunpack.c.h.b16 %v58
  %v360 = vunpack.c.l.b16 %v59
  %v361 = vunpack.c.h.b16 %v59
  %v362 = vunpack.c.l.b16 %v60
  %v363 = vunpack.c.h.b16 %v60
  %v364 = vunpack.c.l.b16 %v61
  %v365 = vunpack.c.h.b16 %v61
  %v366 = vunpack.c.l.b16 %v62
  %v367 = vunpack.c.h.b16 %v62
  %v368 = vunpack.c.l.b16 %v63
  %v369 = vunpack.c.h.b16 %v63
  %v370 = vunpack.c.l.b16 %v64
  %v371 = vunpack.c.h.b16 %v64
  %v372 = vunpack.c.l.b16 %v65
  %v373 = vunpack.c.h.b16 %v65
  %v374 = vunpack.c.l.b16 %v66
  %v375 = vunpack.c.h.b16 %v66
  %v376 = vunpack.c.l.b16 %v67
  %v377 = vunpack.c.h.b16 %v67
  %v378 = vunpack.c.l.b16 %v68
  %v379 = vunpack.c.h.b16 %v68
  %v380 = vunpack.c.l.b16 %v69
  %v381 = vunpack.c.h.b16 %v69
  %v382 = vunpack.c.l.b16 %v70
  %v383 = vunpack.c.h.b16 %v70
  %v384 = vunpack.c.l.b16 %v71
  %v385 = vunpack.c.h.b16 %v71
  %v386 = vunpack.c.l.b16 %v72
  %v387 = vunpack.c.h.b16 %v72
  %v388 = vunpack.c.l.b16 %v73
  %v389 = vunpack.c.h.b16 %v73
  %v390 = vunpack.c.l.b16 %v74
  %v391 = vunpack.c.h.b16 %v74
  %v392 = vunpack.c.l.b16 %v75
  %v393 = vunpack.c.h.b16 %v75
  %v394 = vunpack.c.l.b16 %v76
  %v395 = vunpack.c.h.b16 %v76
  %v396 = vunpack.c.l.b16 %v77
  %v397 = vunpack.c.h.b16 %v77
  %v398 = vpack.c.b16 %v278, %v270
  %v399 = vpack.c.b16 %v279, %v271
  %v400 = vpack.c.b16 %v280, %v272
  %v401 = vpack.c.b16 %v281, %v273
  %v402 = vpack.c.b16 %v282, %v274
  %v403 = vpack.c.b16 %v283, %v275
  %v404 = vpack.c.b16 %v284, %v276
  %v405 = vpack.c.b16 %v285, %v277
  %v406 = vpack.c.b16 %v294, %v286
  %v407 = vpack.c.b16 %v295, %v287
  %v408 = vpack.c.b16 %v296, %v288
  %v409 = vpack.c.b16 %v297, %v289
  %v410 = vpack.c.b16 %v298, %v290
  %v411 = vpack.c.b16 %v299, %v291
  %v412 = vpack.c.b16 %v300, %v292
  %v413 = vpack.c.b16 %v301, %v293
  %v414 = vpack.c.b16 %v310, %v302
  %v415 = vpack.c.b16 %v311, %v303
  %v416 = vpack.c.b16 %v312, %v304
  %v417 = vpack.c.b16 %v313, %v305
  %v418 = vpack.c.b16 %v314, %v306
  %v419 = vpack.c.b16 %v315, %v307
  %v420 = vpack.c.b16 %v316, %v308
  %v421 = vpack.c.b16 %v317, %v309
  %v422 = vpack.c.b16 %v326, %v318
  %v423 = vpack.c.b16 %v327, %v319
  %v424 = vpack.c.b16 %v328, %v320
  %v425 = vpack.c.b16 %v329, %v321
  %v426 = vpack.c.b16 %v330, %v322
  %v427 = vpack.c.b16 %v331, %v323
  %v428 = vpack.c.b16 %v332, %v324
  %v429 = vpack.c.b16 %v333, %v325
  %v430 = vpack.c.b16 %v342, %v334
  %v431 = vpack.c.b16 %v343, %v335
  %v432 = vpack.c.b16 %v344, %v336
  %v433 = vpack.c.b16 %v345, %v337
  %v434 = vpack.c.b16 %v346, %v338
  %v435 = vpack.c.b16 %v347, %v339
  %v436 = vpack.c.b16 %v348, %v340
  %v437 = vpack.c.b16 %v349, %v341
  %v438 = vpack.c.b16 %v358, %v350
  %v439 = vpack.c.b16 %v359, %v351
  %v440 = vpack.c.b16 %v360, %v352
  %v441 = vpack.c.b16 %v361, %v353
  %v442 = vpack.c.b16 %v362, %v354
  %v443 = vpack.c.b16 %v363, %v355
  %v444 = vpack.c.b16 %v364, %v356
  %v445 = vpack.c.b16 %v365, %v357
  %v446 = vpack.c.b16 %v374, %v366
  %v447 = vpack.c.b16 %v375, %v367
  %v448 = vpack.c.b16 %v376, %v368
  %v449 = vpack.c.b16 %v377, %v369
  %v450 = vpack.c.b16 %v378, %v370
  %v451 = vpack.c.b16 %v379, %v371
  %v452 = vpack.c.b16 %v380, %v372
  %v453 = vpack.c.b16 %v381, %v373
  %v454 = vpack.c.b16 %v390, %v382
  %v455 = vpack.c.b16 %v391, %v383
  %v456 = vpack.c.b16 %v392, %v384
  %v457 = vpack.c.b16 %v393, %v385
  %v458 = vpack.c.b16 %v394, %v386
  %v459 = vpack.c.b16 %v395, %v387
  %v460 = vpack.c.b16 %v396, %v388
  %v461 = vpack.c.b16 %v397, %v389
  %v654 = vunpack.c.l.b16 %v78
  %v655 = vunpack.c.l.b16 %v79
  %v656 = vunpack.c.l.b16 %v80
  %v657 = vunpack.c.l.b16 %v81
  %v658 = vunpack.c.l.b16 %v82
  %v659 = vunpack.c.l.b16 %v83
  %v660 = vunpack.c.l.b16 %v84
  %v661 = vunpack.c.l.b16 %v85
  %v662 = vunpack.c.l.b16 %v86
  %v663 = vunpack.c.l.b16 %v87
  %v664 = vunpack.c.l.b16 %v88
  %v665 = vunpack.c.l.b16 %v89
  %v666 = vunpack.c.l.b16 %v90
  %v667 = vunpack.c.l.b16 %v91
  %v668 = vunpack.c.l.b16 %v92
  %v669 = vunpack.c.l.b16 %v93
  %v670 = vunpack.c.l.b16 %v94
  %v671 = vunpack.c.l.b16 %v95
  %v672 = vunpack.c.l.b16 %v96
  %v673 = vunpack.c.l.b16 %v97
  %v674 = vunpack.c.l.b16 %v98
  %v675 = vunpack.c.l.b16 %v99
  %v676 = vunpack.c.l.b16 %v100
  %v677 = vunpack.c.l.b16 %v101
  %v678 = vunpack.c.l.b16 %v102
  %v679 = vunpack.c.l.b16 %v103
  %v680 = vunpack.c.l.b16 %v104
  %v681 = vunpack.c.l.b16 %v105
  %v682 = vunpack.c.l.b16 %v106
  %v683 = vunpack.c.l.b16 %v107
  %v684 = vunpack.c.l.b16 %v108
  %v685 = vunpack.c.l.b16 %v109
  %v686 = vunpack.c.l.b16 %v110
  %v687 = vunpack.c.l.b16 %v111
  %v688 = vunpack.c.l.b16 %v112
  %v689 = vunpack.c.l.b16 %v113
  %v690 = vunpack.c.l.b16 %v114
  %v691 = vunpack.c.l.b16 %v115
  %v692 = vunpack.c.l.b16 %v116
  %v693 = vunpack.c.l.b16 %v117
  %v694 = vunpack.c.l.b16 %v118
  %v695 = vunpack.c.l.b16 %v119
  %v696 = vunpack.c.l.b16 %v120
  %v697 = vunpack.c.l.b16 %v121
  %v698 = vunpack.c.l.b16 %v122
  %v699 = vunpack.c.l.b16 %v123
  %v700 = vunpack.c.l.b16 %v124
  %v701 = vunpack.c.l.b16 %v125
  %v702 = vunpack.c.l.b16 %v126
  %v703 = vunpack.c.l.b16 %v127
  %v704 = vunpack.c.l.b16 %v128
  %v705 = vunpack.c.l.b16 %v129
  %v706 = vunpack.c.l.b16 %v130
  %v707 = vunpack.c.l.b16 %v131
  %v708 = vunpack.c.l.b16 %v132
  %v709 = vunpack.c.l.b16 %v133
  %v710 = vunpack.c.l.b16 %v134
  %v711 = vunpack.c.l.b16 %v135
  %v712 = vunpack.c.l.b16 %v136
  %v713 = vunpack.c.l.b16 %v137
  %v714 = vunpack.c.l.b16 %v138
  %v715 = vunpack.c.l.b16 %v139
  %v716 = vunpack.c.l.b16 %v140
  %v717 = vunpack.c.l.b16 %v141
  %v718 = vunpack.c.l.b16 %v142
  %v719 = vunpack.c.l.b16 %v143
  %v720 = vunpack.c.l.b16 %v144
  %v721 = vunpack.c.l.b16 %v145
  %v722 = vunpack.c.l.b16 %v146
  %v723 = vunpack.c.l.b16 %v147
  %v724 = vunpack.c.l.b16 %v148
  %v725 = vunpack.c.l.b16 %v149
  %v726 = vunpack.c.l.b16 %v150
  %v727 = vunpack.c.l.b16 %v151
  %v728 = vunpack.c.l.b16 %v152
  %v729 = vunpack.c.l.b16 %v153
  %v730 = vunpack.c.l.b16 %v154
  %v731 = vunpack.c.l.b16 %v155
  %v732 = vunpack.c.l.b16 %v156
  %v733 = vunpack.c.l.b16 %v157
  %v734 = vunpack.c.l.b16 %v158
  %v735 = vunpack.c.l.b16 %v159
  %v736 = vunpack.c.l.b16 %v160
  %v737 = vunpack.c.l.b16 %v161
  %v738 = vunpack.c.l.b16 %v162
  %v739 = vunpack.c.l.b16 %v163
  %v740 = vunpack.c.l.b16 %v164
  %v741 = vunpack.c.l.b16 %v165
  %v742 = vunpack.c.l.b16 %v166
  %v743 = vunpack.c.l.b16 %v167
  %v744 = vunpack.c.l.b16 %v168
  %v745 = vunpack.c.l.b16 %v169
  %v746 = vunpack.c.l.b16 %v170
  %v747 = vunpack.c.l.b16 %v171
  %v748 = vunpack.c.l.b16 %v172
  %v749 = vunpack.c.l.b16 %v173
  %v750 = vunpack.c.l.b16 %v174
  %v751 = vunpack.c.l.b16 %v175
  %v752 = vunpack.c.l.b16 %v176
  %v753 = vunpack.c.l.b16 %v177
  %v754 = vunpack.c.l.b16 %v178
  %v755 = vunpack.c.l.b16 %v179
  %v756 = vunpack.c.l.b16 %v180
  %v757 = vunpack.c.l.b16 %v181
  %v758 = vunpack.c.l.b16 %v182
  %v759 = vunpack.c.l.b16 %v183
  %v760 = vunpack.c.l.b16 %v184
  %v761 = vunpack.c.l.b16 %v185
  %v762 = vunpack.c.l.b16 %v186
  %v763 = vunpack.c.l.b16 %v187
  %v764 = vunpack.c.l.b16 %v188
  %v765 = vunpack.c.l.b16 %v189
  %v766 = vunpack.c.l.b16 %v190
  %v767 = vunpack.c.l.b16 %v191
  %v768 = vunpack.c.l.b16 %v192
  %v769 = vunpack.c.l.b16 %v193
  %v770 = vunpack.c.l.b16 %v194
  %v771 = vunpack.c.l.b16 %v195
  %v772 = vunpack.c.l.b16 %v196
  %v773 = vunpack.c.l.b16 %v197
  %v774 = vunpack.c.l.b16 %v198
  %v775 = vunpack.c.l.b16 %v199
  %v776 = vunpack.c.l.b16 %v200
  %v777 = vunpack.c.l.b16 %v201
  %v778 = vunpack.c.l.b16 %v202
  %v779 = vunpack.c.l.b16 %v203
  %v780 = vunpack.c.l.b16 %v204
  %v781 = vunpack.c.l.b16 %v205
  %v782 = vpack.c.b16 %v655, %v654
  %v783 = vpack.c.b16 %v657, %v656
  %v784 = vpack.c.b16 %v659, %v658
  %v785 = vpack.c.b16 %v661, %v660
  %v786 = vpack.c.b16 %v663, %v662
  %v787 = vpack.c.b16 %v665, %v664
  %v788 = vpack.c.b16 %v667, %v666
  %v789 = vpack.c.b16 %v669, %v668
  %v790 = vpack.c.b16 %v671, %v670
  %v791 = vpack.c.b16 %v673, %v672
  %v792 = vpack.c.b16 %v675, %v674
  %v793 = vpack.c.b16 %v677, %v676
  %v794 = vpack.c.b16 %v679, %v678
  %v795 = vpack.c.b16 %v681, %v680
  %v796 = vpack.c.b16 %v683, %v682
  %v797 = vpack.c.b16 %v685, %v684
  %v798 = vpack.c.b16 %v687, %v686
  %v799 = vpack.c.b16 %v689, %v688
  %v800 = vpack.c.b16 %v691, %v690
  %v801 = vpack.c.b16 %v693, %v692
  %v802 = vpack.c.b16 %v695, %v694
  %v803 = vpack.c.b16 %v697, %v696
  %v804 = vpack.c.b16 %v699, %v698
  %v805 = vpack.c.b16 %v701, %v700
  %v806 = vpack.c.b16 %v703, %v702
  %v807 = vpack.c.b16 %v705, %v704
  %v808 = vpack.c.b16 %v707, %v706
  %v809 = vpack.c.b16 %v709, %v708
  %v810 = vpack.c.b16 %v711, %v710
  %v811 = vpack.c.b16 %v713, %v712
  %v812 = vpack.c.b16 %v715, %v714
  %v813 = vpack.c.b16 %v717, %v716
  %v814 = vpack.c.b16 %v719, %v718
  %v815 = vpack.c.b16 %v721, %v720
  %v816 = vpack.c.b16 %v723, %v722
  %v817 = vpack.c.b16 %v725, %v724
  %v818 = vpack.c.b16 %v727, %v726
  %v819 = vpack.c.b16 %v729, %v728
  %v820 = vpack.c.b16 %v731, %v730
  %v821 = vpack.c.b16 %v733, %v732
  %v822 = vpack.c.b16 %v735, %v734
  %v823 = vpack.c.b16 %v737, %v736
  %v824 = vpack.c.b16 %v739, %v738
  %v825 = vpack.c.b16 %v741, %v740
  %v826 = vpack.c.b16 %v743, %v742
  %v827 = vpack.c.b16 %v745, %v744
  %v828 = vpack.c.b16 %v747, %v746
  %v829 = vpack.c.b16 %v749, %v748
  %v830 = vpack.c.b16 %v751, %v750
  %v831 = vpack.c.b16 %v753, %v752
  %v832 = vpack.c.b16 %v755, %v754
  %v833 = vpack.c.b16 %v757, %v756
  %v834 = vpack.c.b16 %v759, %v758
  %v835 = vpack.c.b16 %v761, %v760
  %v836 = vpack.c.b16 %v763, %v762
  %v837 = vpack.c.b16 %v765, %v764
  %v838 = vpack.c.b16 %v767, %v766
  %v839 = vpack.c.b16 %v769, %v768
  %v840 = vpack.c.b16 %v771, %v770
  %v841 = vpack.c.b16 %v773, %v772
  %v842 = vpack.c.b16 %v775, %v774
  %v843 = vpack.c.b16 %v777, %v776
  %v844 = vpack.c.b16 %v779, %v778
  %v845 = vpack.c.b16 %v781, %v780
  %910 = vmatprep.subr.bf16.mxu0 0
  %911 = vmatpush1.bf16.msra.mxu0 %v782
  %912 = vmatprep.subr.bf16.mxu0 0
  %913 = vmatpush1.bf16.msra.mxu0 %v783
  %914 = vmatprep.subr.bf16.mxu0 0
  %915 = vmatpush1.bf16.msra.mxu0 %v784
  %916 = vmatprep.subr.bf16.mxu0 0
  %917 = vmatpush1.bf16.msra.mxu0 %v785
  %918 = vmatprep.subr.bf16.mxu0 0
  %919 = vmatpush1.bf16.msra.mxu0 %v786
  %920 = vmatprep.subr.bf16.mxu0 0
  %921 = vmatpush1.bf16.msra.mxu0 %v787
  %922 = vmatprep.subr.bf16.mxu0 0
  %923 = vmatpush1.bf16.msra.mxu0 %v788
  %924 = vmatprep.subr.bf16.mxu0 0
  %925 = vmatpush1.bf16.msra.mxu0 %v789
  %926 = vmatprep.subr.bf16.mxu0 0
  %927 = vmatpush1.bf16.msra.mxu0 %v790
  %928 = vmatprep.subr.bf16.mxu0 0
  %929 = vmatpush1.bf16.msra.mxu0 %v791
  %930 = vmatprep.subr.bf16.mxu0 0
  %931 = vmatpush1.bf16.msra.mxu0 %v792
  %932 = vmatprep.subr.bf16.mxu0 0
  %933 = vmatpush1.bf16.msra.mxu0 %v793
  %934 = vmatprep.subr.bf16.mxu0 0
  %935 = vmatpush1.bf16.msra.mxu0 %v794
  %936 = vmatprep.subr.bf16.mxu0 0
  %937 = vmatpush1.bf16.msra.mxu0 %v795
  %938 = vmatprep.subr.bf16.mxu0 0
  %939 = vmatpush1.bf16.msra.mxu0 %v796
  %940 = vmatprep.subr.bf16.mxu0 0
  %941 = vmatpush1.bf16.msra.mxu0 %v797
  %942 = vmatprep.mubr.bf16.mxu0 %v399
  %943 = vmatmul.mubr.bf16.gmra.mrb[0].mxu0 %v398
  %v944 = vpop.f32.mrb[0].mxu0
  %v945 = vadd.f32 0.0, %v944
  %v946 = vpop.f32.mrb[0].mxu0
  %v947 = vpop.f32.mrb[0].mxu0
  %v948 = vadd.f32 0.0, %v947
  %v949 = vpop.f32.mrb[0].mxu0
  %950 = vmatprep.mubr.bf16.mxu0 %v407
  %951 = vmatmul.mubr.bf16.gmra.mrb[0].mxu0 %v406
  %v952 = vpop.f32.mrb[0].mxu0
  %v953 = vadd.f32 0.0, %v952
  %v954 = vpop.f32.mrb[0].mxu0
  %v955 = vpop.f32.mrb[0].mxu0
  %v956 = vadd.f32 0.0, %v955
  %v957 = vpop.f32.mrb[0].mxu0
  %958 = vmatprep.mubr.bf16.mxu0 %v415
  %959 = vmatmul.mubr.bf16.gmra.mrb[0].mxu0 %v414
  %v960 = vpop.f32.mrb[0].mxu0
  %v961 = vadd.f32 0.0, %v960
  %v962 = vpop.f32.mrb[0].mxu0
  %v963 = vpop.f32.mrb[0].mxu0
  %v964 = vadd.f32 0.0, %v963
  %v965 = vpop.f32.mrb[0].mxu0
  %966 = vmatprep.mubr.bf16.mxu0 %v423
  %967 = vmatmul.mubr.bf16.gmra.mrb[0].mxu0 %v422
  %v968 = vpop.f32.mrb[0].mxu0
  %v969 = vadd.f32 0.0, %v968
  %v970 = vpop.f32.mrb[0].mxu0
  %v971 = vpop.f32.mrb[0].mxu0
  %v972 = vadd.f32 0.0, %v971
  %v973 = vpop.f32.mrb[0].mxu0
  %974 = vmatprep.mubr.bf16.mxu0 %v431
  %975 = vmatmul.mubr.bf16.gmra.mrb[0].mxu0 %v430
  %v976 = vpop.f32.mrb[0].mxu0
  %v977 = vadd.f32 0.0, %v976
  %v978 = vpop.f32.mrb[0].mxu0
  %v979 = vpop.f32.mrb[0].mxu0
  %v980 = vadd.f32 0.0, %v979
  %v981 = vpop.f32.mrb[0].mxu0
  %982 = vmatprep.mubr.bf16.mxu0 %v439
  %983 = vmatmul.mubr.bf16.gmra.mrb[0].mxu0 %v438
  %v984 = vpop.f32.mrb[0].mxu0
  %v985 = vadd.f32 0.0, %v984
  %v986 = vpop.f32.mrb[0].mxu0
  %v987 = vpop.f32.mrb[0].mxu0
  %v988 = vadd.f32 0.0, %v987
  %v989 = vpop.f32.mrb[0].mxu0
  %990 = vmatprep.mubr.bf16.mxu0 %v447
  %991 = vmatmul.mubr.bf16.gmra.mrb[0].mxu0 %v446
  %v992 = vpop.f32.mrb[0].mxu0
  %v993 = vadd.f32 0.0, %v992
  %v994 = vpop.f32.mrb[0].mxu0
  %v995 = vpop.f32.mrb[0].mxu0
  %v996 = vadd.f32 0.0, %v995
  %v997 = vpop.f32.mrb[0].mxu0
  %998 = vmatprep.mubr.bf16.mxu0 %v455
  %999 = vmatmul.mubr.bf16.gmra.mrb[0].mxu0 %v454
  %v1000 = vpop.f32.mrb[0].mxu0
  %v1001 = vadd.f32 0.0, %v1000
  %v1002 = vpop.f32.mrb[0].mxu0
  %v1003 = vpop.f32.mrb[0].mxu0
  %v1004 = vadd.f32 0.0, %v1003
  %v1005 = vpop.f32.mrb[0].mxu0
  %1006 = vdwg.mxu0
  %1007 = vmatprep.subr.bf16.mxu0 0
  %1008 = vmatpush1.bf16.msra.mxu0 %v798
  %1009 = vmatprep.subr.bf16.mxu0 0
  %1010 = vmatpush1.bf16.msra.mxu0 %v799
  %1011 = vmatprep.subr.bf16.mxu0 0
  %1012 = vmatpush1.bf16.msra.mxu0 %v800
  %1013 = vmatprep.subr.bf16.mxu0 0
  %1014 = vmatpush1.bf16.msra.mxu0 %v801
  %1015 = vmatprep.subr.bf16.mxu0 0
  %1016 = vmatpush1.bf16.msra.mxu0 %v802
  %1017 = vmatprep.subr.bf16.mxu0 0
  %1018 = vmatpush1.bf16.msra.mxu0 %v803
  %1019 = vmatprep.subr.bf16.mxu0 0
  %1020 = vmatpush1.bf16.msra.mxu0 %v804
  %1021 = vmatprep.subr.bf16.mxu0 0
  %1022 = vmatpush1.bf16.msra.mxu0 %v805
  %1023 = vmatprep.subr.bf16.mxu0 0
  %1024 = vmatpush1.bf16.msra.mxu0 %v806
  %1025 = vmatprep.subr.bf16.mxu0 0
  %1026 = vmatpush1.bf16.msra.mxu0 %v807
  %1027 = vmatprep.subr.bf16.mxu0 0
  %1028 = vmatpush1.bf16.msra.mxu0 %v808
  %1029 = vmatprep.subr.bf16.mxu0 0
  %1030 = vmatpush1.bf16.msra.mxu0 %v809
  %1031 = vmatprep.subr.bf16.mxu0 0
  %1032 = vmatpush1.bf16.msra.mxu0 %v810
  %1033 = vmatprep.subr.bf16.mxu0 0
  %1034 = vmatpush1.bf16.msra.mxu0 %v811
  %1035 = vmatprep.subr.bf16.mxu0 0
  %1036 = vmatpush1.bf16.msra.mxu0 %v812
  %1037 = vmatprep.subr.bf16.mxu0 0
  %1038 = vmatpush1.bf16.msra.mxu0 %v813
  %1039 = vmatprep.mubr.bf16.mxu0 %v401
  %1040 = vmatmul.mubr.bf16.gmra.mrb[0].mxu0 %v400
  %v1041 = vpop.f32.mrb[0].mxu0
  %v1042 = vadd.f32 %v945, %v1041
  %v1043 = vpop.f32.mrb[0].mxu0
  %v1044 = vpop.f32.mrb[0].mxu0
  %v1045 = vadd.f32 %v948, %v1044
  %v1046 = vpop.f32.mrb[0].mxu0
  %1047 = vmatprep.mubr.bf16.mxu0 %v409
  %1048 = vmatmul.mubr.bf16.gmra.mrb[0].mxu0 %v408
  %v1049 = vpop.f32.mrb[0].mxu0
  %v1050 = vadd.f32 %v953, %v1049
  %v1051 = vpop.f32.mrb[0].mxu0
  %v1052 = vpop.f32.mrb[0].mxu0
  %v1053 = vadd.f32 %v956, %v1052
  %v1054 = vpop.f32.mrb[0].mxu0
  %1055 = vmatprep.mubr.bf16.mxu0 %v417
  %1056 = vmatmul.mubr.bf16.gmra.mrb[0].mxu0 %v416
  %v1057 = vpop.f32.mrb[0].mxu0
  %v1058 = vadd.f32 %v961, %v1057
  %v1059 = vpop.f32.mrb[0].mxu0
  %v1060 = vpop.f32.mrb[0].mxu0
  %v1061 = vadd.f32 %v964, %v1060
  %v1062 = vpop.f32.mrb[0].mxu0
  %1063 = vmatprep.mubr.bf16.mxu0 %v425
  %1064 = vmatmul.mubr.bf16.gmra.mrb[0].mxu0 %v424
  %v1065 = vpop.f32.mrb[0].mxu0
  %v1066 = vadd.f32 %v969, %v1065
  %v1067 = vpop.f32.mrb[0].mxu0
  %v1068 = vpop.f32.mrb[0].mxu0
  %v1069 = vadd.f32 %v972, %v1068
  %v1070 = vpop.f32.mrb[0].mxu0
  %1071 = vmatprep.mubr.bf16.mxu0 %v433
  %1072 = vmatmul.mubr.bf16.gmra.mrb[0].mxu0 %v432
  %v1073 = vpop.f32.mrb[0].mxu0
  %v1074 = vadd.f32 %v977, %v1073
  %v1075 = vpop.f32.mrb[0].mxu0
  %v1076 = vpop.f32.mrb[0].mxu0
  %v1077 = vadd.f32 %v980, %v1076
  %v1078 = vpop.f32.mrb[0].mxu0
  %1079 = vmatprep.mubr.bf16.mxu0 %v441
  %1080 = vmatmul.mubr.bf16.gmra.mrb[0].mxu0 %v440
  %v1081 = vpop.f32.mrb[0].mxu0
  %v1082 = vadd.f32 %v985, %v1081
  %v1083 = vpop.f32.mrb[0].mxu0
  %v1084 = vpop.f32.mrb[0].mxu0
  %v1085 = vadd.f32 %v988, %v1084
  %v1086 = vpop.f32.mrb[0].mxu0
  %1087 = vmatprep.mubr.bf16.mxu0 %v449
  %1088 = vmatmul.mubr.bf16.gmra.mrb[0].mxu0 %v448
  %v1089 = vpop.f32.mrb[0].mxu0
  %v1090 = vadd.f32 %v993, %v1089
  %v1091 = vpop.f32.mrb[0].mxu0
  %v1092 = vpop.f32.mrb[0].mxu0
  %v1093 = vadd.f32 %v996, %v1092
  %v1094 = vpop.f32.mrb[0].mxu0
  %1095 = vmatprep.mubr.bf16.mxu0 %v457
  %1096 = vmatmul.mubr.bf16.gmra.mrb[0].mxu0 %v456
  %v1097 = vpop.f32.mrb[0].mxu0
  %v1098 = vadd.f32 %v1001, %v1097
  %v1099 = vpop.f32.mrb[0].mxu0
  %v1100 = vpop.f32.mrb[0].mxu0
  %v1101 = vadd.f32 %v1004, %v1100
  %v1102 = vpop.f32.mrb[0].mxu0
  %1103 = vdwg.mxu0
  %1104 = vmatprep.subr.bf16.mxu0 0
  %1105 = vmatpush1.bf16.msra.mxu0 %v814
  %1106 = vmatprep.subr.bf16.mxu0 0
  %1107 = vmatpush1.bf16.msra.mxu0 %v815
  %1108 = vmatprep.subr.bf16.mxu0 0
  %1109 = vmatpush1.bf16.msra.mxu0 %v816
  %1110 = vmatprep.subr.bf16.mxu0 0
  %1111 = vmatpush1.bf16.msra.mxu0 %v817
  %1112 = vmatprep.subr.bf16.mxu0 0
  %1113 = vmatpush1.bf16.msra.mxu0 %v818
  %1114 = vmatprep.subr.bf16.mxu0 0
  %1115 = vmatpush1.bf16.msra.mxu0 %v819
  %1116 = vmatprep.subr.bf16.mxu0 0
  %1117 = vmatpush1.bf16.msra.mxu0 %v820
  %1118 = vmatprep.subr.bf16.mxu0 0
  %1119 = vmatpush1.bf16.msra.mxu0 %v821
  %1120 = vmatprep.subr.bf16.mxu0 0
  %1121 = vmatpush1.bf16.msra.mxu0 %v822
  %1122 = vmatprep.subr.bf16.mxu0 0
  %1123 = vmatpush1.bf16.msra.mxu0 %v823
  %1124 = vmatprep.subr.bf16.mxu0 0
  %1125 = vmatpush1.bf16.msra.mxu0 %v824
  %1126 = vmatprep.subr.bf16.mxu0 0
  %1127 = vmatpush1.bf16.msra.mxu0 %v825
  %1128 = vmatprep.subr.bf16.mxu0 0
  %1129 = vmatpush1.bf16.msra.mxu0 %v826
  %1130 = vmatprep.subr.bf16.mxu0 0
  %1131 = vmatpush1.bf16.msra.mxu0 %v827
  %1132 = vmatprep.subr.bf16.mxu0 0
  %1133 = vmatpush1.bf16.msra.mxu0 %v828
  %1134 = vmatprep.subr.bf16.mxu0 0
  %1135 = vmatpush1.bf16.msra.mxu0 %v829
  %1136 = vmatprep.mubr.bf16.mxu0 %v403
  %1137 = vmatmul.mubr.bf16.gmra.mrb[0].mxu0 %v402
  %v1138 = vpop.f32.mrb[0].mxu0
  %v1139 = vadd.f32 %v1042, %v1138
  %v1140 = vpop.f32.mrb[0].mxu0
  %v1141 = vpop.f32.mrb[0].mxu0
  %v1142 = vadd.f32 %v1045, %v1141
  %v1143 = vpop.f32.mrb[0].mxu0
  %1144 = vmatprep.mubr.bf16.mxu0 %v411
  %1145 = vmatmul.mubr.bf16.gmra.mrb[0].mxu0 %v410
  %v1146 = vpop.f32.mrb[0].mxu0
  %v1147 = vadd.f32 %v1050, %v1146
  %v1148 = vpop.f32.mrb[0].mxu0
  %v1149 = vpop.f32.mrb[0].mxu0
  %v1150 = vadd.f32 %v1053, %v1149
  %v1151 = vpop.f32.mrb[0].mxu0
  %1152 = vmatprep.mubr.bf16.mxu0 %v419
  %1153 = vmatmul.mubr.bf16.gmra.mrb[0].mxu0 %v418
  %v1154 = vpop.f32.mrb[0].mxu0
  %v1155 = vadd.f32 %v1058, %v1154
  %v1156 = vpop.f32.mrb[0].mxu0
  %v1157 = vpop.f32.mrb[0].mxu0
  %v1158 = vadd.f32 %v1061, %v1157
  %v1159 = vpop.f32.mrb[0].mxu0
  %1160 = vmatprep.mubr.bf16.mxu0 %v427
  %1161 = vmatmul.mubr.bf16.gmra.mrb[0].mxu0 %v426
  %v1162 = vpop.f32.mrb[0].mxu0
  %v1163 = vadd.f32 %v1066, %v1162
  %v1164 = vpop.f32.mrb[0].mxu0
  %v1165 = vpop.f32.mrb[0].mxu0
  %v1166 = vadd.f32 %v1069, %v1165
  %v1167 = vpop.f32.mrb[0].mxu0
  %1168 = vmatprep.mubr.bf16.mxu0 %v435
  %1169 = vmatmul.mubr.bf16.gmra.mrb[0].mxu0 %v434
  %v1170 = vpop.f32.mrb[0].mxu0
  %v1171 = vadd.f32 %v1074, %v1170
  %v1172 = vpop.f32.mrb[0].mxu0
  %v1173 = vpop.f32.mrb[0].mxu0
  %v1174 = vadd.f32 %v1077, %v1173
  %v1175 = vpop.f32.mrb[0].mxu0
  %1176 = vmatprep.mubr.bf16.mxu0 %v443
  %1177 = vmatmul.mubr.bf16.gmra.mrb[0].mxu0 %v442
  %v1178 = vpop.f32.mrb[0].mxu0
  %v1179 = vadd.f32 %v1082, %v1178
  %v1180 = vpop.f32.mrb[0].mxu0
  %v1181 = vpop.f32.mrb[0].mxu0
  %v1182 = vadd.f32 %v1085, %v1181
  %v1183 = vpop.f32.mrb[0].mxu0
  %1184 = vmatprep.mubr.bf16.mxu0 %v451
  %1185 = vmatmul.mubr.bf16.gmra.mrb[0].mxu0 %v450
  %v1186 = vpop.f32.mrb[0].mxu0
  %v1187 = vadd.f32 %v1090, %v1186
  %v1188 = vpop.f32.mrb[0].mxu0
  %v1189 = vpop.f32.mrb[0].mxu0
  %v1190 = vadd.f32 %v1093, %v1189
  %v1191 = vpop.f32.mrb[0].mxu0
  %1192 = vmatprep.mubr.bf16.mxu0 %v459
  %1193 = vmatmul.mubr.bf16.gmra.mrb[0].mxu0 %v458
  %v1194 = vpop.f32.mrb[0].mxu0
  %v1195 = vadd.f32 %v1098, %v1194
  %v1196 = vpop.f32.mrb[0].mxu0
  %v1197 = vpop.f32.mrb[0].mxu0
  %v1198 = vadd.f32 %v1101, %v1197
  %v1199 = vpop.f32.mrb[0].mxu0
  %1200 = vdwg.mxu0
  %1201 = vmatprep.subr.bf16.mxu0 0
  %1202 = vmatpush1.bf16.msra.mxu0 %v830
  %1203 = vmatprep.subr.bf16.mxu0 0
  %1204 = vmatpush1.bf16.msra.mxu0 %v831
  %1205 = vmatprep.subr.bf16.mxu0 0
  %1206 = vmatpush1.bf16.msra.mxu0 %v832
  %1207 = vmatprep.subr.bf16.mxu0 0
  %1208 = vmatpush1.bf16.msra.mxu0 %v833
  %1209 = vmatprep.subr.bf16.mxu0 0
  %1210 = vmatpush1.bf16.msra.mxu0 %v834
  %1211 = vmatprep.subr.bf16.mxu0 0
  %1212 = vmatpush1.bf16.msra.mxu0 %v835
  %1213 = vmatprep.subr.bf16.mxu0 0
  %1214 = vmatpush1.bf16.msra.mxu0 %v836
  %1215 = vmatprep.subr.bf16.mxu0 0
  %1216 = vmatpush1.bf16.msra.mxu0 %v837
  %1217 = vmatprep.subr.bf16.mxu0 0
  %1218 = vmatpush1.bf16.msra.mxu0 %v838
  %1219 = vmatprep.subr.bf16.mxu0 0
  %1220 = vmatpush1.bf16.msra.mxu0 %v839
  %1221 = vmatprep.subr.bf16.mxu0 0
  %1222 = vmatpush1.bf16.msra.mxu0 %v840
  %1223 = vmatprep.subr.bf16.mxu0 0
  %1224 = vmatpush1.bf16.msra.mxu0 %v841
  %1225 = vmatprep.subr.bf16.mxu0 0
  %1226 = vmatpush1.bf16.msra.mxu0 %v842
  %1227 = vmatprep.subr.bf16.mxu0 0
  %1228 = vmatpush1.bf16.msra.mxu0 %v843
  %1229 = vmatprep.subr.bf16.mxu0 0
  %1230 = vmatpush1.bf16.msra.mxu0 %v844
  %1231 = vmatprep.subr.bf16.mxu0 0
  %1232 = vmatpush1.bf16.msra.mxu0 %v845
  %1233 = vmatprep.mubr.bf16.mxu0 %v405
  %1234 = vmatmul.mubr.bf16.gmra.mrb[0].mxu0 %v404
  %v1235 = vpop.f32.mrb[0].mxu0
  %v1236 = vadd.f32 %v1139, %v1235
  %v1237 = vpop.f32.mrb[0].mxu0
  %v1238 = vpop.f32.mrb[0].mxu0
  %v1239 = vadd.f32 %v1142, %v1238
  %v1240 = vpop.f32.mrb[0].mxu0
  %1241 = vmatprep.mubr.bf16.mxu0 %v413
  %1242 = vmatmul.mubr.bf16.gmra.mrb[0].mxu0 %v412
  %v1243 = vpop.f32.mrb[0].mxu0
  %v1244 = vadd.f32 %v1147, %v1243
  %v1245 = vpop.f32.mrb[0].mxu0
  %v1246 = vpop.f32.mrb[0].mxu0
  %v1247 = vadd.f32 %v1150, %v1246
  %v1248 = vpop.f32.mrb[0].mxu0
  %1249 = vmatprep.mubr.bf16.mxu0 %v421
  %1250 = vmatmul.mubr.bf16.gmra.mrb[0].mxu0 %v420
  %v1251 = vpop.f32.mrb[0].mxu0
  %v1252 = vadd.f32 %v1155, %v1251
  %v1253 = vpop.f32.mrb[0].mxu0
  %v1254 = vpop.f32.mrb[0].mxu0
  %v1255 = vadd.f32 %v1158, %v1254
  %v1256 = vpop.f32.mrb[0].mxu0
  %1257 = vmatprep.mubr.bf16.mxu0 %v429
  %1258 = vmatmul.mubr.bf16.gmra.mrb[0].mxu0 %v428
  %v1259 = vpop.f32.mrb[0].mxu0
  %v1260 = vadd.f32 %v1163, %v1259
  %v1261 = vpop.f32.mrb[0].mxu0
  %v1262 = vpop.f32.mrb[0].mxu0
  %v1263 = vadd.f32 %v1166, %v1262
  %v1264 = vpop.f32.mrb[0].mxu0
  %1265 = vmatprep.mubr.bf16.mxu0 %v437
  %1266 = vmatmul.mubr.bf16.gmra.mrb[0].mxu0 %v436
  %v1267 = vpop.f32.mrb[0].mxu0
  %v1268 = vadd.f32 %v1171, %v1267
  %v1269 = vpop.f32.mrb[0].mxu0
  %v1270 = vpop.f32.mrb[0].mxu0
  %v1271 = vadd.f32 %v1174, %v1270
  %v1272 = vpop.f32.mrb[0].mxu0
  %1273 = vmatprep.mubr.bf16.mxu0 %v445
  %1274 = vmatmul.mubr.bf16.gmra.mrb[0].mxu0 %v444
  %v1275 = vpop.f32.mrb[0].mxu0
  %v1276 = vadd.f32 %v1179, %v1275
  %v1277 = vpop.f32.mrb[0].mxu0
  %v1278 = vpop.f32.mrb[0].mxu0
  %v1279 = vadd.f32 %v1182, %v1278
  %v1280 = vpop.f32.mrb[0].mxu0
  %1281 = vmatprep.mubr.bf16.mxu0 %v453
  %1282 = vmatmul.mubr.bf16.gmra.mrb[0].mxu0 %v452
  %v1283 = vpop.f32.mrb[0].mxu0
  %v1284 = vadd.f32 %v1187, %v1283
  %v1285 = vpop.f32.mrb[0].mxu0
  %v1286 = vpop.f32.mrb[0].mxu0
  %v1287 = vadd.f32 %v1190, %v1286
  %v1288 = vpop.f32.mrb[0].mxu0
  %1289 = vmatprep.mubr.bf16.mxu0 %v461
  %1290 = vmatmul.mubr.bf16.gmra.mrb[0].mxu0 %v460
  %v1291 = vpop.f32.mrb[0].mxu0
  %v1292 = vadd.f32 %v1195, %v1291
  %v1293 = vpop.f32.mrb[0].mxu0
  %v1294 = vpop.f32.mrb[0].mxu0
  %v1295 = vadd.f32 %v1198, %v1294
  %v1296 = vpop.f32.mrb[0].mxu0
  %1297 = vdwg.mxu0
  %v1298 = vpack.c.bf16 %v1239, %v1236
  %v1299 = vpack.c.bf16 %v1247, %v1244
  %v1300 = vpack.c.bf16 %v1255, %v1252
  %v1301 = vpack.c.bf16 %v1263, %v1260
  %v1302 = vpack.c.bf16 %v1271, %v1268
  %v1303 = vpack.c.bf16 %v1279, %v1276
  %v1304 = vpack.c.bf16 %v1287, %v1284
  %v1305 = vpack.c.bf16 %v1295, %v1292
  %v1314 = vunpack.c.l.b16 %v1298
  %v1315 = vunpack.c.h.b16 %v1298
  %v1316 = vunpack.c.l.b16 %v1299
  %v1317 = vunpack.c.h.b16 %v1299
  %v1318 = vunpack.c.l.b16 %v1300
  %v1319 = vunpack.c.h.b16 %v1300
  %v1320 = vunpack.c.l.b16 %v1301
  %v1321 = vunpack.c.h.b16 %v1301
  %v1322 = vunpack.c.l.b16 %v1302
  %v1323 = vunpack.c.h.b16 %v1302
  %v1324 = vunpack.c.l.b16 %v1303
  %v1325 = vunpack.c.h.b16 %v1303
  %v1326 = vunpack.c.l.b16 %v1304
  %v1327 = vunpack.c.h.b16 %v1304
  %v1328 = vunpack.c.l.b16 %v1305
  %v1329 = vunpack.c.h.b16 %v1305
  %v1330 = vpack.c.b16 %v1314, %v1314
  %v1331 = vpack.c.b16 %v1315, %v1315
  %v1332 = vpack.c.b16 %v1316, %v1316
  %v1333 = vpack.c.b16 %v1317, %v1317
  %v1334 = vpack.c.b16 %v1318, %v1318
  %v1335 = vpack.c.b16 %v1319, %v1319
  %v1336 = vpack.c.b16 %v1320, %v1320
  %v1337 = vpack.c.b16 %v1321, %v1321
  %v1338 = vpack.c.b16 %v1322, %v1322
  %v1339 = vpack.c.b16 %v1323, %v1323
  %v1340 = vpack.c.b16 %v1324, %v1324
  %v1341 = vpack.c.b16 %v1325, %v1325
  %v1342 = vpack.c.b16 %v1326, %v1326
  %v1343 = vpack.c.b16 %v1327, %v1327
  %v1344 = vpack.c.b16 %v1328, %v1328
  %v1345 = vpack.c.b16 %v1329, %v1329
  %1362 = vst [vmem:[%s2] sm:$0xf] %v1330
  %1363 = vst [vmem:[%s2 + $0x4] sm:$0xf] %v1331
  %1364 = vst [vmem:[%s2 + $0x8] sm:$0xf] %v1332
  %1365 = vst [vmem:[%s2 + $0xc] sm:$0xf] %v1333
  %1366 = vst [vmem:[%s2 + $0x10] sm:$0xf] %v1334
  %1367 = vst [vmem:[%s2 + $0x14] sm:$0xf] %v1335
  %1368 = vst [vmem:[%s2 + $0x18] sm:$0xf] %v1336
  %1369 = vst [vmem:[%s2 + $0x1c] sm:$0xf] %v1337
  %1370 = vst [vmem:[%s2 + $0x20] sm:$0xf] %v1338
  %1371 = vst [vmem:[%s2 + $0x24] sm:$0xf] %v1339
  %1372 = vst [vmem:[%s2 + $0x28] sm:$0xf] %v1340
  %1373 = vst [vmem:[%s2 + $0x2c] sm:$0xf] %v1341
  %1374 = vst [vmem:[%s2 + $0x30] sm:$0xf] %v1342
  %1375 = vst [vmem:[%s2 + $0x34] sm:$0xf] %v1343
  %1376 = vst [vmem:[%s2 + $0x38] sm:$0xf] %v1344
  %1377 = vst [vmem:[%s2 + $0x3c] sm:$0xf] %v1345
  %v1378 = vadd.f32 %v1236, %v1239
  %v1379 = vadd.f32 %v1378, %v1244
  %v1380 = vadd.f32 %v1379, %v1247
  %v1381 = vadd.f32 %v1380, %v1252
  %v1382 = vadd.f32 %v1381, %v1255
  %v1383 = vadd.f32 %v1382, %v1260
  %v1384 = vadd.f32 %v1383, %v1263
  %v1385 = vadd.f32 %v1384, %v1268
  %v1386 = vadd.f32 %v1385, %v1271
  %v1387 = vadd.f32 %v1386, %v1276
  %v1388 = vadd.f32 %v1387, %v1279
  %v1389 = vadd.f32 %v1388, %v1284
  %v1390 = vadd.f32 %v1389, %v1287
  %v1391 = vadd.f32 %v1390, %v1292
  %v1392 = vadd.f32 %v1391, %v1295
  %v1393 = vrot.slane %v1392, 4
  %v1394 = vadd.f32 %v1392, %v1393
  %v1395 = vrot.slane %v1394, 2
  %v1396 = vadd.f32 %v1394, %v1395
  %v1397 = vrot.slane %v1396, 1
  %v1398 = vadd.f32 %v1396, %v1397
  %v1399 = vmul.f32 %v1236, %v1236
  %v1400 = vmul.f32 %v1239, %v1239
  %v1401 = vmul.f32 %v1244, %v1244
  %v1402 = vmul.f32 %v1247, %v1247
  %v1403 = vmul.f32 %v1252, %v1252
  %v1404 = vmul.f32 %v1255, %v1255
  %v1405 = vmul.f32 %v1260, %v1260
  %v1406 = vmul.f32 %v1263, %v1263
  %v1407 = vmul.f32 %v1268, %v1268
  %v1408 = vmul.f32 %v1271, %v1271
  %v1409 = vmul.f32 %v1276, %v1276
  %v1410 = vmul.f32 %v1279, %v1279
  %v1411 = vmul.f32 %v1284, %v1284
  %v1412 = vmul.f32 %v1287, %v1287
  %v1413 = vmul.f32 %v1292, %v1292
  %v1414 = vmul.f32 %v1295, %v1295
  %v1415 = vadd.f32 %v1399, %v1400
  %v1416 = vadd.f32 %v1415, %v1401
  %v1417 = vadd.f32 %v1416, %v1402
  %v1418 = vadd.f32 %v1417, %v1403
  %v1419 = vadd.f32 %v1418, %v1404
  %v1420 = vadd.f32 %v1419, %v1405
  %v1421 = vadd.f32 %v1420, %v1406
  %v1422 = vadd.f32 %v1421, %v1407
  %v1423 = vadd.f32 %v1422, %v1408
  %v1424 = vadd.f32 %v1423, %v1409
  %v1425 = vadd.f32 %v1424, %v1410
  %v1426 = vadd.f32 %v1425, %v1411
  %v1427 = vadd.f32 %v1426, %v1412
  %v1428 = vadd.f32 %v1427, %v1413
  %v1429 = vadd.f32 %v1428, %v1414
  %v1430 = vrot.slane %v1429, 4
  %v1431 = vadd.f32 %v1429, %v1430
  %v1432 = vrot.slane %v1431, 2
  %v1433 = vadd.f32 %v1431, %v1432
  %v1434 = vrot.slane %v1433, 1
  %v1435 = vadd.f32 %v1433, %v1434
  %v1436 = vlaneseq
  %v1437 = vshrl.u32 %v1436, 7
  %vm1438 = vcmp.eq.s32.totalorder %v1437, 0
  %vm1439 = vcmp.eq.s32.totalorder %v1437, 1
  %v1440 = vsel %vm1439, 1, 0
  %vm1441 = vcmp.eq.s32.totalorder %v1440, 1
  %v1442 = vsel %vm1441, %v1435, 0.0
  %v1443 = vsel %vm1438, 1, 0
  %vm1444 = vcmp.eq.s32.totalorder %v1443, 1
  %v1445 = vsel %vm1444, %v1398, %v1442
  %1446 = vst [vmem:[%s3] sm:$0xff] %v1445
  // Predicated region
  $region10: #{discriminator_forward.11} parent=0 // pred_check
    _
  $region11: #{discriminator_forward.11} parent=0 // pred_check_branch
    %1448 = sbr.rel (0) target = $region13
  $region12: #{discriminator_forward.11} parent=0 // pred_region
    _
  $region13: #{discriminator_forward.11} parent=0 // pred_fallthru
    _
  // Predicated region
  $region14: #{discriminator_forward.11} parent=0 // pred_check
    _
  $region15: #{discriminator_forward.11} parent=0 // pred_check_branch
    %1450 = sbr.rel (0) target = $region17
  $region16: #{discriminator_forward.11} parent=0 // pred_region
    _
  $region17: #{discriminator_forward.11} parent=0 // pred_fallthru
    _
  // Predicated region
  $region18: #{discriminator_forward.11} parent=0 // pred_check
    _
  $region19: #{discriminator_forward.11} parent=0 // pred_check_branch
    %1452 = sbr.rel (0) target = $region21
  $region20: #{discriminator_forward.11} parent=0 // pred_region
    _
  $region21: #{discriminator_forward.11} parent=0 // pred_fallthru
    _
  // Predicated region
  $region22: #{discriminator_forward.11} parent=0 // pred_check
    _
  $region23: #{discriminator_forward.11} parent=0 // pred_check_branch
    %1454 = sbr.rel (0) target = $region25
  $region24: #{discriminator_forward.11} parent=0 // pred_region
    _
  $region25: #{discriminator_forward.11} parent=0 // pred_fallthru
    _

// kernel: discriminator_forward.14
$region0: #{discriminator_forward.14}
  #allocation0 [shape = 'u32[]', space=smem, size = 0x4, offset = 0x4, fixed_abs, tag = 'smem constant byte address 0x4 - core index']
  #allocation1 [shape = 'u32[144,128]{1,0:T(1,128)}', space=vmem, size = 0x12000, scoped, tag = 'internal scratch']
  %s0 = inlined_call_operand.vmem [shape: bf16[32,256], index: 0, kind: input, shape index: {}, may-alias: {0,3}]
  %s1 = inlined_call_operand.vmem [shape: f32[1,256], index: 1, kind: input, shape index: {}]
  %s2 = inlined_call_operand.vmem [shape: f32[1,256], index: 2, kind: input, shape index: {}]
  %s3 = inlined_call_operand.vmem [shape: bf16[32,256], index: 3, kind: output, shape index: {}, may-alias: {0,3}]
  %s4 = sld [smem:[#allocation0]]
  $region22: #{discriminator_forward.14} parent=0
    _
  %s6 = ssub.s32 1, %s4
  %s7 = scalar_select 0, %s6, %s4
  // Predicated region
  $region2: #{discriminator_forward.14} parent=0 // pred_check
    _
  $region3: #{discriminator_forward.14} parent=0 // pred_check_branch
    %9 = sbr.rel (0) target = $region5
  $region4: #{discriminator_forward.14} parent=0 // pred_region
    _
  $region5: #{discriminator_forward.14} parent=0 // pred_fallthru
    _
  // Predicated region
  $region6: #{discriminator_forward.14} parent=0 // pred_check
    _
  $region7: #{discriminator_forward.14} parent=0 // pred_check_branch
    %11 = sbr.rel (0) target = $region9
  $region8: #{discriminator_forward.14} parent=0 // pred_region
    _
  $region9: #{discriminator_forward.14} parent=0 // pred_fallthru
    _
  // Predicated region
  $region10: #{discriminator_forward.14} parent=0 // pred_check
    _
  $region11: #{discriminator_forward.14} parent=0 // pred_check_branch
    %13 = sbr.rel (0) target = $region13
  $region12: #{discriminator_forward.14} parent=0 // pred_region
    _
  $region13: #{discriminator_forward.14} parent=0 // pred_fallthru
    _
  %v14 = vld [vmem:[%s0] sm:$0xff]
  %v15 = vld [vmem:[%s0 + $0x8] sm:$0xff]
  %v16 = vld [vmem:[%s0 + $0x10] sm:$0xff]
  %v17 = vld [vmem:[%s0 + $0x18] sm:$0xff]
  %v18 = vunpack.c.l.bf16 %v14
  %v19 = vunpack.c.h.bf16 %v14
  %v20 = vunpack.c.l.bf16 %v15
  %v21 = vunpack.c.h.bf16 %v15
  %v22 = vunpack.c.l.bf16 %v16
  %v23 = vunpack.c.h.bf16 %v16
  %v24 = vunpack.c.l.bf16 %v17
  %v25 = vunpack.c.h.bf16 %v17
  %v26 = vld [vmem:[%s1] sm:$0x3]
  %v28 = vlaneseq
  %v29 = vshrl.u32 %v28, 7
  %v30 = vsub.s32 0, %v29
  %v31 = vrot.slane %v26, %v30
  %v32 = vlaneseq
  %v33 = vshrl.u32 %v32, 7
  %v34 = vsub.s32 1, %v33
  %v35 = vrot.slane %v26, %v34
  %v38 = vmul.f32 %v18, %v31
  %v39 = vmul.f32 %v19, %v35
  %v40 = vmul.f32 %v20, %v31
  %v41 = vmul.f32 %v21, %v35
  %v42 = vmul.f32 %v22, %v31
  %v43 = vmul.f32 %v23, %v35
  %v44 = vmul.f32 %v24, %v31
  %v45 = vmul.f32 %v25, %v35
  %v46 = vld [vmem:[%s2] sm:$0x3]
  %v48 = vlaneseq
  %v49 = vshrl.u32 %v48, 7
  %v50 = vsub.s32 0, %v49
  %v51 = vrot.slane %v46, %v50
  %v52 = vlaneseq
  %v53 = vshrl.u32 %v52, 7
  %v54 = vsub.s32 1, %v53
  %v55 = vrot.slane %v46, %v54
  %v58 = vadd.f32 %v38, %v51
  %v59 = vadd.f32 %v39, %v55
  %v60 = vadd.f32 %v40, %v51
  %v61 = vadd.f32 %v41, %v55
  %v62 = vadd.f32 %v42, %v51
  %v63 = vadd.f32 %v43, %v55
  %v64 = vadd.f32 %v44, %v51
  %v65 = vadd.f32 %v45, %v55
  %vm66 = vcmp.ge.f32.partialorder %v58, 0.0
  %vm67 = vcmp.ge.f32.partialorder %v59, 0.0
  %vm68 = vcmp.ge.f32.partialorder %v60, 0.0
  %vm69 = vcmp.ge.f32.partialorder %v61, 0.0
  %vm70 = vcmp.ge.f32.partialorder %v62, 0.0
  %vm71 = vcmp.ge.f32.partialorder %v63, 0.0
  %vm72 = vcmp.ge.f32.partialorder %v64, 0.0
  %vm73 = vcmp.ge.f32.partialorder %v65, 0.0
  %v74 = vmul.f32 %v58, 0.2
  %v75 = vmul.f32 %v59, 0.2
  %v76 = vmul.f32 %v60, 0.2
  %v77 = vmul.f32 %v61, 0.2
  %v78 = vmul.f32 %v62, 0.2
  %v79 = vmul.f32 %v63, 0.2
  %v80 = vmul.f32 %v64, 0.2
  %v81 = vmul.f32 %v65, 0.2
  %v82 = vsel %vm66, %v58, %v74
  %v83 = vsel %vm67, %v59, %v75
  %v84 = vsel %vm68, %v60, %v76
  %v85 = vsel %vm69, %v61, %v77
  %v86 = vsel %vm70, %v62, %v78
  %v87 = vsel %vm71, %v63, %v79
  %v88 = vsel %vm72, %v64, %v80
  %v89 = vsel %vm73, %v65, %v81
  %v90 = vpack.c.bf16 %v84, %v82
  %v91 = vpack.c.bf16 %v85, %v83
  %v92 = vpack.c.bf16 %v88, %v86
  %v93 = vpack.c.bf16 %v89, %v87
  %v98 = vunpack.c.l.b16 %v90
  %v99 = vunpack.c.l.b16 %v91
  %v100 = vunpack.c.h.b16 %v90
  %v101 = vunpack.c.h.b16 %v91
  %v102 = vunpack.c.l.b16 %v92
  %v103 = vunpack.c.l.b16 %v93
  %v104 = vunpack.c.h.b16 %v92
  %v105 = vunpack.c.h.b16 %v93
  %v106 = vpack.c.b16 %v99, %v98
  %v107 = vpack.c.b16 %v101, %v100
  %v108 = vpack.c.b16 %v103, %v102
  %v109 = vpack.c.b16 %v105, %v104
  %114 = vst [vmem:[%s3] sm:$0xff] %v106
  %115 = vst [vmem:[%s3 + $0x8] sm:$0xff] %v107
  %116 = vst [vmem:[%s3 + $0x10] sm:$0xff] %v108
  %117 = vst [vmem:[%s3 + $0x18] sm:$0xff] %v109
  // Predicated region
  $region14: #{discriminator_forward.14} parent=0 // pred_check
    _
  $region15: #{discriminator_forward.14} parent=0 // pred_check_branch
    %119 = sbr.rel (0) target = $region17
  $region16: #{discriminator_forward.14} parent=0 // pred_region
    _
  $region17: #{discriminator_forward.14} parent=0 // pred_fallthru
    _
  // Predicated region
  $region18: #{discriminator_forward.14} parent=0 // pred_check
    _
  $region19: #{discriminator_forward.14} parent=0 // pred_check_branch
    %121 = sbr.rel (0) target = $region21
  $region20: #{discriminator_forward.14} parent=0 // pred_region
    _
  $region21: #{discriminator_forward.14} parent=0 // pred_fallthru
    _

// kernel: discriminator_forward.13
$region0: #{discriminator_forward.13}
  #allocation0 [shape = 'u32[]', space=smem, size = 0x4, offset = 0x4, fixed_abs, tag = 'smem constant byte address 0x4 - core index']
  #allocation1 [shape = 'u32[144,128]{1,0:T(1,128)}', space=vmem, size = 0x12000, scoped, tag = 'internal scratch']
  %s0 = inlined_call_operand.vmem [shape: bf16[32,2048], index: 0, kind: input, shape index: {}]
  %s1 = inlined_call_operand.vmem [shape: bf16[2048,256], index: 1, kind: input, shape index: {}]
  %s2 = inlined_call_operand.vmem [shape: bf16[32,256], index: 2, kind: output, shape index: {0}]
  %s3 = inlined_call_operand.vmem [shape: f32[8,256], index: 3, kind: output, shape index: {1}]
  %4 = xla_tuple %s2, %s3
  %s5 = sld [smem:[#allocation0]]
  $region127: #{discriminator_forward.13} parent=0
    _
  %s7 = ssub.s32 1, %s5
  %s8 = scalar_select 0, %s7, %s5
  $region1: #{discriminator_forward.13} parent=0
    #allocation2 [shape = 'u8[1048576]{0}', space=vmem, size = 0x100000, scoped, tag = 'input window, operand 1']
    #allocation3 [shape = 'u8[16384]{0}', space=vmem, size = 0x4000, scoped, tag = 'output window, operand 0']
    loop: start=0, step=1, limit=4
    $region2: #{discriminator_forward.13} parent=1 // loop_pre_header
      _
    $region3: #{discriminator_forward.13} parent=1 // loop_header
      %s10 = sphi 0, %s14
      %p11 = scmp.ge.s32.totalorder %s10, 4
      %s17 = sphi 0, %s36
      %s18 = sphi 0, %s32
      %s19 = sphi 0, %s28
      %s20 = sphi 0, %s17
      %s21 = sphi 0, %s18
      %s22 = sphi 0, %s19
      %s23 = sphi 0, %s20
      %s24 = sphi 0, %s21
      %s25 = sphi 0, %s22
      %s41 = sphi 0, %s43
      %s44 = sphi 0, %s41
      %s45 = sphi 0, %s44
      %s61 = sphi 0, %s45
      %s69 = sphi 0, %s71
      %s72 = sphi 0, %s69
      %s73 = sphi 0, %s72
      %s89 = sphi 0, %s73
      %s97 = sphi 0, %s99
      %s100 = sphi 0, %s97
      %s101 = sphi 0, %s100
      %s117 = sphi 0, %s101
      %s125 = sphi 0, %s127
      %s128 = sphi 0, %s125
      %s129 = sphi 0, %s128
      %s145 = sphi 0, %s129
    $region4: #{discriminator_forward.13} parent=1 // loop_header_branch
      %13 = sbr.rel (%p11) target = $region8
    $region5: #{discriminator_forward.13} parent=1 // loop_body
      %s15 = ssub.s32 %s10, 1
      %s16 = ssub.s32 %s10, 2
      %s26 = sadd.s32 1, %s19
      %p27 = scmp.ge.s32.totalorder %s26, 1
      %s28 = scalar_select %p27, 0, %s26
      %s29 = sadd.s32 1, %s18
      %s30 = scalar_select %p27, %s29, %s18
      %p31 = scmp.ge.s32.totalorder %s30, 2
      %s32 = scalar_select %p31, 0, %s30
      %s33 = sadd.s32 1, %s17
      %s34 = scalar_select %p31, %s33, %s17
      %p35 = scmp.ge.s32.totalorder %s34, 1
      %s36 = scalar_select %p35, 0, %s34
      %s37 = ssub.s32 %s17, %s36
      %s38 = ssub.s32 %s19, %s28
      %s39 = sor.u32 %s37, %s38
      %p40 = scmp.eq.s32.totalorder %s39, 0
      %s42 = sadd.s32 %s41, 1
      %s43 = scalar_select %p40, %s41, %s42
      %p46 = pneg %p40
      %p47 = scmp.eq.s32.totalorder %s10, 1
      %p48 = por %p46, %p47
      %p49 = scmp.ne.s32.totalorder %s41, %s44
      %p50 = scmp.eq.s32.totalorder %s10, 0
      %p51 = por %p49, %p50
      %p52 = scmp.ne.s32.totalorder %s41, %s44
      %p53 = scmp.eq.s32.totalorder %s15, 1
      %p54 = por %p52, %p53
      %p55 = scmp.ne.s32.totalorder %s44, %s45
      %p56 = scmp.eq.s32.totalorder %s15, 0
      %p57 = por %p55, %p56
      %p58 = scmp.ne.s32.totalorder %s44, %s45
      %p59 = scmp.eq.s32.totalorder %s16, 1
      %p60 = por %p58, %p59
      %p62 = scmp.ne.s32.totalorder %s45, %s61
      %p63 = scmp.eq.s32.totalorder %s16, 0
      %p64 = por %p62, %p63
      %s65 = ssub.s32 %s19, %s28
      %s66 = ssub.s32 %s18, %s32
      %s67 = sor.u32 %s65, %s66
      %p68 = scmp.eq.s32.totalorder %s67, 0
      %s70 = sadd.s32 %s69, 1
      %s71 = scalar_select %p68, %s69, %s70
      %p74 = pneg %p68
      %p75 = scmp.eq.s32.totalorder %s10, 1
      %p76 = por %p74, %p75
      %p77 = scmp.ne.s32.totalorder %s69, %s72
      %p78 = scmp.eq.s32.totalorder %s10, 0
      %p79 = por %p77, %p78
      %p80 = scmp.ne.s32.totalorder %s69, %s72
      %p81 = scmp.eq.s32.totalorder %s15, 1
      %p82 = por %p80, %p81
      %p83 = scmp.ne.s32.totalorder %s72, %s73
      %p84 = scmp.eq.s32.totalorder %s15, 0
      %p85 = por %p83, %p84
      %p86 = scmp.ne.s32.totalorder %s72, %s73
      %p87 = scmp.eq.s32.totalorder %s16, 1
      %p88 = por %p86, %p87
      %p90 = scmp.ne.s32.totalorder %s73, %s89
      %p91 = scmp.eq.s32.totalorder %s16, 0
      %p92 = por %p90, %p91
      %s93 = ssub.s32 %s17, %s36
      %s94 = ssub.s32 %s18, %s32
      %s95 = sor.u32 %s93, %s94
      %p96 = scmp.eq.s32.totalorder %s95, 0
      %s98 = sadd.s32 %s97, 1
      %s99 = scalar_select %p96, %s97, %s98
      %p102 = pneg %p96
      %p103 = scmp.eq.s32.totalorder %s10, 1
      %p104 = por %p102, %p103
      %p105 = scmp.ne.s32.totalorder %s97, %s100
      %p106 = scmp.eq.s32.totalorder %s10, 0
      %p107 = por %p105, %p106
      %p108 = scmp.ne.s32.totalorder %s97, %s100
      %p109 = scmp.eq.s32.totalorder %s15, 1
      %p110 = por %p108, %p109
      %p111 = scmp.ne.s32.totalorder %s100, %s101
      %p112 = scmp.eq.s32.totalorder %s15, 0
      %p113 = por %p111, %p112
      %p114 = scmp.ne.s32.totalorder %s100, %s101
      %p115 = scmp.eq.s32.totalorder %s16, 1
      %p116 = por %p114, %p115
      %p118 = scmp.ne.s32.totalorder %s101, %s117
      %p119 = scmp.eq.s32.totalorder %s16, 0
      %p120 = por %p118, %p119
      %s121 = ssub.s32 %s17, %s36
      %s122 = ssub.s32 %s18, %s32
      %s123 = sor.u32 %s121, %s122
      %p124 = scmp.eq.s32.totalorder %s123, 0
      %s126 = sadd.s32 %s125, 1
      %s127 = scalar_select %p124, %s125, %s126
      %p130 = pneg %p124
      %p131 = scmp.eq.s32.totalorder %s10, 1
      %p132 = por %p130, %p131
      %p133 = scmp.ne.s32.totalorder %s125, %s128
      %p134 = scmp.eq.s32.totalorder %s10, 0
      %p135 = por %p133, %p134
      %p136 = scmp.ne.s32.totalorder %s125, %s128
      %p137 = scmp.eq.s32.totalorder %s15, 1
      %p138 = por %p136, %p137
      %p139 = scmp.ne.s32.totalorder %s128, %s129
      %p140 = scmp.eq.s32.totalorder %s15, 0
      %p141 = por %p139, %p140
      %p142 = scmp.ne.s32.totalorder %s128, %s129
      %p143 = scmp.eq.s32.totalorder %s16, 1
      %p144 = por %p142, %p143
      %p146 = scmp.ne.s32.totalorder %s129, %s145
      %p147 = scmp.eq.s32.totalorder %s16, 0
      %p148 = por %p146, %p147
      %p149 = scmp.le.s32.totalorder 1, %s10
      %p150 = scmp.lt.s32.totalorder %s10, 3
      %p151 = pnand %p149, %p150
      %p152 = pneg %p151
      // Predicated region
      $region9: #{discriminator_forward.13} parent=5 // pred_check
        _
      $region10: #{discriminator_forward.13} parent=5 // pred_check_branch
        %154 = sbr.rel (%p151) target = $region12
      $region11: #{discriminator_forward.13} parent=5 // pred_region
        %s155 = ssub.s32 %s10, 1
        // Predicated region
        $region13: #{discriminator_forward.13} parent=11 // pred_check
          %p156 = pneg %p57
        $region14: #{discriminator_forward.13} parent=11 // pred_check_branch
          %158 = sbr.rel (%p156) target = $region16
        $region15: #{discriminator_forward.13} parent=11 // pred_region
          %s159 = smul.u32 4, %s20
          %s160 = smul.u32 16, %s22
          %p161 = scmp.lt.s32.totalorder %s159, 3
          %s162 = scalar_select %p161, %s159, 3
          %p163 = scmp.lt.s32.totalorder %s160, 15
          %s164 = scalar_select %p163, %s160, 15
          %s165 = smul.addr %s162, 16
          %s166 = sadd.s32 %s164, %s165
          %s167 = smul.addr %s166, 4
          %s168 = scalar_lea.vmem %s0, %s167
          %s169 = smul.u32 4, %s20
          %s170 = smul.u32 16, %s22
        $region16: #{discriminator_forward.13} parent=11 // pred_fallthru
          _
      $region12: #{discriminator_forward.13} parent=5 // pred_fallthru
        _
      %p171 = scmp.lt.s32.totalorder %s10, 2
      // Predicated region
      $region17: #{discriminator_forward.13} parent=5 // pred_check
        %p172 = pneg %p171
      $region18: #{discriminator_forward.13} parent=5 // pred_check_branch
        %174 = sbr.rel (%p172) target = $region20
      $region19: #{discriminator_forward.13} parent=5 // pred_region
        // Predicated region
        $region21: #{discriminator_forward.13} parent=19 // pred_check
          %p175 = pneg %p79
        $region22: #{discriminator_forward.13} parent=19 // pred_check_branch
          %177 = sbr.rel (%p175) target = $region24
        $region23: #{discriminator_forward.13} parent=19 // pred_region
          %s178 = sand.u32 %s69, 1
          %s179 = sand.u32 %s69, 1
          %s180 = smul.addr %s179, 1024
          %s181 = scalar_lea.vmem [#allocation2], %s180
          %s182 = smul.u32 256, %s19
          %s183 = smul.addr %s182, 2
          %s184 = sadd.s32 %s18, %s183
          %s185 = smul.addr %s184, 4
          %s186 = scalar_lea.vmem %s1, %s185
          // Predicated region
          $region25: #{discriminator_forward.13} parent=23 // pred_check
            _
          $region26: #{discriminator_forward.13} parent=23 // pred_check_branch
            %188 = sbr.rel (0) target = $region28
          $region27: #{discriminator_forward.13} parent=23 // pred_region
            // Predicated region
            $region29: #{discriminator_forward.13} parent=27 // pred_check
              _
            $region30: #{discriminator_forward.13} parent=27 // pred_check_branch
              %190 = sbr.rel target = $region32
            $region31: #{discriminator_forward.13} parent=27 // pred_region
              // Predicated region
              $region44: #{discriminator_forward.13} parent=31 // pred_check
                _
              $region45: #{discriminator_forward.13} parent=31 // pred_check_branch
                %715 = sbr.rel (0) target = $region47
              $region46: #{discriminator_forward.13} parent=31 // pred_region
                loop: start=0, step=1, limit=1
                $region48: #{discriminator_forward.13} parent=46 // loop_pre_header
                  _
                $region49: #{discriminator_forward.13} parent=46 // loop_header
                  %s717 = sphi 0, %s721
                  %p718 = scmp.ge.s32.totalorder %s717, 1
                  %s722 = sphi %s186, %s186
                  %s723 = sphi %s181, %s181
                $region50: #{discriminator_forward.13} parent=46 // loop_header_branch
                  %720 = sbr.rel (%p718) target = $region54
                $region51: #{discriminator_forward.13} parent=46 // loop_body
                  _
                $region52: #{discriminator_forward.13} parent=46 // loop_footer
                  %s721 = sadd.s32 1, %s717
                $region53: #{discriminator_forward.13} parent=46 // loop_footer_branch
                  %716 = sbr.rel target = $region49
                $region54: #{discriminator_forward.13} parent=46 // loop_exit
                  _
                loop: start=0, step=1, limit=1
                $region55: #{discriminator_forward.13} parent=46 // loop_pre_header
                  _
                $region56: #{discriminator_forward.13} parent=46 // loop_header
                  %s726 = sphi 0, %s730
                  %p727 = scmp.ge.s32.totalorder %s726, 1
                  %s731 = sphi %s186, %s186
                  %s732 = sphi %s181, %s181
                $region57: #{discriminator_forward.13} parent=46 // loop_header_branch
                  %729 = sbr.rel (%p727) target = $region61
                $region58: #{discriminator_forward.13} parent=46 // loop_body
                  %v733 = vld [vmem:[%s731] sm:$0xf]
                  %734 = vst [vmem:[%s732] sm:$0xf] %v733
                  %v735 = vld [vmem:[%s731 + $0x8] sm:$0xf]
                  %736 = vst [vmem:[%s732 + $0x4] sm:$0xf] %v735
                  %v737 = vld [vmem:[%s731 + $0x10] sm:$0xf]
                  %738 = vst [vmem:[%s732 + $0x8] sm:$0xf] %v737
                  %v739 = vld [vmem:[%s731 + $0x18] sm:$0xf]
                  %740 = vst [vmem:[%s732 + $0xc] sm:$0xf] %v739
                  %v741 = vld [vmem:[%s731 + $0x20] sm:$0xf]
                  %742 = vst [vmem:[%s732 + $0x10] sm:$0xf] %v741
                  %v743 = vld [vmem:[%s731 + $0x28] sm:$0xf]
                  %744 = vst [vmem:[%s732 + $0x14] sm:$0xf] %v743
                  %v745 = vld [vmem:[%s731 + $0x30] sm:$0xf]
                  %746 = vst [vmem:[%s732 + $0x18] sm:$0xf] %v745
                  %v747 = vld [vmem:[%s731 + $0x38] sm:$0xf]
                  %748 = vst [vmem:[%s732 + $0x1c] sm:$0xf] %v747
                  %v749 = vld [vmem:[%s731 + $0x40] sm:$0xf]
                  %750 = vst [vmem:[%s732 + $0x20] sm:$0xf] %v749
                  %v751 = vld [vmem:[%s731 + $0x48] sm:$0xf]
                  %752 = vst [vmem:[%s732 + $0x24] sm:$0xf] %v751
                  %v753 = vld [vmem:[%s731 + $0x50] sm:$0xf]
                  %754 = vst [vmem:[%s732 + $0x28] sm:$0xf] %v753
                  %v755 = vld [vmem:[%s731 + $0x58] sm:$0xf]
                  %756 = vst [vmem:[%s732 + $0x2c] sm:$0xf] %v755
                  %v757 = vld [vmem:[%s731 + $0x60] sm:$0xf]
                  %758 = vst [vmem:[%s732 + $0x30] sm:$0xf] %v757
                  %v759 = vld [vmem:[%s731 + $0x68] sm:$0xf]
                  %760 = vst [vmem:[%s732 + $0x34] sm:$0xf] %v759
                  %v761 = vld [vmem:[%s731 + $0x70] sm:$0xf]
                  %762 = vst [vmem:[%s732 + $0x38] sm:$0xf] %v761
                  %v763 = vld [vmem:[%s731 + $0x78] sm:$0xf]
                  %764 = vst [vmem:[%s732 + $0x3c] sm:$0xf] %v763
                  %v765 = vld [vmem:[%s731 + $0x80] sm:$0xf]
                  %766 = vst [vmem:[%s732 + $0x40] sm:$0xf] %v765
                  %v767 = vld [vmem:[%s731 + $0x88] sm:$0xf]
                  %768 = vst [vmem:[%s732 + $0x44] sm:$0xf] %v767
                  %v769 = vld [vmem:[%s731 + $0x90] sm:$0xf]
                  %770 = vst [vmem:[%s732 + $0x48] sm:$0xf] %v769
                  %v771 = vld [vmem:[%s731 + $0x98] sm:$0xf]
                  %772 = vst [vmem:[%s732 + $0x4c] sm:$0xf] %v771
                  %v773 = vld [vmem:[%s731 + $0xa0] sm:$0xf]
                  %774 = vst [vmem:[%s732 + $0x50] sm:$0xf] %v773
                  %v775 = vld [vmem:[%s731 + $0xa8] sm:$0xf]
                  %776 = vst [vmem:[%s732 + $0x54] sm:$0xf] %v775
                  %v777 = vld [vmem:[%s731 + $0xb0] sm:$0xf]
                  %778 = vst [vmem:[%s732 + $0x58] sm:$0xf] %v777
                  %v779 = vld [vmem:[%s731 + $0xb8] sm:$0xf]
                  %780 = vst [vmem:[%s732 + $0x5c] sm:$0xf] %v779
                  %v781 = vld [vmem:[%s731 + $0xc0] sm:$0xf]
                  %782 = vst [vmem:[%s732 + $0x60] sm:$0xf] %v781
                  %v783 = vld [vmem:[%s731 + $0xc8] sm:$0xf]
                  %784 = vst [vmem:[%s732 + $0x64] sm:$0xf] %v783
                  %v785 = vld [vmem:[%s731 + $0xd0] sm:$0xf]
                  %786 = vst [vmem:[%s732 + $0x68] sm:$0xf] %v785
                  %v787 = vld [vmem:[%s731 + $0xd8] sm:$0xf]
                  %788 = vst [vmem:[%s732 + $0x6c] sm:$0xf] %v787
                  %v789 = vld [vmem:[%s731 + $0xe0] sm:$0xf]
                  %790 = vst [vmem:[%s732 + $0x70] sm:$0xf] %v789
                  %v791 = vld [vmem:[%s731 + $0xe8] sm:$0xf]
                  %792 = vst [vmem:[%s732 + $0x74] sm:$0xf] %v791
                  %v793 = vld [vmem:[%s731 + $0xf0] sm:$0xf]
                  %794 = vst [vmem:[%s732 + $0x78] sm:$0xf] %v793
                  %v795 = vld [vmem:[%s731 + $0xf8] sm:$0xf]
                  %796 = vst [vmem:[%s732 + $0x7c] sm:$0xf] %v795
                  %v797 = vld [vmem:[%s731 + $0x100] sm:$0xf]
                  %798 = vst [vmem:[%s732 + $0x80] sm:$0xf] %v797
                  %v799 = vld [vmem:[%s731 + $0x108] sm:$0xf]
                  %800 = vst [vmem:[%s732 + $0x84] sm:$0xf] %v799
                  %v801 = vld [vmem:[%s731 + $0x110] sm:$0xf]
                  %802 = vst [vmem:[%s732 + $0x88] sm:$0xf] %v801
                  %v803 = vld [vmem:[%s731 + $0x118] sm:$0xf]
                  %804 = vst [vmem:[%s732 + $0x8c] sm:$0xf] %v803
                  %v805 = vld [vmem:[%s731 + $0x120] sm:$0xf]
                  %806 = vst [vmem:[%s732 + $0x90] sm:$0xf] %v805
                  %v807 = vld [vmem:[%s731 + $0x128] sm:$0xf]
                  %808 = vst [vmem:[%s732 + $0x94] sm:$0xf] %v807
                  %v809 = vld [vmem:[%s731 + $0x130] sm:$0xf]
                  %810 = vst [vmem:[%s732 + $0x98] sm:$0xf] %v809
                  %v811 = vld [vmem:[%s731 + $0x138] sm:$0xf]
                  %812 = vst [vmem:[%s732 + $0x9c] sm:$0xf] %v811
                  %v813 = vld [vmem:[%s731 + $0x140] sm:$0xf]
                  %814 = vst [vmem:[%s732 + $0xa0] sm:$0xf] %v813
                  %v815 = vld [vmem:[%s731 + $0x148] sm:$0xf]
                  %816 = vst [vmem:[%s732 + $0xa4] sm:$0xf] %v815
                  %v817 = vld [vmem:[%s731 + $0x150] sm:$0xf]
                  %818 = vst [vmem:[%s732 + $0xa8] sm:$0xf] %v817
                  %v819 = vld [vmem:[%s731 + $0x158] sm:$0xf]
                  %820 = vst [vmem:[%s732 + $0xac] sm:$0xf] %v819
                  %v821 = vld [vmem:[%s731 + $0x160] sm:$0xf]
                  %822 = vst [vmem:[%s732 + $0xb0] sm:$0xf] %v821
                  %v823 = vld [vmem:[%s731 + $0x168] sm:$0xf]
                  %824 = vst [vmem:[%s732 + $0xb4] sm:$0xf] %v823
                  %v825 = vld [vmem:[%s731 + $0x170] sm:$0xf]
                  %826 = vst [vmem:[%s732 + $0xb8] sm:$0xf] %v825
                  %v827 = vld [vmem:[%s731 + $0x178] sm:$0xf]
                  %828 = vst [vmem:[%s732 + $0xbc] sm:$0xf] %v827
                  %v829 = vld [vmem:[%s731 + $0x180] sm:$0xf]
                  %830 = vst [vmem:[%s732 + $0xc0] sm:$0xf] %v829
                  %v831 = vld [vmem:[%s731 + $0x188] sm:$0xf]
                  %832 = vst [vmem:[%s732 + $0xc4] sm:$0xf] %v831
                  %v833 = vld [vmem:[%s731 + $0x190] sm:$0xf]
                  %834 = vst [vmem:[%s732 + $0xc8] sm:$0xf] %v833
                  %v835 = vld [vmem:[%s731 + $0x198] sm:$0xf]
                  %836 = vst [vmem:[%s732 + $0xcc] sm:$0xf] %v835
                  %v837 = vld [vmem:[%s731 + $0x1a0] sm:$0xf]
                  %838 = vst [vmem:[%s732 + $0xd0] sm:$0xf] %v837
                  %v839 = vld [vmem:[%s731 + $0x1a8] sm:$0xf]
                  %840 = vst [vmem:[%s732 + $0xd4] sm:$0xf] %v839
                  %v841 = vld [vmem:[%s731 + $0x1b0] sm:$0xf]
                  %842 = vst [vmem:[%s732 + $0xd8] sm:$0xf] %v841
                  %v843 = vld [vmem:[%s731 + $0x1b8] sm:$0xf]
                  %844 = vst [vmem:[%s732 + $0xdc] sm:$0xf] %v843
                  %v845 = vld [vmem:[%s731 + $0x1c0] sm:$0xf]
                  %846 = vst [vmem:[%s732 + $0xe0] sm:$0xf] %v845
                  %v847 = vld [vmem:[%s731 + $0x1c8] sm:$0xf]
                  %848 = vst [vmem:[%s732 + $0xe4] sm:$0xf] %v847
                  %v849 = vld [vmem:[%s731 + $0x1d0] sm:$0xf]
                  %850 = vst [vmem:[%s732 + $0xe8] sm:$0xf] %v849
                  %v851 = vld [vmem:[%s731 + $0x1d8] sm:$0xf]
                  %852 = vst [vmem:[%s732 + $0xec] sm:$0xf] %v851
                  %v853 = vld [vmem:[%s731 + $0x1e0] sm:$0xf]
                  %854 = vst [vmem:[%s732 + $0xf0] sm:$0xf] %v853
                  %v855 = vld [vmem:[%s731 + $0x1e8] sm:$0xf]
                  %856 = vst [vmem:[%s732 + $0xf4] sm:$0xf] %v855
                  %v857 = vld [vmem:[%s731 + $0x1f0] sm:$0xf]
                  %858 = vst [vmem:[%s732 + $0xf8] sm:$0xf] %v857
                  %v859 = vld [vmem:[%s731 + $0x1f8] sm:$0xf]
                  %860 = vst [vmem:[%s732 + $0xfc] sm:$0xf] %v859
                  %v861 = vld [vmem:[%s731 + $0x200] sm:$0xf]
                  %862 = vst [vmem:[%s732 + $0x100] sm:$0xf] %v861
                  %v863 = vld [vmem:[%s731 + $0x208] sm:$0xf]
                  %864 = vst [vmem:[%s732 + $0x104] sm:$0xf] %v863
                  %v865 = vld [vmem:[%s731 + $0x210] sm:$0xf]
                  %866 = vst [vmem:[%s732 + $0x108] sm:$0xf] %v865
                  %v867 = vld [vmem:[%s731 + $0x218] sm:$0xf]
                  %868 = vst [vmem:[%s732 + $0x10c] sm:$0xf] %v867
                  %v869 = vld [vmem:[%s731 + $0x220] sm:$0xf]
                  %870 = vst [vmem:[%s732 + $0x110] sm:$0xf] %v869
                  %v871 = vld [vmem:[%s731 + $0x228] sm:$0xf]
                  %872 = vst [vmem:[%s732 + $0x114] sm:$0xf] %v871
                  %v873 = vld [vmem:[%s731 + $0x230] sm:$0xf]
                  %874 = vst [vmem:[%s732 + $0x118] sm:$0xf] %v873
                  %v875 = vld [vmem:[%s731 + $0x238] sm:$0xf]
                  %876 = vst [vmem:[%s732 + $0x11c] sm:$0xf] %v875
                  %v877 = vld [vmem:[%s731 + $0x240] sm:$0xf]
                  %878 = vst [vmem:[%s732 + $0x120] sm:$0xf] %v877
                  %v879 = vld [vmem:[%s731 + $0x248] sm:$0xf]
                  %880 = vst [vmem:[%s732 + $0x124] sm:$0xf] %v879
                  %v881 = vld [vmem:[%s731 + $0x250] sm:$0xf]
                  %882 = vst [vmem:[%s732 + $0x128] sm:$0xf] %v881
                  %v883 = vld [vmem:[%s731 + $0x258] sm:$0xf]
                  %884 = vst [vmem:[%s732 + $0x12c] sm:$0xf] %v883
                  %v885 = vld [vmem:[%s731 + $0x260] sm:$0xf]
                  %886 = vst [vmem:[%s732 + $0x130] sm:$0xf] %v885
                  %v887 = vld [vmem:[%s731 + $0x268] sm:$0xf]
                  %888 = vst [vmem:[%s732 + $0x134] sm:$0xf] %v887
                  %v889 = vld [vmem:[%s731 + $0x270] sm:$0xf]
                  %890 = vst [vmem:[%s732 + $0x138] sm:$0xf] %v889
                  %v891 = vld [vmem:[%s731 + $0x278] sm:$0xf]
                  %892 = vst [vmem:[%s732 + $0x13c] sm:$0xf] %v891
                  %v893 = vld [vmem:[%s731 + $0x280] sm:$0xf]
                  %894 = vst [vmem:[%s732 + $0x140] sm:$0xf] %v893
                  %v895 = vld [vmem:[%s731 + $0x288] sm:$0xf]
                  %896 = vst [vmem:[%s732 + $0x144] sm:$0xf] %v895
                  %v897 = vld [vmem:[%s731 + $0x290] sm:$0xf]
                  %898 = vst [vmem:[%s732 + $0x148] sm:$0xf] %v897
                  %v899 = vld [vmem:[%s731 + $0x298] sm:$0xf]
                  %900 = vst [vmem:[%s732 + $0x14c] sm:$0xf] %v899
                  %v901 = vld [vmem:[%s731 + $0x2a0] sm:$0xf]
                  %902 = vst [vmem:[%s732 + $0x150] sm:$0xf] %v901
                  %v903 = vld [vmem:[%s731 + $0x2a8] sm:$0xf]
                  %904 = vst [vmem:[%s732 + $0x154] sm:$0xf] %v903
                  %v905 = vld [vmem:[%s731 + $0x2b0] sm:$0xf]
                  %906 = vst [vmem:[%s732 + $0x158] sm:$0xf] %v905
                  %v907 = vld [vmem:[%s731 + $0x2b8] sm:$0xf]
                  %908 = vst [vmem:[%s732 + $0x15c] sm:$0xf] %v907
                  %v909 = vld [vmem:[%s731 + $0x2c0] sm:$0xf]
                  %910 = vst [vmem:[%s732 + $0x160] sm:$0xf] %v909
                  %v911 = vld [vmem:[%s731 + $0x2c8] sm:$0xf]
                  %912 = vst [vmem:[%s732 + $0x164] sm:$0xf] %v911
                  %v913 = vld [vmem:[%s731 + $0x2d0] sm:$0xf]
                  %914 = vst [vmem:[%s732 + $0x168] sm:$0xf] %v913
                  %v915 = vld [vmem:[%s731 + $0x2d8] sm:$0xf]
                  %916 = vst [vmem:[%s732 + $0x16c] sm:$0xf] %v915
                  %v917 = vld [vmem:[%s731 + $0x2e0] sm:$0xf]
                  %918 = vst [vmem:[%s732 + $0x170] sm:$0xf] %v917
                  %v919 = vld [vmem:[%s731 + $0x2e8] sm:$0xf]
                  %920 = vst [vmem:[%s732 + $0x174] sm:$0xf] %v919
                  %v921 = vld [vmem:[%s731 + $0x2f0] sm:$0xf]
                  %922 = vst [vmem:[%s732 + $0x178] sm:$0xf] %v921
                  %v923 = vld [vmem:[%s731 + $0x2f8] sm:$0xf]
                  %924 = vst [vmem:[%s732 + $0x17c] sm:$0xf] %v923
                  %v925 = vld [vmem:[%s731 + $0x300] sm:$0xf]
                  %926 = vst [vmem:[%s732 + $0x180] sm:$0xf] %v925
                  %v927 = vld [vmem:[%s731 + $0x308] sm:$0xf]
                  %928 = vst [vmem:[%s732 + $0x184] sm:$0xf] %v927
                  %v929 = vld [vmem:[%s731 + $0x310] sm:$0xf]
                  %930 = vst [vmem:[%s732 + $0x188] sm:$0xf] %v929
                  %v931 = vld [vmem:[%s731 + $0x318] sm:$0xf]
                  %932 = vst [vmem:[%s732 + $0x18c] sm:$0xf] %v931
                  %v933 = vld [vmem:[%s731 + $0x320] sm:$0xf]
                  %934 = vst [vmem:[%s732 + $0x190] sm:$0xf] %v933
                  %v935 = vld [vmem:[%s731 + $0x328] sm:$0xf]
                  %936 = vst [vmem:[%s732 + $0x194] sm:$0xf] %v935
                  %v937 = vld [vmem:[%s731 + $0x330] sm:$0xf]
                  %938 = vst [vmem:[%s732 + $0x198] sm:$0xf] %v937
                  %v939 = vld [vmem:[%s731 + $0x338] sm:$0xf]
                  %940 = vst [vmem:[%s732 + $0x19c] sm:$0xf] %v939
                  %v941 = vld [vmem:[%s731 + $0x340] sm:$0xf]
                  %942 = vst [vmem:[%s732 + $0x1a0] sm:$0xf] %v941
                  %v943 = vld [vmem:[%s731 + $0x348] sm:$0xf]
                  %944 = vst [vmem:[%s732 + $0x1a4] sm:$0xf] %v943
                  %v945 = vld [vmem:[%s731 + $0x350] sm:$0xf]
                  %946 = vst [vmem:[%s732 + $0x1a8] sm:$0xf] %v945
                  %v947 = vld [vmem:[%s731 + $0x358] sm:$0xf]
                  %948 = vst [vmem:[%s732 + $0x1ac] sm:$0xf] %v947
                  %v949 = vld [vmem:[%s731 + $0x360] sm:$0xf]
                  %950 = vst [vmem:[%s732 + $0x1b0] sm:$0xf] %v949
                  %v951 = vld [vmem:[%s731 + $0x368] sm:$0xf]
                  %952 = vst [vmem:[%s732 + $0x1b4] sm:$0xf] %v951
                  %v953 = vld [vmem:[%s731 + $0x370] sm:$0xf]
                  %954 = vst [vmem:[%s732 + $0x1b8] sm:$0xf] %v953
                  %v955 = vld [vmem:[%s731 + $0x378] sm:$0xf]
                  %956 = vst [vmem:[%s732 + $0x1bc] sm:$0xf] %v955
                  %v957 = vld [vmem:[%s731 + $0x380] sm:$0xf]
                  %958 = vst [vmem:[%s732 + $0x1c0] sm:$0xf] %v957
                  %v959 = vld [vmem:[%s731 + $0x388] sm:$0xf]
                  %960 = vst [vmem:[%s732 + $0x1c4] sm:$0xf] %v959
                  %v961 = vld [vmem:[%s731 + $0x390] sm:$0xf]
                  %962 = vst [vmem:[%s732 + $0x1c8] sm:$0xf] %v961
                  %v963 = vld [vmem:[%s731 + $0x398] sm:$0xf]
                  %964 = vst [vmem:[%s732 + $0x1cc] sm:$0xf] %v963
                  %v965 = vld [vmem:[%s731 + $0x3a0] sm:$0xf]
                  %966 = vst [vmem:[%s732 + $0x1d0] sm:$0xf] %v965
                  %v967 = vld [vmem:[%s731 + $0x3a8] sm:$0xf]
                  %968 = vst [vmem:[%s732 + $0x1d4] sm:$0xf] %v967
                  %v969 = vld [vmem:[%s731 + $0x3b0] sm:$0xf]
                  %970 = vst [vmem:[%s732 + $0x1d8] sm:$0xf] %v969
                  %v971 = vld [vmem:[%s731 + $0x3b8] sm:$0xf]
                  %972 = vst [vmem:[%s732 + $0x1dc] sm:$0xf] %v971
                  %v973 = vld [vmem:[%s731 + $0x3c0] sm:$0xf]
                  %974 = vst [vmem:[%s732 + $0x1e0] sm:$0xf] %v973
                  %v975 = vld [vmem:[%s731 + $0x3c8] sm:$0xf]
                  %976 = vst [vmem:[%s732 + $0x1e4] sm:$0xf] %v975
                  %v977 = vld [vmem:[%s731 + $0x3d0] sm:$0xf]
                  %978 = vst [vmem:[%s732 + $0x1e8] sm:$0xf] %v977
                  %v979 = vld [vmem:[%s731 + $0x3d8] sm:$0xf]
                  %980 = vst [vmem:[%s732 + $0x1ec] sm:$0xf] %v979
                  %v981 = vld [vmem:[%s731 + $0x3e0] sm:$0xf]
                  %982 = vst [vmem:[%s732 + $0x1f0] sm:$0xf] %v981
                  %v983 = vld [vmem:[%s731 + $0x3e8] sm:$0xf]
                  %984 = vst [vmem:[%s732 + $0x1f4] sm:$0xf] %v983
                  %v985 = vld [vmem:[%s731 + $0x3f0] sm:$0xf]
                  %986 = vst [vmem:[%s732 + $0x1f8] sm:$0xf] %v985
                  %v987 = vld [vmem:[%s731 + $0x3f8] sm:$0xf]
                  %988 = vst [vmem:[%s732 + $0x1fc] sm:$0xf] %v987
                  %v989 = vld [vmem:[%s731 + $0x400] sm:$0xf]
                  %990 = vst [vmem:[%s732 + $0x200] sm:$0xf] %v989
                  %v991 = vld [vmem:[%s731 + $0x408] sm:$0xf]
                  %992 = vst [vmem:[%s732 + $0x204] sm:$0xf] %v991
                  %v993 = vld [vmem:[%s731 + $0x410] sm:$0xf]
                  %994 = vst [vmem:[%s732 + $0x208] sm:$0xf] %v993
                  %v995 = vld [vmem:[%s731 + $0x418] sm:$0xf]
                  %996 = vst [vmem:[%s732 + $0x20c] sm:$0xf] %v995
                  %v997 = vld [vmem:[%s731 + $0x420] sm:$0xf]
                  %998 = vst [vmem:[%s732 + $0x210] sm:$0xf] %v997
                  %v999 = vld [vmem:[%s731 + $0x428] sm:$0xf]
                  %1000 = vst [vmem:[%s732 + $0x214] sm:$0xf] %v999
                  %v1001 = vld [vmem:[%s731 + $0x430] sm:$0xf]
                  %1002 = vst [vmem:[%s732 + $0x218] sm:$0xf] %v1001
                  %v1003 = vld [vmem:[%s731 + $0x438] sm:$0xf]
                  %1004 = vst [vmem:[%s732 + $0x21c] sm:$0xf] %v1003
                  %v1005 = vld [vmem:[%s731 + $0x440] sm:$0xf]
                  %1006 = vst [vmem:[%s732 + $0x220] sm:$0xf] %v1005
                  %v1007 = vld [vmem:[%s731 + $0x448] sm:$0xf]
                  %1008 = vst [vmem:[%s732 + $0x224] sm:$0xf] %v1007
                  %v1009 = vld [vmem:[%s731 + $0x450] sm:$0xf]
                  %1010 = vst [vmem:[%s732 + $0x228] sm:$0xf] %v1009
                  %v1011 = vld [vmem:[%s731 + $0x458] sm:$0xf]
                  %1012 = vst [vmem:[%s732 + $0x22c] sm:$0xf] %v1011
                  %v1013 = vld [vmem:[%s731 + $0x460] sm:$0xf]
                  %1014 = vst [vmem:[%s732 + $0x230] sm:$0xf] %v1013
                  %v1015 = vld [vmem:[%s731 + $0x468] sm:$0xf]
                  %1016 = vst [vmem:[%s732 + $0x234] sm:$0xf] %v1015
                  %v1017 = vld [vmem:[%s731 + $0x470] sm:$0xf]
                  %1018 = vst [vmem:[%s732 + $0x238] sm:$0xf] %v1017
                  %v1019 = vld [vmem:[%s731 + $0x478] sm:$0xf]
                  %1020 = vst [vmem:[%s732 + $0x23c] sm:$0xf] %v1019
                  %v1021 = vld [vmem:[%s731 + $0x480] sm:$0xf]
                  %1022 = vst [vmem:[%s732 + $0x240] sm:$0xf] %v1021
                  %v1023 = vld [vmem:[%s731 + $0x488] sm:$0xf]
                  %1024 = vst [vmem:[%s732 + $0x244] sm:$0xf] %v1023
                  %v1025 = vld [vmem:[%s731 + $0x490] sm:$0xf]
                  %1026 = vst [vmem:[%s732 + $0x248] sm:$0xf] %v1025
                  %v1027 = vld [vmem:[%s731 + $0x498] sm:$0xf]
                  %1028 = vst [vmem:[%s732 + $0x24c] sm:$0xf] %v1027
                  %v1029 = vld [vmem:[%s731 + $0x4a0] sm:$0xf]
                  %1030 = vst [vmem:[%s732 + $0x250] sm:$0xf] %v1029
                  %v1031 = vld [vmem:[%s731 + $0x4a8] sm:$0xf]
                  %1032 = vst [vmem:[%s732 + $0x254] sm:$0xf] %v1031
                  %v1033 = vld [vmem:[%s731 + $0x4b0] sm:$0xf]
                  %1034 = vst [vmem:[%s732 + $0x258] sm:$0xf] %v1033
                  %v1035 = vld [vmem:[%s731 + $0x4b8] sm:$0xf]
                  %1036 = vst [vmem:[%s732 + $0x25c] sm:$0xf] %v1035
                  %v1037 = vld [vmem:[%s731 + $0x4c0] sm:$0xf]
                  %1038 = vst [vmem:[%s732 + $0x260] sm:$0xf] %v1037
                  %v1039 = vld [vmem:[%s731 + $0x4c8] sm:$0xf]
                  %1040 = vst [vmem:[%s732 + $0x264] sm:$0xf] %v1039
                  %v1041 = vld [vmem:[%s731 + $0x4d0] sm:$0xf]
                  %1042 = vst [vmem:[%s732 + $0x268] sm:$0xf] %v1041
                  %v1043 = vld [vmem:[%s731 + $0x4d8] sm:$0xf]
                  %1044 = vst [vmem:[%s732 + $0x26c] sm:$0xf] %v1043
                  %v1045 = vld [vmem:[%s731 + $0x4e0] sm:$0xf]
                  %1046 = vst [vmem:[%s732 + $0x270] sm:$0xf] %v1045
                  %v1047 = vld [vmem:[%s731 + $0x4e8] sm:$0xf]
                  %1048 = vst [vmem:[%s732 + $0x274] sm:$0xf] %v1047
                  %v1049 = vld [vmem:[%s731 + $0x4f0] sm:$0xf]
                  %1050 = vst [vmem:[%s732 + $0x278] sm:$0xf] %v1049
                  %v1051 = vld [vmem:[%s731 + $0x4f8] sm:$0xf]
                  %1052 = vst [vmem:[%s732 + $0x27c] sm:$0xf] %v1051
                  %v1053 = vld [vmem:[%s731 + $0x500] sm:$0xf]
                  %1054 = vst [vmem:[%s732 + $0x280] sm:$0xf] %v1053
                  %v1055 = vld [vmem:[%s731 + $0x508] sm:$0xf]
                  %1056 = vst [vmem:[%s732 + $0x284] sm:$0xf] %v1055
                  %v1057 = vld [vmem:[%s731 + $0x510] sm:$0xf]
                  %1058 = vst [vmem:[%s732 + $0x288] sm:$0xf] %v1057
                  %v1059 = vld [vmem:[%s731 + $0x518] sm:$0xf]
                  %1060 = vst [vmem:[%s732 + $0x28c] sm:$0xf] %v1059
                  %v1061 = vld [vmem:[%s731 + $0x520] sm:$0xf]
                  %1062 = vst [vmem:[%s732 + $0x290] sm:$0xf] %v1061
                  %v1063 = vld [vmem:[%s731 + $0x528] sm:$0xf]
                  %1064 = vst [vmem:[%s732 + $0x294] sm:$0xf] %v1063
                  %v1065 = vld [vmem:[%s731 + $0x530] sm:$0xf]
                  %1066 = vst [vmem:[%s732 + $0x298] sm:$0xf] %v1065
                  %v1067 = vld [vmem:[%s731 + $0x538] sm:$0xf]
                  %1068 = vst [vmem:[%s732 + $0x29c] sm:$0xf] %v1067
                  %v1069 = vld [vmem:[%s731 + $0x540] sm:$0xf]
                  %1070 = vst [vmem:[%s732 + $0x2a0] sm:$0xf] %v1069
                  %v1071 = vld [vmem:[%s731 + $0x548] sm:$0xf]
                  %1072 = vst [vmem:[%s732 + $0x2a4] sm:$0xf] %v1071
                  %v1073 = vld [vmem:[%s731 + $0x550] sm:$0xf]
                  %1074 = vst [vmem:[%s732 + $0x2a8] sm:$0xf] %v1073
                  %v1075 = vld [vmem:[%s731 + $0x558] sm:$0xf]
                  %1076 = vst [vmem:[%s732 + $0x2ac] sm:$0xf] %v1075
                  %v1077 = vld [vmem:[%s731 + $0x560] sm:$0xf]
                  %1078 = vst [vmem:[%s732 + $0x2b0] sm:$0xf] %v1077
                  %v1079 = vld [vmem:[%s731 + $0x568] sm:$0xf]
                  %1080 = vst [vmem:[%s732 + $0x2b4] sm:$0xf] %v1079
                  %v1081 = vld [vmem:[%s731 + $0x570] sm:$0xf]
                  %1082 = vst [vmem:[%s732 + $0x2b8] sm:$0xf] %v1081
                  %v1083 = vld [vmem:[%s731 + $0x578] sm:$0xf]
                  %1084 = vst [vmem:[%s732 + $0x2bc] sm:$0xf] %v1083
                  %v1085 = vld [vmem:[%s731 + $0x580] sm:$0xf]
                  %1086 = vst [vmem:[%s732 + $0x2c0] sm:$0xf] %v1085
                  %v1087 = vld [vmem:[%s731 + $0x588] sm:$0xf]
                  %1088 = vst [vmem:[%s732 + $0x2c4] sm:$0xf] %v1087
                  %v1089 = vld [vmem:[%s731 + $0x590] sm:$0xf]
                  %1090 = vst [vmem:[%s732 + $0x2c8] sm:$0xf] %v1089
                  %v1091 = vld [vmem:[%s731 + $0x598] sm:$0xf]
                  %1092 = vst [vmem:[%s732 + $0x2cc] sm:$0xf] %v1091
                  %v1093 = vld [vmem:[%s731 + $0x5a0] sm:$0xf]
                  %1094 = vst [vmem:[%s732 + $0x2d0] sm:$0xf] %v1093
                  %v1095 = vld [vmem:[%s731 + $0x5a8] sm:$0xf]
                  %1096 = vst [vmem:[%s732 + $0x2d4] sm:$0xf] %v1095
                  %v1097 = vld [vmem:[%s731 + $0x5b0] sm:$0xf]
                  %1098 = vst [vmem:[%s732 + $0x2d8] sm:$0xf] %v1097
                  %v1099 = vld [vmem:[%s731 + $0x5b8] sm:$0xf]
                  %1100 = vst [vmem:[%s732 + $0x2dc] sm:$0xf] %v1099
                  %v1101 = vld [vmem:[%s731 + $0x5c0] sm:$0xf]
                  %1102 = vst [vmem:[%s732 + $0x2e0] sm:$0xf] %v1101
                  %v1103 = vld [vmem:[%s731 + $0x5c8] sm:$0xf]
                  %1104 = vst [vmem:[%s732 + $0x2e4] sm:$0xf] %v1103
                  %v1105 = vld [vmem:[%s731 + $0x5d0] sm:$0xf]
                  %1106 = vst [vmem:[%s732 + $0x2e8] sm:$0xf] %v1105
                  %v1107 = vld [vmem:[%s731 + $0x5d8] sm:$0xf]
                  %1108 = vst [vmem:[%s732 + $0x2ec] sm:$0xf] %v1107
                  %v1109 = vld [vmem:[%s731 + $0x5e0] sm:$0xf]
                  %1110 = vst [vmem:[%s732 + $0x2f0] sm:$0xf] %v1109
                  %v1111 = vld [vmem:[%s731 + $0x5e8] sm:$0xf]
                  %1112 = vst [vmem:[%s732 + $0x2f4] sm:$0xf] %v1111
                  %v1113 = vld [vmem:[%s731 + $0x5f0] sm:$0xf]
                  %1114 = vst [vmem:[%s732 + $0x2f8] sm:$0xf] %v1113
                  %v1115 = vld [vmem:[%s731 + $0x5f8] sm:$0xf]
                  %1116 = vst [vmem:[%s732 + $0x2fc] sm:$0xf] %v1115
                  %v1117 = vld [vmem:[%s731 + $0x600] sm:$0xf]
                  %1118 = vst [vmem:[%s732 + $0x300] sm:$0xf] %v1117
                  %v1119 = vld [vmem:[%s731 + $0x608] sm:$0xf]
                  %1120 = vst [vmem:[%s732 + $0x304] sm:$0xf] %v1119
                  %v1121 = vld [vmem:[%s731 + $0x610] sm:$0xf]
                  %1122 = vst [vmem:[%s732 + $0x308] sm:$0xf] %v1121
                  %v1123 = vld [vmem:[%s731 + $0x618] sm:$0xf]
                  %1124 = vst [vmem:[%s732 + $0x30c] sm:$0xf] %v1123
                  %v1125 = vld [vmem:[%s731 + $0x620] sm:$0xf]
                  %1126 = vst [vmem:[%s732 + $0x310] sm:$0xf] %v1125
                  %v1127 = vld [vmem:[%s731 + $0x628] sm:$0xf]
                  %1128 = vst [vmem:[%s732 + $0x314] sm:$0xf] %v1127
                  %v1129 = vld [vmem:[%s731 + $0x630] sm:$0xf]
                  %1130 = vst [vmem:[%s732 + $0x318] sm:$0xf] %v1129
                  %v1131 = vld [vmem:[%s731 + $0x638] sm:$0xf]
                  %1132 = vst [vmem:[%s732 + $0x31c] sm:$0xf] %v1131
                  %v1133 = vld [vmem:[%s731 + $0x640] sm:$0xf]
                  %1134 = vst [vmem:[%s732 + $0x320] sm:$0xf] %v1133
                  %v1135 = vld [vmem:[%s731 + $0x648] sm:$0xf]
                  %1136 = vst [vmem:[%s732 + $0x324] sm:$0xf] %v1135
                  %v1137 = vld [vmem:[%s731 + $0x650] sm:$0xf]
                  %1138 = vst [vmem:[%s732 + $0x328] sm:$0xf] %v1137
                  %v1139 = vld [vmem:[%s731 + $0x658] sm:$0xf]
                  %1140 = vst [vmem:[%s732 + $0x32c] sm:$0xf] %v1139
                  %v1141 = vld [vmem:[%s731 + $0x660] sm:$0xf]
                  %1142 = vst [vmem:[%s732 + $0x330] sm:$0xf] %v1141
                  %v1143 = vld [vmem:[%s731 + $0x668] sm:$0xf]
                  %1144 = vst [vmem:[%s732 + $0x334] sm:$0xf] %v1143
                  %v1145 = vld [vmem:[%s731 + $0x670] sm:$0xf]
                  %1146 = vst [vmem:[%s732 + $0x338] sm:$0xf] %v1145
                  %v1147 = vld [vmem:[%s731 + $0x678] sm:$0xf]
                  %1148 = vst [vmem:[%s732 + $0x33c] sm:$0xf] %v1147
                  %v1149 = vld [vmem:[%s731 + $0x680] sm:$0xf]
                  %1150 = vst [vmem:[%s732 + $0x340] sm:$0xf] %v1149
                  %v1151 = vld [vmem:[%s731 + $0x688] sm:$0xf]
                  %1152 = vst [vmem:[%s732 + $0x344] sm:$0xf] %v1151
                  %v1153 = vld [vmem:[%s731 + $0x690] sm:$0xf]
                  %1154 = vst [vmem:[%s732 + $0x348] sm:$0xf] %v1153
                  %v1155 = vld [vmem:[%s731 + $0x698] sm:$0xf]
                  %1156 = vst [vmem:[%s732 + $0x34c] sm:$0xf] %v1155
                  %v1157 = vld [vmem:[%s731 + $0x6a0] sm:$0xf]
                  %1158 = vst [vmem:[%s732 + $0x350] sm:$0xf] %v1157
                  %v1159 = vld [vmem:[%s731 + $0x6a8] sm:$0xf]
                  %1160 = vst [vmem:[%s732 + $0x354] sm:$0xf] %v1159
                  %v1161 = vld [vmem:[%s731 + $0x6b0] sm:$0xf]
                  %1162 = vst [vmem:[%s732 + $0x358] sm:$0xf] %v1161
                  %v1163 = vld [vmem:[%s731 + $0x6b8] sm:$0xf]
                  %1164 = vst [vmem:[%s732 + $0x35c] sm:$0xf] %v1163
                  %v1165 = vld [vmem:[%s731 + $0x6c0] sm:$0xf]
                  %1166 = vst [vmem:[%s732 + $0x360] sm:$0xf] %v1165
                  %v1167 = vld [vmem:[%s731 + $0x6c8] sm:$0xf]
                  %1168 = vst [vmem:[%s732 + $0x364] sm:$0xf] %v1167
                  %v1169 = vld [vmem:[%s731 + $0x6d0] sm:$0xf]
                  %1170 = vst [vmem:[%s732 + $0x368] sm:$0xf] %v1169
                  %v1171 = vld [vmem:[%s731 + $0x6d8] sm:$0xf]
                  %1172 = vst [vmem:[%s732 + $0x36c] sm:$0xf] %v1171
                  %v1173 = vld [vmem:[%s731 + $0x6e0] sm:$0xf]
                  %1174 = vst [vmem:[%s732 + $0x370] sm:$0xf] %v1173
                  %v1175 = vld [vmem:[%s731 + $0x6e8] sm:$0xf]
                  %1176 = vst [vmem:[%s732 + $0x374] sm:$0xf] %v1175
                  %v1177 = vld [vmem:[%s731 + $0x6f0] sm:$0xf]
                  %1178 = vst [vmem:[%s732 + $0x378] sm:$0xf] %v1177
                  %v1179 = vld [vmem:[%s731 + $0x6f8] sm:$0xf]
                  %1180 = vst [vmem:[%s732 + $0x37c] sm:$0xf] %v1179
                  %v1181 = vld [vmem:[%s731 + $0x700] sm:$0xf]
                  %1182 = vst [vmem:[%s732 + $0x380] sm:$0xf] %v1181
                  %v1183 = vld [vmem:[%s731 + $0x708] sm:$0xf]
                  %1184 = vst [vmem:[%s732 + $0x384] sm:$0xf] %v1183
                  %v1185 = vld [vmem:[%s731 + $0x710] sm:$0xf]
                  %1186 = vst [vmem:[%s732 + $0x388] sm:$0xf] %v1185
                  %v1187 = vld [vmem:[%s731 + $0x718] sm:$0xf]
                  %1188 = vst [vmem:[%s732 + $0x38c] sm:$0xf] %v1187
                  %v1189 = vld [vmem:[%s731 + $0x720] sm:$0xf]
                  %1190 = vst [vmem:[%s732 + $0x390] sm:$0xf] %v1189
                  %v1191 = vld [vmem:[%s731 + $0x728] sm:$0xf]
                  %1192 = vst [vmem:[%s732 + $0x394] sm:$0xf] %v1191
                  %v1193 = vld [vmem:[%s731 + $0x730] sm:$0xf]
                  %1194 = vst [vmem:[%s732 + $0x398] sm:$0xf] %v1193
                  %v1195 = vld [vmem:[%s731 + $0x738] sm:$0xf]
                  %1196 = vst [vmem:[%s732 + $0x39c] sm:$0xf] %v1195
                  %v1197 = vld [vmem:[%s731 + $0x740] sm:$0xf]
                  %1198 = vst [vmem:[%s732 + $0x3a0] sm:$0xf] %v1197
                  %v1199 = vld [vmem:[%s731 + $0x748] sm:$0xf]
                  %1200 = vst [vmem:[%s732 + $0x3a4] sm:$0xf] %v1199
                  %v1201 = vld [vmem:[%s731 + $0x750] sm:$0xf]
                  %1202 = vst [vmem:[%s732 + $0x3a8] sm:$0xf] %v1201
                  %v1203 = vld [vmem:[%s731 + $0x758] sm:$0xf]
                  %1204 = vst [vmem:[%s732 + $0x3ac] sm:$0xf] %v1203
                  %v1205 = vld [vmem:[%s731 + $0x760] sm:$0xf]
                  %1206 = vst [vmem:[%s732 + $0x3b0] sm:$0xf] %v1205
                  %v1207 = vld [vmem:[%s731 + $0x768] sm:$0xf]
                  %1208 = vst [vmem:[%s732 + $0x3b4] sm:$0xf] %v1207
                  %v1209 = vld [vmem:[%s731 + $0x770] sm:$0xf]
                  %1210 = vst [vmem:[%s732 + $0x3b8] sm:$0xf] %v1209
                  %v1211 = vld [vmem:[%s731 + $0x778] sm:$0xf]
                  %1212 = vst [vmem:[%s732 + $0x3bc] sm:$0xf] %v1211
                  %v1213 = vld [vmem:[%s731 + $0x780] sm:$0xf]
                  %1214 = vst [vmem:[%s732 + $0x3c0] sm:$0xf] %v1213
                  %v1215 = vld [vmem:[%s731 + $0x788] sm:$0xf]
                  %1216 = vst [vmem:[%s732 + $0x3c4] sm:$0xf] %v1215
                  %v1217 = vld [vmem:[%s731 + $0x790] sm:$0xf]
                  %1218 = vst [vmem:[%s732 + $0x3c8] sm:$0xf] %v1217
                  %v1219 = vld [vmem:[%s731 + $0x798] sm:$0xf]
                  %1220 = vst [vmem:[%s732 + $0x3cc] sm:$0xf] %v1219
                  %v1221 = vld [vmem:[%s731 + $0x7a0] sm:$0xf]
                  %1222 = vst [vmem:[%s732 + $0x3d0] sm:$0xf] %v1221
                  %v1223 = vld [vmem:[%s731 + $0x7a8] sm:$0xf]
                  %1224 = vst [vmem:[%s732 + $0x3d4] sm:$0xf] %v1223
                  %v1225 = vld [vmem:[%s731 + $0x7b0] sm:$0xf]
                  %1226 = vst [vmem:[%s732 + $0x3d8] sm:$0xf] %v1225
                  %v1227 = vld [vmem:[%s731 + $0x7b8] sm:$0xf]
                  %1228 = vst [vmem:[%s732 + $0x3dc] sm:$0xf] %v1227
                  %v1229 = vld [vmem:[%s731 + $0x7c0] sm:$0xf]
                  %1230 = vst [vmem:[%s732 + $0x3e0] sm:$0xf] %v1229
                  %v1231 = vld [vmem:[%s731 + $0x7c8] sm:$0xf]
                  %1232 = vst [vmem:[%s732 + $0x3e4] sm:$0xf] %v1231
                  %v1233 = vld [vmem:[%s731 + $0x7d0] sm:$0xf]
                  %1234 = vst [vmem:[%s732 + $0x3e8] sm:$0xf] %v1233
                  %v1235 = vld [vmem:[%s731 + $0x7d8] sm:$0xf]
                  %1236 = vst [vmem:[%s732 + $0x3ec] sm:$0xf] %v1235
                  %v1237 = vld [vmem:[%s731 + $0x7e0] sm:$0xf]
                  %1238 = vst [vmem:[%s732 + $0x3f0] sm:$0xf] %v1237
                  %v1239 = vld [vmem:[%s731 + $0x7e8] sm:$0xf]
                  %1240 = vst [vmem:[%s732 + $0x3f4] sm:$0xf] %v1239
                  %v1241 = vld [vmem:[%s731 + $0x7f0] sm:$0xf]
                  %1242 = vst [vmem:[%s732 + $0x3f8] sm:$0xf] %v1241
                  %v1243 = vld [vmem:[%s731 + $0x7f8] sm:$0xf]
                  %1244 = vst [vmem:[%s732 + $0x3fc] sm:$0xf] %v1243
                $region59: #{discriminator_forward.13} parent=46 // loop_footer
                  %s730 = sadd.s32 1, %s726
                $region60: #{discriminator_forward.13} parent=46 // loop_footer_branch
                  %725 = sbr.rel target = $region56
                $region61: #{discriminator_forward.13} parent=46 // loop_exit
                  _
              $region47: #{discriminator_forward.13} parent=31 // pred_fallthru
                _
            $region32: #{discriminator_forward.13} parent=27 // pred_fallthru
              _
            // Predicated region
            $region33: #{discriminator_forward.13} parent=27 // pred_check
              _
            $region34: #{discriminator_forward.13} parent=27 // pred_check_branch
              %192 = sbr.rel (0) target = $region36
            $region35: #{discriminator_forward.13} parent=27 // pred_region
              loop: start=0, step=1, limit=1
              $region37: #{discriminator_forward.13} parent=35 // loop_pre_header
                _
              $region38: #{discriminator_forward.13} parent=35 // loop_header
                %s195 = sphi 0, %s199
                %p196 = scmp.ge.s32.totalorder %s195, 1
                %s200 = sphi %s186, %s186
                %s201 = sphi %s181, %s181
              $region39: #{discriminator_forward.13} parent=35 // loop_header_branch
                %198 = sbr.rel (%p196) target = $region43
              $region40: #{discriminator_forward.13} parent=35 // loop_body
                %v202 = vld [vmem:[%s200] sm:$0xf]
                %203 = vst [vmem:[%s201] sm:$0xf] %v202
                %v204 = vld [vmem:[%s200 + $0x8] sm:$0xf]
                %205 = vst [vmem:[%s201 + $0x4] sm:$0xf] %v204
                %v206 = vld [vmem:[%s200 + $0x10] sm:$0xf]
                %207 = vst [vmem:[%s201 + $0x8] sm:$0xf] %v206
                %v208 = vld [vmem:[%s200 + $0x18] sm:$0xf]
                %209 = vst [vmem:[%s201 + $0xc] sm:$0xf] %v208
                %v210 = vld [vmem:[%s200 + $0x20] sm:$0xf]
                %211 = vst [vmem:[%s201 + $0x10] sm:$0xf] %v210
                %v212 = vld [vmem:[%s200 + $0x28] sm:$0xf]
                %213 = vst [vmem:[%s201 + $0x14] sm:$0xf] %v212
                %v214 = vld [vmem:[%s200 + $0x30] sm:$0xf]
                %215 = vst [vmem:[%s201 + $0x18] sm:$0xf] %v214
                %v216 = vld [vmem:[%s200 + $0x38] sm:$0xf]
                %217 = vst [vmem:[%s201 + $0x1c] sm:$0xf] %v216
                %v218 = vld [vmem:[%s200 + $0x40] sm:$0xf]
                %219 = vst [vmem:[%s201 + $0x20] sm:$0xf] %v218
                %v220 = vld [vmem:[%s200 + $0x48] sm:$0xf]
                %221 = vst [vmem:[%s201 + $0x24] sm:$0xf] %v220
                %v222 = vld [vmem:[%s200 + $0x50] sm:$0xf]
                %223 = vst [vmem:[%s201 + $0x28] sm:$0xf] %v222
                %v224 = vld [vmem:[%s200 + $0x58] sm:$0xf]
                %225 = vst [vmem:[%s201 + $0x2c] sm:$0xf] %v224
                %v226 = vld [vmem:[%s200 + $0x60] sm:$0xf]
                %227 = vst [vmem:[%s201 + $0x30] sm:$0xf] %v226
                %v228 = vld [vmem:[%s200 + $0x68] sm:$0xf]
                %229 = vst [vmem:[%s201 + $0x34] sm:$0xf] %v228
                %v230 = vld [vmem:[%s200 + $0x70] sm:$0xf]
                %231 = vst [vmem:[%s201 + $0x38] sm:$0xf] %v230
                %v232 = vld [vmem:[%s200 + $0x78] sm:$0xf]
                %233 = vst [vmem:[%s201 + $0x3c] sm:$0xf] %v232
                %v234 = vld [vmem:[%s200 + $0x80] sm:$0xf]
                %235 = vst [vmem:[%s201 + $0x40] sm:$0xf] %v234
                %v236 = vld [vmem:[%s200 + $0x88] sm:$0xf]
                %237 = vst [vmem:[%s201 + $0x44] sm:$0xf] %v236
                %v238 = vld [vmem:[%s200 + $0x90] sm:$0xf]
                %239 = vst [vmem:[%s201 + $0x48] sm:$0xf] %v238
                %v240 = vld [vmem:[%s200 + $0x98] sm:$0xf]
                %241 = vst [vmem:[%s201 + $0x4c] sm:$0xf] %v240
                %v242 = vld [vmem:[%s200 + $0xa0] sm:$0xf]
                %243 = vst [vmem:[%s201 + $0x50] sm:$0xf] %v242
                %v244 = vld [vmem:[%s200 + $0xa8] sm:$0xf]
                %245 = vst [vmem:[%s201 + $0x54] sm:$0xf] %v244
                %v246 = vld [vmem:[%s200 + $0xb0] sm:$0xf]
                %247 = vst [vmem:[%s201 + $0x58] sm:$0xf] %v246
                %v248 = vld [vmem:[%s200 + $0xb8] sm:$0xf]
                %249 = vst [vmem:[%s201 + $0x5c] sm:$0xf] %v248
                %v250 = vld [vmem:[%s200 + $0xc0] sm:$0xf]
                %251 = vst [vmem:[%s201 + $0x60] sm:$0xf] %v250
                %v252 = vld [vmem:[%s200 + $0xc8] sm:$0xf]
                %253 = vst [vmem:[%s201 + $0x64] sm:$0xf] %v252
                %v254 = vld [vmem:[%s200 + $0xd0] sm:$0xf]
                %255 = vst [vmem:[%s201 + $0x68] sm:$0xf] %v254
                %v256 = vld [vmem:[%s200 + $0xd8] sm:$0xf]
                %257 = vst [vmem:[%s201 + $0x6c] sm:$0xf] %v256
                %v258 = vld [vmem:[%s200 + $0xe0] sm:$0xf]
                %259 = vst [vmem:[%s201 + $0x70] sm:$0xf] %v258
                %v260 = vld [vmem:[%s200 + $0xe8] sm:$0xf]
                %261 = vst [vmem:[%s201 + $0x74] sm:$0xf] %v260
                %v262 = vld [vmem:[%s200 + $0xf0] sm:$0xf]
                %263 = vst [vmem:[%s201 + $0x78] sm:$0xf] %v262
                %v264 = vld [vmem:[%s200 + $0xf8] sm:$0xf]
                %265 = vst [vmem:[%s201 + $0x7c] sm:$0xf] %v264
                %v266 = vld [vmem:[%s200 + $0x100] sm:$0xf]
                %267 = vst [vmem:[%s201 + $0x80] sm:$0xf] %v266
                %v268 = vld [vmem:[%s200 + $0x108] sm:$0xf]
                %269 = vst [vmem:[%s201 + $0x84] sm:$0xf] %v268
                %v270 = vld [vmem:[%s200 + $0x110] sm:$0xf]
                %271 = vst [vmem:[%s201 + $0x88] sm:$0xf] %v270
                %v272 = vld [vmem:[%s200 + $0x118] sm:$0xf]
                %273 = vst [vmem:[%s201 + $0x8c] sm:$0xf] %v272
                %v274 = vld [vmem:[%s200 + $0x120] sm:$0xf]
                %275 = vst [vmem:[%s201 + $0x90] sm:$0xf] %v274
                %v276 = vld [vmem:[%s200 + $0x128] sm:$0xf]
                %277 = vst [vmem:[%s201 + $0x94] sm:$0xf] %v276
                %v278 = vld [vmem:[%s200 + $0x130] sm:$0xf]
                %279 = vst [vmem:[%s201 + $0x98] sm:$0xf] %v278
                %v280 = vld [vmem:[%s200 + $0x138] sm:$0xf]
                %281 = vst [vmem:[%s201 + $0x9c] sm:$0xf] %v280
                %v282 = vld [vmem:[%s200 + $0x140] sm:$0xf]
                %283 = vst [vmem:[%s201 + $0xa0] sm:$0xf] %v282
                %v284 = vld [vmem:[%s200 + $0x148] sm:$0xf]
                %285 = vst [vmem:[%s201 + $0xa4] sm:$0xf] %v284
                %v286 = vld [vmem:[%s200 + $0x150] sm:$0xf]
                %287 = vst [vmem:[%s201 + $0xa8] sm:$0xf] %v286
                %v288 = vld [vmem:[%s200 + $0x158] sm:$0xf]
                %289 = vst [vmem:[%s201 + $0xac] sm:$0xf] %v288
                %v290 = vld [vmem:[%s200 + $0x160] sm:$0xf]
                %291 = vst [vmem:[%s201 + $0xb0] sm:$0xf] %v290
                %v292 = vld [vmem:[%s200 + $0x168] sm:$0xf]
                %293 = vst [vmem:[%s201 + $0xb4] sm:$0xf] %v292
                %v294 = vld [vmem:[%s200 + $0x170] sm:$0xf]
                %295 = vst [vmem:[%s201 + $0xb8] sm:$0xf] %v294
                %v296 = vld [vmem:[%s200 + $0x178] sm:$0xf]
                %297 = vst [vmem:[%s201 + $0xbc] sm:$0xf] %v296
                %v298 = vld [vmem:[%s200 + $0x180] sm:$0xf]
                %299 = vst [vmem:[%s201 + $0xc0] sm:$0xf] %v298
                %v300 = vld [vmem:[%s200 + $0x188] sm:$0xf]
                %301 = vst [vmem:[%s201 + $0xc4] sm:$0xf] %v300
                %v302 = vld [vmem:[%s200 + $0x190] sm:$0xf]
                %303 = vst [vmem:[%s201 + $0xc8] sm:$0xf] %v302
                %v304 = vld [vmem:[%s200 + $0x198] sm:$0xf]
                %305 = vst [vmem:[%s201 + $0xcc] sm:$0xf] %v304
                %v306 = vld [vmem:[%s200 + $0x1a0] sm:$0xf]
                %307 = vst [vmem:[%s201 + $0xd0] sm:$0xf] %v306
                %v308 = vld [vmem:[%s200 + $0x1a8] sm:$0xf]
                %309 = vst [vmem:[%s201 + $0xd4] sm:$0xf] %v308
                %v310 = vld [vmem:[%s200 + $0x1b0] sm:$0xf]
                %311 = vst [vmem:[%s201 + $0xd8] sm:$0xf] %v310
                %v312 = vld [vmem:[%s200 + $0x1b8] sm:$0xf]
                %313 = vst [vmem:[%s201 + $0xdc] sm:$0xf] %v312
                %v314 = vld [vmem:[%s200 + $0x1c0] sm:$0xf]
                %315 = vst [vmem:[%s201 + $0xe0] sm:$0xf] %v314
                %v316 = vld [vmem:[%s200 + $0x1c8] sm:$0xf]
                %317 = vst [vmem:[%s201 + $0xe4] sm:$0xf] %v316
                %v318 = vld [vmem:[%s200 + $0x1d0] sm:$0xf]
                %319 = vst [vmem:[%s201 + $0xe8] sm:$0xf] %v318
                %v320 = vld [vmem:[%s200 + $0x1d8] sm:$0xf]
                %321 = vst [vmem:[%s201 + $0xec] sm:$0xf] %v320
                %v322 = vld [vmem:[%s200 + $0x1e0] sm:$0xf]
                %323 = vst [vmem:[%s201 + $0xf0] sm:$0xf] %v322
                %v324 = vld [vmem:[%s200 + $0x1e8] sm:$0xf]
                %325 = vst [vmem:[%s201 + $0xf4] sm:$0xf] %v324
                %v326 = vld [vmem:[%s200 + $0x1f0] sm:$0xf]
                %327 = vst [vmem:[%s201 + $0xf8] sm:$0xf] %v326
                %v328 = vld [vmem:[%s200 + $0x1f8] sm:$0xf]
                %329 = vst [vmem:[%s201 + $0xfc] sm:$0xf] %v328
                %v330 = vld [vmem:[%s200 + $0x200] sm:$0xf]
                %331 = vst [vmem:[%s201 + $0x100] sm:$0xf] %v330
                %v332 = vld [vmem:[%s200 + $0x208] sm:$0xf]
                %333 = vst [vmem:[%s201 + $0x104] sm:$0xf] %v332
                %v334 = vld [vmem:[%s200 + $0x210] sm:$0xf]
                %335 = vst [vmem:[%s201 + $0x108] sm:$0xf] %v334
                %v336 = vld [vmem:[%s200 + $0x218] sm:$0xf]
                %337 = vst [vmem:[%s201 + $0x10c] sm:$0xf] %v336
                %v338 = vld [vmem:[%s200 + $0x220] sm:$0xf]
                %339 = vst [vmem:[%s201 + $0x110] sm:$0xf] %v338
                %v340 = vld [vmem:[%s200 + $0x228] sm:$0xf]
                %341 = vst [vmem:[%s201 + $0x114] sm:$0xf] %v340
                %v342 = vld [vmem:[%s200 + $0x230] sm:$0xf]
                %343 = vst [vmem:[%s201 + $0x118] sm:$0xf] %v342
                %v344 = vld [vmem:[%s200 + $0x238] sm:$0xf]
                %345 = vst [vmem:[%s201 + $0x11c] sm:$0xf] %v344
                %v346 = vld [vmem:[%s200 + $0x240] sm:$0xf]
                %347 = vst [vmem:[%s201 + $0x120] sm:$0xf] %v346
                %v348 = vld [vmem:[%s200 + $0x248] sm:$0xf]
                %349 = vst [vmem:[%s201 + $0x124] sm:$0xf] %v348
                %v350 = vld [vmem:[%s200 + $0x250] sm:$0xf]
                %351 = vst [vmem:[%s201 + $0x128] sm:$0xf] %v350
                %v352 = vld [vmem:[%s200 + $0x258] sm:$0xf]
                %353 = vst [vmem:[%s201 + $0x12c] sm:$0xf] %v352
                %v354 = vld [vmem:[%s200 + $0x260] sm:$0xf]
                %355 = vst [vmem:[%s201 + $0x130] sm:$0xf] %v354
                %v356 = vld [vmem:[%s200 + $0x268] sm:$0xf]
                %357 = vst [vmem:[%s201 + $0x134] sm:$0xf] %v356
                %v358 = vld [vmem:[%s200 + $0x270] sm:$0xf]
                %359 = vst [vmem:[%s201 + $0x138] sm:$0xf] %v358
                %v360 = vld [vmem:[%s200 + $0x278] sm:$0xf]
                %361 = vst [vmem:[%s201 + $0x13c] sm:$0xf] %v360
                %v362 = vld [vmem:[%s200 + $0x280] sm:$0xf]
                %363 = vst [vmem:[%s201 + $0x140] sm:$0xf] %v362
                %v364 = vld [vmem:[%s200 + $0x288] sm:$0xf]
                %365 = vst [vmem:[%s201 + $0x144] sm:$0xf] %v364
                %v366 = vld [vmem:[%s200 + $0x290] sm:$0xf]
                %367 = vst [vmem:[%s201 + $0x148] sm:$0xf] %v366
                %v368 = vld [vmem:[%s200 + $0x298] sm:$0xf]
                %369 = vst [vmem:[%s201 + $0x14c] sm:$0xf] %v368
                %v370 = vld [vmem:[%s200 + $0x2a0] sm:$0xf]
                %371 = vst [vmem:[%s201 + $0x150] sm:$0xf] %v370
                %v372 = vld [vmem:[%s200 + $0x2a8] sm:$0xf]
                %373 = vst [vmem:[%s201 + $0x154] sm:$0xf] %v372
                %v374 = vld [vmem:[%s200 + $0x2b0] sm:$0xf]
                %375 = vst [vmem:[%s201 + $0x158] sm:$0xf] %v374
                %v376 = vld [vmem:[%s200 + $0x2b8] sm:$0xf]
                %377 = vst [vmem:[%s201 + $0x15c] sm:$0xf] %v376
                %v378 = vld [vmem:[%s200 + $0x2c0] sm:$0xf]
                %379 = vst [vmem:[%s201 + $0x160] sm:$0xf] %v378
                %v380 = vld [vmem:[%s200 + $0x2c8] sm:$0xf]
                %381 = vst [vmem:[%s201 + $0x164] sm:$0xf] %v380
                %v382 = vld [vmem:[%s200 + $0x2d0] sm:$0xf]
                %383 = vst [vmem:[%s201 + $0x168] sm:$0xf] %v382
                %v384 = vld [vmem:[%s200 + $0x2d8] sm:$0xf]
                %385 = vst [vmem:[%s201 + $0x16c] sm:$0xf] %v384
                %v386 = vld [vmem:[%s200 + $0x2e0] sm:$0xf]
                %387 = vst [vmem:[%s201 + $0x170] sm:$0xf] %v386
                %v388 = vld [vmem:[%s200 + $0x2e8] sm:$0xf]
                %389 = vst [vmem:[%s201 + $0x174] sm:$0xf] %v388
                %v390 = vld [vmem:[%s200 + $0x2f0] sm:$0xf]
                %391 = vst [vmem:[%s201 + $0x178] sm:$0xf] %v390
                %v392 = vld [vmem:[%s200 + $0x2f8] sm:$0xf]
                %393 = vst [vmem:[%s201 + $0x17c] sm:$0xf] %v392
                %v394 = vld [vmem:[%s200 + $0x300] sm:$0xf]
                %395 = vst [vmem:[%s201 + $0x180] sm:$0xf] %v394
                %v396 = vld [vmem:[%s200 + $0x308] sm:$0xf]
                %397 = vst [vmem:[%s201 + $0x184] sm:$0xf] %v396
                %v398 = vld [vmem:[%s200 + $0x310] sm:$0xf]
                %399 = vst [vmem:[%s201 + $0x188] sm:$0xf] %v398
                %v400 = vld [vmem:[%s200 + $0x318] sm:$0xf]
                %401 = vst [vmem:[%s201 + $0x18c] sm:$0xf] %v400
                %v402 = vld [vmem:[%s200 + $0x320] sm:$0xf]
                %403 = vst [vmem:[%s201 + $0x190] sm:$0xf] %v402
                %v404 = vld [vmem:[%s200 + $0x328] sm:$0xf]
                %405 = vst [vmem:[%s201 + $0x194] sm:$0xf] %v404
                %v406 = vld [vmem:[%s200 + $0x330] sm:$0xf]
                %407 = vst [vmem:[%s201 + $0x198] sm:$0xf] %v406
                %v408 = vld [vmem:[%s200 + $0x338] sm:$0xf]
                %409 = vst [vmem:[%s201 + $0x19c] sm:$0xf] %v408
                %v410 = vld [vmem:[%s200 + $0x340] sm:$0xf]
                %411 = vst [vmem:[%s201 + $0x1a0] sm:$0xf] %v410
                %v412 = vld [vmem:[%s200 + $0x348] sm:$0xf]
                %413 = vst [vmem:[%s201 + $0x1a4] sm:$0xf] %v412
                %v414 = vld [vmem:[%s200 + $0x350] sm:$0xf]
                %415 = vst [vmem:[%s201 + $0x1a8] sm:$0xf] %v414
                %v416 = vld [vmem:[%s200 + $0x358] sm:$0xf]
                %417 = vst [vmem:[%s201 + $0x1ac] sm:$0xf] %v416
                %v418 = vld [vmem:[%s200 + $0x360] sm:$0xf]
                %419 = vst [vmem:[%s201 + $0x1b0] sm:$0xf] %v418
                %v420 = vld [vmem:[%s200 + $0x368] sm:$0xf]
                %421 = vst [vmem:[%s201 + $0x1b4] sm:$0xf] %v420
                %v422 = vld [vmem:[%s200 + $0x370] sm:$0xf]
                %423 = vst [vmem:[%s201 + $0x1b8] sm:$0xf] %v422
                %v424 = vld [vmem:[%s200 + $0x378] sm:$0xf]
                %425 = vst [vmem:[%s201 + $0x1bc] sm:$0xf] %v424
                %v426 = vld [vmem:[%s200 + $0x380] sm:$0xf]
                %427 = vst [vmem:[%s201 + $0x1c0] sm:$0xf] %v426
                %v428 = vld [vmem:[%s200 + $0x388] sm:$0xf]
                %429 = vst [vmem:[%s201 + $0x1c4] sm:$0xf] %v428
                %v430 = vld [vmem:[%s200 + $0x390] sm:$0xf]
                %431 = vst [vmem:[%s201 + $0x1c8] sm:$0xf] %v430
                %v432 = vld [vmem:[%s200 + $0x398] sm:$0xf]
                %433 = vst [vmem:[%s201 + $0x1cc] sm:$0xf] %v432
                %v434 = vld [vmem:[%s200 + $0x3a0] sm:$0xf]
                %435 = vst [vmem:[%s201 + $0x1d0] sm:$0xf] %v434
                %v436 = vld [vmem:[%s200 + $0x3a8] sm:$0xf]
                %437 = vst [vmem:[%s201 + $0x1d4] sm:$0xf] %v436
                %v438 = vld [vmem:[%s200 + $0x3b0] sm:$0xf]
                %439 = vst [vmem:[%s201 + $0x1d8] sm:$0xf] %v438
                %v440 = vld [vmem:[%s200 + $0x3b8] sm:$0xf]
                %441 = vst [vmem:[%s201 + $0x1dc] sm:$0xf] %v440
                %v442 = vld [vmem:[%s200 + $0x3c0] sm:$0xf]
                %443 = vst [vmem:[%s201 + $0x1e0] sm:$0xf] %v442
                %v444 = vld [vmem:[%s200 + $0x3c8] sm:$0xf]
                %445 = vst [vmem:[%s201 + $0x1e4] sm:$0xf] %v444
                %v446 = vld [vmem:[%s200 + $0x3d0] sm:$0xf]
                %447 = vst [vmem:[%s201 + $0x1e8] sm:$0xf] %v446
                %v448 = vld [vmem:[%s200 + $0x3d8] sm:$0xf]
                %449 = vst [vmem:[%s201 + $0x1ec] sm:$0xf] %v448
                %v450 = vld [vmem:[%s200 + $0x3e0] sm:$0xf]
                %451 = vst [vmem:[%s201 + $0x1f0] sm:$0xf] %v450
                %v452 = vld [vmem:[%s200 + $0x3e8] sm:$0xf]
                %453 = vst [vmem:[%s201 + $0x1f4] sm:$0xf] %v452
                %v454 = vld [vmem:[%s200 + $0x3f0] sm:$0xf]
                %455 = vst [vmem:[%s201 + $0x1f8] sm:$0xf] %v454
                %v456 = vld [vmem:[%s200 + $0x3f8] sm:$0xf]
                %457 = vst [vmem:[%s201 + $0x1fc] sm:$0xf] %v456
                %v458 = vld [vmem:[%s200 + $0x400] sm:$0xf]
                %459 = vst [vmem:[%s201 + $0x200] sm:$0xf] %v458
                %v460 = vld [vmem:[%s200 + $0x408] sm:$0xf]
                %461 = vst [vmem:[%s201 + $0x204] sm:$0xf] %v460
                %v462 = vld [vmem:[%s200 + $0x410] sm:$0xf]
                %463 = vst [vmem:[%s201 + $0x208] sm:$0xf] %v462
                %v464 = vld [vmem:[%s200 + $0x418] sm:$0xf]
                %465 = vst [vmem:[%s201 + $0x20c] sm:$0xf] %v464
                %v466 = vld [vmem:[%s200 + $0x420] sm:$0xf]
                %467 = vst [vmem:[%s201 + $0x210] sm:$0xf] %v466
                %v468 = vld [vmem:[%s200 + $0x428] sm:$0xf]
                %469 = vst [vmem:[%s201 + $0x214] sm:$0xf] %v468
                %v470 = vld [vmem:[%s200 + $0x430] sm:$0xf]
                %471 = vst [vmem:[%s201 + $0x218] sm:$0xf] %v470
                %v472 = vld [vmem:[%s200 + $0x438] sm:$0xf]
                %473 = vst [vmem:[%s201 + $0x21c] sm:$0xf] %v472
                %v474 = vld [vmem:[%s200 + $0x440] sm:$0xf]
                %475 = vst [vmem:[%s201 + $0x220] sm:$0xf] %v474
                %v476 = vld [vmem:[%s200 + $0x448] sm:$0xf]
                %477 = vst [vmem:[%s201 + $0x224] sm:$0xf] %v476
                %v478 = vld [vmem:[%s200 + $0x450] sm:$0xf]
                %479 = vst [vmem:[%s201 + $0x228] sm:$0xf] %v478
                %v480 = vld [vmem:[%s200 + $0x458] sm:$0xf]
                %481 = vst [vmem:[%s201 + $0x22c] sm:$0xf] %v480
                %v482 = vld [vmem:[%s200 + $0x460] sm:$0xf]
                %483 = vst [vmem:[%s201 + $0x230] sm:$0xf] %v482
                %v484 = vld [vmem:[%s200 + $0x468] sm:$0xf]
                %485 = vst [vmem:[%s201 + $0x234] sm:$0xf] %v484
                %v486 = vld [vmem:[%s200 + $0x470] sm:$0xf]
                %487 = vst [vmem:[%s201 + $0x238] sm:$0xf] %v486
                %v488 = vld [vmem:[%s200 + $0x478] sm:$0xf]
                %489 = vst [vmem:[%s201 + $0x23c] sm:$0xf] %v488
                %v490 = vld [vmem:[%s200 + $0x480] sm:$0xf]
                %491 = vst [vmem:[%s201 + $0x240] sm:$0xf] %v490
                %v492 = vld [vmem:[%s200 + $0x488] sm:$0xf]
                %493 = vst [vmem:[%s201 + $0x244] sm:$0xf] %v492
                %v494 = vld [vmem:[%s200 + $0x490] sm:$0xf]
                %495 = vst [vmem:[%s201 + $0x248] sm:$0xf] %v494
                %v496 = vld [vmem:[%s200 + $0x498] sm:$0xf]
                %497 = vst [vmem:[%s201 + $0x24c] sm:$0xf] %v496
                %v498 = vld [vmem:[%s200 + $0x4a0] sm:$0xf]
                %499 = vst [vmem:[%s201 + $0x250] sm:$0xf] %v498
                %v500 = vld [vmem:[%s200 + $0x4a8] sm:$0xf]
                %501 = vst [vmem:[%s201 + $0x254] sm:$0xf] %v500
                %v502 = vld [vmem:[%s200 + $0x4b0] sm:$0xf]
                %503 = vst [vmem:[%s201 + $0x258] sm:$0xf] %v502
                %v504 = vld [vmem:[%s200 + $0x4b8] sm:$0xf]
                %505 = vst [vmem:[%s201 + $0x25c] sm:$0xf] %v504
                %v506 = vld [vmem:[%s200 + $0x4c0] sm:$0xf]
                %507 = vst [vmem:[%s201 + $0x260] sm:$0xf] %v506
                %v508 = vld [vmem:[%s200 + $0x4c8] sm:$0xf]
                %509 = vst [vmem:[%s201 + $0x264] sm:$0xf] %v508
                %v510 = vld [vmem:[%s200 + $0x4d0] sm:$0xf]
                %511 = vst [vmem:[%s201 + $0x268] sm:$0xf] %v510
                %v512 = vld [vmem:[%s200 + $0x4d8] sm:$0xf]
                %513 = vst [vmem:[%s201 + $0x26c] sm:$0xf] %v512
                %v514 = vld [vmem:[%s200 + $0x4e0] sm:$0xf]
                %515 = vst [vmem:[%s201 + $0x270] sm:$0xf] %v514
                %v516 = vld [vmem:[%s200 + $0x4e8] sm:$0xf]
                %517 = vst [vmem:[%s201 + $0x274] sm:$0xf] %v516
                %v518 = vld [vmem:[%s200 + $0x4f0] sm:$0xf]
                %519 = vst [vmem:[%s201 + $0x278] sm:$0xf] %v518
                %v520 = vld [vmem:[%s200 + $0x4f8] sm:$0xf]
                %521 = vst [vmem:[%s201 + $0x27c] sm:$0xf] %v520
                %v522 = vld [vmem:[%s200 + $0x500] sm:$0xf]
                %523 = vst [vmem:[%s201 + $0x280] sm:$0xf] %v522
                %v524 = vld [vmem:[%s200 + $0x508] sm:$0xf]
                %525 = vst [vmem:[%s201 + $0x284] sm:$0xf] %v524
                %v526 = vld [vmem:[%s200 + $0x510] sm:$0xf]
                %527 = vst [vmem:[%s201 + $0x288] sm:$0xf] %v526
                %v528 = vld [vmem:[%s200 + $0x518] sm:$0xf]
                %529 = vst [vmem:[%s201 + $0x28c] sm:$0xf] %v528
                %v530 = vld [vmem:[%s200 + $0x520] sm:$0xf]
                %531 = vst [vmem:[%s201 + $0x290] sm:$0xf] %v530
                %v532 = vld [vmem:[%s200 + $0x528] sm:$0xf]
                %533 = vst [vmem:[%s201 + $0x294] sm:$0xf] %v532
                %v534 = vld [vmem:[%s200 + $0x530] sm:$0xf]
                %535 = vst [vmem:[%s201 + $0x298] sm:$0xf] %v534
                %v536 = vld [vmem:[%s200 + $0x538] sm:$0xf]
                %537 = vst [vmem:[%s201 + $0x29c] sm:$0xf] %v536
                %v538 = vld [vmem:[%s200 + $0x540] sm:$0xf]
                %539 = vst [vmem:[%s201 + $0x2a0] sm:$0xf] %v538
                %v540 = vld [vmem:[%s200 + $0x548] sm:$0xf]
                %541 = vst [vmem:[%s201 + $0x2a4] sm:$0xf] %v540
                %v542 = vld [vmem:[%s200 + $0x550] sm:$0xf]
                %543 = vst [vmem:[%s201 + $0x2a8] sm:$0xf] %v542
                %v544 = vld [vmem:[%s200 + $0x558] sm:$0xf]
                %545 = vst [vmem:[%s201 + $0x2ac] sm:$0xf] %v544
                %v546 = vld [vmem:[%s200 + $0x560] sm:$0xf]
                %547 = vst [vmem:[%s201 + $0x2b0] sm:$0xf] %v546
                %v548 = vld [vmem:[%s200 + $0x568] sm:$0xf]
                %549 = vst [vmem:[%s201 + $0x2b4] sm:$0xf] %v548
                %v550 = vld [vmem:[%s200 + $0x570] sm:$0xf]
                %551 = vst [vmem:[%s201 + $0x2b8] sm:$0xf] %v550
                %v552 = vld [vmem:[%s200 + $0x578] sm:$0xf]
                %553 = vst [vmem:[%s201 + $0x2bc] sm:$0xf] %v552
                %v554 = vld [vmem:[%s200 + $0x580] sm:$0xf]
                %555 = vst [vmem:[%s201 + $0x2c0] sm:$0xf] %v554
                %v556 = vld [vmem:[%s200 + $0x588] sm:$0xf]
                %557 = vst [vmem:[%s201 + $0x2c4] sm:$0xf] %v556
                %v558 = vld [vmem:[%s200 + $0x590] sm:$0xf]
                %559 = vst [vmem:[%s201 + $0x2c8] sm:$0xf] %v558
                %v560 = vld [vmem:[%s200 + $0x598] sm:$0xf]
                %561 = vst [vmem:[%s201 + $0x2cc] sm:$0xf] %v560
                %v562 = vld [vmem:[%s200 + $0x5a0] sm:$0xf]
                %563 = vst [vmem:[%s201 + $0x2d0] sm:$0xf] %v562
                %v564 = vld [vmem:[%s200 + $0x5a8] sm:$0xf]
                %565 = vst [vmem:[%s201 + $0x2d4] sm:$0xf] %v564
                %v566 = vld [vmem:[%s200 + $0x5b0] sm:$0xf]
                %567 = vst [vmem:[%s201 + $0x2d8] sm:$0xf] %v566
                %v568 = vld [vmem:[%s200 + $0x5b8] sm:$0xf]
                %569 = vst [vmem:[%s201 + $0x2dc] sm:$0xf] %v568
                %v570 = vld [vmem:[%s200 + $0x5c0] sm:$0xf]
                %571 = vst [vmem:[%s201 + $0x2e0] sm:$0xf] %v570
                %v572 = vld [vmem:[%s200 + $0x5c8] sm:$0xf]
                %573 = vst [vmem:[%s201 + $0x2e4] sm:$0xf] %v572
                %v574 = vld [vmem:[%s200 + $0x5d0] sm:$0xf]
                %575 = vst [vmem:[%s201 + $0x2e8] sm:$0xf] %v574
                %v576 = vld [vmem:[%s200 + $0x5d8] sm:$0xf]
                %577 = vst [vmem:[%s201 + $0x2ec] sm:$0xf] %v576
                %v578 = vld [vmem:[%s200 + $0x5e0] sm:$0xf]
                %579 = vst [vmem:[%s201 + $0x2f0] sm:$0xf] %v578
                %v580 = vld [vmem:[%s200 + $0x5e8] sm:$0xf]
                %581 = vst [vmem:[%s201 + $0x2f4] sm:$0xf] %v580
                %v582 = vld [vmem:[%s200 + $0x5f0] sm:$0xf]
                %583 = vst [vmem:[%s201 + $0x2f8] sm:$0xf] %v582
                %v584 = vld [vmem:[%s200 + $0x5f8] sm:$0xf]
                %585 = vst [vmem:[%s201 + $0x2fc] sm:$0xf] %v584
                %v586 = vld [vmem:[%s200 + $0x600] sm:$0xf]
                %587 = vst [vmem:[%s201 + $0x300] sm:$0xf] %v586
                %v588 = vld [vmem:[%s200 + $0x608] sm:$0xf]
                %589 = vst [vmem:[%s201 + $0x304] sm:$0xf] %v588
                %v590 = vld [vmem:[%s200 + $0x610] sm:$0xf]
                %591 = vst [vmem:[%s201 + $0x308] sm:$0xf] %v590
                %v592 = vld [vmem:[%s200 + $0x618] sm:$0xf]
                %593 = vst [vmem:[%s201 + $0x30c] sm:$0xf] %v592
                %v594 = vld [vmem:[%s200 + $0x620] sm:$0xf]
                %595 = vst [vmem:[%s201 + $0x310] sm:$0xf] %v594
                %v596 = vld [vmem:[%s200 + $0x628] sm:$0xf]
                %597 = vst [vmem:[%s201 + $0x314] sm:$0xf] %v596
                %v598 = vld [vmem:[%s200 + $0x630] sm:$0xf]
                %599 = vst [vmem:[%s201 + $0x318] sm:$0xf] %v598
                %v600 = vld [vmem:[%s200 + $0x638] sm:$0xf]
                %601 = vst [vmem:[%s201 + $0x31c] sm:$0xf] %v600
                %v602 = vld [vmem:[%s200 + $0x640] sm:$0xf]
                %603 = vst [vmem:[%s201 + $0x320] sm:$0xf] %v602
                %v604 = vld [vmem:[%s200 + $0x648] sm:$0xf]
                %605 = vst [vmem:[%s201 + $0x324] sm:$0xf] %v604
                %v606 = vld [vmem:[%s200 + $0x650] sm:$0xf]
                %607 = vst [vmem:[%s201 + $0x328] sm:$0xf] %v606
                %v608 = vld [vmem:[%s200 + $0x658] sm:$0xf]
                %609 = vst [vmem:[%s201 + $0x32c] sm:$0xf] %v608
                %v610 = vld [vmem:[%s200 + $0x660] sm:$0xf]
                %611 = vst [vmem:[%s201 + $0x330] sm:$0xf] %v610
                %v612 = vld [vmem:[%s200 + $0x668] sm:$0xf]
                %613 = vst [vmem:[%s201 + $0x334] sm:$0xf] %v612
                %v614 = vld [vmem:[%s200 + $0x670] sm:$0xf]
                %615 = vst [vmem:[%s201 + $0x338] sm:$0xf] %v614
                %v616 = vld [vmem:[%s200 + $0x678] sm:$0xf]
                %617 = vst [vmem:[%s201 + $0x33c] sm:$0xf] %v616
                %v618 = vld [vmem:[%s200 + $0x680] sm:$0xf]
                %619 = vst [vmem:[%s201 + $0x340] sm:$0xf] %v618
                %v620 = vld [vmem:[%s200 + $0x688] sm:$0xf]
                %621 = vst [vmem:[%s201 + $0x344] sm:$0xf] %v620
                %v622 = vld [vmem:[%s200 + $0x690] sm:$0xf]
                %623 = vst [vmem:[%s201 + $0x348] sm:$0xf] %v622
                %v624 = vld [vmem:[%s200 + $0x698] sm:$0xf]
                %625 = vst [vmem:[%s201 + $0x34c] sm:$0xf] %v624
                %v626 = vld [vmem:[%s200 + $0x6a0] sm:$0xf]
                %627 = vst [vmem:[%s201 + $0x350] sm:$0xf] %v626
                %v628 = vld [vmem:[%s200 + $0x6a8] sm:$0xf]
                %629 = vst [vmem:[%s201 + $0x354] sm:$0xf] %v628
                %v630 = vld [vmem:[%s200 + $0x6b0] sm:$0xf]
                %631 = vst [vmem:[%s201 + $0x358] sm:$0xf] %v630
                %v632 = vld [vmem:[%s200 + $0x6b8] sm:$0xf]
                %633 = vst [vmem:[%s201 + $0x35c] sm:$0xf] %v632
                %v634 = vld [vmem:[%s200 + $0x6c0] sm:$0xf]
                %635 = vst [vmem:[%s201 + $0x360] sm:$0xf] %v634
                %v636 = vld [vmem:[%s200 + $0x6c8] sm:$0xf]
                %637 = vst [vmem:[%s201 + $0x364] sm:$0xf] %v636
                %v638 = vld [vmem:[%s200 + $0x6d0] sm:$0xf]
                %639 = vst [vmem:[%s201 + $0x368] sm:$0xf] %v638
                %v640 = vld [vmem:[%s200 + $0x6d8] sm:$0xf]
                %641 = vst [vmem:[%s201 + $0x36c] sm:$0xf] %v640
                %v642 = vld [vmem:[%s200 + $0x6e0] sm:$0xf]
                %643 = vst [vmem:[%s201 + $0x370] sm:$0xf] %v642
                %v644 = vld [vmem:[%s200 + $0x6e8] sm:$0xf]
                %645 = vst [vmem:[%s201 + $0x374] sm:$0xf] %v644
                %v646 = vld [vmem:[%s200 + $0x6f0] sm:$0xf]
                %647 = vst [vmem:[%s201 + $0x378] sm:$0xf] %v646
                %v648 = vld [vmem:[%s200 + $0x6f8] sm:$0xf]
                %649 = vst [vmem:[%s201 + $0x37c] sm:$0xf] %v648
                %v650 = vld [vmem:[%s200 + $0x700] sm:$0xf]
                %651 = vst [vmem:[%s201 + $0x380] sm:$0xf] %v650
                %v652 = vld [vmem:[%s200 + $0x708] sm:$0xf]
                %653 = vst [vmem:[%s201 + $0x384] sm:$0xf] %v652
                %v654 = vld [vmem:[%s200 + $0x710] sm:$0xf]
                %655 = vst [vmem:[%s201 + $0x388] sm:$0xf] %v654
                %v656 = vld [vmem:[%s200 + $0x718] sm:$0xf]
                %657 = vst [vmem:[%s201 + $0x38c] sm:$0xf] %v656
                %v658 = vld [vmem:[%s200 + $0x720] sm:$0xf]
                %659 = vst [vmem:[%s201 + $0x390] sm:$0xf] %v658
                %v660 = vld [vmem:[%s200 + $0x728] sm:$0xf]
                %661 = vst [vmem:[%s201 + $0x394] sm:$0xf] %v660
                %v662 = vld [vmem:[%s200 + $0x730] sm:$0xf]
                %663 = vst [vmem:[%s201 + $0x398] sm:$0xf] %v662
                %v664 = vld [vmem:[%s200 + $0x738] sm:$0xf]
                %665 = vst [vmem:[%s201 + $0x39c] sm:$0xf] %v664
                %v666 = vld [vmem:[%s200 + $0x740] sm:$0xf]
                %667 = vst [vmem:[%s201 + $0x3a0] sm:$0xf] %v666
                %v668 = vld [vmem:[%s200 + $0x748] sm:$0xf]
                %669 = vst [vmem:[%s201 + $0x3a4] sm:$0xf] %v668
                %v670 = vld [vmem:[%s200 + $0x750] sm:$0xf]
                %671 = vst [vmem:[%s201 + $0x3a8] sm:$0xf] %v670
                %v672 = vld [vmem:[%s200 + $0x758] sm:$0xf]
                %673 = vst [vmem:[%s201 + $0x3ac] sm:$0xf] %v672
                %v674 = vld [vmem:[%s200 + $0x760] sm:$0xf]
                %675 = vst [vmem:[%s201 + $0x3b0] sm:$0xf] %v674
                %v676 = vld [vmem:[%s200 + $0x768] sm:$0xf]
                %677 = vst [vmem:[%s201 + $0x3b4] sm:$0xf] %v676
                %v678 = vld [vmem:[%s200 + $0x770] sm:$0xf]
                %679 = vst [vmem:[%s201 + $0x3b8] sm:$0xf] %v678
                %v680 = vld [vmem:[%s200 + $0x778] sm:$0xf]
                %681 = vst [vmem:[%s201 + $0x3bc] sm:$0xf] %v680
                %v682 = vld [vmem:[%s200 + $0x780] sm:$0xf]
                %683 = vst [vmem:[%s201 + $0x3c0] sm:$0xf] %v682
                %v684 = vld [vmem:[%s200 + $0x788] sm:$0xf]
                %685 = vst [vmem:[%s201 + $0x3c4] sm:$0xf] %v684
                %v686 = vld [vmem:[%s200 + $0x790] sm:$0xf]
                %687 = vst [vmem:[%s201 + $0x3c8] sm:$0xf] %v686
                %v688 = vld [vmem:[%s200 + $0x798] sm:$0xf]
                %689 = vst [vmem:[%s201 + $0x3cc] sm:$0xf] %v688
                %v690 = vld [vmem:[%s200 + $0x7a0] sm:$0xf]
                %691 = vst [vmem:[%s201 + $0x3d0] sm:$0xf] %v690
                %v692 = vld [vmem:[%s200 + $0x7a8] sm:$0xf]
                %693 = vst [vmem:[%s201 + $0x3d4] sm:$0xf] %v692
                %v694 = vld [vmem:[%s200 + $0x7b0] sm:$0xf]
                %695 = vst [vmem:[%s201 + $0x3d8] sm:$0xf] %v694
                %v696 = vld [vmem:[%s200 + $0x7b8] sm:$0xf]
                %697 = vst [vmem:[%s201 + $0x3dc] sm:$0xf] %v696
                %v698 = vld [vmem:[%s200 + $0x7c0] sm:$0xf]
                %699 = vst [vmem:[%s201 + $0x3e0] sm:$0xf] %v698
                %v700 = vld [vmem:[%s200 + $0x7c8] sm:$0xf]
                %701 = vst [vmem:[%s201 + $0x3e4] sm:$0xf] %v700
                %v702 = vld [vmem:[%s200 + $0x7d0] sm:$0xf]
                %703 = vst [vmem:[%s201 + $0x3e8] sm:$0xf] %v702
                %v704 = vld [vmem:[%s200 + $0x7d8] sm:$0xf]
                %705 = vst [vmem:[%s201 + $0x3ec] sm:$0xf] %v704
                %v706 = vld [vmem:[%s200 + $0x7e0] sm:$0xf]
                %707 = vst [vmem:[%s201 + $0x3f0] sm:$0xf] %v706
                %v708 = vld [vmem:[%s200 + $0x7e8] sm:$0xf]
                %709 = vst [vmem:[%s201 + $0x3f4] sm:$0xf] %v708
                %v710 = vld [vmem:[%s200 + $0x7f0] sm:$0xf]
                %711 = vst [vmem:[%s201 + $0x3f8] sm:$0xf] %v710
                %v712 = vld [vmem:[%s200 + $0x7f8] sm:$0xf]
                %713 = vst [vmem:[%s201 + $0x3fc] sm:$0xf] %v712
              $region41: #{discriminator_forward.13} parent=35 // loop_footer
                %s199 = sadd.s32 1, %s195
              $region42: #{discriminator_forward.13} parent=35 // loop_footer_branch
                %194 = sbr.rel target = $region38
              $region43: #{discriminator_forward.13} parent=35 // loop_exit
                _
            $region36: #{discriminator_forward.13} parent=27 // pred_fallthru
              _
          $region28: #{discriminator_forward.13} parent=23 // pred_fallthru
            _
          %1245 = vnop
        $region24: #{discriminator_forward.13} parent=19 // pred_fallthru
          _
      $region20: #{discriminator_forward.13} parent=5 // pred_fallthru
        _
      %p1246 = scmp.le.s32.totalorder 1, %s10
      %p1247 = scmp.lt.s32.totalorder %s10, 3
      %p1248 = pnand %p1246, %p1247
      %p1249 = pneg %p1248
      // Predicated region
      $region62: #{discriminator_forward.13} parent=5 // pred_check
        _
      $region63: #{discriminator_forward.13} parent=5 // pred_check_branch
        %1251 = sbr.rel (%p1248) target = $region65
      $region64: #{discriminator_forward.13} parent=5 // pred_region
        %s1252 = ssub.s32 %s10, 1
        %s1253 = sand.u32 %s72, 1
        %s1254 = sand.u32 %s72, 1
        %s1255 = smul.addr %s1254, 1024
        %s1256 = scalar_lea.vmem [#allocation2], %s1255
        // Predicated region
        $region66: #{discriminator_forward.13} parent=64 // pred_check
          %p1257 = pneg %p85
        $region67: #{discriminator_forward.13} parent=64 // pred_check_branch
          %1259 = sbr.rel (%p1257) target = $region69
        $region68: #{discriminator_forward.13} parent=64 // pred_region
          _
        $region69: #{discriminator_forward.13} parent=64 // pred_fallthru
          _
        %s1260 = smul.u32 4, %s20
        %s1261 = smul.u32 16, %s22
        %p1262 = scmp.lt.s32.totalorder %s1260, 3
        %s1263 = scalar_select %p1262, %s1260, 3
        %p1264 = scmp.lt.s32.totalorder %s1261, 15
        %s1265 = scalar_select %p1264, %s1261, 15
        %s1266 = smul.addr %s1263, 16
        %s1267 = sadd.s32 %s1265, %s1266
        %s1268 = smul.addr %s1267, 4
        %s1269 = scalar_lea.vmem %s0, %s1268
        %p1270 = pneg %p57
        %p1271 = pneg %p54
        %s1272 = sand.u32 %s72, 1
        %s1273 = sand.u32 %s72, 1
        %s1274 = smul.addr %s1273, 1024
        %s1275 = scalar_lea.vmem [#allocation2], %s1274
        %p1276 = pneg %p85
        %p1277 = pneg %p82
        %p1278 = pneg %p113
        %p1279 = pneg %p110
        %s1280 = sand.u32 %s100, 1
        %s1281 = sand.u32 %s100, 1
        %s1282 = smul.addr %s1281, 16
        %s1283 = scalar_lea.vmem [#allocation3], %s1282
        %p1284 = pneg %p141
        %p1285 = pneg %p138
        %p1286 = scmp.lt.s32.totalorder %s20, 0
        %s1287 = scalar_select %p1286, %s20, 0
        %p1288 = scmp.lt.s32.totalorder %s21, 1
        %s1289 = scalar_select %p1288, %s21, 1
        %s1290 = smul.addr %s1287, 2
        %s1291 = sadd.s32 %s1289, %s1290
        %s1292 = smul.addr %s1291, 8
        %s1293 = scalar_lea.vmem %s3, %s1292
        %s1294 = smul.u32 4, %s20
        %s1295 = smul.u32 16, %s22
        %p1296 = scmp.lt.s32.totalorder %s1294, 3
        %s1297 = scalar_select %p1296, %s1294, 3
        %p1298 = scmp.lt.s32.totalorder %s1295, 15
        %s1299 = scalar_select %p1298, %s1295, 15
        %s1300 = smul.addr %s1297, 16
        %s1301 = sadd.s32 %s1299, %s1300
        %s1302 = smul.addr %s1301, 4
        %s1303 = scalar_lea.vmem %s0, %s1302
        %s1304 = smul.u32 4, %s20
        %s1305 = smul.u32 16, %s22
        %s1306 = smul.u32 256, %s22
        %s1307 = smul.u32 4, %s20
        %p1308 = scmp.lt.s32.totalorder %s20, 0
        %s1309 = scalar_select %p1308, %s20, 0
        %p1310 = scmp.lt.s32.totalorder %s21, 1
        %s1311 = scalar_select %p1310, %s21, 1
        %s1312 = smul.addr %s1309, 2
        %s1313 = sadd.s32 %s1311, %s1312
        %s1314 = smul.addr %s1313, 8
        %s1315 = scalar_lea.vmem %s3, %s1314
        %v1317 = vld [vmem:[%s1303] sm:$0xff]
        %v1318 = vld [vmem:[%s1303 + $0x8] sm:$0xff]
        %v1319 = vld [vmem:[%s1303 + $0x10] sm:$0xff]
        %v1320 = vld [vmem:[%s1303 + $0x18] sm:$0xff]
        %v1321 = vld [vmem:[%s1303 + $0x20] sm:$0xff]
        %v1322 = vld [vmem:[%s1303 + $0x28] sm:$0xff]
        %v1323 = vld [vmem:[%s1303 + $0x30] sm:$0xff]
        %v1324 = vld [vmem:[%s1303 + $0x38] sm:$0xff]
        %v1325 = vld [vmem:[%s1303 + $0x40] sm:$0xff]
        %v1326 = vld [vmem:[%s1303 + $0x48] sm:$0xff]
        %v1327 = vld [vmem:[%s1303 + $0x50] sm:$0xff]
        %v1328 = vld [vmem:[%s1303 + $0x58] sm:$0xff]
        %v1329 = vld [vmem:[%s1303 + $0x60] sm:$0xff]
        %v1330 = vld [vmem:[%s1303 + $0x68] sm:$0xff]
        %v1331 = vld [vmem:[%s1303 + $0x70] sm:$0xff]
        %v1332 = vld [vmem:[%s1303 + $0x78] sm:$0xff]
        %v1333 = vld [vmem:[%s1303 + $0x80] sm:$0xff]
        %v1334 = vld [vmem:[%s1303 + $0x88] sm:$0xff]
        %v1335 = vld [vmem:[%s1303 + $0x90] sm:$0xff]
        %v1336 = vld [vmem:[%s1303 + $0x98] sm:$0xff]
        %v1337 = vld [vmem:[%s1303 + $0xa0] sm:$0xff]
        %v1338 = vld [vmem:[%s1303 + $0xa8] sm:$0xff]
        %v1339 = vld [vmem:[%s1303 + $0xb0] sm:$0xff]
        %v1340 = vld [vmem:[%s1303 + $0xb8] sm:$0xff]
        %v1341 = vld [vmem:[%s1303 + $0xc0] sm:$0xff]
        %v1342 = vld [vmem:[%s1303 + $0xc8] sm:$0xff]
        %v1343 = vld [vmem:[%s1303 + $0xd0] sm:$0xff]
        %v1344 = vld [vmem:[%s1303 + $0xd8] sm:$0xff]
        %v1345 = vld [vmem:[%s1303 + $0xe0] sm:$0xff]
        %v1346 = vld [vmem:[%s1303 + $0xe8] sm:$0xff]
        %v1347 = vld [vmem:[%s1303 + $0xf0] sm:$0xff]
        %v1348 = vld [vmem:[%s1303 + $0xf8] sm:$0xff]
        %v1349 = vld [vmem:[%s1256] sm:$0xf]
        %v1350 = vld [vmem:[%s1256 + $0x4] sm:$0xf]
        %v1351 = vld [vmem:[%s1256 + $0x8] sm:$0xf]
        %v1352 = vld [vmem:[%s1256 + $0xc] sm:$0xf]
        %v1353 = vld [vmem:[%s1256 + $0x10] sm:$0xf]
        %v1354 = vld [vmem:[%s1256 + $0x14] sm:$0xf]
        %v1355 = vld [vmem:[%s1256 + $0x18] sm:$0xf]
        %v1356 = vld [vmem:[%s1256 + $0x1c] sm:$0xf]
        %v1357 = vld [vmem:[%s1256 + $0x20] sm:$0xf]
        %v1358 = vld [vmem:[%s1256 + $0x24] sm:$0xf]
        %v1359 = vld [vmem:[%s1256 + $0x28] sm:$0xf]
        %v1360 = vld [vmem:[%s1256 + $0x2c] sm:$0xf]
        %v1361 = vld [vmem:[%s1256 + $0x30] sm:$0xf]
        %v1362 = vld [vmem:[%s1256 + $0x34] sm:$0xf]
        %v1363 = vld [vmem:[%s1256 + $0x38] sm:$0xf]
        %v1364 = vld [vmem:[%s1256 + $0x3c] sm:$0xf]
        %v1365 = vld [vmem:[%s1256 + $0x40] sm:$0xf]
        %v1366 = vld [vmem:[%s1256 + $0x44] sm:$0xf]
        %v1367 = vld [vmem:[%s1256 + $0x48] sm:$0xf]
        %v1368 = vld [vmem:[%s1256 + $0x4c] sm:$0xf]
        %v1369 = vld [vmem:[%s1256 + $0x50] sm:$0xf]
        %v1370 = vld [vmem:[%s1256 + $0x54] sm:$0xf]
        %v1371 = vld [vmem:[%s1256 + $0x58] sm:$0xf]
        %v1372 = vld [vmem:[%s1256 + $0x5c] sm:$0xf]
        %v1373 = vld [vmem:[%s1256 + $0x60] sm:$0xf]
        %v1374 = vld [vmem:[%s1256 + $0x64] sm:$0xf]
        %v1375 = vld [vmem:[%s1256 + $0x68] sm:$0xf]
        %v1376 = vld [vmem:[%s1256 + $0x6c] sm:$0xf]
        %v1377 = vld [vmem:[%s1256 + $0x70] sm:$0xf]
        %v1378 = vld [vmem:[%s1256 + $0x74] sm:$0xf]
        %v1379 = vld [vmem:[%s1256 + $0x78] sm:$0xf]
        %v1380 = vld [vmem:[%s1256 + $0x7c] sm:$0xf]
        %v1381 = vld [vmem:[%s1256 + $0x80] sm:$0xf]
        %v1382 = vld [vmem:[%s1256 + $0x84] sm:$0xf]
        %v1383 = vld [vmem:[%s1256 + $0x88] sm:$0xf]
        %v1384 = vld [vmem:[%s1256 + $0x8c] sm:$0xf]
        %v1385 = vld [vmem:[%s1256 + $0x90] sm:$0xf]
        %v1386 = vld [vmem:[%s1256 + $0x94] sm:$0xf]
        %v1387 = vld [vmem:[%s1256 + $0x98] sm:$0xf]
        %v1388 = vld [vmem:[%s1256 + $0x9c] sm:$0xf]
        %v1389 = vld [vmem:[%s1256 + $0xa0] sm:$0xf]
        %v1390 = vld [vmem:[%s1256 + $0xa4] sm:$0xf]
        %v1391 = vld [vmem:[%s1256 + $0xa8] sm:$0xf]
        %v1392 = vld [vmem:[%s1256 + $0xac] sm:$0xf]
        %v1393 = vld [vmem:[%s1256 + $0xb0] sm:$0xf]
        %v1394 = vld [vmem:[%s1256 + $0xb4] sm:$0xf]
        %v1395 = vld [vmem:[%s1256 + $0xb8] sm:$0xf]
        %v1396 = vld [vmem:[%s1256 + $0xbc] sm:$0xf]
        %v1397 = vld [vmem:[%s1256 + $0xc0] sm:$0xf]
        %v1398 = vld [vmem:[%s1256 + $0xc4] sm:$0xf]
        %v1399 = vld [vmem:[%s1256 + $0xc8] sm:$0xf]
        %v1400 = vld [vmem:[%s1256 + $0xcc] sm:$0xf]
        %v1401 = vld [vmem:[%s1256 + $0xd0] sm:$0xf]
        %v1402 = vld [vmem:[%s1256 + $0xd4] sm:$0xf]
        %v1403 = vld [vmem:[%s1256 + $0xd8] sm:$0xf]
        %v1404 = vld [vmem:[%s1256 + $0xdc] sm:$0xf]
        %v1405 = vld [vmem:[%s1256 + $0xe0] sm:$0xf]
        %v1406 = vld [vmem:[%s1256 + $0xe4] sm:$0xf]
        %v1407 = vld [vmem:[%s1256 + $0xe8] sm:$0xf]
        %v1408 = vld [vmem:[%s1256 + $0xec] sm:$0xf]
        %v1409 = vld [vmem:[%s1256 + $0xf0] sm:$0xf]
        %v1410 = vld [vmem:[%s1256 + $0xf4] sm:$0xf]
        %v1411 = vld [vmem:[%s1256 + $0xf8] sm:$0xf]
        %v1412 = vld [vmem:[%s1256 + $0xfc] sm:$0xf]
        %v1413 = vld [vmem:[%s1256 + $0x100] sm:$0xf]
        %v1414 = vld [vmem:[%s1256 + $0x104] sm:$0xf]
        %v1415 = vld [vmem:[%s1256 + $0x108] sm:$0xf]
        %v1416 = vld [vmem:[%s1256 + $0x10c] sm:$0xf]
        %v1417 = vld [vmem:[%s1256 + $0x110] sm:$0xf]
        %v1418 = vld [vmem:[%s1256 + $0x114] sm:$0xf]
        %v1419 = vld [vmem:[%s1256 + $0x118] sm:$0xf]
        %v1420 = vld [vmem:[%s1256 + $0x11c] sm:$0xf]
        %v1421 = vld [vmem:[%s1256 + $0x120] sm:$0xf]
        %v1422 = vld [vmem:[%s1256 + $0x124] sm:$0xf]
        %v1423 = vld [vmem:[%s1256 + $0x128] sm:$0xf]
        %v1424 = vld [vmem:[%s1256 + $0x12c] sm:$0xf]
        %v1425 = vld [vmem:[%s1256 + $0x130] sm:$0xf]
        %v1426 = vld [vmem:[%s1256 + $0x134] sm:$0xf]
        %v1427 = vld [vmem:[%s1256 + $0x138] sm:$0xf]
        %v1428 = vld [vmem:[%s1256 + $0x13c] sm:$0xf]
        %v1429 = vld [vmem:[%s1256 + $0x140] sm:$0xf]
        %v1430 = vld [vmem:[%s1256 + $0x144] sm:$0xf]
        %v1431 = vld [vmem:[%s1256 + $0x148] sm:$0xf]
        %v1432 = vld [vmem:[%s1256 + $0x14c] sm:$0xf]
        %v1433 = vld [vmem:[%s1256 + $0x150] sm:$0xf]
        %v1434 = vld [vmem:[%s1256 + $0x154] sm:$0xf]
        %v1435 = vld [vmem:[%s1256 + $0x158] sm:$0xf]
        %v1436 = vld [vmem:[%s1256 + $0x15c] sm:$0xf]
        %v1437 = vld [vmem:[%s1256 + $0x160] sm:$0xf]
        %v1438 = vld [vmem:[%s1256 + $0x164] sm:$0xf]
        %v1439 = vld [vmem:[%s1256 + $0x168] sm:$0xf]
        %v1440 = vld [vmem:[%s1256 + $0x16c] sm:$0xf]
        %v1441 = vld [vmem:[%s1256 + $0x170] sm:$0xf]
        %v1442 = vld [vmem:[%s1256 + $0x174] sm:$0xf]
        %v1443 = vld [vmem:[%s1256 + $0x178] sm:$0xf]
        %v1444 = vld [vmem:[%s1256 + $0x17c] sm:$0xf]
        %v1445 = vld [vmem:[%s1256 + $0x180] sm:$0xf]
        %v1446 = vld [vmem:[%s1256 + $0x184] sm:$0xf]
        %v1447 = vld [vmem:[%s1256 + $0x188] sm:$0xf]
        %v1448 = vld [vmem:[%s1256 + $0x18c] sm:$0xf]
        %v1449 = vld [vmem:[%s1256 + $0x190] sm:$0xf]
        %v1450 = vld [vmem:[%s1256 + $0x194] sm:$0xf]
        %v1451 = vld [vmem:[%s1256 + $0x198] sm:$0xf]
        %v1452 = vld [vmem:[%s1256 + $0x19c] sm:$0xf]
        %v1453 = vld [vmem:[%s1256 + $0x1a0] sm:$0xf]
        %v1454 = vld [vmem:[%s1256 + $0x1a4] sm:$0xf]
        %v1455 = vld [vmem:[%s1256 + $0x1a8] sm:$0xf]
        %v1456 = vld [vmem:[%s1256 + $0x1ac] sm:$0xf]
        %v1457 = vld [vmem:[%s1256 + $0x1b0] sm:$0xf]
        %v1458 = vld [vmem:[%s1256 + $0x1b4] sm:$0xf]
        %v1459 = vld [vmem:[%s1256 + $0x1b8] sm:$0xf]
        %v1460 = vld [vmem:[%s1256 + $0x1bc] sm:$0xf]
        %v1461 = vld [vmem:[%s1256 + $0x1c0] sm:$0xf]
        %v1462 = vld [vmem:[%s1256 + $0x1c4] sm:$0xf]
        %v1463 = vld [vmem:[%s1256 + $0x1c8] sm:$0xf]
        %v1464 = vld [vmem:[%s1256 + $0x1cc] sm:$0xf]
        %v1465 = vld [vmem:[%s1256 + $0x1d0] sm:$0xf]
        %v1466 = vld [vmem:[%s1256 + $0x1d4] sm:$0xf]
        %v1467 = vld [vmem:[%s1256 + $0x1d8] sm:$0xf]
        %v1468 = vld [vmem:[%s1256 + $0x1dc] sm:$0xf]
        %v1469 = vld [vmem:[%s1256 + $0x1e0] sm:$0xf]
        %v1470 = vld [vmem:[%s1256 + $0x1e4] sm:$0xf]
        %v1471 = vld [vmem:[%s1256 + $0x1e8] sm:$0xf]
        %v1472 = vld [vmem:[%s1256 + $0x1ec] sm:$0xf]
        %v1473 = vld [vmem:[%s1256 + $0x1f0] sm:$0xf]
        %v1474 = vld [vmem:[%s1256 + $0x1f4] sm:$0xf]
        %v1475 = vld [vmem:[%s1256 + $0x1f8] sm:$0xf]
        %v1476 = vld [vmem:[%s1256 + $0x1fc] sm:$0xf]
        %v1477 = vld [vmem:[%s1256 + $0x200] sm:$0xf]
        %v1478 = vld [vmem:[%s1256 + $0x204] sm:$0xf]
        %v1479 = vld [vmem:[%s1256 + $0x208] sm:$0xf]
        %v1480 = vld [vmem:[%s1256 + $0x20c] sm:$0xf]
        %v1481 = vld [vmem:[%s1256 + $0x210] sm:$0xf]
        %v1482 = vld [vmem:[%s1256 + $0x214] sm:$0xf]
        %v1483 = vld [vmem:[%s1256 + $0x218] sm:$0xf]
        %v1484 = vld [vmem:[%s1256 + $0x21c] sm:$0xf]
        %v1485 = vld [vmem:[%s1256 + $0x220] sm:$0xf]
        %v1486 = vld [vmem:[%s1256 + $0x224] sm:$0xf]
        %v1487 = vld [vmem:[%s1256 + $0x228] sm:$0xf]
        %v1488 = vld [vmem:[%s1256 + $0x22c] sm:$0xf]
        %v1489 = vld [vmem:[%s1256 + $0x230] sm:$0xf]
        %v1490 = vld [vmem:[%s1256 + $0x234] sm:$0xf]
        %v1491 = vld [vmem:[%s1256 + $0x238] sm:$0xf]
        %v1492 = vld [vmem:[%s1256 + $0x23c] sm:$0xf]
        %v1493 = vld [vmem:[%s1256 + $0x240] sm:$0xf]
        %v1494 = vld [vmem:[%s1256 + $0x244] sm:$0xf]
        %v1495 = vld [vmem:[%s1256 + $0x248] sm:$0xf]
        %v1496 = vld [vmem:[%s1256 + $0x24c] sm:$0xf]
        %v1497 = vld [vmem:[%s1256 + $0x250] sm:$0xf]
        %v1498 = vld [vmem:[%s1256 + $0x254] sm:$0xf]
        %v1499 = vld [vmem:[%s1256 + $0x258] sm:$0xf]
        %v1500 = vld [vmem:[%s1256 + $0x25c] sm:$0xf]
        %v1501 = vld [vmem:[%s1256 + $0x260] sm:$0xf]
        %v1502 = vld [vmem:[%s1256 + $0x264] sm:$0xf]
        %v1503 = vld [vmem:[%s1256 + $0x268] sm:$0xf]
        %v1504 = vld [vmem:[%s1256 + $0x26c] sm:$0xf]
        %v1505 = vld [vmem:[%s1256 + $0x270] sm:$0xf]
        %v1506 = vld [vmem:[%s1256 + $0x274] sm:$0xf]
        %v1507 = vld [vmem:[%s1256 + $0x278] sm:$0xf]
        %v1508 = vld [vmem:[%s1256 + $0x27c] sm:$0xf]
        %v1509 = vld [vmem:[%s1256 + $0x280] sm:$0xf]
        %v1510 = vld [vmem:[%s1256 + $0x284] sm:$0xf]
        %v1511 = vld [vmem:[%s1256 + $0x288] sm:$0xf]
        %v1512 = vld [vmem:[%s1256 + $0x28c] sm:$0xf]
        %v1513 = vld [vmem:[%s1256 + $0x290] sm:$0xf]
        %v1514 = vld [vmem:[%s1256 + $0x294] sm:$0xf]
        %v1515 = vld [vmem:[%s1256 + $0x298] sm:$0xf]
        %v1516 = vld [vmem:[%s1256 + $0x29c] sm:$0xf]
        %v1517 = vld [vmem:[%s1256 + $0x2a0] sm:$0xf]
        %v1518 = vld [vmem:[%s1256 + $0x2a4] sm:$0xf]
        %v1519 = vld [vmem:[%s1256 + $0x2a8] sm:$0xf]
        %v1520 = vld [vmem:[%s1256 + $0x2ac] sm:$0xf]
        %v1521 = vld [vmem:[%s1256 + $0x2b0] sm:$0xf]
        %v1522 = vld [vmem:[%s1256 + $0x2b4] sm:$0xf]
        %v1523 = vld [vmem:[%s1256 + $0x2b8] sm:$0xf]
        %v1524 = vld [vmem:[%s1256 + $0x2bc] sm:$0xf]
        %v1525 = vld [vmem:[%s1256 + $0x2c0] sm:$0xf]
        %v1526 = vld [vmem:[%s1256 + $0x2c4] sm:$0xf]
        %v1527 = vld [vmem:[%s1256 + $0x2c8] sm:$0xf]
        %v1528 = vld [vmem:[%s1256 + $0x2cc] sm:$0xf]
        %v1529 = vld [vmem:[%s1256 + $0x2d0] sm:$0xf]
        %v1530 = vld [vmem:[%s1256 + $0x2d4] sm:$0xf]
        %v1531 = vld [vmem:[%s1256 + $0x2d8] sm:$0xf]
        %v1532 = vld [vmem:[%s1256 + $0x2dc] sm:$0xf]
        %v1533 = vld [vmem:[%s1256 + $0x2e0] sm:$0xf]
        %v1534 = vld [vmem:[%s1256 + $0x2e4] sm:$0xf]
        %v1535 = vld [vmem:[%s1256 + $0x2e8] sm:$0xf]
        %v1536 = vld [vmem:[%s1256 + $0x2ec] sm:$0xf]
        %v1537 = vld [vmem:[%s1256 + $0x2f0] sm:$0xf]
        %v1538 = vld [vmem:[%s1256 + $0x2f4] sm:$0xf]
        %v1539 = vld [vmem:[%s1256 + $0x2f8] sm:$0xf]
        %v1540 = vld [vmem:[%s1256 + $0x2fc] sm:$0xf]
        %v1541 = vld [vmem:[%s1256 + $0x300] sm:$0xf]
        %v1542 = vld [vmem:[%s1256 + $0x304] sm:$0xf]
        %v1543 = vld [vmem:[%s1256 + $0x308] sm:$0xf]
        %v1544 = vld [vmem:[%s1256 + $0x30c] sm:$0xf]
        %v1545 = vld [vmem:[%s1256 + $0x310] sm:$0xf]
        %v1546 = vld [vmem:[%s1256 + $0x314] sm:$0xf]
        %v1547 = vld [vmem:[%s1256 + $0x318] sm:$0xf]
        %v1548 = vld [vmem:[%s1256 + $0x31c] sm:$0xf]
        %v1549 = vld [vmem:[%s1256 + $0x320] sm:$0xf]
        %v1550 = vld [vmem:[%s1256 + $0x324] sm:$0xf]
        %v1551 = vld [vmem:[%s1256 + $0x328] sm:$0xf]
        %v1552 = vld [vmem:[%s1256 + $0x32c] sm:$0xf]
        %v1553 = vld [vmem:[%s1256 + $0x330] sm:$0xf]
        %v1554 = vld [vmem:[%s1256 + $0x334] sm:$0xf]
        %v1555 = vld [vmem:[%s1256 + $0x338] sm:$0xf]
        %v1556 = vld [vmem:[%s1256 + $0x33c] sm:$0xf]
        %v1557 = vld [vmem:[%s1256 + $0x340] sm:$0xf]
        %v1558 = vld [vmem:[%s1256 + $0x344] sm:$0xf]
        %v1559 = vld [vmem:[%s1256 + $0x348] sm:$0xf]
        %v1560 = vld [vmem:[%s1256 + $0x34c] sm:$0xf]
        %v1561 = vld [vmem:[%s1256 + $0x350] sm:$0xf]
        %v1562 = vld [vmem:[%s1256 + $0x354] sm:$0xf]
        %v1563 = vld [vmem:[%s1256 + $0x358] sm:$0xf]
        %v1564 = vld [vmem:[%s1256 + $0x35c] sm:$0xf]
        %v1565 = vld [vmem:[%s1256 + $0x360] sm:$0xf]
        %v1566 = vld [vmem:[%s1256 + $0x364] sm:$0xf]
        %v1567 = vld [vmem:[%s1256 + $0x368] sm:$0xf]
        %v1568 = vld [vmem:[%s1256 + $0x36c] sm:$0xf]
        %v1569 = vld [vmem:[%s1256 + $0x370] sm:$0xf]
        %v1570 = vld [vmem:[%s1256 + $0x374] sm:$0xf]
        %v1571 = vld [vmem:[%s1256 + $0x378] sm:$0xf]
        %v1572 = vld [vmem:[%s1256 + $0x37c] sm:$0xf]
        %v1573 = vld [vmem:[%s1256 + $0x380] sm:$0xf]
        %v1574 = vld [vmem:[%s1256 + $0x384] sm:$0xf]
        %v1575 = vld [vmem:[%s1256 + $0x388] sm:$0xf]
        %v1576 = vld [vmem:[%s1256 + $0x38c] sm:$0xf]
        %v1577 = vld [vmem:[%s1256 + $0x390] sm:$0xf]
        %v1578 = vld [vmem:[%s1256 + $0x394] sm:$0xf]
        %v1579 = vld [vmem:[%s1256 + $0x398] sm:$0xf]
        %v1580 = vld [vmem:[%s1256 + $0x39c] sm:$0xf]
        %v1581 = vld [vmem:[%s1256 + $0x3a0] sm:$0xf]
        %v1582 = vld [vmem:[%s1256 + $0x3a4] sm:$0xf]
        %v1583 = vld [vmem:[%s1256 + $0x3a8] sm:$0xf]
        %v1584 = vld [vmem:[%s1256 + $0x3ac] sm:$0xf]
        %v1585 = vld [vmem:[%s1256 + $0x3b0] sm:$0xf]
        %v1586 = vld [vmem:[%s1256 + $0x3b4] sm:$0xf]
        %v1587 = vld [vmem:[%s1256 + $0x3b8] sm:$0xf]
        %v1588 = vld [vmem:[%s1256 + $0x3bc] sm:$0xf]
        %v1589 = vld [vmem:[%s1256 + $0x3c0] sm:$0xf]
        %v1590 = vld [vmem:[%s1256 + $0x3c4] sm:$0xf]
        %v1591 = vld [vmem:[%s1256 + $0x3c8] sm:$0xf]
        %v1592 = vld [vmem:[%s1256 + $0x3cc] sm:$0xf]
        %v1593 = vld [vmem:[%s1256 + $0x3d0] sm:$0xf]
        %v1594 = vld [vmem:[%s1256 + $0x3d4] sm:$0xf]
        %v1595 = vld [vmem:[%s1256 + $0x3d8] sm:$0xf]
        %v1596 = vld [vmem:[%s1256 + $0x3dc] sm:$0xf]
        %v1597 = vld [vmem:[%s1256 + $0x3e0] sm:$0xf]
        %v1598 = vld [vmem:[%s1256 + $0x3e4] sm:$0xf]
        %v1599 = vld [vmem:[%s1256 + $0x3e8] sm:$0xf]
        %v1600 = vld [vmem:[%s1256 + $0x3ec] sm:$0xf]
        %v1601 = vld [vmem:[%s1256 + $0x3f0] sm:$0xf]
        %v1602 = vld [vmem:[%s1256 + $0x3f4] sm:$0xf]
        %v1603 = vld [vmem:[%s1256 + $0x3f8] sm:$0xf]
        %v1604 = vld [vmem:[%s1256 + $0x3fc] sm:$0xf]
        %v1637 = vunpack.c.l.b16 %v1317
        %v1638 = vunpack.c.h.b16 %v1317
        %v1639 = vunpack.c.l.b16 %v1318
        %v1640 = vunpack.c.h.b16 %v1318
        %v1641 = vunpack.c.l.b16 %v1319
        %v1642 = vunpack.c.h.b16 %v1319
        %v1643 = vunpack.c.l.b16 %v1320
        %v1644 = vunpack.c.h.b16 %v1320
        %v1645 = vunpack.c.l.b16 %v1321
        %v1646 = vunpack.c.h.b16 %v1321
        %v1647 = vunpack.c.l.b16 %v1322
        %v1648 = vunpack.c.h.b16 %v1322
        %v1649 = vunpack.c.l.b16 %v1323
        %v1650 = vunpack.c.h.b16 %v1323
        %v1651 = vunpack.c.l.b16 %v1324
        %v1652 = vunpack.c.h.b16 %v1324
        %v1653 = vunpack.c.l.b16 %v1325
        %v1654 = vunpack.c.h.b16 %v1325
        %v1655 = vunpack.c.l.b16 %v1326
        %v1656 = vunpack.c.h.b16 %v1326
        %v1657 = vunpack.c.l.b16 %v1327
        %v1658 = vunpack.c.h.b16 %v1327
        %v1659 = vunpack.c.l.b16 %v1328
        %v1660 = vunpack.c.h.b16 %v1328
        %v1661 = vunpack.c.l.b16 %v1329
        %v1662 = vunpack.c.h.b16 %v1329
        %v1663 = vunpack.c.l.b16 %v1330
        %v1664 = vunpack.c.h.b16 %v1330
        %v1665 = vunpack.c.l.b16 %v1331
        %v1666 = vunpack.c.h.b16 %v1331
        %v1667 = vunpack.c.l.b16 %v1332
        %v1668 = vunpack.c.h.b16 %v1332
        %v1669 = vunpack.c.l.b16 %v1333
        %v1670 = vunpack.c.h.b16 %v1333
        %v1671 = vunpack.c.l.b16 %v1334
        %v1672 = vunpack.c.h.b16 %v1334
        %v1673 = vunpack.c.l.b16 %v1335
        %v1674 = vunpack.c.h.b16 %v1335
        %v1675 = vunpack.c.l.b16 %v1336
        %v1676 = vunpack.c.h.b16 %v1336
        %v1677 = vunpack.c.l.b16 %v1337
        %v1678 = vunpack.c.h.b16 %v1337
        %v1679 = vunpack.c.l.b16 %v1338
        %v1680 = vunpack.c.h.b16 %v1338
        %v1681 = vunpack.c.l.b16 %v1339
        %v1682 = vunpack.c.h.b16 %v1339
        %v1683 = vunpack.c.l.b16 %v1340
        %v1684 = vunpack.c.h.b16 %v1340
        %v1685 = vunpack.c.l.b16 %v1341
        %v1686 = vunpack.c.h.b16 %v1341
        %v1687 = vunpack.c.l.b16 %v1342
        %v1688 = vunpack.c.h.b16 %v1342
        %v1689 = vunpack.c.l.b16 %v1343
        %v1690 = vunpack.c.h.b16 %v1343
        %v1691 = vunpack.c.l.b16 %v1344
        %v1692 = vunpack.c.h.b16 %v1344
        %v1693 = vunpack.c.l.b16 %v1345
        %v1694 = vunpack.c.h.b16 %v1345
        %v1695 = vunpack.c.l.b16 %v1346
        %v1696 = vunpack.c.h.b16 %v1346
        %v1697 = vunpack.c.l.b16 %v1347
        %v1698 = vunpack.c.h.b16 %v1347
        %v1699 = vunpack.c.l.b16 %v1348
        %v1700 = vunpack.c.h.b16 %v1348
        %v1701 = vpack.c.b16 %v1653, %v1637
        %v1702 = vpack.c.b16 %v1654, %v1638
        %v1703 = vpack.c.b16 %v1655, %v1639
        %v1704 = vpack.c.b16 %v1656, %v1640
        %v1705 = vpack.c.b16 %v1657, %v1641
        %v1706 = vpack.c.b16 %v1658, %v1642
        %v1707 = vpack.c.b16 %v1659, %v1643
        %v1708 = vpack.c.b16 %v1660, %v1644
        %v1709 = vpack.c.b16 %v1661, %v1645
        %v1710 = vpack.c.b16 %v1662, %v1646
        %v1711 = vpack.c.b16 %v1663, %v1647
        %v1712 = vpack.c.b16 %v1664, %v1648
        %v1713 = vpack.c.b16 %v1665, %v1649
        %v1714 = vpack.c.b16 %v1666, %v1650
        %v1715 = vpack.c.b16 %v1667, %v1651
        %v1716 = vpack.c.b16 %v1668, %v1652
        %v1717 = vpack.c.b16 %v1685, %v1669
        %v1718 = vpack.c.b16 %v1686, %v1670
        %v1719 = vpack.c.b16 %v1687, %v1671
        %v1720 = vpack.c.b16 %v1688, %v1672
        %v1721 = vpack.c.b16 %v1689, %v1673
        %v1722 = vpack.c.b16 %v1690, %v1674
        %v1723 = vpack.c.b16 %v1691, %v1675
        %v1724 = vpack.c.b16 %v1692, %v1676
        %v1725 = vpack.c.b16 %v1693, %v1677
        %v1726 = vpack.c.b16 %v1694, %v1678
        %v1727 = vpack.c.b16 %v1695, %v1679
        %v1728 = vpack.c.b16 %v1696, %v1680
        %v1729 = vpack.c.b16 %v1697, %v1681
        %v1730 = vpack.c.b16 %v1698, %v1682
        %v1731 = vpack.c.b16 %v1699, %v1683
        %v1732 = vpack.c.b16 %v1700, %v1684
        %v2021 = vunpack.c.l.b16 %v1349
        %v2022 = vunpack.c.l.b16 %v1350
        %v2023 = vunpack.c.l.b16 %v1351
        %v2024 = vunpack.c.l.b16 %v1352
        %v2025 = vunpack.c.l.b16 %v1353
        %v2026 = vunpack.c.l.b16 %v1354
        %v2027 = vunpack.c.l.b16 %v1355
        %v2028 = vunpack.c.l.b16 %v1356
        %v2029 = vunpack.c.l.b16 %v1357
        %v2030 = vunpack.c.l.b16 %v1358
        %v2031 = vunpack.c.l.b16 %v1359
        %v2032 = vunpack.c.l.b16 %v1360
        %v2033 = vunpack.c.l.b16 %v1361
        %v2034 = vunpack.c.l.b16 %v1362
        %v2035 = vunpack.c.l.b16 %v1363
        %v2036 = vunpack.c.l.b16 %v1364
        %v2037 = vunpack.c.l.b16 %v1365
        %v2038 = vunpack.c.l.b16 %v1366
        %v2039 = vunpack.c.l.b16 %v1367
        %v2040 = vunpack.c.l.b16 %v1368
        %v2041 = vunpack.c.l.b16 %v1369
        %v2042 = vunpack.c.l.b16 %v1370
        %v2043 = vunpack.c.l.b16 %v1371
        %v2044 = vunpack.c.l.b16 %v1372
        %v2045 = vunpack.c.l.b16 %v1373
        %v2046 = vunpack.c.l.b16 %v1374
        %v2047 = vunpack.c.l.b16 %v1375
        %v2048 = vunpack.c.l.b16 %v1376
        %v2049 = vunpack.c.l.b16 %v1377
        %v2050 = vunpack.c.l.b16 %v1378
        %v2051 = vunpack.c.l.b16 %v1379
        %v2052 = vunpack.c.l.b16 %v1380
        %v2053 = vunpack.c.l.b16 %v1381
        %v2054 = vunpack.c.l.b16 %v1382
        %v2055 = vunpack.c.l.b16 %v1383
        %v2056 = vunpack.c.l.b16 %v1384
        %v2057 = vunpack.c.l.b16 %v1385
        %v2058 = vunpack.c.l.b16 %v1386
        %v2059 = vunpack.c.l.b16 %v1387
        %v2060 = vunpack.c.l.b16 %v1388
        %v2061 = vunpack.c.l.b16 %v1389
        %v2062 = vunpack.c.l.b16 %v1390
        %v2063 = vunpack.c.l.b16 %v1391
        %v2064 = vunpack.c.l.b16 %v1392
        %v2065 = vunpack.c.l.b16 %v1393
        %v2066 = vunpack.c.l.b16 %v1394
        %v2067 = vunpack.c.l.b16 %v1395
        %v2068 = vunpack.c.l.b16 %v1396
        %v2069 = vunpack.c.l.b16 %v1397
        %v2070 = vunpack.c.l.b16 %v1398
        %v2071 = vunpack.c.l.b16 %v1399
        %v2072 = vunpack.c.l.b16 %v1400
        %v2073 = vunpack.c.l.b16 %v1401
        %v2074 = vunpack.c.l.b16 %v1402
        %v2075 = vunpack.c.l.b16 %v1403
        %v2076 = vunpack.c.l.b16 %v1404
        %v2077 = vunpack.c.l.b16 %v1405
        %v2078 = vunpack.c.l.b16 %v1406
        %v2079 = vunpack.c.l.b16 %v1407
        %v2080 = vunpack.c.l.b16 %v1408
        %v2081 = vunpack.c.l.b16 %v1409
        %v2082 = vunpack.c.l.b16 %v1410
        %v2083 = vunpack.c.l.b16 %v1411
        %v2084 = vunpack.c.l.b16 %v1412
        %v2085 = vunpack.c.l.b16 %v1413
        %v2086 = vunpack.c.l.b16 %v1414
        %v2087 = vunpack.c.l.b16 %v1415
        %v2088 = vunpack.c.l.b16 %v1416
        %v2089 = vunpack.c.l.b16 %v1417
        %v2090 = vunpack.c.l.b16 %v1418
        %v2091 = vunpack.c.l.b16 %v1419
        %v2092 = vunpack.c.l.b16 %v1420
        %v2093 = vunpack.c.l.b16 %v1421
        %v2094 = vunpack.c.l.b16 %v1422
        %v2095 = vunpack.c.l.b16 %v1423
        %v2096 = vunpack.c.l.b16 %v1424
        %v2097 = vunpack.c.l.b16 %v1425
        %v2098 = vunpack.c.l.b16 %v1426
        %v2099 = vunpack.c.l.b16 %v1427
        %v2100 = vunpack.c.l.b16 %v1428
        %v2101 = vunpack.c.l.b16 %v1429
        %v2102 = vunpack.c.l.b16 %v1430
        %v2103 = vunpack.c.l.b16 %v1431
        %v2104 = vunpack.c.l.b16 %v1432
        %v2105 = vunpack.c.l.b16 %v1433
        %v2106 = vunpack.c.l.b16 %v1434
        %v2107 = vunpack.c.l.b16 %v1435
        %v2108 = vunpack.c.l.b16 %v1436
        %v2109 = vunpack.c.l.b16 %v1437
        %v2110 = vunpack.c.l.b16 %v1438
        %v2111 = vunpack.c.l.b16 %v1439
        %v2112 = vunpack.c.l.b16 %v1440
        %v2113 = vunpack.c.l.b16 %v1441
        %v2114 = vunpack.c.l.b16 %v1442
        %v2115 = vunpack.c.l.b16 %v1443
        %v2116 = vunpack.c.l.b16 %v1444
        %v2117 = vunpack.c.l.b16 %v1445
        %v2118 = vunpack.c.l.b16 %v1446
        %v2119 = vunpack.c.l.b16 %v1447
        %v2120 = vunpack.c.l.b16 %v1448
        %v2121 = vunpack.c.l.b16 %v1449
        %v2122 = vunpack.c.l.b16 %v1450
        %v2123 = vunpack.c.l.b16 %v1451
        %v2124 = vunpack.c.l.b16 %v1452
        %v2125 = vunpack.c.l.b16 %v1453
        %v2126 = vunpack.c.l.b16 %v1454
        %v2127 = vunpack.c.l.b16 %v1455
        %v2128 = vunpack.c.l.b16 %v1456
        %v2129 = vunpack.c.l.b16 %v1457
        %v2130 = vunpack.c.l.b16 %v1458
        %v2131 = vunpack.c.l.b16 %v1459
        %v2132 = vunpack.c.l.b16 %v1460
        %v2133 = vunpack.c.l.b16 %v1461
        %v2134 = vunpack.c.l.b16 %v1462
        %v2135 = vunpack.c.l.b16 %v1463
        %v2136 = vunpack.c.l.b16 %v1464
        %v2137 = vunpack.c.l.b16 %v1465
        %v2138 = vunpack.c.l.b16 %v1466
        %v2139 = vunpack.c.l.b16 %v1467
        %v2140 = vunpack.c.l.b16 %v1468
        %v2141 = vunpack.c.l.b16 %v1469
        %v2142 = vunpack.c.l.b16 %v1470
        %v2143 = vunpack.c.l.b16 %v1471
        %v2144 = vunpack.c.l.b16 %v1472
        %v2145 = vunpack.c.l.b16 %v1473
        %v2146 = vunpack.c.l.b16 %v1474
        %v2147 = vunpack.c.l.b16 %v1475
        %v2148 = vunpack.c.l.b16 %v1476
        %v2149 = vunpack.c.l.b16 %v1477
        %v2150 = vunpack.c.l.b16 %v1478
        %v2151 = vunpack.c.l.b16 %v1479
        %v2152 = vunpack.c.l.b16 %v1480
        %v2153 = vunpack.c.l.b16 %v1481
        %v2154 = vunpack.c.l.b16 %v1482
        %v2155 = vunpack.c.l.b16 %v1483
        %v2156 = vunpack.c.l.b16 %v1484
        %v2157 = vunpack.c.l.b16 %v1485
        %v2158 = vunpack.c.l.b16 %v1486
        %v2159 = vunpack.c.l.b16 %v1487
        %v2160 = vunpack.c.l.b16 %v1488
        %v2161 = vunpack.c.l.b16 %v1489
        %v2162 = vunpack.c.l.b16 %v1490
        %v2163 = vunpack.c.l.b16 %v1491
        %v2164 = vunpack.c.l.b16 %v1492
        %v2165 = vunpack.c.l.b16 %v1493
        %v2166 = vunpack.c.l.b16 %v1494
        %v2167 = vunpack.c.l.b16 %v1495
        %v2168 = vunpack.c.l.b16 %v1496
        %v2169 = vunpack.c.l.b16 %v1497
        %v2170 = vunpack.c.l.b16 %v1498
        %v2171 = vunpack.c.l.b16 %v1499
        %v2172 = vunpack.c.l.b16 %v1500
        %v2173 = vunpack.c.l.b16 %v1501
        %v2174 = vunpack.c.l.b16 %v1502
        %v2175 = vunpack.c.l.b16 %v1503
        %v2176 = vunpack.c.l.b16 %v1504
        %v2177 = vunpack.c.l.b16 %v1505
        %v2178 = vunpack.c.l.b16 %v1506
        %v2179 = vunpack.c.l.b16 %v1507
        %v2180 = vunpack.c.l.b16 %v1508
        %v2181 = vunpack.c.l.b16 %v1509
        %v2182 = vunpack.c.l.b16 %v1510
        %v2183 = vunpack.c.l.b16 %v1511
        %v2184 = vunpack.c.l.b16 %v1512
        %v2185 = vunpack.c.l.b16 %v1513
        %v2186 = vunpack.c.l.b16 %v1514
        %v2187 = vunpack.c.l.b16 %v1515
        %v2188 = vunpack.c.l.b16 %v1516
        %v2189 = vunpack.c.l.b16 %v1517
        %v2190 = vunpack.c.l.b16 %v1518
        %v2191 = vunpack.c.l.b16 %v1519
        %v2192 = vunpack.c.l.b16 %v1520
        %v2193 = vunpack.c.l.b16 %v1521
        %v2194 = vunpack.c.l.b16 %v1522
        %v2195 = vunpack.c.l.b16 %v1523
        %v2196 = vunpack.c.l.b16 %v1524
        %v2197 = vunpack.c.l.b16 %v1525
        %v2198 = vunpack.c.l.b16 %v1526
        %v2199 = vunpack.c.l.b16 %v1527
        %v2200 = vunpack.c.l.b16 %v1528
        %v2201 = vunpack.c.l.b16 %v1529
        %v2202 = vunpack.c.l.b16 %v1530
        %v2203 = vunpack.c.l.b16 %v1531
        %v2204 = vunpack.c.l.b16 %v1532
        %v2205 = vunpack.c.l.b16 %v1533
        %v2206 = vunpack.c.l.b16 %v1534
        %v2207 = vunpack.c.l.b16 %v1535
        %v2208 = vunpack.c.l.b16 %v1536
        %v2209 = vunpack.c.l.b16 %v1537
        %v2210 = vunpack.c.l.b16 %v1538
        %v2211 = vunpack.c.l.b16 %v1539
        %v2212 = vunpack.c.l.b16 %v1540
        %v2213 = vunpack.c.l.b16 %v1541
        %v2214 = vunpack.c.l.b16 %v1542
        %v2215 = vunpack.c.l.b16 %v1543
        %v2216 = vunpack.c.l.b16 %v1544
        %v2217 = vunpack.c.l.b16 %v1545
        %v2218 = vunpack.c.l.b16 %v1546
        %v2219 = vunpack.c.l.b16 %v1547
        %v2220 = vunpack.c.l.b16 %v1548
        %v2221 = vunpack.c.l.b16 %v1549
        %v2222 = vunpack.c.l.b16 %v1550
        %v2223 = vunpack.c.l.b16 %v1551
        %v2224 = vunpack.c.l.b16 %v1552
        %v2225 = vunpack.c.l.b16 %v1553
        %v2226 = vunpack.c.l.b16 %v1554
        %v2227 = vunpack.c.l.b16 %v1555
        %v2228 = vunpack.c.l.b16 %v1556
        %v2229 = vunpack.c.l.b16 %v1557
        %v2230 = vunpack.c.l.b16 %v1558
        %v2231 = vunpack.c.l.b16 %v1559
        %v2232 = vunpack.c.l.b16 %v1560
        %v2233 = vunpack.c.l.b16 %v1561
        %v2234 = vunpack.c.l.b16 %v1562
        %v2235 = vunpack.c.l.b16 %v1563
        %v2236 = vunpack.c.l.b16 %v1564
        %v2237 = vunpack.c.l.b16 %v1565
        %v2238 = vunpack.c.l.b16 %v1566
        %v2239 = vunpack.c.l.b16 %v1567
        %v2240 = vunpack.c.l.b16 %v1568
        %v2241 = vunpack.c.l.b16 %v1569
        %v2242 = vunpack.c.l.b16 %v1570
        %v2243 = vunpack.c.l.b16 %v1571
        %v2244 = vunpack.c.l.b16 %v1572
        %v2245 = vunpack.c.l.b16 %v1573
        %v2246 = vunpack.c.l.b16 %v1574
        %v2247 = vunpack.c.l.b16 %v1575
        %v2248 = vunpack.c.l.b16 %v1576
        %v2249 = vunpack.c.l.b16 %v1577
        %v2250 = vunpack.c.l.b16 %v1578
        %v2251 = vunpack.c.l.b16 %v1579
        %v2252 = vunpack.c.l.b16 %v1580
        %v2253 = vunpack.c.l.b16 %v1581
        %v2254 = vunpack.c.l.b16 %v1582
        %v2255 = vunpack.c.l.b16 %v1583
        %v2256 = vunpack.c.l.b16 %v1584
        %v2257 = vunpack.c.l.b16 %v1585
        %v2258 = vunpack.c.l.b16 %v1586
        %v2259 = vunpack.c.l.b16 %v1587
        %v2260 = vunpack.c.l.b16 %v1588
        %v2261 = vunpack.c.l.b16 %v1589
        %v2262 = vunpack.c.l.b16 %v1590
        %v2263 = vunpack.c.l.b16 %v1591
        %v2264 = vunpack.c.l.b16 %v1592
        %v2265 = vunpack.c.l.b16 %v1593
        %v2266 = vunpack.c.l.b16 %v1594
        %v2267 = vunpack.c.l.b16 %v1595
        %v2268 = vunpack.c.l.b16 %v1596
        %v2269 = vunpack.c.l.b16 %v1597
        %v2270 = vunpack.c.l.b16 %v1598
        %v2271 = vunpack.c.l.b16 %v1599
        %v2272 = vunpack.c.l.b16 %v1600
        %v2273 = vunpack.c.l.b16 %v1601
        %v2274 = vunpack.c.l.b16 %v1602
        %v2275 = vunpack.c.l.b16 %v1603
        %v2276 = vunpack.c.l.b16 %v1604
        %v2277 = vpack.c.b16 %v2022, %v2021
        %v2278 = vpack.c.b16 %v2024, %v2023
        %v2279 = vpack.c.b16 %v2026, %v2025
        %v2280 = vpack.c.b16 %v2028, %v2027
        %v2281 = vpack.c.b16 %v2030, %v2029
        %v2282 = vpack.c.b16 %v2032, %v2031
        %v2283 = vpack.c.b16 %v2034, %v2033
        %v2284 = vpack.c.b16 %v2036, %v2035
        %v2285 = vpack.c.b16 %v2038, %v2037
        %v2286 = vpack.c.b16 %v2040, %v2039
        %v2287 = vpack.c.b16 %v2042, %v2041
        %v2288 = vpack.c.b16 %v2044, %v2043
        %v2289 = vpack.c.b16 %v2046, %v2045
        %v2290 = vpack.c.b16 %v2048, %v2047
        %v2291 = vpack.c.b16 %v2050, %v2049
        %v2292 = vpack.c.b16 %v2052, %v2051
        %v2293 = vpack.c.b16 %v2054, %v2053
        %v2294 = vpack.c.b16 %v2056, %v2055
        %v2295 = vpack.c.b16 %v2058, %v2057
        %v2296 = vpack.c.b16 %v2060, %v2059
        %v2297 = vpack.c.b16 %v2062, %v2061
        %v2298 = vpack.c.b16 %v2064, %v2063
        %v2299 = vpack.c.b16 %v2066, %v2065
        %v2300 = vpack.c.b16 %v2068, %v2067
        %v2301 = vpack.c.b16 %v2070, %v2069
        %v2302 = vpack.c.b16 %v2072, %v2071
        %v2303 = vpack.c.b16 %v2074, %v2073
        %v2304 = vpack.c.b16 %v2076, %v2075
        %v2305 = vpack.c.b16 %v2078, %v2077
        %v2306 = vpack.c.b16 %v2080, %v2079
        %v2307 = vpack.c.b16 %v2082, %v2081
        %v2308 = vpack.c.b16 %v2084, %v2083
        %v2309 = vpack.c.b16 %v2086, %v2085
        %v2310 = vpack.c.b16 %v2088, %v2087
        %v2311 = vpack.c.b16 %v2090, %v2089
        %v2312 = vpack.c.b16 %v2092, %v2091
        %v2313 = vpack.c.b16 %v2094, %v2093
        %v2314 = vpack.c.b16 %v2096, %v2095
        %v2315 = vpack.c.b16 %v2098, %v2097
        %v2316 = vpack.c.b16 %v2100, %v2099
        %v2317 = vpack.c.b16 %v2102, %v2101
        %v2318 = vpack.c.b16 %v2104, %v2103
        %v2319 = vpack.c.b16 %v2106, %v2105
        %v2320 = vpack.c.b16 %v2108, %v2107
        %v2321 = vpack.c.b16 %v2110, %v2109
        %v2322 = vpack.c.b16 %v2112, %v2111
        %v2323 = vpack.c.b16 %v2114, %v2113
        %v2324 = vpack.c.b16 %v2116, %v2115
        %v2325 = vpack.c.b16 %v2118, %v2117
        %v2326 = vpack.c.b16 %v2120, %v2119
        %v2327 = vpack.c.b16 %v2122, %v2121
        %v2328 = vpack.c.b16 %v2124, %v2123
        %v2329 = vpack.c.b16 %v2126, %v2125
        %v2330 = vpack.c.b16 %v2128, %v2127
        %v2331 = vpack.c.b16 %v2130, %v2129
        %v2332 = vpack.c.b16 %v2132, %v2131
        %v2333 = vpack.c.b16 %v2134, %v2133
        %v2334 = vpack.c.b16 %v2136, %v2135
        %v2335 = vpack.c.b16 %v2138, %v2137
        %v2336 = vpack.c.b16 %v2140, %v2139
        %v2337 = vpack.c.b16 %v2142, %v2141
        %v2338 = vpack.c.b16 %v2144, %v2143
        %v2339 = vpack.c.b16 %v2146, %v2145
        %v2340 = vpack.c.b16 %v2148, %v2147
        %v2341 = vpack.c.b16 %v2150, %v2149
        %v2342 = vpack.c.b16 %v2152, %v2151
        %v2343 = vpack.c.b16 %v2154, %v2153
        %v2344 = vpack.c.b16 %v2156, %v2155
        %v2345 = vpack.c.b16 %v2158, %v2157
        %v2346 = vpack.c.b16 %v2160, %v2159
        %v2347 = vpack.c.b16 %v2162, %v2161
        %v2348 = vpack.c.b16 %v2164, %v2163
        %v2349 = vpack.c.b16 %v2166, %v2165
        %v2350 = vpack.c.b16 %v2168, %v2167
        %v2351 = vpack.c.b16 %v2170, %v2169
        %v2352 = vpack.c.b16 %v2172, %v2171
        %v2353 = vpack.c.b16 %v2174, %v2173
        %v2354 = vpack.c.b16 %v2176, %v2175
        %v2355 = vpack.c.b16 %v2178, %v2177
        %v2356 = vpack.c.b16 %v2180, %v2179
        %v2357 = vpack.c.b16 %v2182, %v2181
        %v2358 = vpack.c.b16 %v2184, %v2183
        %v2359 = vpack.c.b16 %v2186, %v2185
        %v2360 = vpack.c.b16 %v2188, %v2187
        %v2361 = vpack.c.b16 %v2190, %v2189
        %v2362 = vpack.c.b16 %v2192, %v2191
        %v2363 = vpack.c.b16 %v2194, %v2193
        %v2364 = vpack.c.b16 %v2196, %v2195
        %v2365 = vpack.c.b16 %v2198, %v2197
        %v2366 = vpack.c.b16 %v2200, %v2199
        %v2367 = vpack.c.b16 %v2202, %v2201
        %v2368 = vpack.c.b16 %v2204, %v2203
        %v2369 = vpack.c.b16 %v2206, %v2205
        %v2370 = vpack.c.b16 %v2208, %v2207
        %v2371 = vpack.c.b16 %v2210, %v2209
        %v2372 = vpack.c.b16 %v2212, %v2211
        %v2373 = vpack.c.b16 %v2214, %v2213
        %v2374 = vpack.c.b16 %v2216, %v2215
        %v2375 = vpack.c.b16 %v2218, %v2217
        %v2376 = vpack.c.b16 %v2220, %v2219
        %v2377 = vpack.c.b16 %v2222, %v2221
        %v2378 = vpack.c.b16 %v2224, %v2223
        %v2379 = vpack.c.b16 %v2226, %v2225
        %v2380 = vpack.c.b16 %v2228, %v2227
        %v2381 = vpack.c.b16 %v2230, %v2229
        %v2382 = vpack.c.b16 %v2232, %v2231
        %v2383 = vpack.c.b16 %v2234, %v2233
        %v2384 = vpack.c.b16 %v2236, %v2235
        %v2385 = vpack.c.b16 %v2238, %v2237
        %v2386 = vpack.c.b16 %v2240, %v2239
        %v2387 = vpack.c.b16 %v2242, %v2241
        %v2388 = vpack.c.b16 %v2244, %v2243
        %v2389 = vpack.c.b16 %v2246, %v2245
        %v2390 = vpack.c.b16 %v2248, %v2247
        %v2391 = vpack.c.b16 %v2250, %v2249
        %v2392 = vpack.c.b16 %v2252, %v2251
        %v2393 = vpack.c.b16 %v2254, %v2253
        %v2394 = vpack.c.b16 %v2256, %v2255
        %v2395 = vpack.c.b16 %v2258, %v2257
        %v2396 = vpack.c.b16 %v2260, %v2259
        %v2397 = vpack.c.b16 %v2262, %v2261
        %v2398 = vpack.c.b16 %v2264, %v2263
        %v2399 = vpack.c.b16 %v2266, %v2265
        %v2400 = vpack.c.b16 %v2268, %v2267
        %v2401 = vpack.c.b16 %v2270, %v2269
        %v2402 = vpack.c.b16 %v2272, %v2271
        %v2403 = vpack.c.b16 %v2274, %v2273
        %v2404 = vpack.c.b16 %v2276, %v2275
        %2533 = vmatprep.subr.bf16.mxu0 0
        %2534 = vmatpush1.bf16.msra.mxu0 %v2277
        %2535 = vmatprep.subr.bf16.mxu0 0
        %2536 = vmatpush1.bf16.msra.mxu0 %v2278
        %2537 = vmatprep.subr.bf16.mxu0 0
        %2538 = vmatpush1.bf16.msra.mxu0 %v2279
        %2539 = vmatprep.subr.bf16.mxu0 0
        %2540 = vmatpush1.bf16.msra.mxu0 %v2280
        %2541 = vmatprep.subr.bf16.mxu0 0
        %2542 = vmatpush1.bf16.msra.mxu0 %v2281
        %2543 = vmatprep.subr.bf16.mxu0 0
        %2544 = vmatpush1.bf16.msra.mxu0 %v2282
        %2545 = vmatprep.subr.bf16.mxu0 0
        %2546 = vmatpush1.bf16.msra.mxu0 %v2283
        %2547 = vmatprep.subr.bf16.mxu0 0
        %2548 = vmatpush1.bf16.msra.mxu0 %v2284
        %2549 = vmatprep.subr.bf16.mxu0 0
        %2550 = vmatpush1.bf16.msra.mxu0 %v2285
        %2551 = vmatprep.subr.bf16.mxu0 0
        %2552 = vmatpush1.bf16.msra.mxu0 %v2286
        %2553 = vmatprep.subr.bf16.mxu0 0
        %2554 = vmatpush1.bf16.msra.mxu0 %v2287
        %2555 = vmatprep.subr.bf16.mxu0 0
        %2556 = vmatpush1.bf16.msra.mxu0 %v2288
        %2557 = vmatprep.subr.bf16.mxu0 0
        %2558 = vmatpush1.bf16.msra.mxu0 %v2289
        %2559 = vmatprep.subr.bf16.mxu0 0
        %2560 = vmatpush1.bf16.msra.mxu0 %v2290
        %2561 = vmatprep.subr.bf16.mxu0 0
        %2562 = vmatpush1.bf16.msra.mxu0 %v2291
        %2563 = vmatprep.subr.bf16.mxu0 0
        %2564 = vmatpush1.bf16.msra.mxu0 %v2292
        %2565 = vmatprep.mubr.bf16.mxu0 %v1702
        %2566 = vmatmul.mubr.bf16.gmra.mrb[0].mxu0 %v1701
        %v2567 = vpop.f32.mrb[0].mxu0
        %v2568 = vadd.f32 0.0, %v2567
        %v2569 = vpop.f32.mrb[0].mxu0
        %v2570 = vpop.f32.mrb[0].mxu0
        %v2571 = vadd.f32 0.0, %v2570
        %v2572 = vpop.f32.mrb[0].mxu0
        %2573 = vmatprep.mubr.bf16.mxu0 %v1718
        %2574 = vmatmul.mubr.bf16.gmra.mrb[0].mxu0 %v1717
        %v2575 = vpop.f32.mrb[0].mxu0
        %v2576 = vadd.f32 0.0, %v2575
        %v2577 = vpop.f32.mrb[0].mxu0
        %v2578 = vpop.f32.mrb[0].mxu0
        %v2579 = vadd.f32 0.0, %v2578
        %v2580 = vpop.f32.mrb[0].mxu0
        %2581 = vdwg.mxu0
        %2582 = vmatprep.subr.bf16.mxu0 0
        %2583 = vmatpush1.bf16.msra.mxu0 %v2293
        %2584 = vmatprep.subr.bf16.mxu0 0
        %2585 = vmatpush1.bf16.msra.mxu0 %v2294
        %2586 = vmatprep.subr.bf16.mxu0 0
        %2587 = vmatpush1.bf16.msra.mxu0 %v2295
        %2588 = vmatprep.subr.bf16.mxu0 0
        %2589 = vmatpush1.bf16.msra.mxu0 %v2296
        %2590 = vmatprep.subr.bf16.mxu0 0
        %2591 = vmatpush1.bf16.msra.mxu0 %v2297
        %2592 = vmatprep.subr.bf16.mxu0 0
        %2593 = vmatpush1.bf16.msra.mxu0 %v2298
        %2594 = vmatprep.subr.bf16.mxu0 0
        %2595 = vmatpush1.bf16.msra.mxu0 %v2299
        %2596 = vmatprep.subr.bf16.mxu0 0
        %2597 = vmatpush1.bf16.msra.mxu0 %v2300
        %2598 = vmatprep.subr.bf16.mxu0 0
        %2599 = vmatpush1.bf16.msra.mxu0 %v2301
        %2600 = vmatprep.subr.bf16.mxu0 0
        %2601 = vmatpush1.bf16.msra.mxu0 %v2302
        %2602 = vmatprep.subr.bf16.mxu0 0
        %2603 = vmatpush1.bf16.msra.mxu0 %v2303
        %2604 = vmatprep.subr.bf16.mxu0 0
        %2605 = vmatpush1.bf16.msra.mxu0 %v2304
        %2606 = vmatprep.subr.bf16.mxu0 0
        %2607 = vmatpush1.bf16.msra.mxu0 %v2305
        %2608 = vmatprep.subr.bf16.mxu0 0
        %2609 = vmatpush1.bf16.msra.mxu0 %v2306
        %2610 = vmatprep.subr.bf16.mxu0 0
        %2611 = vmatpush1.bf16.msra.mxu0 %v2307
        %2612 = vmatprep.subr.bf16.mxu0 0
        %2613 = vmatpush1.bf16.msra.mxu0 %v2308
        %2614 = vmatprep.mubr.bf16.mxu0 %v1704
        %2615 = vmatmul.mubr.bf16.gmra.mrb[0].mxu0 %v1703
        %v2616 = vpop.f32.mrb[0].mxu0
        %v2617 = vadd.f32 %v2568, %v2616
        %v2618 = vpop.f32.mrb[0].mxu0
        %v2619 = vpop.f32.mrb[0].mxu0
        %v2620 = vadd.f32 %v2571, %v2619
        %v2621 = vpop.f32.mrb[0].mxu0
        %2622 = vmatprep.mubr.bf16.mxu0 %v1720
        %2623 = vmatmul.mubr.bf16.gmra.mrb[0].mxu0 %v1719
        %v2624 = vpop.f32.mrb[0].mxu0
        %v2625 = vadd.f32 %v2576, %v2624
        %v2626 = vpop.f32.mrb[0].mxu0
        %v2627 = vpop.f32.mrb[0].mxu0
        %v2628 = vadd.f32 %v2579, %v2627
        %v2629 = vpop.f32.mrb[0].mxu0
        %2630 = vdwg.mxu0
        %2631 = vmatprep.subr.bf16.mxu0 0
        %2632 = vmatpush1.bf16.msra.mxu0 %v2309
        %2633 = vmatprep.subr.bf16.mxu0 0
        %2634 = vmatpush1.bf16.msra.mxu0 %v2310
        %2635 = vmatprep.subr.bf16.mxu0 0
        %2636 = vmatpush1.bf16.msra.mxu0 %v2311
        %2637 = vmatprep.subr.bf16.mxu0 0
        %2638 = vmatpush1.bf16.msra.mxu0 %v2312
        %2639 = vmatprep.subr.bf16.mxu0 0
        %2640 = vmatpush1.bf16.msra.mxu0 %v2313
        %2641 = vmatprep.subr.bf16.mxu0 0
        %2642 = vmatpush1.bf16.msra.mxu0 %v2314
        %2643 = vmatprep.subr.bf16.mxu0 0
        %2644 = vmatpush1.bf16.msra.mxu0 %v2315
        %2645 = vmatprep.subr.bf16.mxu0 0
        %2646 = vmatpush1.bf16.msra.mxu0 %v2316
        %2647 = vmatprep.subr.bf16.mxu0 0
        %2648 = vmatpush1.bf16.msra.mxu0 %v2317
        %2649 = vmatprep.subr.bf16.mxu0 0
        %2650 = vmatpush1.bf16.msra.mxu0 %v2318
        %2651 = vmatprep.subr.bf16.mxu0 0
        %2652 = vmatpush1.bf16.msra.mxu0 %v2319
        %2653 = vmatprep.subr.bf16.mxu0 0
        %2654 = vmatpush1.bf16.msra.mxu0 %v2320
        %2655 = vmatprep.subr.bf16.mxu0 0
        %2656 = vmatpush1.bf16.msra.mxu0 %v2321
        %2657 = vmatprep.subr.bf16.mxu0 0
        %2658 = vmatpush1.bf16.msra.mxu0 %v2322
        %2659 = vmatprep.subr.bf16.mxu0 0
        %2660 = vmatpush1.bf16.msra.mxu0 %v2323
        %2661 = vmatprep.subr.bf16.mxu0 0
        %2662 = vmatpush1.bf16.msra.mxu0 %v2324
        %2663 = vmatprep.mubr.bf16.mxu0 %v1706
        %2664 = vmatmul.mubr.bf16.gmra.mrb[0].mxu0 %v1705
        %v2665 = vpop.f32.mrb[0].mxu0
        %v2666 = vadd.f32 %v2617, %v2665
        %v2667 = vpop.f32.mrb[0].mxu0
        %v2668 = vpop.f32.mrb[0].mxu0
        %v2669 = vadd.f32 %v2620, %v2668
        %v2670 = vpop.f32.mrb[0].mxu0
        %2671 = vmatprep.mubr.bf16.mxu0 %v1722
        %2672 = vmatmul.mubr.bf16.gmra.mrb[0].mxu0 %v1721
        %v2673 = vpop.f32.mrb[0].mxu0
        %v2674 = vadd.f32 %v2625, %v2673
        %v2675 = vpop.f32.mrb[0].mxu0
        %v2676 = vpop.f32.mrb[0].mxu0
        %v2677 = vadd.f32 %v2628, %v2676
        %v2678 = vpop.f32.mrb[0].mxu0
        %2679 = vdwg.mxu0
        %2680 = vmatprep.subr.bf16.mxu0 0
        %2681 = vmatpush1.bf16.msra.mxu0 %v2325
        %2682 = vmatprep.subr.bf16.mxu0 0
        %2683 = vmatpush1.bf16.msra.mxu0 %v2326
        %2684 = vmatprep.subr.bf16.mxu0 0
        %2685 = vmatpush1.bf16.msra.mxu0 %v2327
        %2686 = vmatprep.subr.bf16.mxu0 0
        %2687 = vmatpush1.bf16.msra.mxu0 %v2328
        %2688 = vmatprep.subr.bf16.mxu0 0
        %2689 = vmatpush1.bf16.msra.mxu0 %v2329
        %2690 = vmatprep.subr.bf16.mxu0 0
        %2691 = vmatpush1.bf16.msra.mxu0 %v2330
        %2692 = vmatprep.subr.bf16.mxu0 0
        %2693 = vmatpush1.bf16.msra.mxu0 %v2331
        %2694 = vmatprep.subr.bf16.mxu0 0
        %2695 = vmatpush1.bf16.msra.mxu0 %v2332
        %2696 = vmatprep.subr.bf16.mxu0 0
        %2697 = vmatpush1.bf16.msra.mxu0 %v2333
        %2698 = vmatprep.subr.bf16.mxu0 0
        %2699 = vmatpush1.bf16.msra.mxu0 %v2334
        %2700 = vmatprep.subr.bf16.mxu0 0
        %2701 = vmatpush1.bf16.msra.mxu0 %v2335
        %2702 = vmatprep.subr.bf16.mxu0 0
        %2703 = vmatpush1.bf16.msra.mxu0 %v2336
        %2704 = vmatprep.subr.bf16.mxu0 0
        %2705 = vmatpush1.bf16.msra.mxu0 %v2337
        %2706 = vmatprep.subr.bf16.mxu0 0
        %2707 = vmatpush1.bf16.msra.mxu0 %v2338
        %2708 = vmatprep.subr.bf16.mxu0 0
        %2709 = vmatpush1.bf16.msra.mxu0 %v2339
        %2710 = vmatprep.subr.bf16.mxu0 0
        %2711 = vmatpush1.bf16.msra.mxu0 %v2340
        %2712 = vmatprep.mubr.bf16.mxu0 %v1708
        %2713 = vmatmul.mubr.bf16.gmra.mrb[0].mxu0 %v1707
        %v2714 = vpop.f32.mrb[0].mxu0
        %v2715 = vadd.f32 %v2666, %v2714
        %v2716 = vpop.f32.mrb[0].mxu0
        %v2717 = vpop.f32.mrb[0].mxu0
        %v2718 = vadd.f32 %v2669, %v2717
        %v2719 = vpop.f32.mrb[0].mxu0
        %2720 = vmatprep.mubr.bf16.mxu0 %v1724
        %2721 = vmatmul.mubr.bf16.gmra.mrb[0].mxu0 %v1723
        %v2722 = vpop.f32.mrb[0].mxu0
        %v2723 = vadd.f32 %v2674, %v2722
        %v2724 = vpop.f32.mrb[0].mxu0
        %v2725 = vpop.f32.mrb[0].mxu0
        %v2726 = vadd.f32 %v2677, %v2725
        %v2727 = vpop.f32.mrb[0].mxu0
        %2728 = vdwg.mxu0
        %2729 = vmatprep.subr.bf16.mxu0 0
        %2730 = vmatpush1.bf16.msra.mxu0 %v2341
        %2731 = vmatprep.subr.bf16.mxu0 0
        %2732 = vmatpush1.bf16.msra.mxu0 %v2342
        %2733 = vmatprep.subr.bf16.mxu0 0
        %2734 = vmatpush1.bf16.msra.mxu0 %v2343
        %2735 = vmatprep.subr.bf16.mxu0 0
        %2736 = vmatpush1.bf16.msra.mxu0 %v2344
        %2737 = vmatprep.subr.bf16.mxu0 0
        %2738 = vmatpush1.bf16.msra.mxu0 %v2345
        %2739 = vmatprep.subr.bf16.mxu0 0
        %2740 = vmatpush1.bf16.msra.mxu0 %v2346
        %2741 = vmatprep.subr.bf16.mxu0 0
        %2742 = vmatpush1.bf16.msra.mxu0 %v2347
        %2743 = vmatprep.subr.bf16.mxu0 0
        %2744 = vmatpush1.bf16.msra.mxu0 %v2348
        %2745 = vmatprep.subr.bf16.mxu0 0
        %2746 = vmatpush1.bf16.msra.mxu0 %v2349
        %2747 = vmatprep.subr.bf16.mxu0 0
        %2748 = vmatpush1.bf16.msra.mxu0 %v2350
        %2749 = vmatprep.subr.bf16.mxu0 0
        %2750 = vmatpush1.bf16.msra.mxu0 %v2351
        %2751 = vmatprep.subr.bf16.mxu0 0
        %2752 = vmatpush1.bf16.msra.mxu0 %v2352
        %2753 = vmatprep.subr.bf16.mxu0 0
        %2754 = vmatpush1.bf16.msra.mxu0 %v2353
        %2755 = vmatprep.subr.bf16.mxu0 0
        %2756 = vmatpush1.bf16.msra.mxu0 %v2354
        %2757 = vmatprep.subr.bf16.mxu0 0
        %2758 = vmatpush1.bf16.msra.mxu0 %v2355
        %2759 = vmatprep.subr.bf16.mxu0 0
        %2760 = vmatpush1.bf16.msra.mxu0 %v2356
        %2761 = vmatprep.mubr.bf16.mxu0 %v1710
        %2762 = vmatmul.mubr.bf16.gmra.mrb[0].mxu0 %v1709
        %v2763 = vpop.f32.mrb[0].mxu0
        %v2764 = vadd.f32 %v2715, %v2763
        %v2765 = vpop.f32.mrb[0].mxu0
        %v2766 = vpop.f32.mrb[0].mxu0
        %v2767 = vadd.f32 %v2718, %v2766
        %v2768 = vpop.f32.mrb[0].mxu0
        %2769 = vmatprep.mubr.bf16.mxu0 %v1726
        %2770 = vmatmul.mubr.bf16.gmra.mrb[0].mxu0 %v1725
        %v2771 = vpop.f32.mrb[0].mxu0
        %v2772 = vadd.f32 %v2723, %v2771
        %v2773 = vpop.f32.mrb[0].mxu0
        %v2774 = vpop.f32.mrb[0].mxu0
        %v2775 = vadd.f32 %v2726, %v2774
        %v2776 = vpop.f32.mrb[0].mxu0
        %2777 = vdwg.mxu0
        %2778 = vmatprep.subr.bf16.mxu0 0
        %2779 = vmatpush1.bf16.msra.mxu0 %v2357
        %2780 = vmatprep.subr.bf16.mxu0 0
        %2781 = vmatpush1.bf16.msra.mxu0 %v2358
        %2782 = vmatprep.subr.bf16.mxu0 0
        %2783 = vmatpush1.bf16.msra.mxu0 %v2359
        %2784 = vmatprep.subr.bf16.mxu0 0
        %2785 = vmatpush1.bf16.msra.mxu0 %v2360
        %2786 = vmatprep.subr.bf16.mxu0 0
        %2787 = vmatpush1.bf16.msra.mxu0 %v2361
        %2788 = vmatprep.subr.bf16.mxu0 0
        %2789 = vmatpush1.bf16.msra.mxu0 %v2362
        %2790 = vmatprep.subr.bf16.mxu0 0
        %2791 = vmatpush1.bf16.msra.mxu0 %v2363
        %2792 = vmatprep.subr.bf16.mxu0 0
        %2793 = vmatpush1.bf16.msra.mxu0 %v2364
        %2794 = vmatprep.subr.bf16.mxu0 0
        %2795 = vmatpush1.bf16.msra.mxu0 %v2365
        %2796 = vmatprep.subr.bf16.mxu0 0
        %2797 = vmatpush1.bf16.msra.mxu0 %v2366
        %2798 = vmatprep.subr.bf16.mxu0 0
        %2799 = vmatpush1.bf16.msra.mxu0 %v2367
        %2800 = vmatprep.subr.bf16.mxu0 0
        %2801 = vmatpush1.bf16.msra.mxu0 %v2368
        %2802 = vmatprep.subr.bf16.mxu0 0
        %2803 = vmatpush1.bf16.msra.mxu0 %v2369
        %2804 = vmatprep.subr.bf16.mxu0 0
        %2805 = vmatpush1.bf16.msra.mxu0 %v2370
        %2806 = vmatprep.subr.bf16.mxu0 0
        %2807 = vmatpush1.bf16.msra.mxu0 %v2371
        %2808 = vmatprep.subr.bf16.mxu0 0
        %2809 = vmatpush1.bf16.msra.mxu0 %v2372
        %2810 = vmatprep.mubr.bf16.mxu0 %v1712
        %2811 = vmatmul.mubr.bf16.gmra.mrb[0].mxu0 %v1711
        %v2812 = vpop.f32.mrb[0].mxu0
        %v2813 = vadd.f32 %v2764, %v2812
        %v2814 = vpop.f32.mrb[0].mxu0
        %v2815 = vpop.f32.mrb[0].mxu0
        %v2816 = vadd.f32 %v2767, %v2815
        %v2817 = vpop.f32.mrb[0].mxu0
        %2818 = vmatprep.mubr.bf16.mxu0 %v1728
        %2819 = vmatmul.mubr.bf16.gmra.mrb[0].mxu0 %v1727
        %v2820 = vpop.f32.mrb[0].mxu0
        %v2821 = vadd.f32 %v2772, %v2820
        %v2822 = vpop.f32.mrb[0].mxu0
        %v2823 = vpop.f32.mrb[0].mxu0
        %v2824 = vadd.f32 %v2775, %v2823
        %v2825 = vpop.f32.mrb[0].mxu0
        %2826 = vdwg.mxu0
        %2827 = vmatprep.subr.bf16.mxu0 0
        %2828 = vmatpush1.bf16.msra.mxu0 %v2373
        %2829 = vmatprep.subr.bf16.mxu0 0
        %2830 = vmatpush1.bf16.msra.mxu0 %v2374
        %2831 = vmatprep.subr.bf16.mxu0 0
        %2832 = vmatpush1.bf16.msra.mxu0 %v2375
        %2833 = vmatprep.subr.bf16.mxu0 0
        %2834 = vmatpush1.bf16.msra.mxu0 %v2376
        %2835 = vmatprep.subr.bf16.mxu0 0
        %2836 = vmatpush1.bf16.msra.mxu0 %v2377
        %2837 = vmatprep.subr.bf16.mxu0 0
        %2838 = vmatpush1.bf16.msra.mxu0 %v2378
        %2839 = vmatprep.subr.bf16.mxu0 0
        %2840 = vmatpush1.bf16.msra.mxu0 %v2379
        %2841 = vmatprep.subr.bf16.mxu0 0
        %2842 = vmatpush1.bf16.msra.mxu0 %v2380
        %2843 = vmatprep.subr.bf16.mxu0 0
        %2844 = vmatpush1.bf16.msra.mxu0 %v2381
        %2845 = vmatprep.subr.bf16.mxu0 0
        %2846 = vmatpush1.bf16.msra.mxu0 %v2382
        %2847 = vmatprep.subr.bf16.mxu0 0
        %2848 = vmatpush1.bf16.msra.mxu0 %v2383
        %2849 = vmatprep.subr.bf16.mxu0 0
        %2850 = vmatpush1.bf16.msra.mxu0 %v2384
        %2851 = vmatprep.subr.bf16.mxu0 0
        %2852 = vmatpush1.bf16.msra.mxu0 %v2385
        %2853 = vmatprep.subr.bf16.mxu0 0
        %2854 = vmatpush1.bf16.msra.mxu0 %v2386
        %2855 = vmatprep.subr.bf16.mxu0 0
        %2856 = vmatpush1.bf16.msra.mxu0 %v2387
        %2857 = vmatprep.subr.bf16.mxu0 0
        %2858 = vmatpush1.bf16.msra.mxu0 %v2388
        %2859 = vmatprep.mubr.bf16.mxu0 %v1714
        %2860 = vmatmul.mubr.bf16.gmra.mrb[0].mxu0 %v1713
        %v2861 = vpop.f32.mrb[0].mxu0
        %v2862 = vadd.f32 %v2813, %v2861
        %v2863 = vpop.f32.mrb[0].mxu0
        %v2864 = vpop.f32.mrb[0].mxu0
        %v2865 = vadd.f32 %v2816, %v2864
        %v2866 = vpop.f32.mrb[0].mxu0
        %2867 = vmatprep.mubr.bf16.mxu0 %v1730
        %2868 = vmatmul.mubr.bf16.gmra.mrb[0].mxu0 %v1729
        %v2869 = vpop.f32.mrb[0].mxu0
        %v2870 = vadd.f32 %v2821, %v2869
        %v2871 = vpop.f32.mrb[0].mxu0
        %v2872 = vpop.f32.mrb[0].mxu0
        %v2873 = vadd.f32 %v2824, %v2872
        %v2874 = vpop.f32.mrb[0].mxu0
        %2875 = vdwg.mxu0
        %2876 = vmatprep.subr.bf16.mxu0 0
        %2877 = vmatpush1.bf16.msra.mxu0 %v2389
        %2878 = vmatprep.subr.bf16.mxu0 0
        %2879 = vmatpush1.bf16.msra.mxu0 %v2390
        %2880 = vmatprep.subr.bf16.mxu0 0
        %2881 = vmatpush1.bf16.msra.mxu0 %v2391
        %2882 = vmatprep.subr.bf16.mxu0 0
        %2883 = vmatpush1.bf16.msra.mxu0 %v2392
        %2884 = vmatprep.subr.bf16.mxu0 0
        %2885 = vmatpush1.bf16.msra.mxu0 %v2393
        %2886 = vmatprep.subr.bf16.mxu0 0
        %2887 = vmatpush1.bf16.msra.mxu0 %v2394
        %2888 = vmatprep.subr.bf16.mxu0 0
        %2889 = vmatpush1.bf16.msra.mxu0 %v2395
        %2890 = vmatprep.subr.bf16.mxu0 0
        %2891 = vmatpush1.bf16.msra.mxu0 %v2396
        %2892 = vmatprep.subr.bf16.mxu0 0
        %2893 = vmatpush1.bf16.msra.mxu0 %v2397
        %2894 = vmatprep.subr.bf16.mxu0 0
        %2895 = vmatpush1.bf16.msra.mxu0 %v2398
        %2896 = vmatprep.subr.bf16.mxu0 0
        %2897 = vmatpush1.bf16.msra.mxu0 %v2399
        %2898 = vmatprep.subr.bf16.mxu0 0
        %2899 = vmatpush1.bf16.msra.mxu0 %v2400
        %2900 = vmatprep.subr.bf16.mxu0 0
        %2901 = vmatpush1.bf16.msra.mxu0 %v2401
        %2902 = vmatprep.subr.bf16.mxu0 0
        %2903 = vmatpush1.bf16.msra.mxu0 %v2402
        %2904 = vmatprep.subr.bf16.mxu0 0
        %2905 = vmatpush1.bf16.msra.mxu0 %v2403
        %2906 = vmatprep.subr.bf16.mxu0 0
        %2907 = vmatpush1.bf16.msra.mxu0 %v2404
        %2908 = vmatprep.mubr.bf16.mxu0 %v1716
        %2909 = vmatmul.mubr.bf16.gmra.mrb[0].mxu0 %v1715
        %v2910 = vpop.f32.mrb[0].mxu0
        %v2911 = vadd.f32 %v2862, %v2910
        %v2912 = vpop.f32.mrb[0].mxu0
        %v2913 = vpop.f32.mrb[0].mxu0
        %v2914 = vadd.f32 %v2865, %v2913
        %v2915 = vpop.f32.mrb[0].mxu0
        %2916 = vmatprep.mubr.bf16.mxu0 %v1732
        %2917 = vmatmul.mubr.bf16.gmra.mrb[0].mxu0 %v1731
        %v2918 = vpop.f32.mrb[0].mxu0
        %v2919 = vadd.f32 %v2870, %v2918
        %v2920 = vpop.f32.mrb[0].mxu0
        %v2921 = vpop.f32.mrb[0].mxu0
        %v2922 = vadd.f32 %v2873, %v2921
        %v2923 = vpop.f32.mrb[0].mxu0
        %2924 = vdwg.mxu0
        %v2925 = vpack.c.bf16 %v2914, %v2911
        %v2926 = vpack.c.bf16 %v2922, %v2919
        %v2929 = vunpack.c.l.b16 %v2925
        %v2930 = vunpack.c.h.b16 %v2925
        %v2931 = vunpack.c.l.b16 %v2926
        %v2932 = vunpack.c.h.b16 %v2926
        %v2933 = vpack.c.b16 %v2929, %v2929
        %v2934 = vpack.c.b16 %v2930, %v2930
        %v2935 = vpack.c.b16 %v2931, %v2931
        %v2936 = vpack.c.b16 %v2932, %v2932
        %2941 = vst [vmem:[%s1283] sm:$0xf] %v2933
        %2942 = vst [vmem:[%s1283 + $0x4] sm:$0xf] %v2934
        %2943 = vst [vmem:[%s1283 + $0x8] sm:$0xf] %v2935
        %2944 = vst [vmem:[%s1283 + $0xc] sm:$0xf] %v2936
        %v2945 = vadd.f32 %v2911, %v2914
        %v2946 = vadd.f32 %v2945, %v2919
        %v2947 = vadd.f32 %v2946, %v2922
        %v2948 = vrot.slane %v2947, 4
        %v2949 = vadd.f32 %v2947, %v2948
        %v2950 = vrot.slane %v2949, 2
        %v2951 = vadd.f32 %v2949, %v2950
        %v2952 = vrot.slane %v2951, 1
        %v2953 = vadd.f32 %v2951, %v2952
        %v2954 = vmul.f32 %v2911, %v2911
        %v2955 = vmul.f32 %v2914, %v2914
        %v2956 = vmul.f32 %v2919, %v2919
        %v2957 = vmul.f32 %v2922, %v2922
        %v2958 = vadd.f32 %v2954, %v2955
        %v2959 = vadd.f32 %v2958, %v2956
        %v2960 = vadd.f32 %v2959, %v2957
        %v2961 = vrot.slane %v2960, 4
        %v2962 = vadd.f32 %v2960, %v2961
        %v2963 = vrot.slane %v2962, 2
        %v2964 = vadd.f32 %v2962, %v2963
        %v2965 = vrot.slane %v2964, 1
        %v2966 = vadd.f32 %v2964, %v2965
        %v2967 = vlaneseq
        %v2968 = vshrl.u32 %v2967, 7
        %vm2969 = vcmp.eq.s32.totalorder %v2968, 0
        %vm2970 = vcmp.eq.s32.totalorder %v2968, 1
        %v2971 = vsel %vm2970, 1, 0
        %vm2972 = vcmp.eq.s32.totalorder %v2971, 1
        %v2973 = vsel %vm2972, %v2966, 0.0
        %v2974 = vsel %vm2969, 1, 0
        %vm2975 = vcmp.eq.s32.totalorder %v2974, 1
        %v2976 = vsel %vm2975, %v2953, %v2973
        %2977 = vst [vmem:[%s1315] sm:$0xff] %v2976
        %s2978 = sand.u32 %s100, 1
        %s2979 = sand.u32 %s100, 1
        %s2980 = smul.addr %s2979, 16
        %s2981 = scalar_lea.vmem [#allocation3], %s2980
        %p2982 = scmp.lt.s32.totalorder %s20, 0
        %s2983 = scalar_select %p2982, %s20, 0
        %p2984 = scmp.lt.s32.totalorder %s21, 1
        %s2985 = scalar_select %p2984, %s21, 1
        %s2986 = smul.addr %s2983, 2
        %s2987 = sadd.s32 %s2985, %s2986
        %s2988 = smul.addr %s2987, 8
        %s2989 = scalar_lea.vmem %s3, %s2988
        // Predicated region
        $region70: #{discriminator_forward.13} parent=64 // pred_check
          %p2990 = pneg %p110
        $region71: #{discriminator_forward.13} parent=64 // pred_check_branch
          %2992 = sbr.rel (%p2990) target = $region73
        $region72: #{discriminator_forward.13} parent=64 // pred_region
          %s2993 = smul.u32 4, %s20
          %s2994 = smul.addr %s2993, 2
          %s2995 = sadd.s32 %s21, %s2994
          %s2996 = smul.addr %s2995, 4
          %s2997 = scalar_lea.vmem %s2, %s2996
          // Predicated region
          $region74: #{discriminator_forward.13} parent=72 // pred_check
            _
          $region75: #{discriminator_forward.13} parent=72 // pred_check_branch
            %2999 = sbr.rel (0) target = $region77
          $region76: #{discriminator_forward.13} parent=72 // pred_region
            // Predicated region
            $region78: #{discriminator_forward.13} parent=76 // pred_check
              _
            $region79: #{discriminator_forward.13} parent=76 // pred_check_branch
              %3001 = sbr.rel target = $region81
            $region80: #{discriminator_forward.13} parent=76 // pred_region
              // Predicated region
              $region93: #{discriminator_forward.13} parent=80 // pred_check
                _
              $region94: #{discriminator_forward.13} parent=80 // pred_check_branch
                %3022 = sbr.rel (0) target = $region96
              $region95: #{discriminator_forward.13} parent=80 // pred_region
                loop: start=0, step=1, limit=1
                $region97: #{discriminator_forward.13} parent=95 // loop_pre_header
                  _
                $region98: #{discriminator_forward.13} parent=95 // loop_header
                  %s3024 = sphi 0, %s3028
                  %p3025 = scmp.ge.s32.totalorder %s3024, 1
                  %s3029 = sphi %s2981, %s2981
                  %s3030 = sphi %s2997, %s2997
                $region99: #{discriminator_forward.13} parent=95 // loop_header_branch
                  %3027 = sbr.rel (%p3025) target = $region103
                $region100: #{discriminator_forward.13} parent=95 // loop_body
                  _
                $region101: #{discriminator_forward.13} parent=95 // loop_footer
                  %s3028 = sadd.s32 1, %s3024
                $region102: #{discriminator_forward.13} parent=95 // loop_footer_branch
                  %3023 = sbr.rel target = $region98
                $region103: #{discriminator_forward.13} parent=95 // loop_exit
                  _
                loop: start=0, step=1, limit=1
                $region104: #{discriminator_forward.13} parent=95 // loop_pre_header
                  _
                $region105: #{discriminator_forward.13} parent=95 // loop_header
                  %s3033 = sphi 0, %s3037
                  %p3034 = scmp.ge.s32.totalorder %s3033, 1
                  %s3038 = sphi %s2981, %s2981
                  %s3039 = sphi %s2997, %s2997
                $region106: #{discriminator_forward.13} parent=95 // loop_header_branch
                  %3036 = sbr.rel (%p3034) target = $region110
                $region107: #{discriminator_forward.13} parent=95 // loop_body
                  %v3040 = vld [vmem:[%s3038] sm:$0xf]
                  %3041 = vst [vmem:[%s3039] sm:$0xf] %v3040
                  %v3042 = vld [vmem:[%s3038 + $0x4] sm:$0xf]
                  %3043 = vst [vmem:[%s3039 + $0x8] sm:$0xf] %v3042
                  %v3044 = vld [vmem:[%s3038 + $0x8] sm:$0xf]
                  %3045 = vst [vmem:[%s3039 + $0x10] sm:$0xf] %v3044
                  %v3046 = vld [vmem:[%s3038 + $0xc] sm:$0xf]
                  %3047 = vst [vmem:[%s3039 + $0x18] sm:$0xf] %v3046
                $region108: #{discriminator_forward.13} parent=95 // loop_footer
                  %s3037 = sadd.s32 1, %s3033
                $region109: #{discriminator_forward.13} parent=95 // loop_footer_branch
                  %3032 = sbr.rel target = $region105
                $region110: #{discriminator_forward.13} parent=95 // loop_exit
                  _
              $region96: #{discriminator_forward.13} parent=80 // pred_fallthru
                _
            $region81: #{discriminator_forward.13} parent=76 // pred_fallthru
              _
            // Predicated region
            $region82: #{discriminator_forward.13} parent=76 // pred_check
              _
            $region83: #{discriminator_forward.13} parent=76 // pred_check_branch
              %3003 = sbr.rel (0) target = $region85
            $region84: #{discriminator_forward.13} parent=76 // pred_region
              loop: start=0, step=1, limit=1
              $region86: #{discriminator_forward.13} parent=84 // loop_pre_header
                _
              $region87: #{discriminator_forward.13} parent=84 // loop_header
                %s3006 = sphi 0, %s3010
                %p3007 = scmp.ge.s32.totalorder %s3006, 1
                %s3011 = sphi %s2981, %s2981
                %s3012 = sphi %s2997, %s2997
              $region88: #{discriminator_forward.13} parent=84 // loop_header_branch
                %3009 = sbr.rel (%p3007) target = $region92
              $region89: #{discriminator_forward.13} parent=84 // loop_body
                %v3013 = vld [vmem:[%s3011] sm:$0xf]
                %3014 = vst [vmem:[%s3012] sm:$0xf] %v3013
                %v3015 = vld [vmem:[%s3011 + $0x4] sm:$0xf]
                %3016 = vst [vmem:[%s3012 + $0x8] sm:$0xf] %v3015
                %v3017 = vld [vmem:[%s3011 + $0x8] sm:$0xf]
                %3018 = vst [vmem:[%s3012 + $0x10] sm:$0xf] %v3017
                %v3019 = vld [vmem:[%s3011 + $0xc] sm:$0xf]
                %3020 = vst [vmem:[%s3012 + $0x18] sm:$0xf] %v3019
              $region90: #{discriminator_forward.13} parent=84 // loop_footer
                %s3010 = sadd.s32 1, %s3006
              $region91: #{discriminator_forward.13} parent=84 // loop_footer_branch
                %3005 = sbr.rel target = $region87
              $region92: #{discriminator_forward.13} parent=84 // loop_exit
                _
            $region85: #{discriminator_forward.13} parent=76 // pred_fallthru
              _
          $region77: #{discriminator_forward.13} parent=72 // pred_fallthru
            _
          %3048 = vnop
        $region73: #{discriminator_forward.13} parent=64 // pred_fallthru
          _
        // Predicated region
        $region111: #{discriminator_forward.13} parent=64 // pred_check
          %p3049 = pneg %p138
        $region112: #{discriminator_forward.13} parent=64 // pred_check_branch
          %3051 = sbr.rel (%p3049) target = $region114
        $region113: #{discriminator_forward.13} parent=64 // pred_region
          _
        $region114: #{discriminator_forward.13} parent=64 // pred_fallthru
          _
      $region65: #{discriminator_forward.13} parent=5 // pred_fallthru
        _
      %p3052 = scmp.le.s32.totalorder 2, %s10
      // Predicated region
      $region115: #{discriminator_forward.13} parent=5 // pred_check
        %p3053 = pneg %p3052
      $region116: #{discriminator_forward.13} parent=5 // pred_check_branch
        %3055 = sbr.rel (%p3053) target = $region118
      $region117: #{discriminator_forward.13} parent=5 // pred_region
        %s3056 = ssub.s32 %s10, 2
        // Predicated region
        $region119: #{discriminator_forward.13} parent=117 // pred_check
          %p3057 = pneg %p116
        $region120: #{discriminator_forward.13} parent=117 // pred_check_branch
          %3059 = sbr.rel (%p3057) target = $region122
        $region121: #{discriminator_forward.13} parent=117 // pred_region
          %s3060 = sand.u32 %s101, 1
          %s3061 = sand.u32 %s101, 1
          %s3062 = smul.addr %s3061, 16
          %s3063 = scalar_lea.vmem [#allocation3], %s3062
        $region122: #{discriminator_forward.13} parent=117 // pred_fallthru
          _
        // Predicated region
        $region123: #{discriminator_forward.13} parent=117 // pred_check
          %p3064 = pneg %p144
        $region124: #{discriminator_forward.13} parent=117 // pred_check_branch
          %3066 = sbr.rel (%p3064) target = $region126
        $region125: #{discriminator_forward.13} parent=117 // pred_region
          %p3067 = scmp.lt.s32.totalorder %s23, 0
          %s3068 = scalar_select %p3067, %s23, 0
          %p3069 = scmp.lt.s32.totalorder %s24, 1
          %s3070 = scalar_select %p3069, %s24, 1
          %s3071 = smul.addr %s3068, 2
          %s3072 = sadd.s32 %s3070, %s3071
          %s3073 = smul.addr %s3072, 8
          %s3074 = scalar_lea.vmem %s3, %s3073
        $region126: #{discriminator_forward.13} parent=117 // pred_fallthru
          _
      $region118: #{discriminator_forward.13} parent=5 // pred_fallthru
        _
    $region6: #{discriminator_forward.13} parent=1 // loop_footer
      %s14 = sadd.s32 1, %s10
    $region7: #{discriminator_forward.13} parent=1 // loop_footer_branch
      %9 = sbr.rel target = $region3
    $region8: #{discriminator_forward.13} parent=1 // loop_exit
      _

// kernel: discriminator_forward.15
$region0: #{discriminator_forward.15}
  #allocation0 [shape = 'u32[]', space=smem, size = 0x4, offset = 0x4, fixed_abs, tag = 'smem constant byte address 0x4 - core index']
  #allocation1 [shape = 'u32[144,128]{1,0:T(1,128)}', space=vmem, size = 0x12000, scoped, tag = 'internal scratch']
  %s0 = inlined_call_operand.vmem [shape: bf16[8,4096], index: 0, kind: input, shape index: {}]
  %s1 = inlined_call_operand.vmem [shape: bf16[4096,128], index: 1, kind: input, shape index: {}]
  %s2 = inlined_call_operand.vmem [shape: f32[1,128], index: 2, kind: input, shape index: {}]
  %s3 = inlined_call_operand.vmem [shape: f32[8,128], index: 3, kind: output, shape index: {}]
  %s4 = sld [smem:[#allocation0]]
  $region22: #{discriminator_forward.15} parent=0
    _
  %s6 = ssub.s32 1, %s4
  %s7 = scalar_select 0, %s6, %s4
  // Predicated region
  $region2: #{discriminator_forward.15} parent=0 // pred_check
    _
  $region3: #{discriminator_forward.15} parent=0 // pred_check_branch
    %9 = sbr.rel (0) target = $region5
  $region4: #{discriminator_forward.15} parent=0 // pred_region
    _
  $region5: #{discriminator_forward.15} parent=0 // pred_fallthru
    _
  // Predicated region
  $region6: #{discriminator_forward.15} parent=0 // pred_check
    _
  $region7: #{discriminator_forward.15} parent=0 // pred_check_branch
    %11 = sbr.rel (0) target = $region9
  $region8: #{discriminator_forward.15} parent=0 // pred_region
    _
  $region9: #{discriminator_forward.15} parent=0 // pred_fallthru
    _
  // Predicated region
  $region10: #{discriminator_forward.15} parent=0 // pred_check
    _
  $region11: #{discriminator_forward.15} parent=0 // pred_check_branch
    %13 = sbr.rel (0) target = $region13
  $region12: #{discriminator_forward.15} parent=0 // pred_region
    _
  $region13: #{discriminator_forward.15} parent=0 // pred_fallthru
    _
  %v15 = vld [vmem:[%s0] sm:$0xff]
  %v16 = vld [vmem:[%s0 + $0x8] sm:$0xff]
  %v17 = vld [vmem:[%s0 + $0x10] sm:$0xff]
  %v18 = vld [vmem:[%s0 + $0x18] sm:$0xff]
  %v19 = vld [vmem:[%s0 + $0x20] sm:$0xff]
  %v20 = vld [vmem:[%s0 + $0x28] sm:$0xff]
  %v21 = vld [vmem:[%s0 + $0x30] sm:$0xff]
  %v22 = vld [vmem:[%s0 + $0x38] sm:$0xff]
  %v23 = vld [vmem:[%s0 + $0x40] sm:$0xff]
  %v24 = vld [vmem:[%s0 + $0x48] sm:$0xff]
  %v25 = vld [vmem:[%s0 + $0x50] sm:$0xff]
  %v26 = vld [vmem:[%s0 + $0x58] sm:$0xff]
  %v27 = vld [vmem:[%s0 + $0x60] sm:$0xff]
  %v28 = vld [vmem:[%s0 + $0x68] sm:$0xff]
  %v29 = vld [vmem:[%s0 + $0x70] sm:$0xff]
  %v30 = vld [vmem:[%s0 + $0x78] sm:$0xff]
  %v31 = vld [vmem:[%s1] sm:$0xf]
  %v32 = vld [vmem:[%s1 + $0x4] sm:$0xf]
  %v33 = vld [vmem:[%s1 + $0x8] sm:$0xf]
  %v34 = vld [vmem:[%s1 + $0xc] sm:$0xf]
  %v35 = vld [vmem:[%s1 + $0x10] sm:$0xf]
  %v36 = vld [vmem:[%s1 + $0x14] sm:$0xf]
  %v37 = vld [vmem:[%s1 + $0x18] sm:$0xf]
  %v38 = vld [vmem:[%s1 + $0x1c] sm:$0xf]
  %v39 = vld [vmem:[%s1 + $0x20] sm:$0xf]
  %v40 = vld [vmem:[%s1 + $0x24] sm:$0xf]
  %v41 = vld [vmem:[%s1 + $0x28] sm:$0xf]
  %v42 = vld [vmem:[%s1 + $0x2c] sm:$0xf]
  %v43 = vld [vmem:[%s1 + $0x30] sm:$0xf]
  %v44 = vld [vmem:[%s1 + $0x34] sm:$0xf]
  %v45 = vld [vmem:[%s1 + $0x38] sm:$0xf]
  %v46 = vld [vmem:[%s1 + $0x3c] sm:$0xf]
  %v47 = vld [vmem:[%s1 + $0x40] sm:$0xf]
  %v48 = vld [vmem:[%s1 + $0x44] sm:$0xf]
  %v49 = vld [vmem:[%s1 + $0x48] sm:$0xf]
  %v50 = vld [vmem:[%s1 + $0x4c] sm:$0xf]
  %v51 = vld [vmem:[%s1 + $0x50] sm:$0xf]
  %v52 = vld [vmem:[%s1 + $0x54] sm:$0xf]
  %v53 = vld [vmem:[%s1 + $0x58] sm:$0xf]
  %v54 = vld [vmem:[%s1 + $0x5c] sm:$0xf]
  %v55 = vld [vmem:[%s1 + $0x60] sm:$0xf]
  %v56 = vld [vmem:[%s1 + $0x64] sm:$0xf]
  %v57 = vld [vmem:[%s1 + $0x68] sm:$0xf]
  %v58 = vld [vmem:[%s1 + $0x6c] sm:$0xf]
  %v59 = vld [vmem:[%s1 + $0x70] sm:$0xf]
  %v60 = vld [vmem:[%s1 + $0x74] sm:$0xf]
  %v61 = vld [vmem:[%s1 + $0x78] sm:$0xf]
  %v62 = vld [vmem:[%s1 + $0x7c] sm:$0xf]
  %v63 = vld [vmem:[%s1 + $0x80] sm:$0xf]
  %v64 = vld [vmem:[%s1 + $0x84] sm:$0xf]
  %v65 = vld [vmem:[%s1 + $0x88] sm:$0xf]
  %v66 = vld [vmem:[%s1 + $0x8c] sm:$0xf]
  %v67 = vld [vmem:[%s1 + $0x90] sm:$0xf]
  %v68 = vld [vmem:[%s1 + $0x94] sm:$0xf]
  %v69 = vld [vmem:[%s1 + $0x98] sm:$0xf]
  %v70 = vld [vmem:[%s1 + $0x9c] sm:$0xf]
  %v71 = vld [vmem:[%s1 + $0xa0] sm:$0xf]
  %v72 = vld [vmem:[%s1 + $0xa4] sm:$0xf]
  %v73 = vld [vmem:[%s1 + $0xa8] sm:$0xf]
  %v74 = vld [vmem:[%s1 + $0xac] sm:$0xf]
  %v75 = vld [vmem:[%s1 + $0xb0] sm:$0xf]
  %v76 = vld [vmem:[%s1 + $0xb4] sm:$0xf]
  %v77 = vld [vmem:[%s1 + $0xb8] sm:$0xf]
  %v78 = vld [vmem:[%s1 + $0xbc] sm:$0xf]
  %v79 = vld [vmem:[%s1 + $0xc0] sm:$0xf]
  %v80 = vld [vmem:[%s1 + $0xc4] sm:$0xf]
  %v81 = vld [vmem:[%s1 + $0xc8] sm:$0xf]
  %v82 = vld [vmem:[%s1 + $0xcc] sm:$0xf]
  %v83 = vld [vmem:[%s1 + $0xd0] sm:$0xf]
  %v84 = vld [vmem:[%s1 + $0xd4] sm:$0xf]
  %v85 = vld [vmem:[%s1 + $0xd8] sm:$0xf]
  %v86 = vld [vmem:[%s1 + $0xdc] sm:$0xf]
  %v87 = vld [vmem:[%s1 + $0xe0] sm:$0xf]
  %v88 = vld [vmem:[%s1 + $0xe4] sm:$0xf]
  %v89 = vld [vmem:[%s1 + $0xe8] sm:$0xf]
  %v90 = vld [vmem:[%s1 + $0xec] sm:$0xf]
  %v91 = vld [vmem:[%s1 + $0xf0] sm:$0xf]
  %v92 = vld [vmem:[%s1 + $0xf4] sm:$0xf]
  %v93 = vld [vmem:[%s1 + $0xf8] sm:$0xf]
  %v94 = vld [vmem:[%s1 + $0xfc] sm:$0xf]
  %v95 = vld [vmem:[%s1 + $0x100] sm:$0xf]
  %v96 = vld [vmem:[%s1 + $0x104] sm:$0xf]
  %v97 = vld [vmem:[%s1 + $0x108] sm:$0xf]
  %v98 = vld [vmem:[%s1 + $0x10c] sm:$0xf]
  %v99 = vld [vmem:[%s1 + $0x110] sm:$0xf]
  %v100 = vld [vmem:[%s1 + $0x114] sm:$0xf]
  %v101 = vld [vmem:[%s1 + $0x118] sm:$0xf]
  %v102 = vld [vmem:[%s1 + $0x11c] sm:$0xf]
  %v103 = vld [vmem:[%s1 + $0x120] sm:$0xf]
  %v104 = vld [vmem:[%s1 + $0x124] sm:$0xf]
  %v105 = vld [vmem:[%s1 + $0x128] sm:$0xf]
  %v106 = vld [vmem:[%s1 + $0x12c] sm:$0xf]
  %v107 = vld [vmem:[%s1 + $0x130] sm:$0xf]
  %v108 = vld [vmem:[%s1 + $0x134] sm:$0xf]
  %v109 = vld [vmem:[%s1 + $0x138] sm:$0xf]
  %v110 = vld [vmem:[%s1 + $0x13c] sm:$0xf]
  %v111 = vld [vmem:[%s1 + $0x140] sm:$0xf]
  %v112 = vld [vmem:[%s1 + $0x144] sm:$0xf]
  %v113 = vld [vmem:[%s1 + $0x148] sm:$0xf]
  %v114 = vld [vmem:[%s1 + $0x14c] sm:$0xf]
  %v115 = vld [vmem:[%s1 + $0x150] sm:$0xf]
  %v116 = vld [vmem:[%s1 + $0x154] sm:$0xf]
  %v117 = vld [vmem:[%s1 + $0x158] sm:$0xf]
  %v118 = vld [vmem:[%s1 + $0x15c] sm:$0xf]
  %v119 = vld [vmem:[%s1 + $0x160] sm:$0xf]
  %v120 = vld [vmem:[%s1 + $0x164] sm:$0xf]
  %v121 = vld [vmem:[%s1 + $0x168] sm:$0xf]
  %v122 = vld [vmem:[%s1 + $0x16c] sm:$0xf]
  %v123 = vld [vmem:[%s1 + $0x170] sm:$0xf]
  %v124 = vld [vmem:[%s1 + $0x174] sm:$0xf]
  %v125 = vld [vmem:[%s1 + $0x178] sm:$0xf]
  %v126 = vld [vmem:[%s1 + $0x17c] sm:$0xf]
  %v127 = vld [vmem:[%s1 + $0x180] sm:$0xf]
  %v128 = vld [vmem:[%s1 + $0x184] sm:$0xf]
  %v129 = vld [vmem:[%s1 + $0x188] sm:$0xf]
  %v130 = vld [vmem:[%s1 + $0x18c] sm:$0xf]
  %v131 = vld [vmem:[%s1 + $0x190] sm:$0xf]
  %v132 = vld [vmem:[%s1 + $0x194] sm:$0xf]
  %v133 = vld [vmem:[%s1 + $0x198] sm:$0xf]
  %v134 = vld [vmem:[%s1 + $0x19c] sm:$0xf]
  %v135 = vld [vmem:[%s1 + $0x1a0] sm:$0xf]
  %v136 = vld [vmem:[%s1 + $0x1a4] sm:$0xf]
  %v137 = vld [vmem:[%s1 + $0x1a8] sm:$0xf]
  %v138 = vld [vmem:[%s1 + $0x1ac] sm:$0xf]
  %v139 = vld [vmem:[%s1 + $0x1b0] sm:$0xf]
  %v140 = vld [vmem:[%s1 + $0x1b4] sm:$0xf]
  %v141 = vld [vmem:[%s1 + $0x1b8] sm:$0xf]
  %v142 = vld [vmem:[%s1 + $0x1bc] sm:$0xf]
  %v143 = vld [vmem:[%s1 + $0x1c0] sm:$0xf]
  %v144 = vld [vmem:[%s1 + $0x1c4] sm:$0xf]
  %v145 = vld [vmem:[%s1 + $0x1c8] sm:$0xf]
  %v146 = vld [vmem:[%s1 + $0x1cc] sm:$0xf]
  %v147 = vld [vmem:[%s1 + $0x1d0] sm:$0xf]
  %v148 = vld [vmem:[%s1 + $0x1d4] sm:$0xf]
  %v149 = vld [vmem:[%s1 + $0x1d8] sm:$0xf]
  %v150 = vld [vmem:[%s1 + $0x1dc] sm:$0xf]
  %v151 = vld [vmem:[%s1 + $0x1e0] sm:$0xf]
  %v152 = vld [vmem:[%s1 + $0x1e4] sm:$0xf]
  %v153 = vld [vmem:[%s1 + $0x1e8] sm:$0xf]
  %v154 = vld [vmem:[%s1 + $0x1ec] sm:$0xf]
  %v155 = vld [vmem:[%s1 + $0x1f0] sm:$0xf]
  %v156 = vld [vmem:[%s1 + $0x1f4] sm:$0xf]
  %v157 = vld [vmem:[%s1 + $0x1f8] sm:$0xf]
  %v158 = vld [vmem:[%s1 + $0x1fc] sm:$0xf]
  %v159 = vld [vmem:[%s1 + $0x200] sm:$0xf]
  %v160 = vld [vmem:[%s1 + $0x204] sm:$0xf]
  %v161 = vld [vmem:[%s1 + $0x208] sm:$0xf]
  %v162 = vld [vmem:[%s1 + $0x20c] sm:$0xf]
  %v163 = vld [vmem:[%s1 + $0x210] sm:$0xf]
  %v164 = vld [vmem:[%s1 + $0x214] sm:$0xf]
  %v165 = vld [vmem:[%s1 + $0x218] sm:$0xf]
  %v166 = vld [vmem:[%s1 + $0x21c] sm:$0xf]
  %v167 = vld [vmem:[%s1 + $0x220] sm:$0xf]
  %v168 = vld [vmem:[%s1 + $0x224] sm:$0xf]
  %v169 = vld [vmem:[%s1 + $0x228] sm:$0xf]
  %v170 = vld [vmem:[%s1 + $0x22c] sm:$0xf]
  %v171 = vld [vmem:[%s1 + $0x230] sm:$0xf]
  %v172 = vld [vmem:[%s1 + $0x234] sm:$0xf]
  %v173 = vld [vmem:[%s1 + $0x238] sm:$0xf]
  %v174 = vld [vmem:[%s1 + $0x23c] sm:$0xf]
  %v175 = vld [vmem:[%s1 + $0x240] sm:$0xf]
  %v176 = vld [vmem:[%s1 + $0x244] sm:$0xf]
  %v177 = vld [vmem:[%s1 + $0x248] sm:$0xf]
  %v178 = vld [vmem:[%s1 + $0x24c] sm:$0xf]
  %v179 = vld [vmem:[%s1 + $0x250] sm:$0xf]
  %v180 = vld [vmem:[%s1 + $0x254] sm:$0xf]
  %v181 = vld [vmem:[%s1 + $0x258] sm:$0xf]
  %v182 = vld [vmem:[%s1 + $0x25c] sm:$0xf]
  %v183 = vld [vmem:[%s1 + $0x260] sm:$0xf]
  %v184 = vld [vmem:[%s1 + $0x264] sm:$0xf]
  %v185 = vld [vmem:[%s1 + $0x268] sm:$0xf]
  %v186 = vld [vmem:[%s1 + $0x26c] sm:$0xf]
  %v187 = vld [vmem:[%s1 + $0x270] sm:$0xf]
  %v188 = vld [vmem:[%s1 + $0x274] sm:$0xf]
  %v189 = vld [vmem:[%s1 + $0x278] sm:$0xf]
  %v190 = vld [vmem:[%s1 + $0x27c] sm:$0xf]
  %v191 = vld [vmem:[%s1 + $0x280] sm:$0xf]
  %v192 = vld [vmem:[%s1 + $0x284] sm:$0xf]
  %v193 = vld [vmem:[%s1 + $0x288] sm:$0xf]
  %v194 = vld [vmem:[%s1 + $0x28c] sm:$0xf]
  %v195 = vld [vmem:[%s1 + $0x290] sm:$0xf]
  %v196 = vld [vmem:[%s1 + $0x294] sm:$0xf]
  %v197 = vld [vmem:[%s1 + $0x298] sm:$0xf]
  %v198 = vld [vmem:[%s1 + $0x29c] sm:$0xf]
  %v199 = vld [vmem:[%s1 + $0x2a0] sm:$0xf]
  %v200 = vld [vmem:[%s1 + $0x2a4] sm:$0xf]
  %v201 = vld [vmem:[%s1 + $0x2a8] sm:$0xf]
  %v202 = vld [vmem:[%s1 + $0x2ac] sm:$0xf]
  %v203 = vld [vmem:[%s1 + $0x2b0] sm:$0xf]
  %v204 = vld [vmem:[%s1 + $0x2b4] sm:$0xf]
  %v205 = vld [vmem:[%s1 + $0x2b8] sm:$0xf]
  %v206 = vld [vmem:[%s1 + $0x2bc] sm:$0xf]
  %v207 = vld [vmem:[%s1 + $0x2c0] sm:$0xf]
  %v208 = vld [vmem:[%s1 + $0x2c4] sm:$0xf]
  %v209 = vld [vmem:[%s1 + $0x2c8] sm:$0xf]
  %v210 = vld [vmem:[%s1 + $0x2cc] sm:$0xf]
  %v211 = vld [vmem:[%s1 + $0x2d0] sm:$0xf]
  %v212 = vld [vmem:[%s1 + $0x2d4] sm:$0xf]
  %v213 = vld [vmem:[%s1 + $0x2d8] sm:$0xf]
  %v214 = vld [vmem:[%s1 + $0x2dc] sm:$0xf]
  %v215 = vld [vmem:[%s1 + $0x2e0] sm:$0xf]
  %v216 = vld [vmem:[%s1 + $0x2e4] sm:$0xf]
  %v217 = vld [vmem:[%s1 + $0x2e8] sm:$0xf]
  %v218 = vld [vmem:[%s1 + $0x2ec] sm:$0xf]
  %v219 = vld [vmem:[%s1 + $0x2f0] sm:$0xf]
  %v220 = vld [vmem:[%s1 + $0x2f4] sm:$0xf]
  %v221 = vld [vmem:[%s1 + $0x2f8] sm:$0xf]
  %v222 = vld [vmem:[%s1 + $0x2fc] sm:$0xf]
  %v223 = vld [vmem:[%s1 + $0x300] sm:$0xf]
  %v224 = vld [vmem:[%s1 + $0x304] sm:$0xf]
  %v225 = vld [vmem:[%s1 + $0x308] sm:$0xf]
  %v226 = vld [vmem:[%s1 + $0x30c] sm:$0xf]
  %v227 = vld [vmem:[%s1 + $0x310] sm:$0xf]
  %v228 = vld [vmem:[%s1 + $0x314] sm:$0xf]
  %v229 = vld [vmem:[%s1 + $0x318] sm:$0xf]
  %v230 = vld [vmem:[%s1 + $0x31c] sm:$0xf]
  %v231 = vld [vmem:[%s1 + $0x320] sm:$0xf]
  %v232 = vld [vmem:[%s1 + $0x324] sm:$0xf]
  %v233 = vld [vmem:[%s1 + $0x328] sm:$0xf]
  %v234 = vld [vmem:[%s1 + $0x32c] sm:$0xf]
  %v235 = vld [vmem:[%s1 + $0x330] sm:$0xf]
  %v236 = vld [vmem:[%s1 + $0x334] sm:$0xf]
  %v237 = vld [vmem:[%s1 + $0x338] sm:$0xf]
  %v238 = vld [vmem:[%s1 + $0x33c] sm:$0xf]
  %v239 = vld [vmem:[%s1 + $0x340] sm:$0xf]
  %v240 = vld [vmem:[%s1 + $0x344] sm:$0xf]
  %v241 = vld [vmem:[%s1 + $0x348] sm:$0xf]
  %v242 = vld [vmem:[%s1 + $0x34c] sm:$0xf]
  %v243 = vld [vmem:[%s1 + $0x350] sm:$0xf]
  %v244 = vld [vmem:[%s1 + $0x354] sm:$0xf]
  %v245 = vld [vmem:[%s1 + $0x358] sm:$0xf]
  %v246 = vld [vmem:[%s1 + $0x35c] sm:$0xf]
  %v247 = vld [vmem:[%s1 + $0x360] sm:$0xf]
  %v248 = vld [vmem:[%s1 + $0x364] sm:$0xf]
  %v249 = vld [vmem:[%s1 + $0x368] sm:$0xf]
  %v250 = vld [vmem:[%s1 + $0x36c] sm:$0xf]
  %v251 = vld [vmem:[%s1 + $0x370] sm:$0xf]
  %v252 = vld [vmem:[%s1 + $0x374] sm:$0xf]
  %v253 = vld [vmem:[%s1 + $0x378] sm:$0xf]
  %v254 = vld [vmem:[%s1 + $0x37c] sm:$0xf]
  %v255 = vld [vmem:[%s1 + $0x380] sm:$0xf]
  %v256 = vld [vmem:[%s1 + $0x384] sm:$0xf]
  %v257 = vld [vmem:[%s1 + $0x388] sm:$0xf]
  %v258 = vld [vmem:[%s1 + $0x38c] sm:$0xf]
  %v259 = vld [vmem:[%s1 + $0x390] sm:$0xf]
  %v260 = vld [vmem:[%s1 + $0x394] sm:$0xf]
  %v261 = vld [vmem:[%s1 + $0x398] sm:$0xf]
  %v262 = vld [vmem:[%s1 + $0x39c] sm:$0xf]
  %v263 = vld [vmem:[%s1 + $0x3a0] sm:$0xf]
  %v264 = vld [vmem:[%s1 + $0x3a4] sm:$0xf]
  %v265 = vld [vmem:[%s1 + $0x3a8] sm:$0xf]
  %v266 = vld [vmem:[%s1 + $0x3ac] sm:$0xf]
  %v267 = vld [vmem:[%s1 + $0x3b0] sm:$0xf]
  %v268 = vld [vmem:[%s1 + $0x3b4] sm:$0xf]
  %v269 = vld [vmem:[%s1 + $0x3b8] sm:$0xf]
  %v270 = vld [vmem:[%s1 + $0x3bc] sm:$0xf]
  %v271 = vld [vmem:[%s1 + $0x3c0] sm:$0xf]
  %v272 = vld [vmem:[%s1 + $0x3c4] sm:$0xf]
  %v273 = vld [vmem:[%s1 + $0x3c8] sm:$0xf]
  %v274 = vld [vmem:[%s1 + $0x3cc] sm:$0xf]
  %v275 = vld [vmem:[%s1 + $0x3d0] sm:$0xf]
  %v276 = vld [vmem:[%s1 + $0x3d4] sm:$0xf]
  %v277 = vld [vmem:[%s1 + $0x3d8] sm:$0xf]
  %v278 = vld [vmem:[%s1 + $0x3dc] sm:$0xf]
  %v279 = vld [vmem:[%s1 + $0x3e0] sm:$0xf]
  %v280 = vld [vmem:[%s1 + $0x3e4] sm:$0xf]
  %v281 = vld [vmem:[%s1 + $0x3e8] sm:$0xf]
  %v282 = vld [vmem:[%s1 + $0x3ec] sm:$0xf]
  %v283 = vld [vmem:[%s1 + $0x3f0] sm:$0xf]
  %v284 = vld [vmem:[%s1 + $0x3f4] sm:$0xf]
  %v285 = vld [vmem:[%s1 + $0x3f8] sm:$0xf]
  %v286 = vld [vmem:[%s1 + $0x3fc] sm:$0xf]
  %v287 = vld [vmem:[%s1 + $0x400] sm:$0xf]
  %v288 = vld [vmem:[%s1 + $0x404] sm:$0xf]
  %v289 = vld [vmem:[%s1 + $0x408] sm:$0xf]
  %v290 = vld [vmem:[%s1 + $0x40c] sm:$0xf]
  %v291 = vld [vmem:[%s1 + $0x410] sm:$0xf]
  %v292 = vld [vmem:[%s1 + $0x414] sm:$0xf]
  %v293 = vld [vmem:[%s1 + $0x418] sm:$0xf]
  %v294 = vld [vmem:[%s1 + $0x41c] sm:$0xf]
  %v295 = vld [vmem:[%s1 + $0x420] sm:$0xf]
  %v296 = vld [vmem:[%s1 + $0x424] sm:$0xf]
  %v297 = vld [vmem:[%s1 + $0x428] sm:$0xf]
  %v298 = vld [vmem:[%s1 + $0x42c] sm:$0xf]
  %v299 = vld [vmem:[%s1 + $0x430] sm:$0xf]
  %v300 = vld [vmem:[%s1 + $0x434] sm:$0xf]
  %v301 = vld [vmem:[%s1 + $0x438] sm:$0xf]
  %v302 = vld [vmem:[%s1 + $0x43c] sm:$0xf]
  %v303 = vld [vmem:[%s1 + $0x440] sm:$0xf]
  %v304 = vld [vmem:[%s1 + $0x444] sm:$0xf]
  %v305 = vld [vmem:[%s1 + $0x448] sm:$0xf]
  %v306 = vld [vmem:[%s1 + $0x44c] sm:$0xf]
  %v307 = vld [vmem:[%s1 + $0x450] sm:$0xf]
  %v308 = vld [vmem:[%s1 + $0x454] sm:$0xf]
  %v309 = vld [vmem:[%s1 + $0x458] sm:$0xf]
  %v310 = vld [vmem:[%s1 + $0x45c] sm:$0xf]
  %v311 = vld [vmem:[%s1 + $0x460] sm:$0xf]
  %v312 = vld [vmem:[%s1 + $0x464] sm:$0xf]
  %v313 = vld [vmem:[%s1 + $0x468] sm:$0xf]
  %v314 = vld [vmem:[%s1 + $0x46c] sm:$0xf]
  %v315 = vld [vmem:[%s1 + $0x470] sm:$0xf]
  %v316 = vld [vmem:[%s1 + $0x474] sm:$0xf]
  %v317 = vld [vmem:[%s1 + $0x478] sm:$0xf]
  %v318 = vld [vmem:[%s1 + $0x47c] sm:$0xf]
  %v319 = vld [vmem:[%s1 + $0x480] sm:$0xf]
  %v320 = vld [vmem:[%s1 + $0x484] sm:$0xf]
  %v321 = vld [vmem:[%s1 + $0x488] sm:$0xf]
  %v322 = vld [vmem:[%s1 + $0x48c] sm:$0xf]
  %v323 = vld [vmem:[%s1 + $0x490] sm:$0xf]
  %v324 = vld [vmem:[%s1 + $0x494] sm:$0xf]
  %v325 = vld [vmem:[%s1 + $0x498] sm:$0xf]
  %v326 = vld [vmem:[%s1 + $0x49c] sm:$0xf]
  %v327 = vld [vmem:[%s1 + $0x4a0] sm:$0xf]
  %v328 = vld [vmem:[%s1 + $0x4a4] sm:$0xf]
  %v329 = vld [vmem:[%s1 + $0x4a8] sm:$0xf]
  %v330 = vld [vmem:[%s1 + $0x4ac] sm:$0xf]
  %v331 = vld [vmem:[%s1 + $0x4b0] sm:$0xf]
  %v332 = vld [vmem:[%s1 + $0x4b4] sm:$0xf]
  %v333 = vld [vmem:[%s1 + $0x4b8] sm:$0xf]
  %v334 = vld [vmem:[%s1 + $0x4bc] sm:$0xf]
  %v335 = vld [vmem:[%s1 + $0x4c0] sm:$0xf]
  %v336 = vld [vmem:[%s1 + $0x4c4] sm:$0xf]
  %v337 = vld [vmem:[%s1 + $0x4c8] sm:$0xf]
  %v338 = vld [vmem:[%s1 + $0x4cc] sm:$0xf]
  %v339 = vld [vmem:[%s1 + $0x4d0] sm:$0xf]
  %v340 = vld [vmem:[%s1 + $0x4d4] sm:$0xf]
  %v341 = vld [vmem:[%s1 + $0x4d8] sm:$0xf]
  %v342 = vld [vmem:[%s1 + $0x4dc] sm:$0xf]
  %v343 = vld [vmem:[%s1 + $0x4e0] sm:$0xf]
  %v344 = vld [vmem:[%s1 + $0x4e4] sm:$0xf]
  %v345 = vld [vmem:[%s1 + $0x4e8] sm:$0xf]
  %v346 = vld [vmem:[%s1 + $0x4ec] sm:$0xf]
  %v347 = vld [vmem:[%s1 + $0x4f0] sm:$0xf]
  %v348 = vld [vmem:[%s1 + $0x4f4] sm:$0xf]
  %v349 = vld [vmem:[%s1 + $0x4f8] sm:$0xf]
  %v350 = vld [vmem:[%s1 + $0x4fc] sm:$0xf]
  %v351 = vld [vmem:[%s1 + $0x500] sm:$0xf]
  %v352 = vld [vmem:[%s1 + $0x504] sm:$0xf]
  %v353 = vld [vmem:[%s1 + $0x508] sm:$0xf]
  %v354 = vld [vmem:[%s1 + $0x50c] sm:$0xf]
  %v355 = vld [vmem:[%s1 + $0x510] sm:$0xf]
  %v356 = vld [vmem:[%s1 + $0x514] sm:$0xf]
  %v357 = vld [vmem:[%s1 + $0x518] sm:$0xf]
  %v358 = vld [vmem:[%s1 + $0x51c] sm:$0xf]
  %v359 = vld [vmem:[%s1 + $0x520] sm:$0xf]
  %v360 = vld [vmem:[%s1 + $0x524] sm:$0xf]
  %v361 = vld [vmem:[%s1 + $0x528] sm:$0xf]
  %v362 = vld [vmem:[%s1 + $0x52c] sm:$0xf]
  %v363 = vld [vmem:[%s1 + $0x530] sm:$0xf]
  %v364 = vld [vmem:[%s1 + $0x534] sm:$0xf]
  %v365 = vld [vmem:[%s1 + $0x538] sm:$0xf]
  %v366 = vld [vmem:[%s1 + $0x53c] sm:$0xf]
  %v367 = vld [vmem:[%s1 + $0x540] sm:$0xf]
  %v368 = vld [vmem:[%s1 + $0x544] sm:$0xf]
  %v369 = vld [vmem:[%s1 + $0x548] sm:$0xf]
  %v370 = vld [vmem:[%s1 + $0x54c] sm:$0xf]
  %v371 = vld [vmem:[%s1 + $0x550] sm:$0xf]
  %v372 = vld [vmem:[%s1 + $0x554] sm:$0xf]
  %v373 = vld [vmem:[%s1 + $0x558] sm:$0xf]
  %v374 = vld [vmem:[%s1 + $0x55c] sm:$0xf]
  %v375 = vld [vmem:[%s1 + $0x560] sm:$0xf]
  %v376 = vld [vmem:[%s1 + $0x564] sm:$0xf]
  %v377 = vld [vmem:[%s1 + $0x568] sm:$0xf]
  %v378 = vld [vmem:[%s1 + $0x56c] sm:$0xf]
  %v379 = vld [vmem:[%s1 + $0x570] sm:$0xf]
  %v380 = vld [vmem:[%s1 + $0x574] sm:$0xf]
  %v381 = vld [vmem:[%s1 + $0x578] sm:$0xf]
  %v382 = vld [vmem:[%s1 + $0x57c] sm:$0xf]
  %v383 = vld [vmem:[%s1 + $0x580] sm:$0xf]
  %v384 = vld [vmem:[%s1 + $0x584] sm:$0xf]
  %v385 = vld [vmem:[%s1 + $0x588] sm:$0xf]
  %v386 = vld [vmem:[%s1 + $0x58c] sm:$0xf]
  %v387 = vld [vmem:[%s1 + $0x590] sm:$0xf]
  %v388 = vld [vmem:[%s1 + $0x594] sm:$0xf]
  %v389 = vld [vmem:[%s1 + $0x598] sm:$0xf]
  %v390 = vld [vmem:[%s1 + $0x59c] sm:$0xf]
  %v391 = vld [vmem:[%s1 + $0x5a0] sm:$0xf]
  %v392 = vld [vmem:[%s1 + $0x5a4] sm:$0xf]
  %v393 = vld [vmem:[%s1 + $0x5a8] sm:$0xf]
  %v394 = vld [vmem:[%s1 + $0x5ac] sm:$0xf]
  %v395 = vld [vmem:[%s1 + $0x5b0] sm:$0xf]
  %v396 = vld [vmem:[%s1 + $0x5b4] sm:$0xf]
  %v397 = vld [vmem:[%s1 + $0x5b8] sm:$0xf]
  %v398 = vld [vmem:[%s1 + $0x5bc] sm:$0xf]
  %v399 = vld [vmem:[%s1 + $0x5c0] sm:$0xf]
  %v400 = vld [vmem:[%s1 + $0x5c4] sm:$0xf]
  %v401 = vld [vmem:[%s1 + $0x5c8] sm:$0xf]
  %v402 = vld [vmem:[%s1 + $0x5cc] sm:$0xf]
  %v403 = vld [vmem:[%s1 + $0x5d0] sm:$0xf]
  %v404 = vld [vmem:[%s1 + $0x5d4] sm:$0xf]
  %v405 = vld [vmem:[%s1 + $0x5d8] sm:$0xf]
  %v406 = vld [vmem:[%s1 + $0x5dc] sm:$0xf]
  %v407 = vld [vmem:[%s1 + $0x5e0] sm:$0xf]
  %v408 = vld [vmem:[%s1 + $0x5e4] sm:$0xf]
  %v409 = vld [vmem:[%s1 + $0x5e8] sm:$0xf]
  %v410 = vld [vmem:[%s1 + $0x5ec] sm:$0xf]
  %v411 = vld [vmem:[%s1 + $0x5f0] sm:$0xf]
  %v412 = vld [vmem:[%s1 + $0x5f4] sm:$0xf]
  %v413 = vld [vmem:[%s1 + $0x5f8] sm:$0xf]
  %v414 = vld [vmem:[%s1 + $0x5fc] sm:$0xf]
  %v415 = vld [vmem:[%s1 + $0x600] sm:$0xf]
  %v416 = vld [vmem:[%s1 + $0x604] sm:$0xf]
  %v417 = vld [vmem:[%s1 + $0x608] sm:$0xf]
  %v418 = vld [vmem:[%s1 + $0x60c] sm:$0xf]
  %v419 = vld [vmem:[%s1 + $0x610] sm:$0xf]
  %v420 = vld [vmem:[%s1 + $0x614] sm:$0xf]
  %v421 = vld [vmem:[%s1 + $0x618] sm:$0xf]
  %v422 = vld [vmem:[%s1 + $0x61c] sm:$0xf]
  %v423 = vld [vmem:[%s1 + $0x620] sm:$0xf]
  %v424 = vld [vmem:[%s1 + $0x624] sm:$0xf]
  %v425 = vld [vmem:[%s1 + $0x628] sm:$0xf]
  %v426 = vld [vmem:[%s1 + $0x62c] sm:$0xf]
  %v427 = vld [vmem:[%s1 + $0x630] sm:$0xf]
  %v428 = vld [vmem:[%s1 + $0x634] sm:$0xf]
  %v429 = vld [vmem:[%s1 + $0x638] sm:$0xf]
  %v430 = vld [vmem:[%s1 + $0x63c] sm:$0xf]
  %v431 = vld [vmem:[%s1 + $0x640] sm:$0xf]
  %v432 = vld [vmem:[%s1 + $0x644] sm:$0xf]
  %v433 = vld [vmem:[%s1 + $0x648] sm:$0xf]
  %v434 = vld [vmem:[%s1 + $0x64c] sm:$0xf]
  %v435 = vld [vmem:[%s1 + $0x650] sm:$0xf]
  %v436 = vld [vmem:[%s1 + $0x654] sm:$0xf]
  %v437 = vld [vmem:[%s1 + $0x658] sm:$0xf]
  %v438 = vld [vmem:[%s1 + $0x65c] sm:$0xf]
  %v439 = vld [vmem:[%s1 + $0x660] sm:$0xf]
  %v440 = vld [vmem:[%s1 + $0x664] sm:$0xf]
  %v441 = vld [vmem:[%s1 + $0x668] sm:$0xf]
  %v442 = vld [vmem:[%s1 + $0x66c] sm:$0xf]
  %v443 = vld [vmem:[%s1 + $0x670] sm:$0xf]
  %v444 = vld [vmem:[%s1 + $0x674] sm:$0xf]
  %v445 = vld [vmem:[%s1 + $0x678] sm:$0xf]
  %v446 = vld [vmem:[%s1 + $0x67c] sm:$0xf]
  %v447 = vld [vmem:[%s1 + $0x680] sm:$0xf]
  %v448 = vld [vmem:[%s1 + $0x684] sm:$0xf]
  %v449 = vld [vmem:[%s1 + $0x688] sm:$0xf]
  %v450 = vld [vmem:[%s1 + $0x68c] sm:$0xf]
  %v451 = vld [vmem:[%s1 + $0x690] sm:$0xf]
  %v452 = vld [vmem:[%s1 + $0x694] sm:$0xf]
  %v453 = vld [vmem:[%s1 + $0x698] sm:$0xf]
  %v454 = vld [vmem:[%s1 + $0x69c] sm:$0xf]
  %v455 = vld [vmem:[%s1 + $0x6a0] sm:$0xf]
  %v456 = vld [vmem:[%s1 + $0x6a4] sm:$0xf]
  %v457 = vld [vmem:[%s1 + $0x6a8] sm:$0xf]
  %v458 = vld [vmem:[%s1 + $0x6ac] sm:$0xf]
  %v459 = vld [vmem:[%s1 + $0x6b0] sm:$0xf]
  %v460 = vld [vmem:[%s1 + $0x6b4] sm:$0xf]
  %v461 = vld [vmem:[%s1 + $0x6b8] sm:$0xf]
  %v462 = vld [vmem:[%s1 + $0x6bc] sm:$0xf]
  %v463 = vld [vmem:[%s1 + $0x6c0] sm:$0xf]
  %v464 = vld [vmem:[%s1 + $0x6c4] sm:$0xf]
  %v465 = vld [vmem:[%s1 + $0x6c8] sm:$0xf]
  %v466 = vld [vmem:[%s1 + $0x6cc] sm:$0xf]
  %v467 = vld [vmem:[%s1 + $0x6d0] sm:$0xf]
  %v468 = vld [vmem:[%s1 + $0x6d4] sm:$0xf]
  %v469 = vld [vmem:[%s1 + $0x6d8] sm:$0xf]
  %v470 = vld [vmem:[%s1 + $0x6dc] sm:$0xf]
  %v471 = vld [vmem:[%s1 + $0x6e0] sm:$0xf]
  %v472 = vld [vmem:[%s1 + $0x6e4] sm:$0xf]
  %v473 = vld [vmem:[%s1 + $0x6e8] sm:$0xf]
  %v474 = vld [vmem:[%s1 + $0x6ec] sm:$0xf]
  %v475 = vld [vmem:[%s1 + $0x6f0] sm:$0xf]
  %v476 = vld [vmem:[%s1 + $0x6f4] sm:$0xf]
  %v477 = vld [vmem:[%s1 + $0x6f8] sm:$0xf]
  %v478 = vld [vmem:[%s1 + $0x6fc] sm:$0xf]
  %v479 = vld [vmem:[%s1 + $0x700] sm:$0xf]
  %v480 = vld [vmem:[%s1 + $0x704] sm:$0xf]
  %v481 = vld [vmem:[%s1 + $0x708] sm:$0xf]
  %v482 = vld [vmem:[%s1 + $0x70c] sm:$0xf]
  %v483 = vld [vmem:[%s1 + $0x710] sm:$0xf]
  %v484 = vld [vmem:[%s1 + $0x714] sm:$0xf]
  %v485 = vld [vmem:[%s1 + $0x718] sm:$0xf]
  %v486 = vld [vmem:[%s1 + $0x71c] sm:$0xf]
  %v487 = vld [vmem:[%s1 + $0x720] sm:$0xf]
  %v488 = vld [vmem:[%s1 + $0x724] sm:$0xf]
  %v489 = vld [vmem:[%s1 + $0x728] sm:$0xf]
  %v490 = vld [vmem:[%s1 + $0x72c] sm:$0xf]
  %v491 = vld [vmem:[%s1 + $0x730] sm:$0xf]
  %v492 = vld [vmem:[%s1 + $0x734] sm:$0xf]
  %v493 = vld [vmem:[%s1 + $0x738] sm:$0xf]
  %v494 = vld [vmem:[%s1 + $0x73c] sm:$0xf]
  %v495 = vld [vmem:[%s1 + $0x740] sm:$0xf]
  %v496 = vld [vmem:[%s1 + $0x744] sm:$0xf]
  %v497 = vld [vmem:[%s1 + $0x748] sm:$0xf]
  %v498 = vld [vmem:[%s1 + $0x74c] sm:$0xf]
  %v499 = vld [vmem:[%s1 + $0x750] sm:$0xf]
  %v500 = vld [vmem:[%s1 + $0x754] sm:$0xf]
  %v501 = vld [vmem:[%s1 + $0x758] sm:$0xf]
  %v502 = vld [vmem:[%s1 + $0x75c] sm:$0xf]
  %v503 = vld [vmem:[%s1 + $0x760] sm:$0xf]
  %v504 = vld [vmem:[%s1 + $0x764] sm:$0xf]
  %v505 = vld [vmem:[%s1 + $0x768] sm:$0xf]
  %v506 = vld [vmem:[%s1 + $0x76c] sm:$0xf]
  %v507 = vld [vmem:[%s1 + $0x770] sm:$0xf]
  %v508 = vld [vmem:[%s1 + $0x774] sm:$0xf]
  %v509 = vld [vmem:[%s1 + $0x778] sm:$0xf]
  %v510 = vld [vmem:[%s1 + $0x77c] sm:$0xf]
  %v511 = vld [vmem:[%s1 + $0x780] sm:$0xf]
  %v512 = vld [vmem:[%s1 + $0x784] sm:$0xf]
  %v513 = vld [vmem:[%s1 + $0x788] sm:$0xf]
  %v514 = vld [vmem:[%s1 + $0x78c] sm:$0xf]
  %v515 = vld [vmem:[%s1 + $0x790] sm:$0xf]
  %v516 = vld [vmem:[%s1 + $0x794] sm:$0xf]
  %v517 = vld [vmem:[%s1 + $0x798] sm:$0xf]
  %v518 = vld [vmem:[%s1 + $0x79c] sm:$0xf]
  %v519 = vld [vmem:[%s1 + $0x7a0] sm:$0xf]
  %v520 = vld [vmem:[%s1 + $0x7a4] sm:$0xf]
  %v521 = vld [vmem:[%s1 + $0x7a8] sm:$0xf]
  %v522 = vld [vmem:[%s1 + $0x7ac] sm:$0xf]
  %v523 = vld [vmem:[%s1 + $0x7b0] sm:$0xf]
  %v524 = vld [vmem:[%s1 + $0x7b4] sm:$0xf]
  %v525 = vld [vmem:[%s1 + $0x7b8] sm:$0xf]
  %v526 = vld [vmem:[%s1 + $0x7bc] sm:$0xf]
  %v527 = vld [vmem:[%s1 + $0x7c0] sm:$0xf]
  %v528 = vld [vmem:[%s1 + $0x7c4] sm:$0xf]
  %v529 = vld [vmem:[%s1 + $0x7c8] sm:$0xf]
  %v530 = vld [vmem:[%s1 + $0x7cc] sm:$0xf]
  %v531 = vld [vmem:[%s1 + $0x7d0] sm:$0xf]
  %v532 = vld [vmem:[%s1 + $0x7d4] sm:$0xf]
  %v533 = vld [vmem:[%s1 + $0x7d8] sm:$0xf]
  %v534 = vld [vmem:[%s1 + $0x7dc] sm:$0xf]
  %v535 = vld [vmem:[%s1 + $0x7e0] sm:$0xf]
  %v536 = vld [vmem:[%s1 + $0x7e4] sm:$0xf]
  %v537 = vld [vmem:[%s1 + $0x7e8] sm:$0xf]
  %v538 = vld [vmem:[%s1 + $0x7ec] sm:$0xf]
  %v539 = vld [vmem:[%s1 + $0x7f0] sm:$0xf]
  %v540 = vld [vmem:[%s1 + $0x7f4] sm:$0xf]
  %v541 = vld [vmem:[%s1 + $0x7f8] sm:$0xf]
  %v542 = vld [vmem:[%s1 + $0x7fc] sm:$0xf]
  %v543 = vld [vmem:[%s2] sm:$0x1]
  %v545 = vlaneseq
  %v546 = vshrl.u32 %v545, 7
  %v547 = vsub.s32 0, %v546
  %v548 = vrot.slane %v543, %v547
  %v566 = vunpack.c.l.b16 %v15
  %v567 = vunpack.c.h.b16 %v15
  %v568 = vunpack.c.l.b16 %v16
  %v569 = vunpack.c.h.b16 %v16
  %v570 = vunpack.c.l.b16 %v17
  %v571 = vunpack.c.h.b16 %v17
  %v572 = vunpack.c.l.b16 %v18
  %v573 = vunpack.c.h.b16 %v18
  %v574 = vunpack.c.l.b16 %v19
  %v575 = vunpack.c.h.b16 %v19
  %v576 = vunpack.c.l.b16 %v20
  %v577 = vunpack.c.h.b16 %v20
  %v578 = vunpack.c.l.b16 %v21
  %v579 = vunpack.c.h.b16 %v21
  %v580 = vunpack.c.l.b16 %v22
  %v581 = vunpack.c.h.b16 %v22
  %v582 = vunpack.c.l.b16 %v23
  %v583 = vunpack.c.h.b16 %v23
  %v584 = vunpack.c.l.b16 %v24
  %v585 = vunpack.c.h.b16 %v24
  %v586 = vunpack.c.l.b16 %v25
  %v587 = vunpack.c.h.b16 %v25
  %v588 = vunpack.c.l.b16 %v26
  %v589 = vunpack.c.h.b16 %v26
  %v590 = vunpack.c.l.b16 %v27
  %v591 = vunpack.c.h.b16 %v27
  %v592 = vunpack.c.l.b16 %v28
  %v593 = vunpack.c.h.b16 %v28
  %v594 = vunpack.c.l.b16 %v29
  %v595 = vunpack.c.h.b16 %v29
  %v596 = vunpack.c.l.b16 %v30
  %v597 = vunpack.c.h.b16 %v30
  %v598 = vpack.c.b16 %v566, %v566
  %v599 = vpack.c.b16 %v567, %v567
  %v600 = vpack.c.b16 %v568, %v568
  %v601 = vpack.c.b16 %v569, %v569
  %v602 = vpack.c.b16 %v570, %v570
  %v603 = vpack.c.b16 %v571, %v571
  %v604 = vpack.c.b16 %v572, %v572
  %v605 = vpack.c.b16 %v573, %v573
  %v606 = vpack.c.b16 %v574, %v574
  %v607 = vpack.c.b16 %v575, %v575
  %v608 = vpack.c.b16 %v576, %v576
  %v609 = vpack.c.b16 %v577, %v577
  %v610 = vpack.c.b16 %v578, %v578
  %v611 = vpack.c.b16 %v579, %v579
  %v612 = vpack.c.b16 %v580, %v580
  %v613 = vpack.c.b16 %v581, %v581
  %v614 = vpack.c.b16 %v582, %v582
  %v615 = vpack.c.b16 %v583, %v583
  %v616 = vpack.c.b16 %v584, %v584
  %v617 = vpack.c.b16 %v585, %v585
  %v618 = vpack.c.b16 %v586, %v586
  %v619 = vpack.c.b16 %v587, %v587
  %v620 = vpack.c.b16 %v588, %v588
  %v621 = vpack.c.b16 %v589, %v589
  %v622 = vpack.c.b16 %v590, %v590
  %v623 = vpack.c.b16 %v591, %v591
  %v624 = vpack.c.b16 %v592, %v592
  %v625 = vpack.c.b16 %v593, %v593
  %v626 = vpack.c.b16 %v594, %v594
  %v627 = vpack.c.b16 %v595, %v595
  %v628 = vpack.c.b16 %v596, %v596
  %v629 = vpack.c.b16 %v597, %v597
  %v1174 = vunpack.c.l.b16 %v31
  %v1175 = vunpack.c.l.b16 %v32
  %v1176 = vunpack.c.l.b16 %v33
  %v1177 = vunpack.c.l.b16 %v34
  %v1178 = vunpack.c.l.b16 %v35
  %v1179 = vunpack.c.l.b16 %v36
  %v1180 = vunpack.c.l.b16 %v37
  %v1181 = vunpack.c.l.b16 %v38
  %v1182 = vunpack.c.l.b16 %v39
  %v1183 = vunpack.c.l.b16 %v40
  %v1184 = vunpack.c.l.b16 %v41
  %v1185 = vunpack.c.l.b16 %v42
  %v1186 = vunpack.c.l.b16 %v43
  %v1187 = vunpack.c.l.b16 %v44
  %v1188 = vunpack.c.l.b16 %v45
  %v1189 = vunpack.c.l.b16 %v46
  %v1190 = vunpack.c.l.b16 %v47
  %v1191 = vunpack.c.l.b16 %v48
  %v1192 = vunpack.c.l.b16 %v49
  %v1193 = vunpack.c.l.b16 %v50
  %v1194 = vunpack.c.l.b16 %v51
  %v1195 = vunpack.c.l.b16 %v52
  %v1196 = vunpack.c.l.b16 %v53
  %v1197 = vunpack.c.l.b16 %v54
  %v1198 = vunpack.c.l.b16 %v55
  %v1199 = vunpack.c.l.b16 %v56
  %v1200 = vunpack.c.l.b16 %v57
  %v1201 = vunpack.c.l.b16 %v58
  %v1202 = vunpack.c.l.b16 %v59
  %v1203 = vunpack.c.l.b16 %v60
  %v1204 = vunpack.c.l.b16 %v61
  %v1205 = vunpack.c.l.b16 %v62
  %v1206 = vunpack.c.l.b16 %v63
  %v1207 = vunpack.c.l.b16 %v64
  %v1208 = vunpack.c.l.b16 %v65
  %v1209 = vunpack.c.l.b16 %v66
  %v1210 = vunpack.c.l.b16 %v67
  %v1211 = vunpack.c.l.b16 %v68
  %v1212 = vunpack.c.l.b16 %v69
  %v1213 = vunpack.c.l.b16 %v70
  %v1214 = vunpack.c.l.b16 %v71
  %v1215 = vunpack.c.l.b16 %v72
  %v1216 = vunpack.c.l.b16 %v73
  %v1217 = vunpack.c.l.b16 %v74
  %v1218 = vunpack.c.l.b16 %v75
  %v1219 = vunpack.c.l.b16 %v76
  %v1220 = vunpack.c.l.b16 %v77
  %v1221 = vunpack.c.l.b16 %v78
  %v1222 = vunpack.c.l.b16 %v79
  %v1223 = vunpack.c.l.b16 %v80
  %v1224 = vunpack.c.l.b16 %v81
  %v1225 = vunpack.c.l.b16 %v82
  %v1226 = vunpack.c.l.b16 %v83
  %v1227 = vunpack.c.l.b16 %v84
  %v1228 = vunpack.c.l.b16 %v85
  %v1229 = vunpack.c.l.b16 %v86
  %v1230 = vunpack.c.l.b16 %v87
  %v1231 = vunpack.c.l.b16 %v88
  %v1232 = vunpack.c.l.b16 %v89
  %v1233 = vunpack.c.l.b16 %v90
  %v1234 = vunpack.c.l.b16 %v91
  %v1235 = vunpack.c.l.b16 %v92
  %v1236 = vunpack.c.l.b16 %v93
  %v1237 = vunpack.c.l.b16 %v94
  %v1238 = vunpack.c.l.b16 %v95
  %v1239 = vunpack.c.l.b16 %v96
  %v1240 = vunpack.c.l.b16 %v97
  %v1241 = vunpack.c.l.b16 %v98
  %v1242 = vunpack.c.l.b16 %v99
  %v1243 = vunpack.c.l.b16 %v100
  %v1244 = vunpack.c.l.b16 %v101
  %v1245 = vunpack.c.l.b16 %v102
  %v1246 = vunpack.c.l.b16 %v103
  %v1247 = vunpack.c.l.b16 %v104
  %v1248 = vunpack.c.l.b16 %v105
  %v1249 = vunpack.c.l.b16 %v106
  %v1250 = vunpack.c.l.b16 %v107
  %v1251 = vunpack.c.l.b16 %v108
  %v1252 = vunpack.c.l.b16 %v109
  %v1253 = vunpack.c.l.b16 %v110
  %v1254 = vunpack.c.l.b16 %v111
  %v1255 = vunpack.c.l.b16 %v112
  %v1256 = vunpack.c.l.b16 %v113
  %v1257 = vunpack.c.l.b16 %v114
  %v1258 = vunpack.c.l.b16 %v115
  %v1259 = vunpack.c.l.b16 %v116
  %v1260 = vunpack.c.l.b16 %v117
  %v1261 = vunpack.c.l.b16 %v118
  %v1262 = vunpack.c.l.b16 %v119
  %v1263 = vunpack.c.l.b16 %v120
  %v1264 = vunpack.c.l.b16 %v121
  %v1265 = vunpack.c.l.b16 %v122
  %v1266 = vunpack.c.l.b16 %v123
  %v1267 = vunpack.c.l.b16 %v124
  %v1268 = vunpack.c.l.b16 %v125
  %v1269 = vunpack.c.l.b16 %v126
  %v1270 = vunpack.c.l.b16 %v127
  %v1271 = vunpack.c.l.b16 %v128
  %v1272 = vunpack.c.l.b16 %v129
  %v1273 = vunpack.c.l.b16 %v130
  %v1274 = vunpack.c.l.b16 %v131
  %v1275 = vunpack.c.l.b16 %v132
  %v1276 = vunpack.c.l.b16 %v133
  %v1277 = vunpack.c.l.b16 %v134
  %v1278 = vunpack.c.l.b16 %v135
  %v1279 = vunpack.c.l.b16 %v136
  %v1280 = vunpack.c.l.b16 %v137
  %v1281 = vunpack.c.l.b16 %v138
  %v1282 = vunpack.c.l.b16 %v139
  %v1283 = vunpack.c.l.b16 %v140
  %v1284 = vunpack.c.l.b16 %v141
  %v1285 = vunpack.c.l.b16 %v142
  %v1286 = vunpack.c.l.b16 %v143
  %v1287 = vunpack.c.l.b16 %v144
  %v1288 = vunpack.c.l.b16 %v145
  %v1289 = vunpack.c.l.b16 %v146
  %v1290 = vunpack.c.l.b16 %v147
  %v1291 = vunpack.c.l.b16 %v148
  %v1292 = vunpack.c.l.b16 %v149
  %v1293 = vunpack.c.l.b16 %v150
  %v1294 = vunpack.c.l.b16 %v151
  %v1295 = vunpack.c.l.b16 %v152
  %v1296 = vunpack.c.l.b16 %v153
  %v1297 = vunpack.c.l.b16 %v154
  %v1298 = vunpack.c.l.b16 %v155
  %v1299 = vunpack.c.l.b16 %v156
  %v1300 = vunpack.c.l.b16 %v157
  %v1301 = vunpack.c.l.b16 %v158
  %v1302 = vunpack.c.l.b16 %v159
  %v1303 = vunpack.c.l.b16 %v160
  %v1304 = vunpack.c.l.b16 %v161
  %v1305 = vunpack.c.l.b16 %v162
  %v1306 = vunpack.c.l.b16 %v163
  %v1307 = vunpack.c.l.b16 %v164
  %v1308 = vunpack.c.l.b16 %v165
  %v1309 = vunpack.c.l.b16 %v166
  %v1310 = vunpack.c.l.b16 %v167
  %v1311 = vunpack.c.l.b16 %v168
  %v1312 = vunpack.c.l.b16 %v169
  %v1313 = vunpack.c.l.b16 %v170
  %v1314 = vunpack.c.l.b16 %v171
  %v1315 = vunpack.c.l.b16 %v172
  %v1316 = vunpack.c.l.b16 %v173
  %v1317 = vunpack.c.l.b16 %v174
  %v1318 = vunpack.c.l.b16 %v175
  %v1319 = vunpack.c.l.b16 %v176
  %v1320 = vunpack.c.l.b16 %v177
  %v1321 = vunpack.c.l.b16 %v178
  %v1322 = vunpack.c.l.b16 %v179
  %v1323 = vunpack.c.l.b16 %v180
  %v1324 = vunpack.c.l.b16 %v181
  %v1325 = vunpack.c.l.b16 %v182
  %v1326 = vunpack.c.l.b16 %v183
  %v1327 = vunpack.c.l.b16 %v184
  %v1328 = vunpack.c.l.b16 %v185
  %v1329 = vunpack.c.l.b16 %v186
  %v1330 = vunpack.c.l.b16 %v187
  %v1331 = vunpack.c.l.b16 %v188
  %v1332 = vunpack.c.l.b16 %v189
  %v1333 = vunpack.c.l.b16 %v190
  %v1334 = vunpack.c.l.b16 %v191
  %v1335 = vunpack.c.l.b16 %v192
  %v1336 = vunpack.c.l.b16 %v193
  %v1337 = vunpack.c.l.b16 %v194
  %v1338 = vunpack.c.l.b16 %v195
  %v1339 = vunpack.c.l.b16 %v196
  %v1340 = vunpack.c.l.b16 %v197
  %v1341 = vunpack.c.l.b16 %v198
  %v1342 = vunpack.c.l.b16 %v199
  %v1343 = vunpack.c.l.b16 %v200
  %v1344 = vunpack.c.l.b16 %v201
  %v1345 = vunpack.c.l.b16 %v202
  %v1346 = vunpack.c.l.b16 %v203
  %v1347 = vunpack.c.l.b16 %v204
  %v1348 = vunpack.c.l.b16 %v205
  %v1349 = vunpack.c.l.b16 %v206
  %v1350 = vunpack.c.l.b16 %v207
  %v1351 = vunpack.c.l.b16 %v208
  %v1352 = vunpack.c.l.b16 %v209
  %v1353 = vunpack.c.l.b16 %v210
  %v1354 = vunpack.c.l.b16 %v211
  %v1355 = vunpack.c.l.b16 %v212
  %v1356 = vunpack.c.l.b16 %v213
  %v1357 = vunpack.c.l.b16 %v214
  %v1358 = vunpack.c.l.b16 %v215
  %v1359 = vunpack.c.l.b16 %v216
  %v1360 = vunpack.c.l.b16 %v217
  %v1361 = vunpack.c.l.b16 %v218
  %v1362 = vunpack.c.l.b16 %v219
  %v1363 = vunpack.c.l.b16 %v220
  %v1364 = vunpack.c.l.b16 %v221
  %v1365 = vunpack.c.l.b16 %v222
  %v1366 = vunpack.c.l.b16 %v223
  %v1367 = vunpack.c.l.b16 %v224
  %v1368 = vunpack.c.l.b16 %v225
  %v1369 = vunpack.c.l.b16 %v226
  %v1370 = vunpack.c.l.b16 %v227
  %v1371 = vunpack.c.l.b16 %v228
  %v1372 = vunpack.c.l.b16 %v229
  %v1373 = vunpack.c.l.b16 %v230
  %v1374 = vunpack.c.l.b16 %v231
  %v1375 = vunpack.c.l.b16 %v232
  %v1376 = vunpack.c.l.b16 %v233
  %v1377 = vunpack.c.l.b16 %v234
  %v1378 = vunpack.c.l.b16 %v235
  %v1379 = vunpack.c.l.b16 %v236
  %v1380 = vunpack.c.l.b16 %v237
  %v1381 = vunpack.c.l.b16 %v238
  %v1382 = vunpack.c.l.b16 %v239
  %v1383 = vunpack.c.l.b16 %v240
  %v1384 = vunpack.c.l.b16 %v241
  %v1385 = vunpack.c.l.b16 %v242
  %v1386 = vunpack.c.l.b16 %v243
  %v1387 = vunpack.c.l.b16 %v244
  %v1388 = vunpack.c.l.b16 %v245
  %v1389 = vunpack.c.l.b16 %v246
  %v1390 = vunpack.c.l.b16 %v247
  %v1391 = vunpack.c.l.b16 %v248
  %v1392 = vunpack.c.l.b16 %v249
  %v1393 = vunpack.c.l.b16 %v250
  %v1394 = vunpack.c.l.b16 %v251
  %v1395 = vunpack.c.l.b16 %v252
  %v1396 = vunpack.c.l.b16 %v253
  %v1397 = vunpack.c.l.b16 %v254
  %v1398 = vunpack.c.l.b16 %v255
  %v1399 = vunpack.c.l.b16 %v256
  %v1400 = vunpack.c.l.b16 %v257
  %v1401 = vunpack.c.l.b16 %v258
  %v1402 = vunpack.c.l.b16 %v259
  %v1403 = vunpack.c.l.b16 %v260
  %v1404 = vunpack.c.l.b16 %v261
  %v1405 = vunpack.c.l.b16 %v262
  %v1406 = vunpack.c.l.b16 %v263
  %v1407 = vunpack.c.l.b16 %v264
  %v1408 = vunpack.c.l.b16 %v265
  %v1409 = vunpack.c.l.b16 %v266
  %v1410 = vunpack.c.l.b16 %v267
  %v1411 = vunpack.c.l.b16 %v268
  %v1412 = vunpack.c.l.b16 %v269
  %v1413 = vunpack.c.l.b16 %v270
  %v1414 = vunpack.c.l.b16 %v271
  %v1415 = vunpack.c.l.b16 %v272
  %v1416 = vunpack.c.l.b16 %v273
  %v1417 = vunpack.c.l.b16 %v274
  %v1418 = vunpack.c.l.b16 %v275
  %v1419 = vunpack.c.l.b16 %v276
  %v1420 = vunpack.c.l.b16 %v277
  %v1421 = vunpack.c.l.b16 %v278
  %v1422 = vunpack.c.l.b16 %v279
  %v1423 = vunpack.c.l.b16 %v280
  %v1424 = vunpack.c.l.b16 %v281
  %v1425 = vunpack.c.l.b16 %v282
  %v1426 = vunpack.c.l.b16 %v283
  %v1427 = vunpack.c.l.b16 %v284
  %v1428 = vunpack.c.l.b16 %v285
  %v1429 = vunpack.c.l.b16 %v286
  %v1430 = vunpack.c.l.b16 %v287
  %v1431 = vunpack.c.l.b16 %v288
  %v1432 = vunpack.c.l.b16 %v289
  %v1433 = vunpack.c.l.b16 %v290
  %v1434 = vunpack.c.l.b16 %v291
  %v1435 = vunpack.c.l.b16 %v292
  %v1436 = vunpack.c.l.b16 %v293
  %v1437 = vunpack.c.l.b16 %v294
  %v1438 = vunpack.c.l.b16 %v295
  %v1439 = vunpack.c.l.b16 %v296
  %v1440 = vunpack.c.l.b16 %v297
  %v1441 = vunpack.c.l.b16 %v298
  %v1442 = vunpack.c.l.b16 %v299
  %v1443 = vunpack.c.l.b16 %v300
  %v1444 = vunpack.c.l.b16 %v301
  %v1445 = vunpack.c.l.b16 %v302
  %v1446 = vunpack.c.l.b16 %v303
  %v1447 = vunpack.c.l.b16 %v304
  %v1448 = vunpack.c.l.b16 %v305
  %v1449 = vunpack.c.l.b16 %v306
  %v1450 = vunpack.c.l.b16 %v307
  %v1451 = vunpack.c.l.b16 %v308
  %v1452 = vunpack.c.l.b16 %v309
  %v1453 = vunpack.c.l.b16 %v310
  %v1454 = vunpack.c.l.b16 %v311
  %v1455 = vunpack.c.l.b16 %v312
  %v1456 = vunpack.c.l.b16 %v313
  %v1457 = vunpack.c.l.b16 %v314
  %v1458 = vunpack.c.l.b16 %v315
  %v1459 = vunpack.c.l.b16 %v316
  %v1460 = vunpack.c.l.b16 %v317
  %v1461 = vunpack.c.l.b16 %v318
  %v1462 = vunpack.c.l.b16 %v319
  %v1463 = vunpack.c.l.b16 %v320
  %v1464 = vunpack.c.l.b16 %v321
  %v1465 = vunpack.c.l.b16 %v322
  %v1466 = vunpack.c.l.b16 %v323
  %v1467 = vunpack.c.l.b16 %v324
  %v1468 = vunpack.c.l.b16 %v325
  %v1469 = vunpack.c.l.b16 %v326
  %v1470 = vunpack.c.l.b16 %v327
  %v1471 = vunpack.c.l.b16 %v328
  %v1472 = vunpack.c.l.b16 %v329
  %v1473 = vunpack.c.l.b16 %v330
  %v1474 = vunpack.c.l.b16 %v331
  %v1475 = vunpack.c.l.b16 %v332
  %v1476 = vunpack.c.l.b16 %v333
  %v1477 = vunpack.c.l.b16 %v334
  %v1478 = vunpack.c.l.b16 %v335
  %v1479 = vunpack.c.l.b16 %v336
  %v1480 = vunpack.c.l.b16 %v337
  %v1481 = vunpack.c.l.b16 %v338
  %v1482 = vunpack.c.l.b16 %v339
  %v1483 = vunpack.c.l.b16 %v340
  %v1484 = vunpack.c.l.b16 %v341
  %v1485 = vunpack.c.l.b16 %v342
  %v1486 = vunpack.c.l.b16 %v343
  %v1487 = vunpack.c.l.b16 %v344
  %v1488 = vunpack.c.l.b16 %v345
  %v1489 = vunpack.c.l.b16 %v346
  %v1490 = vunpack.c.l.b16 %v347
  %v1491 = vunpack.c.l.b16 %v348
  %v1492 = vunpack.c.l.b16 %v349
  %v1493 = vunpack.c.l.b16 %v350
  %v1494 = vunpack.c.l.b16 %v351
  %v1495 = vunpack.c.l.b16 %v352
  %v1496 = vunpack.c.l.b16 %v353
  %v1497 = vunpack.c.l.b16 %v354
  %v1498 = vunpack.c.l.b16 %v355
  %v1499 = vunpack.c.l.b16 %v356
  %v1500 = vunpack.c.l.b16 %v357
  %v1501 = vunpack.c.l.b16 %v358
  %v1502 = vunpack.c.l.b16 %v359
  %v1503 = vunpack.c.l.b16 %v360
  %v1504 = vunpack.c.l.b16 %v361
  %v1505 = vunpack.c.l.b16 %v362
  %v1506 = vunpack.c.l.b16 %v363
  %v1507 = vunpack.c.l.b16 %v364
  %v1508 = vunpack.c.l.b16 %v365
  %v1509 = vunpack.c.l.b16 %v366
  %v1510 = vunpack.c.l.b16 %v367
  %v1511 = vunpack.c.l.b16 %v368
  %v1512 = vunpack.c.l.b16 %v369
  %v1513 = vunpack.c.l.b16 %v370
  %v1514 = vunpack.c.l.b16 %v371
  %v1515 = vunpack.c.l.b16 %v372
  %v1516 = vunpack.c.l.b16 %v373
  %v1517 = vunpack.c.l.b16 %v374
  %v1518 = vunpack.c.l.b16 %v375
  %v1519 = vunpack.c.l.b16 %v376
  %v1520 = vunpack.c.l.b16 %v377
  %v1521 = vunpack.c.l.b16 %v378
  %v1522 = vunpack.c.l.b16 %v379
  %v1523 = vunpack.c.l.b16 %v380
  %v1524 = vunpack.c.l.b16 %v381
  %v1525 = vunpack.c.l.b16 %v382
  %v1526 = vunpack.c.l.b16 %v383
  %v1527 = vunpack.c.l.b16 %v384
  %v1528 = vunpack.c.l.b16 %v385
  %v1529 = vunpack.c.l.b16 %v386
  %v1530 = vunpack.c.l.b16 %v387
  %v1531 = vunpack.c.l.b16 %v388
  %v1532 = vunpack.c.l.b16 %v389
  %v1533 = vunpack.c.l.b16 %v390
  %v1534 = vunpack.c.l.b16 %v391
  %v1535 = vunpack.c.l.b16 %v392
  %v1536 = vunpack.c.l.b16 %v393
  %v1537 = vunpack.c.l.b16 %v394
  %v1538 = vunpack.c.l.b16 %v395
  %v1539 = vunpack.c.l.b16 %v396
  %v1540 = vunpack.c.l.b16 %v397
  %v1541 = vunpack.c.l.b16 %v398
  %v1542 = vunpack.c.l.b16 %v399
  %v1543 = vunpack.c.l.b16 %v400
  %v1544 = vunpack.c.l.b16 %v401
  %v1545 = vunpack.c.l.b16 %v402
  %v1546 = vunpack.c.l.b16 %v403
  %v1547 = vunpack.c.l.b16 %v404
  %v1548 = vunpack.c.l.b16 %v405
  %v1549 = vunpack.c.l.b16 %v406
  %v1550 = vunpack.c.l.b16 %v407
  %v1551 = vunpack.c.l.b16 %v408
  %v1552 = vunpack.c.l.b16 %v409
  %v1553 = vunpack.c.l.b16 %v410
  %v1554 = vunpack.c.l.b16 %v411
  %v1555 = vunpack.c.l.b16 %v412
  %v1556 = vunpack.c.l.b16 %v413
  %v1557 = vunpack.c.l.b16 %v414
  %v1558 = vunpack.c.l.b16 %v415
  %v1559 = vunpack.c.l.b16 %v416
  %v1560 = vunpack.c.l.b16 %v417
  %v1561 = vunpack.c.l.b16 %v418
  %v1562 = vunpack.c.l.b16 %v419
  %v1563 = vunpack.c.l.b16 %v420
  %v1564 = vunpack.c.l.b16 %v421
  %v1565 = vunpack.c.l.b16 %v422
  %v1566 = vunpack.c.l.b16 %v423
  %v1567 = vunpack.c.l.b16 %v424
  %v1568 = vunpack.c.l.b16 %v425
  %v1569 = vunpack.c.l.b16 %v426
  %v1570 = vunpack.c.l.b16 %v427
  %v1571 = vunpack.c.l.b16 %v428
  %v1572 = vunpack.c.l.b16 %v429
  %v1573 = vunpack.c.l.b16 %v430
  %v1574 = vunpack.c.l.b16 %v431
  %v1575 = vunpack.c.l.b16 %v432
  %v1576 = vunpack.c.l.b16 %v433
  %v1577 = vunpack.c.l.b16 %v434
  %v1578 = vunpack.c.l.b16 %v435
  %v1579 = vunpack.c.l.b16 %v436
  %v1580 = vunpack.c.l.b16 %v437
  %v1581 = vunpack.c.l.b16 %v438
  %v1582 = vunpack.c.l.b16 %v439
  %v1583 = vunpack.c.l.b16 %v440
  %v1584 = vunpack.c.l.b16 %v441
  %v1585 = vunpack.c.l.b16 %v442
  %v1586 = vunpack.c.l.b16 %v443
  %v1587 = vunpack.c.l.b16 %v444
  %v1588 = vunpack.c.l.b16 %v445
  %v1589 = vunpack.c.l.b16 %v446
  %v1590 = vunpack.c.l.b16 %v447
  %v1591 = vunpack.c.l.b16 %v448
  %v1592 = vunpack.c.l.b16 %v449
  %v1593 = vunpack.c.l.b16 %v450
  %v1594 = vunpack.c.l.b16 %v451
  %v1595 = vunpack.c.l.b16 %v452
  %v1596 = vunpack.c.l.b16 %v453
  %v1597 = vunpack.c.l.b16 %v454
  %v1598 = vunpack.c.l.b16 %v455
  %v1599 = vunpack.c.l.b16 %v456
  %v1600 = vunpack.c.l.b16 %v457
  %v1601 = vunpack.c.l.b16 %v458
  %v1602 = vunpack.c.l.b16 %v459
  %v1603 = vunpack.c.l.b16 %v460
  %v1604 = vunpack.c.l.b16 %v461
  %v1605 = vunpack.c.l.b16 %v462
  %v1606 = vunpack.c.l.b16 %v463
  %v1607 = vunpack.c.l.b16 %v464
  %v1608 = vunpack.c.l.b16 %v465
  %v1609 = vunpack.c.l.b16 %v466
  %v1610 = vunpack.c.l.b16 %v467
  %v1611 = vunpack.c.l.b16 %v468
  %v1612 = vunpack.c.l.b16 %v469
  %v1613 = vunpack.c.l.b16 %v470
  %v1614 = vunpack.c.l.b16 %v471
  %v1615 = vunpack.c.l.b16 %v472
  %v1616 = vunpack.c.l.b16 %v473
  %v1617 = vunpack.c.l.b16 %v474
  %v1618 = vunpack.c.l.b16 %v475
  %v1619 = vunpack.c.l.b16 %v476
  %v1620 = vunpack.c.l.b16 %v477
  %v1621 = vunpack.c.l.b16 %v478
  %v1622 = vunpack.c.l.b16 %v479
  %v1623 = vunpack.c.l.b16 %v480
  %v1624 = vunpack.c.l.b16 %v481
  %v1625 = vunpack.c.l.b16 %v482
  %v1626 = vunpack.c.l.b16 %v483
  %v1627 = vunpack.c.l.b16 %v484
  %v1628 = vunpack.c.l.b16 %v485
  %v1629 = vunpack.c.l.b16 %v486
  %v1630 = vunpack.c.l.b16 %v487
  %v1631 = vunpack.c.l.b16 %v488
  %v1632 = vunpack.c.l.b16 %v489
  %v1633 = vunpack.c.l.b16 %v490
  %v1634 = vunpack.c.l.b16 %v491
  %v1635 = vunpack.c.l.b16 %v492
  %v1636 = vunpack.c.l.b16 %v493
  %v1637 = vunpack.c.l.b16 %v494
  %v1638 = vunpack.c.l.b16 %v495
  %v1639 = vunpack.c.l.b16 %v496
  %v1640 = vunpack.c.l.b16 %v497
  %v1641 = vunpack.c.l.b16 %v498
  %v1642 = vunpack.c.l.b16 %v499
  %v1643 = vunpack.c.l.b16 %v500
  %v1644 = vunpack.c.l.b16 %v501
  %v1645 = vunpack.c.l.b16 %v502
  %v1646 = vunpack.c.l.b16 %v503
  %v1647 = vunpack.c.l.b16 %v504
  %v1648 = vunpack.c.l.b16 %v505
  %v1649 = vunpack.c.l.b16 %v506
  %v1650 = vunpack.c.l.b16 %v507
  %v1651 = vunpack.c.l.b16 %v508
  %v1652 = vunpack.c.l.b16 %v509
  %v1653 = vunpack.c.l.b16 %v510
  %v1654 = vunpack.c.l.b16 %v511
  %v1655 = vunpack.c.l.b16 %v512
  %v1656 = vunpack.c.l.b16 %v513
  %v1657 = vunpack.c.l.b16 %v514
  %v1658 = vunpack.c.l.b16 %v515
  %v1659 = vunpack.c.l.b16 %v516
  %v1660 = vunpack.c.l.b16 %v517
  %v1661 = vunpack.c.l.b16 %v518
  %v1662 = vunpack.c.l.b16 %v519
  %v1663 = vunpack.c.l.b16 %v520
  %v1664 = vunpack.c.l.b16 %v521
  %v1665 = vunpack.c.l.b16 %v522
  %v1666 = vunpack.c.l.b16 %v523
  %v1667 = vunpack.c.l.b16 %v524
  %v1668 = vunpack.c.l.b16 %v525
  %v1669 = vunpack.c.l.b16 %v526
  %v1670 = vunpack.c.l.b16 %v527
  %v1671 = vunpack.c.l.b16 %v528
  %v1672 = vunpack.c.l.b16 %v529
  %v1673 = vunpack.c.l.b16 %v530
  %v1674 = vunpack.c.l.b16 %v531
  %v1675 = vunpack.c.l.b16 %v532
  %v1676 = vunpack.c.l.b16 %v533
  %v1677 = vunpack.c.l.b16 %v534
  %v1678 = vunpack.c.l.b16 %v535
  %v1679 = vunpack.c.l.b16 %v536
  %v1680 = vunpack.c.l.b16 %v537
  %v1681 = vunpack.c.l.b16 %v538
  %v1682 = vunpack.c.l.b16 %v539
  %v1683 = vunpack.c.l.b16 %v540
  %v1684 = vunpack.c.l.b16 %v541
  %v1685 = vunpack.c.l.b16 %v542
  %v1686 = vpack.c.b16 %v1175, %v1174
  %v1687 = vpack.c.b16 %v1177, %v1176
  %v1688 = vpack.c.b16 %v1179, %v1178
  %v1689 = vpack.c.b16 %v1181, %v1180
  %v1690 = vpack.c.b16 %v1183, %v1182
  %v1691 = vpack.c.b16 %v1185, %v1184
  %v1692 = vpack.c.b16 %v1187, %v1186
  %v1693 = vpack.c.b16 %v1189, %v1188
  %v1694 = vpack.c.b16 %v1191, %v1190
  %v1695 = vpack.c.b16 %v1193, %v1192
  %v1696 = vpack.c.b16 %v1195, %v1194
  %v1697 = vpack.c.b16 %v1197, %v1196
  %v1698 = vpack.c.b16 %v1199, %v1198
  %v1699 = vpack.c.b16 %v1201, %v1200
  %v1700 = vpack.c.b16 %v1203, %v1202
  %v1701 = vpack.c.b16 %v1205, %v1204
  %v1702 = vpack.c.b16 %v1207, %v1206
  %v1703 = vpack.c.b16 %v1209, %v1208
  %v1704 = vpack.c.b16 %v1211, %v1210
  %v1705 = vpack.c.b16 %v1213, %v1212
  %v1706 = vpack.c.b16 %v1215, %v1214
  %v1707 = vpack.c.b16 %v1217, %v1216
  %v1708 = vpack.c.b16 %v1219, %v1218
  %v1709 = vpack.c.b16 %v1221, %v1220
  %v1710 = vpack.c.b16 %v1223, %v1222
  %v1711 = vpack.c.b16 %v1225, %v1224
  %v1712 = vpack.c.b16 %v1227, %v1226
  %v1713 = vpack.c.b16 %v1229, %v1228
  %v1714 = vpack.c.b16 %v1231, %v1230
  %v1715 = vpack.c.b16 %v1233, %v1232
  %v1716 = vpack.c.b16 %v1235, %v1234
  %v1717 = vpack.c.b16 %v1237, %v1236
  %v1718 = vpack.c.b16 %v1239, %v1238
  %v1719 = vpack.c.b16 %v1241, %v1240
  %v1720 = vpack.c.b16 %v1243, %v1242
  %v1721 = vpack.c.b16 %v1245, %v1244
  %v1722 = vpack.c.b16 %v1247, %v1246
  %v1723 = vpack.c.b16 %v1249, %v1248
  %v1724 = vpack.c.b16 %v1251, %v1250
  %v1725 = vpack.c.b16 %v1253, %v1252
  %v1726 = vpack.c.b16 %v1255, %v1254
  %v1727 = vpack.c.b16 %v1257, %v1256
  %v1728 = vpack.c.b16 %v1259, %v1258
  %v1729 = vpack.c.b16 %v1261, %v1260
  %v1730 = vpack.c.b16 %v1263, %v1262
  %v1731 = vpack.c.b16 %v1265, %v1264
  %v1732 = vpack.c.b16 %v1267, %v1266
  %v1733 = vpack.c.b16 %v1269, %v1268
  %v1734 = vpack.c.b16 %v1271, %v1270
  %v1735 = vpack.c.b16 %v1273, %v1272
  %v1736 = vpack.c.b16 %v1275, %v1274
  %v1737 = vpack.c.b16 %v1277, %v1276
  %v1738 = vpack.c.b16 %v1279, %v1278
  %v1739 = vpack.c.b16 %v1281, %v1280
  %v1740 = vpack.c.b16 %v1283, %v1282
  %v1741 = vpack.c.b16 %v1285, %v1284
  %v1742 = vpack.c.b16 %v1287, %v1286
  %v1743 = vpack.c.b16 %v1289, %v1288
  %v1744 = vpack.c.b16 %v1291, %v1290
  %v1745 = vpack.c.b16 %v1293, %v1292
  %v1746 = vpack.c.b16 %v1295, %v1294
  %v1747 = vpack.c.b16 %v1297, %v1296
  %v1748 = vpack.c.b16 %v1299, %v1298
  %v1749 = vpack.c.b16 %v1301, %v1300
  %v1750 = vpack.c.b16 %v1303, %v1302
  %v1751 = vpack.c.b16 %v1305, %v1304
  %v1752 = vpack.c.b16 %v1307, %v1306
  %v1753 = vpack.c.b16 %v1309, %v1308
  %v1754 = vpack.c.b16 %v1311, %v1310
  %v1755 = vpack.c.b16 %v1313, %v1312
  %v1756 = vpack.c.b16 %v1315, %v1314
  %v1757 = vpack.c.b16 %v1317, %v1316
  %v1758 = vpack.c.b16 %v1319, %v1318
  %v1759 = vpack.c.b16 %v1321, %v1320
  %v1760 = vpack.c.b16 %v1323, %v1322
  %v1761 = vpack.c.b16 %v1325, %v1324
  %v1762 = vpack.c.b16 %v1327, %v1326
  %v1763 = vpack.c.b16 %v1329, %v1328
  %v1764 = vpack.c.b16 %v1331, %v1330
  %v1765 = vpack.c.b16 %v1333, %v1332
  %v1766 = vpack.c.b16 %v1335, %v1334
  %v1767 = vpack.c.b16 %v1337, %v1336
  %v1768 = vpack.c.b16 %v1339, %v1338
  %v1769 = vpack.c.b16 %v1341, %v1340
  %v1770 = vpack.c.b16 %v1343, %v1342
  %v1771 = vpack.c.b16 %v1345, %v1344
  %v1772 = vpack.c.b16 %v1347, %v1346
  %v1773 = vpack.c.b16 %v1349, %v1348
  %v1774 = vpack.c.b16 %v1351, %v1350
  %v1775 = vpack.c.b16 %v1353, %v1352
  %v1776 = vpack.c.b16 %v1355, %v1354
  %v1777 = vpack.c.b16 %v1357, %v1356
  %v1778 = vpack.c.b16 %v1359, %v1358
  %v1779 = vpack.c.b16 %v1361, %v1360
  %v1780 = vpack.c.b16 %v1363, %v1362
  %v1781 = vpack.c.b16 %v1365, %v1364
  %v1782 = vpack.c.b16 %v1367, %v1366
  %v1783 = vpack.c.b16 %v1369, %v1368
  %v1784 = vpack.c.b16 %v1371, %v1370
  %v1785 = vpack.c.b16 %v1373, %v1372
  %v1786 = vpack.c.b16 %v1375, %v1374
  %v1787 = vpack.c.b16 %v1377, %v1376
  %v1788 = vpack.c.b16 %v1379, %v1378
  %v1789 = vpack.c.b16 %v1381, %v1380
  %v1790 = vpack.c.b16 %v1383, %v1382
  %v1791 = vpack.c.b16 %v1385, %v1384
  %v1792 = vpack.c.b16 %v1387, %v1386
  %v1793 = vpack.c.b16 %v1389, %v1388
  %v1794 = vpack.c.b16 %v1391, %v1390
  %v1795 = vpack.c.b16 %v1393, %v1392
  %v1796 = vpack.c.b16 %v1395, %v1394
  %v1797 = vpack.c.b16 %v1397, %v1396
  %v1798 = vpack.c.b16 %v1399, %v1398
  %v1799 = vpack.c.b16 %v1401, %v1400
  %v1800 = vpack.c.b16 %v1403, %v1402
  %v1801 = vpack.c.b16 %v1405, %v1404
  %v1802 = vpack.c.b16 %v1407, %v1406
  %v1803 = vpack.c.b16 %v1409, %v1408
  %v1804 = vpack.c.b16 %v1411, %v1410
  %v1805 = vpack.c.b16 %v1413, %v1412
  %v1806 = vpack.c.b16 %v1415, %v1414
  %v1807 = vpack.c.b16 %v1417, %v1416
  %v1808 = vpack.c.b16 %v1419, %v1418
  %v1809 = vpack.c.b16 %v1421, %v1420
  %v1810 = vpack.c.b16 %v1423, %v1422
  %v1811 = vpack.c.b16 %v1425, %v1424
  %v1812 = vpack.c.b16 %v1427, %v1426
  %v1813 = vpack.c.b16 %v1429, %v1428
  %v1814 = vpack.c.b16 %v1431, %v1430
  %v1815 = vpack.c.b16 %v1433, %v1432
  %v1816 = vpack.c.b16 %v1435, %v1434
  %v1817 = vpack.c.b16 %v1437, %v1436
  %v1818 = vpack.c.b16 %v1439, %v1438
  %v1819 = vpack.c.b16 %v1441, %v1440
  %v1820 = vpack.c.b16 %v1443, %v1442
  %v1821 = vpack.c.b16 %v1445, %v1444
  %v1822 = vpack.c.b16 %v1447, %v1446
  %v1823 = vpack.c.b16 %v1449, %v1448
  %v1824 = vpack.c.b16 %v1451, %v1450
  %v1825 = vpack.c.b16 %v1453, %v1452
  %v1826 = vpack.c.b16 %v1455, %v1454
  %v1827 = vpack.c.b16 %v1457, %v1456
  %v1828 = vpack.c.b16 %v1459, %v1458
  %v1829 = vpack.c.b16 %v1461, %v1460
  %v1830 = vpack.c.b16 %v1463, %v1462
  %v1831 = vpack.c.b16 %v1465, %v1464
  %v1832 = vpack.c.b16 %v1467, %v1466
  %v1833 = vpack.c.b16 %v1469, %v1468
  %v1834 = vpack.c.b16 %v1471, %v1470
  %v1835 = vpack.c.b16 %v1473, %v1472
  %v1836 = vpack.c.b16 %v1475, %v1474
  %v1837 = vpack.c.b16 %v1477, %v1476
  %v1838 = vpack.c.b16 %v1479, %v1478
  %v1839 = vpack.c.b16 %v1481, %v1480
  %v1840 = vpack.c.b16 %v1483, %v1482
  %v1841 = vpack.c.b16 %v1485, %v1484
  %v1842 = vpack.c.b16 %v1487, %v1486
  %v1843 = vpack.c.b16 %v1489, %v1488
  %v1844 = vpack.c.b16 %v1491, %v1490
  %v1845 = vpack.c.b16 %v1493, %v1492
  %v1846 = vpack.c.b16 %v1495, %v1494
  %v1847 = vpack.c.b16 %v1497, %v1496
  %v1848 = vpack.c.b16 %v1499, %v1498
  %v1849 = vpack.c.b16 %v1501, %v1500
  %v1850 = vpack.c.b16 %v1503, %v1502
  %v1851 = vpack.c.b16 %v1505, %v1504
  %v1852 = vpack.c.b16 %v1507, %v1506
  %v1853 = vpack.c.b16 %v1509, %v1508
  %v1854 = vpack.c.b16 %v1511, %v1510
  %v1855 = vpack.c.b16 %v1513, %v1512
  %v1856 = vpack.c.b16 %v1515, %v1514
  %v1857 = vpack.c.b16 %v1517, %v1516
  %v1858 = vpack.c.b16 %v1519, %v1518
  %v1859 = vpack.c.b16 %v1521, %v1520
  %v1860 = vpack.c.b16 %v1523, %v1522
  %v1861 = vpack.c.b16 %v1525, %v1524
  %v1862 = vpack.c.b16 %v1527, %v1526
  %v1863 = vpack.c.b16 %v1529, %v1528
  %v1864 = vpack.c.b16 %v1531, %v1530
  %v1865 = vpack.c.b16 %v1533, %v1532
  %v1866 = vpack.c.b16 %v1535, %v1534
  %v1867 = vpack.c.b16 %v1537, %v1536
  %v1868 = vpack.c.b16 %v1539, %v1538
  %v1869 = vpack.c.b16 %v1541, %v1540
  %v1870 = vpack.c.b16 %v1543, %v1542
  %v1871 = vpack.c.b16 %v1545, %v1544
  %v1872 = vpack.c.b16 %v1547, %v1546
  %v1873 = vpack.c.b16 %v1549, %v1548
  %v1874 = vpack.c.b16 %v1551, %v1550
  %v1875 = vpack.c.b16 %v1553, %v1552
  %v1876 = vpack.c.b16 %v1555, %v1554
  %v1877 = vpack.c.b16 %v1557, %v1556
  %v1878 = vpack.c.b16 %v1559, %v1558
  %v1879 = vpack.c.b16 %v1561, %v1560
  %v1880 = vpack.c.b16 %v1563, %v1562
  %v1881 = vpack.c.b16 %v1565, %v1564
  %v1882 = vpack.c.b16 %v1567, %v1566
  %v1883 = vpack.c.b16 %v1569, %v1568
  %v1884 = vpack.c.b16 %v1571, %v1570
  %v1885 = vpack.c.b16 %v1573, %v1572
  %v1886 = vpack.c.b16 %v1575, %v1574
  %v1887 = vpack.c.b16 %v1577, %v1576
  %v1888 = vpack.c.b16 %v1579, %v1578
  %v1889 = vpack.c.b16 %v1581, %v1580
  %v1890 = vpack.c.b16 %v1583, %v1582
  %v1891 = vpack.c.b16 %v1585, %v1584
  %v1892 = vpack.c.b16 %v1587, %v1586
  %v1893 = vpack.c.b16 %v1589, %v1588
  %v1894 = vpack.c.b16 %v1591, %v1590
  %v1895 = vpack.c.b16 %v1593, %v1592
  %v1896 = vpack.c.b16 %v1595, %v1594
  %v1897 = vpack.c.b16 %v1597, %v1596
  %v1898 = vpack.c.b16 %v1599, %v1598
  %v1899 = vpack.c.b16 %v1601, %v1600
  %v1900 = vpack.c.b16 %v1603, %v1602
  %v1901 = vpack.c.b16 %v1605, %v1604
  %v1902 = vpack.c.b16 %v1607, %v1606
  %v1903 = vpack.c.b16 %v1609, %v1608
  %v1904 = vpack.c.b16 %v1611, %v1610
  %v1905 = vpack.c.b16 %v1613, %v1612
  %v1906 = vpack.c.b16 %v1615, %v1614
  %v1907 = vpack.c.b16 %v1617, %v1616
  %v1908 = vpack.c.b16 %v1619, %v1618
  %v1909 = vpack.c.b16 %v1621, %v1620
  %v1910 = vpack.c.b16 %v1623, %v1622
  %v1911 = vpack.c.b16 %v1625, %v1624
  %v1912 = vpack.c.b16 %v1627, %v1626
  %v1913 = vpack.c.b16 %v1629, %v1628
  %v1914 = vpack.c.b16 %v1631, %v1630
  %v1915 = vpack.c.b16 %v1633, %v1632
  %v1916 = vpack.c.b16 %v1635, %v1634
  %v1917 = vpack.c.b16 %v1637, %v1636
  %v1918 = vpack.c.b16 %v1639, %v1638
  %v1919 = vpack.c.b16 %v1641, %v1640
  %v1920 = vpack.c.b16 %v1643, %v1642
  %v1921 = vpack.c.b16 %v1645, %v1644
  %v1922 = vpack.c.b16 %v1647, %v1646
  %v1923 = vpack.c.b16 %v1649, %v1648
  %v1924 = vpack.c.b16 %v1651, %v1650
  %v1925 = vpack.c.b16 %v1653, %v1652
  %v1926 = vpack.c.b16 %v1655, %v1654
  %v1927 = vpack.c.b16 %v1657, %v1656
  %v1928 = vpack.c.b16 %v1659, %v1658
  %v1929 = vpack.c.b16 %v1661, %v1660
  %v1930 = vpack.c.b16 %v1663, %v1662
  %v1931 = vpack.c.b16 %v1665, %v1664
  %v1932 = vpack.c.b16 %v1667, %v1666
  %v1933 = vpack.c.b16 %v1669, %v1668
  %v1934 = vpack.c.b16 %v1671, %v1670
  %v1935 = vpack.c.b16 %v1673, %v1672
  %v1936 = vpack.c.b16 %v1675, %v1674
  %v1937 = vpack.c.b16 %v1677, %v1676
  %v1938 = vpack.c.b16 %v1679, %v1678
  %v1939 = vpack.c.b16 %v1681, %v1680
  %v1940 = vpack.c.b16 %v1683, %v1682
  %v1941 = vpack.c.b16 %v1685, %v1684
  %2198 = vmatprep.subr.bf16.mxu0 0
  %2199 = vmatpush1.bf16.msra.mxu0 %v1686
  %2200 = vmatprep.subr.bf16.mxu0 0
  %2201 = vmatpush1.bf16.msra.mxu0 %v1687
  %2202 = vmatprep.subr.bf16.mxu0 0
  %2203 = vmatpush1.bf16.msra.mxu0 %v1688
  %2204 = vmatprep.subr.bf16.mxu0 0
  %2205 = vmatpush1.bf16.msra.mxu0 %v1689
  %2206 = vmatprep.subr.bf16.mxu0 0
  %2207 = vmatpush1.bf16.msra.mxu0 %v1690
  %2208 = vmatprep.subr.bf16.mxu0 0
  %2209 = vmatpush1.bf16.msra.mxu0 %v1691
  %2210 = vmatprep.subr.bf16.mxu0 0
  %2211 = vmatpush1.bf16.msra.mxu0 %v1692
  %2212 = vmatprep.subr.bf16.mxu0 0
  %2213 = vmatpush1.bf16.msra.mxu0 %v1693
  %2214 = vmatprep.subr.bf16.mxu0 0
  %2215 = vmatpush1.bf16.msra.mxu0 %v1694
  %2216 = vmatprep.subr.bf16.mxu0 0
  %2217 = vmatpush1.bf16.msra.mxu0 %v1695
  %2218 = vmatprep.subr.bf16.mxu0 0
  %2219 = vmatpush1.bf16.msra.mxu0 %v1696
  %2220 = vmatprep.subr.bf16.mxu0 0
  %2221 = vmatpush1.bf16.msra.mxu0 %v1697
  %2222 = vmatprep.subr.bf16.mxu0 0
  %2223 = vmatpush1.bf16.msra.mxu0 %v1698
  %2224 = vmatprep.subr.bf16.mxu0 0
  %2225 = vmatpush1.bf16.msra.mxu0 %v1699
  %2226 = vmatprep.subr.bf16.mxu0 0
  %2227 = vmatpush1.bf16.msra.mxu0 %v1700
  %2228 = vmatprep.subr.bf16.mxu0 0
  %2229 = vmatpush1.bf16.msra.mxu0 %v1701
  %2230 = vmatprep.mubr.bf16.mxu0 %v599
  %2231 = vmatmul.mubr.bf16.gmra.mrb[0].mxu0 %v598
  %v2232 = vpop.f32.mrb[0].mxu0
  %v2233 = vadd.f32 %v548, %v2232
  %v2234 = vpop.f32.mrb[0].mxu0
  %v2235 = vpop.f32.mrb[0].mxu0
  %v2236 = vpop.f32.mrb[0].mxu0
  %2237 = vdwg.mxu0
  %2238 = vmatprep.subr.bf16.mxu0 0
  %2239 = vmatpush1.bf16.msra.mxu0 %v1702
  %2240 = vmatprep.subr.bf16.mxu0 0
  %2241 = vmatpush1.bf16.msra.mxu0 %v1703
  %2242 = vmatprep.subr.bf16.mxu0 0
  %2243 = vmatpush1.bf16.msra.mxu0 %v1704
  %2244 = vmatprep.subr.bf16.mxu0 0
  %2245 = vmatpush1.bf16.msra.mxu0 %v1705
  %2246 = vmatprep.subr.bf16.mxu0 0
  %2247 = vmatpush1.bf16.msra.mxu0 %v1706
  %2248 = vmatprep.subr.bf16.mxu0 0
  %2249 = vmatpush1.bf16.msra.mxu0 %v1707
  %2250 = vmatprep.subr.bf16.mxu0 0
  %2251 = vmatpush1.bf16.msra.mxu0 %v1708
  %2252 = vmatprep.subr.bf16.mxu0 0
  %2253 = vmatpush1.bf16.msra.mxu0 %v1709
  %2254 = vmatprep.subr.bf16.mxu0 0
  %2255 = vmatpush1.bf16.msra.mxu0 %v1710
  %2256 = vmatprep.subr.bf16.mxu0 0
  %2257 = vmatpush1.bf16.msra.mxu0 %v1711
  %2258 = vmatprep.subr.bf16.mxu0 0
  %2259 = vmatpush1.bf16.msra.mxu0 %v1712
  %2260 = vmatprep.subr.bf16.mxu0 0
  %2261 = vmatpush1.bf16.msra.mxu0 %v1713
  %2262 = vmatprep.subr.bf16.mxu0 0
  %2263 = vmatpush1.bf16.msra.mxu0 %v1714
  %2264 = vmatprep.subr.bf16.mxu0 0
  %2265 = vmatpush1.bf16.msra.mxu0 %v1715
  %2266 = vmatprep.subr.bf16.mxu0 0
  %2267 = vmatpush1.bf16.msra.mxu0 %v1716
  %2268 = vmatprep.subr.bf16.mxu0 0
  %2269 = vmatpush1.bf16.msra.mxu0 %v1717
  %2270 = vmatprep.mubr.bf16.mxu0 %v601
  %2271 = vmatmul.mubr.bf16.gmra.mrb[0].mxu0 %v600
  %v2272 = vpop.f32.mrb[0].mxu0
  %v2273 = vadd.f32 %v2233, %v2272
  %v2274 = vpop.f32.mrb[0].mxu0
  %v2275 = vpop.f32.mrb[0].mxu0
  %v2276 = vpop.f32.mrb[0].mxu0
  %2277 = vdwg.mxu0
  %2278 = vmatprep.subr.bf16.mxu0 0
  %2279 = vmatpush1.bf16.msra.mxu0 %v1718
  %2280 = vmatprep.subr.bf16.mxu0 0
  %2281 = vmatpush1.bf16.msra.mxu0 %v1719
  %2282 = vmatprep.subr.bf16.mxu0 0
  %2283 = vmatpush1.bf16.msra.mxu0 %v1720
  %2284 = vmatprep.subr.bf16.mxu0 0
  %2285 = vmatpush1.bf16.msra.mxu0 %v1721
  %2286 = vmatprep.subr.bf16.mxu0 0
  %2287 = vmatpush1.bf16.msra.mxu0 %v1722
  %2288 = vmatprep.subr.bf16.mxu0 0
  %2289 = vmatpush1.bf16.msra.mxu0 %v1723
  %2290 = vmatprep.subr.bf16.mxu0 0
  %2291 = vmatpush1.bf16.msra.mxu0 %v1724
  %2292 = vmatprep.subr.bf16.mxu0 0
  %2293 = vmatpush1.bf16.msra.mxu0 %v1725
  %2294 = vmatprep.subr.bf16.mxu0 0
  %2295 = vmatpush1.bf16.msra.mxu0 %v1726
  %2296 = vmatprep.subr.bf16.mxu0 0
  %2297 = vmatpush1.bf16.msra.mxu0 %v1727
  %2298 = vmatprep.subr.bf16.mxu0 0
  %2299 = vmatpush1.bf16.msra.mxu0 %v1728
  %2300 = vmatprep.subr.bf16.mxu0 0
  %2301 = vmatpush1.bf16.msra.mxu0 %v1729
  %2302 = vmatprep.subr.bf16.mxu0 0
  %2303 = vmatpush1.bf16.msra.mxu0 %v1730
  %2304 = vmatprep.subr.bf16.mxu0 0
  %2305 = vmatpush1.bf16.msra.mxu0 %v1731
  %2306 = vmatprep.subr.bf16.mxu0 0
  %2307 = vmatpush1.bf16.msra.mxu0 %v1732
  %2308 = vmatprep.subr.bf16.mxu0 0
  %2309 = vmatpush1.bf16.msra.mxu0 %v1733
  %2310 = vmatprep.mubr.bf16.mxu0 %v603
  %2311 = vmatmul.mubr.bf16.gmra.mrb[0].mxu0 %v602
  %v2312 = vpop.f32.mrb[0].mxu0
  %v2313 = vadd.f32 %v2273, %v2312
  %v2314 = vpop.f32.mrb[0].mxu0
  %v2315 = vpop.f32.mrb[0].mxu0
  %v2316 = vpop.f32.mrb[0].mxu0
  %2317 = vdwg.mxu0
  %2318 = vmatprep.subr.bf16.mxu0 0
  %2319 = vmatpush1.bf16.msra.mxu0 %v1734
  %2320 = vmatprep.subr.bf16.mxu0 0
  %2321 = vmatpush1.bf16.msra.mxu0 %v1735
  %2322 = vmatprep.subr.bf16.mxu0 0
  %2323 = vmatpush1.bf16.msra.mxu0 %v1736
  %2324 = vmatprep.subr.bf16.mxu0 0
  %2325 = vmatpush1.bf16.msra.mxu0 %v1737
  %2326 = vmatprep.subr.bf16.mxu0 0
  %2327 = vmatpush1.bf16.msra.mxu0 %v1738
  %2328 = vmatprep.subr.bf16.mxu0 0
  %2329 = vmatpush1.bf16.msra.mxu0 %v1739
  %2330 = vmatprep.subr.bf16.mxu0 0
  %2331 = vmatpush1.bf16.msra.mxu0 %v1740
  %2332 = vmatprep.subr.bf16.mxu0 0
  %2333 = vmatpush1.bf16.msra.mxu0 %v1741
  %2334 = vmatprep.subr.bf16.mxu0 0
  %2335 = vmatpush1.bf16.msra.mxu0 %v1742
  %2336 = vmatprep.subr.bf16.mxu0 0
  %2337 = vmatpush1.bf16.msra.mxu0 %v1743
  %2338 = vmatprep.subr.bf16.mxu0 0
  %2339 = vmatpush1.bf16.msra.mxu0 %v1744
  %2340 = vmatprep.subr.bf16.mxu0 0
  %2341 = vmatpush1.bf16.msra.mxu0 %v1745
  %2342 = vmatprep.subr.bf16.mxu0 0
  %2343 = vmatpush1.bf16.msra.mxu0 %v1746
  %2344 = vmatprep.subr.bf16.mxu0 0
  %2345 = vmatpush1.bf16.msra.mxu0 %v1747
  %2346 = vmatprep.subr.bf16.mxu0 0
  %2347 = vmatpush1.bf16.msra.mxu0 %v1748
  %2348 = vmatprep.subr.bf16.mxu0 0
  %2349 = vmatpush1.bf16.msra.mxu0 %v1749
  %2350 = vmatprep.mubr.bf16.mxu0 %v605
  %2351 = vmatmul.mubr.bf16.gmra.mrb[0].mxu0 %v604
  %v2352 = vpop.f32.mrb[0].mxu0
  %v2353 = vadd.f32 %v2313, %v2352
  %v2354 = vpop.f32.mrb[0].mxu0
  %v2355 = vpop.f32.mrb[0].mxu0
  %v2356 = vpop.f32.mrb[0].mxu0
  %2357 = vdwg.mxu0
  %2358 = vmatprep.subr.bf16.mxu0 0
  %2359 = vmatpush1.bf16.msra.mxu0 %v1750
  %2360 = vmatprep.subr.bf16.mxu0 0
  %2361 = vmatpush1.bf16.msra.mxu0 %v1751
  %2362 = vmatprep.subr.bf16.mxu0 0
  %2363 = vmatpush1.bf16.msra.mxu0 %v1752
  %2364 = vmatprep.subr.bf16.mxu0 0
  %2365 = vmatpush1.bf16.msra.mxu0 %v1753
  %2366 = vmatprep.subr.bf16.mxu0 0
  %2367 = vmatpush1.bf16.msra.mxu0 %v1754
  %2368 = vmatprep.subr.bf16.mxu0 0
  %2369 = vmatpush1.bf16.msra.mxu0 %v1755
  %2370 = vmatprep.subr.bf16.mxu0 0
  %2371 = vmatpush1.bf16.msra.mxu0 %v1756
  %2372 = vmatprep.subr.bf16.mxu0 0
  %2373 = vmatpush1.bf16.msra.mxu0 %v1757
  %2374 = vmatprep.subr.bf16.mxu0 0
  %2375 = vmatpush1.bf16.msra.mxu0 %v1758
  %2376 = vmatprep.subr.bf16.mxu0 0
  %2377 = vmatpush1.bf16.msra.mxu0 %v1759
  %2378 = vmatprep.subr.bf16.mxu0 0
  %2379 = vmatpush1.bf16.msra.mxu0 %v1760
  %2380 = vmatprep.subr.bf16.mxu0 0
  %2381 = vmatpush1.bf16.msra.mxu0 %v1761
  %2382 = vmatprep.subr.bf16.mxu0 0
  %2383 = vmatpush1.bf16.msra.mxu0 %v1762
  %2384 = vmatprep.subr.bf16.mxu0 0
  %2385 = vmatpush1.bf16.msra.mxu0 %v1763
  %2386 = vmatprep.subr.bf16.mxu0 0
  %2387 = vmatpush1.bf16.msra.mxu0 %v1764
  %2388 = vmatprep.subr.bf16.mxu0 0
  %2389 = vmatpush1.bf16.msra.mxu0 %v1765
  %2390 = vmatprep.mubr.bf16.mxu0 %v607
  %2391 = vmatmul.mubr.bf16.gmra.mrb[0].mxu0 %v606
  %v2392 = vpop.f32.mrb[0].mxu0
  %v2393 = vadd.f32 %v2353, %v2392
  %v2394 = vpop.f32.mrb[0].mxu0
  %v2395 = vpop.f32.mrb[0].mxu0
  %v2396 = vpop.f32.mrb[0].mxu0
  %2397 = vdwg.mxu0
  %2398 = vmatprep.subr.bf16.mxu0 0
  %2399 = vmatpush1.bf16.msra.mxu0 %v1766
  %2400 = vmatprep.subr.bf16.mxu0 0
  %2401 = vmatpush1.bf16.msra.mxu0 %v1767
  %2402 = vmatprep.subr.bf16.mxu0 0
  %2403 = vmatpush1.bf16.msra.mxu0 %v1768
  %2404 = vmatprep.subr.bf16.mxu0 0
  %2405 = vmatpush1.bf16.msra.mxu0 %v1769
  %2406 = vmatprep.subr.bf16.mxu0 0
  %2407 = vmatpush1.bf16.msra.mxu0 %v1770
  %2408 = vmatprep.subr.bf16.mxu0 0
  %2409 = vmatpush1.bf16.msra.mxu0 %v1771
  %2410 = vmatprep.subr.bf16.mxu0 0
  %2411 = vmatpush1.bf16.msra.mxu0 %v1772
  %2412 = vmatprep.subr.bf16.mxu0 0
  %2413 = vmatpush1.bf16.msra.mxu0 %v1773
  %2414 = vmatprep.subr.bf16.mxu0 0
  %2415 = vmatpush1.bf16.msra.mxu0 %v1774
  %2416 = vmatprep.subr.bf16.mxu0 0
  %2417 = vmatpush1.bf16.msra.mxu0 %v1775
  %2418 = vmatprep.subr.bf16.mxu0 0
  %2419 = vmatpush1.bf16.msra.mxu0 %v1776
  %2420 = vmatprep.subr.bf16.mxu0 0
  %2421 = vmatpush1.bf16.msra.mxu0 %v1777
  %2422 = vmatprep.subr.bf16.mxu0 0
  %2423 = vmatpush1.bf16.msra.mxu0 %v1778
  %2424 = vmatprep.subr.bf16.mxu0 0
  %2425 = vmatpush1.bf16.msra.mxu0 %v1779
  %2426 = vmatprep.subr.bf16.mxu0 0
  %2427 = vmatpush1.bf16.msra.mxu0 %v1780
  %2428 = vmatprep.subr.bf16.mxu0 0
  %2429 = vmatpush1.bf16.msra.mxu0 %v1781
  %2430 = vmatprep.mubr.bf16.mxu0 %v609
  %2431 = vmatmul.mubr.bf16.gmra.mrb[0].mxu0 %v608
  %v2432 = vpop.f32.mrb[0].mxu0
  %v2433 = vadd.f32 %v2393, %v2432
  %v2434 = vpop.f32.mrb[0].mxu0
  %v2435 = vpop.f32.mrb[0].mxu0
  %v2436 = vpop.f32.mrb[0].mxu0
  %2437 = vdwg.mxu0
  %2438 = vmatprep.subr.bf16.mxu0 0
  %2439 = vmatpush1.bf16.msra.mxu0 %v1782
  %2440 = vmatprep.subr.bf16.mxu0 0
  %2441 = vmatpush1.bf16.msra.mxu0 %v1783
  %2442 = vmatprep.subr.bf16.mxu0 0
  %2443 = vmatpush1.bf16.msra.mxu0 %v1784
  %2444 = vmatprep.subr.bf16.mxu0 0
  %2445 = vmatpush1.bf16.msra.mxu0 %v1785
  %2446 = vmatprep.subr.bf16.mxu0 0
  %2447 = vmatpush1.bf16.msra.mxu0 %v1786
  %2448 = vmatprep.subr.bf16.mxu0 0
  %2449 = vmatpush1.bf16.msra.mxu0 %v1787
  %2450 = vmatprep.subr.bf16.mxu0 0
  %2451 = vmatpush1.bf16.msra.mxu0 %v1788
  %2452 = vmatprep.subr.bf16.mxu0 0
  %2453 = vmatpush1.bf16.msra.mxu0 %v1789
  %2454 = vmatprep.subr.bf16.mxu0 0
  %2455 = vmatpush1.bf16.msra.mxu0 %v1790
  %2456 = vmatprep.subr.bf16.mxu0 0
  %2457 = vmatpush1.bf16.msra.mxu0 %v1791
  %2458 = vmatprep.subr.bf16.mxu0 0
  %2459 = vmatpush1.bf16.msra.mxu0 %v1792
  %2460 = vmatprep.subr.bf16.mxu0 0
  %2461 = vmatpush1.bf16.msra.mxu0 %v1793
  %2462 = vmatprep.subr.bf16.mxu0 0
  %2463 = vmatpush1.bf16.msra.mxu0 %v1794
  %2464 = vmatprep.subr.bf16.mxu0 0
  %2465 = vmatpush1.bf16.msra.mxu0 %v1795
  %2466 = vmatprep.subr.bf16.mxu0 0
  %2467 = vmatpush1.bf16.msra.mxu0 %v1796
  %2468 = vmatprep.subr.bf16.mxu0 0
  %2469 = vmatpush1.bf16.msra.mxu0 %v1797
  %2470 = vmatprep.mubr.bf16.mxu0 %v611
  %2471 = vmatmul.mubr.bf16.gmra.mrb[0].mxu0 %v610
  %v2472 = vpop.f32.mrb[0].mxu0
  %v2473 = vadd.f32 %v2433, %v2472
  %v2474 = vpop.f32.mrb[0].mxu0
  %v2475 = vpop.f32.mrb[0].mxu0
  %v2476 = vpop.f32.mrb[0].mxu0
  %2477 = vdwg.mxu0
  %2478 = vmatprep.subr.bf16.mxu0 0
  %2479 = vmatpush1.bf16.msra.mxu0 %v1798
  %2480 = vmatprep.subr.bf16.mxu0 0
  %2481 = vmatpush1.bf16.msra.mxu0 %v1799
  %2482 = vmatprep.subr.bf16.mxu0 0
  %2483 = vmatpush1.bf16.msra.mxu0 %v1800
  %2484 = vmatprep.subr.bf16.mxu0 0
  %2485 = vmatpush1.bf16.msra.mxu0 %v1801
  %2486 = vmatprep.subr.bf16.mxu0 0
  %2487 = vmatpush1.bf16.msra.mxu0 %v1802
  %2488 = vmatprep.subr.bf16.mxu0 0
  %2489 = vmatpush1.bf16.msra.mxu0 %v1803
  %2490 = vmatprep.subr.bf16.mxu0 0
  %2491 = vmatpush1.bf16.msra.mxu0 %v1804
  %2492 = vmatprep.subr.bf16.mxu0 0
  %2493 = vmatpush1.bf16.msra.mxu0 %v1805
  %2494 = vmatprep.subr.bf16.mxu0 0
  %2495 = vmatpush1.bf16.msra.mxu0 %v1806
  %2496 = vmatprep.subr.bf16.mxu0 0
  %2497 = vmatpush1.bf16.msra.mxu0 %v1807
  %2498 = vmatprep.subr.bf16.mxu0 0
  %2499 = vmatpush1.bf16.msra.mxu0 %v1808
  %2500 = vmatprep.subr.bf16.mxu0 0
  %2501 = vmatpush1.bf16.msra.mxu0 %v1809
  %2502 = vmatprep.subr.bf16.mxu0 0
  %2503 = vmatpush1.bf16.msra.mxu0 %v1810
  %2504 = vmatprep.subr.bf16.mxu0 0
  %2505 = vmatpush1.bf16.msra.mxu0 %v1811
  %2506 = vmatprep.subr.bf16.mxu0 0
  %2507 = vmatpush1.bf16.msra.mxu0 %v1812
  %2508 = vmatprep.subr.bf16.mxu0 0
  %2509 = vmatpush1.bf16.msra.mxu0 %v1813
  %2510 = vmatprep.mubr.bf16.mxu0 %v613
  %2511 = vmatmul.mubr.bf16.gmra.mrb[0].mxu0 %v612
  %v2512 = vpop.f32.mrb[0].mxu0
  %v2513 = vadd.f32 %v2473, %v2512
  %v2514 = vpop.f32.mrb[0].mxu0
  %v2515 = vpop.f32.mrb[0].mxu0
  %v2516 = vpop.f32.mrb[0].mxu0
  %2517 = vdwg.mxu0
  %2518 = vmatprep.subr.bf16.mxu0 0
  %2519 = vmatpush1.bf16.msra.mxu0 %v1814
  %2520 = vmatprep.subr.bf16.mxu0 0
  %2521 = vmatpush1.bf16.msra.mxu0 %v1815
  %2522 = vmatprep.subr.bf16.mxu0 0
  %2523 = vmatpush1.bf16.msra.mxu0 %v1816
  %2524 = vmatprep.subr.bf16.mxu0 0
  %2525 = vmatpush1.bf16.msra.mxu0 %v1817
  %2526 = vmatprep.subr.bf16.mxu0 0
  %2527 = vmatpush1.bf16.msra.mxu0 %v1818
  %2528 = vmatprep.subr.bf16.mxu0 0
  %2529 = vmatpush1.bf16.msra.mxu0 %v1819
  %2530 = vmatprep.subr.bf16.mxu0 0
  %2531 = vmatpush1.bf16.msra.mxu0 %v1820
  %2532 = vmatprep.subr.bf16.mxu0 0
  %2533 = vmatpush1.bf16.msra.mxu0 %v1821
  %2534 = vmatprep.subr.bf16.mxu0 0
  %2535 = vmatpush1.bf16.msra.mxu0 %v1822
  %2536 = vmatprep.subr.bf16.mxu0 0
  %2537 = vmatpush1.bf16.msra.mxu0 %v1823
  %2538 = vmatprep.subr.bf16.mxu0 0
  %2539 = vmatpush1.bf16.msra.mxu0 %v1824
  %2540 = vmatprep.subr.bf16.mxu0 0
  %2541 = vmatpush1.bf16.msra.mxu0 %v1825
  %2542 = vmatprep.subr.bf16.mxu0 0
  %2543 = vmatpush1.bf16.msra.mxu0 %v1826
  %2544 = vmatprep.subr.bf16.mxu0 0
  %2545 = vmatpush1.bf16.msra.mxu0 %v1827
  %2546 = vmatprep.subr.bf16.mxu0 0
  %2547 = vmatpush1.bf16.msra.mxu0 %v1828
  %2548 = vmatprep.subr.bf16.mxu0 0
  %2549 = vmatpush1.bf16.msra.mxu0 %v1829
  %2550 = vmatprep.mubr.bf16.mxu0 %v615
  %2551 = vmatmul.mubr.bf16.gmra.mrb[0].mxu0 %v614
  %v2552 = vpop.f32.mrb[0].mxu0
  %v2553 = vadd.f32 %v2513, %v2552
  %v2554 = vpop.f32.mrb[0].mxu0
  %v2555 = vpop.f32.mrb[0].mxu0
  %v2556 = vpop.f32.mrb[0].mxu0
  %2557 = vdwg.mxu0
  %2558 = vmatprep.subr.bf16.mxu0 0
  %2559 = vmatpush1.bf16.msra.mxu0 %v1830
  %2560 = vmatprep.subr.bf16.mxu0 0
  %2561 = vmatpush1.bf16.msra.mxu0 %v1831
  %2562 = vmatprep.subr.bf16.mxu0 0
  %2563 = vmatpush1.bf16.msra.mxu0 %v1832
  %2564 = vmatprep.subr.bf16.mxu0 0
  %2565 = vmatpush1.bf16.msra.mxu0 %v1833
  %2566 = vmatprep.subr.bf16.mxu0 0
  %2567 = vmatpush1.bf16.msra.mxu0 %v1834
  %2568 = vmatprep.subr.bf16.mxu0 0
  %2569 = vmatpush1.bf16.msra.mxu0 %v1835
  %2570 = vmatprep.subr.bf16.mxu0 0
  %2571 = vmatpush1.bf16.msra.mxu0 %v1836
  %2572 = vmatprep.subr.bf16.mxu0 0
  %2573 = vmatpush1.bf16.msra.mxu0 %v1837
  %2574 = vmatprep.subr.bf16.mxu0 0
  %2575 = vmatpush1.bf16.msra.mxu0 %v1838
  %2576 = vmatprep.subr.bf16.mxu0 0
  %2577 = vmatpush1.bf16.msra.mxu0 %v1839
  %2578 = vmatprep.subr.bf16.mxu0 0
  %2579 = vmatpush1.bf16.msra.mxu0 %v1840
  %2580 = vmatprep.subr.bf16.mxu0 0
  %2581 = vmatpush1.bf16.msra.mxu0 %v1841
  %2582 = vmatprep.subr.bf16.mxu0 0
  %2583 = vmatpush1.bf16.msra.mxu0 %v1842
  %2584 = vmatprep.subr.bf16.mxu0 0
  %2585 = vmatpush1.bf16.msra.mxu0 %v1843
  %2586 = vmatprep.subr.bf16.mxu0 0
  %2587 = vmatpush1.bf16.msra.mxu0 %v1844
  %2588 = vmatprep.subr.bf16.mxu0 0
  %2589 = vmatpush1.bf16.msra.mxu0 %v1845
  %2590 = vmatprep.mubr.bf16.mxu0 %v617
  %2591 = vmatmul.mubr.bf16.gmra.mrb[0].mxu0 %v616
  %v2592 = vpop.f32.mrb[0].mxu0
  %v2593 = vadd.f32 %v2553, %v2592
  %v2594 = vpop.f32.mrb[0].mxu0
  %v2595 = vpop.f32.mrb[0].mxu0
  %v2596 = vpop.f32.mrb[0].mxu0
  %2597 = vdwg.mxu0
  %2598 = vmatprep.subr.bf16.mxu0 0
  %2599 = vmatpush1.bf16.msra.mxu0 %v1846
  %2600 = vmatprep.subr.bf16.mxu0 0
  %2601 = vmatpush1.bf16.msra.mxu0 %v1847
  %2602 = vmatprep.subr.bf16.mxu0 0
  %2603 = vmatpush1.bf16.msra.mxu0 %v1848
  %2604 = vmatprep.subr.bf16.mxu0 0
  %2605 = vmatpush1.bf16.msra.mxu0 %v1849
  %2606 = vmatprep.subr.bf16.mxu0 0
  %2607 = vmatpush1.bf16.msra.mxu0 %v1850
  %2608 = vmatprep.subr.bf16.mxu0 0
  %2609 = vmatpush1.bf16.msra.mxu0 %v1851
  %2610 = vmatprep.subr.bf16.mxu0 0
  %2611 = vmatpush1.bf16.msra.mxu0 %v1852
  %2612 = vmatprep.subr.bf16.mxu0 0
  %2613 = vmatpush1.bf16.msra.mxu0 %v1853
  %2614 = vmatprep.subr.bf16.mxu0 0
  %2615 = vmatpush1.bf16.msra.mxu0 %v1854
  %2616 = vmatprep.subr.bf16.mxu0 0
  %2617 = vmatpush1.bf16.msra.mxu0 %v1855
  %2618 = vmatprep.subr.bf16.mxu0 0
  %2619 = vmatpush1.bf16.msra.mxu0 %v1856
  %2620 = vmatprep.subr.bf16.mxu0 0
  %2621 = vmatpush1.bf16.msra.mxu0 %v1857
  %2622 = vmatprep.subr.bf16.mxu0 0
  %2623 = vmatpush1.bf16.msra.mxu0 %v1858
  %2624 = vmatprep.subr.bf16.mxu0 0
  %2625 = vmatpush1.bf16.msra.mxu0 %v1859
  %2626 = vmatprep.subr.bf16.mxu0 0
  %2627 = vmatpush1.bf16.msra.mxu0 %v1860
  %2628 = vmatprep.subr.bf16.mxu0 0
  %2629 = vmatpush1.bf16.msra.mxu0 %v1861
  %2630 = vmatprep.mubr.bf16.mxu0 %v619
  %2631 = vmatmul.mubr.bf16.gmra.mrb[0].mxu0 %v618
  %v2632 = vpop.f32.mrb[0].mxu0
  %v2633 = vadd.f32 %v2593, %v2632
  %v2634 = vpop.f32.mrb[0].mxu0
  %v2635 = vpop.f32.mrb[0].mxu0
  %v2636 = vpop.f32.mrb[0].mxu0
  %2637 = vdwg.mxu0
  %2638 = vmatprep.subr.bf16.mxu0 0
  %2639 = vmatpush1.bf16.msra.mxu0 %v1862
  %2640 = vmatprep.subr.bf16.mxu0 0
  %2641 = vmatpush1.bf16.msra.mxu0 %v1863
  %2642 = vmatprep.subr.bf16.mxu0 0
  %2643 = vmatpush1.bf16.msra.mxu0 %v1864
  %2644 = vmatprep.subr.bf16.mxu0 0
  %2645 = vmatpush1.bf16.msra.mxu0 %v1865
  %2646 = vmatprep.subr.bf16.mxu0 0
  %2647 = vmatpush1.bf16.msra.mxu0 %v1866
  %2648 = vmatprep.subr.bf16.mxu0 0
  %2649 = vmatpush1.bf16.msra.mxu0 %v1867
  %2650 = vmatprep.subr.bf16.mxu0 0
  %2651 = vmatpush1.bf16.msra.mxu0 %v1868
  %2652 = vmatprep.subr.bf16.mxu0 0
  %2653 = vmatpush1.bf16.msra.mxu0 %v1869
  %2654 = vmatprep.subr.bf16.mxu0 0
  %2655 = vmatpush1.bf16.msra.mxu0 %v1870
  %2656 = vmatprep.subr.bf16.mxu0 0
  %2657 = vmatpush1.bf16.msra.mxu0 %v1871
  %2658 = vmatprep.subr.bf16.mxu0 0
  %2659 = vmatpush1.bf16.msra.mxu0 %v1872
  %2660 = vmatprep.subr.bf16.mxu0 0
  %2661 = vmatpush1.bf16.msra.mxu0 %v1873
  %2662 = vmatprep.subr.bf16.mxu0 0
  %2663 = vmatpush1.bf16.msra.mxu0 %v1874
  %2664 = vmatprep.subr.bf16.mxu0 0
  %2665 = vmatpush1.bf16.msra.mxu0 %v1875
  %2666 = vmatprep.subr.bf16.mxu0 0
  %2667 = vmatpush1.bf16.msra.mxu0 %v1876
  %2668 = vmatprep.subr.bf16.mxu0 0
  %2669 = vmatpush1.bf16.msra.mxu0 %v1877
  %2670 = vmatprep.mubr.bf16.mxu0 %v621
  %2671 = vmatmul.mubr.bf16.gmra.mrb[0].mxu0 %v620
  %v2672 = vpop.f32.mrb[0].mxu0
  %v2673 = vadd.f32 %v2633, %v2672
  %v2674 = vpop.f32.mrb[0].mxu0
  %v2675 = vpop.f32.mrb[0].mxu0
  %v2676 = vpop.f32.mrb[0].mxu0
  %2677 = vdwg.mxu0
  %2678 = vmatprep.subr.bf16.mxu0 0
  %2679 = vmatpush1.bf16.msra.mxu0 %v1878
  %2680 = vmatprep.subr.bf16.mxu0 0
  %2681 = vmatpush1.bf16.msra.mxu0 %v1879
  %2682 = vmatprep.subr.bf16.mxu0 0
  %2683 = vmatpush1.bf16.msra.mxu0 %v1880
  %2684 = vmatprep.subr.bf16.mxu0 0
  %2685 = vmatpush1.bf16.msra.mxu0 %v1881
  %2686 = vmatprep.subr.bf16.mxu0 0
  %2687 = vmatpush1.bf16.msra.mxu0 %v1882
  %2688 = vmatprep.subr.bf16.mxu0 0
  %2689 = vmatpush1.bf16.msra.mxu0 %v1883
  %2690 = vmatprep.subr.bf16.mxu0 0
  %2691 = vmatpush1.bf16.msra.mxu0 %v1884
  %2692 = vmatprep.subr.bf16.mxu0 0
  %2693 = vmatpush1.bf16.msra.mxu0 %v1885
  %2694 = vmatprep.subr.bf16.mxu0 0
  %2695 = vmatpush1.bf16.msra.mxu0 %v1886
  %2696 = vmatprep.subr.bf16.mxu0 0
  %2697 = vmatpush1.bf16.msra.mxu0 %v1887
  %2698 = vmatprep.subr.bf16.mxu0 0
  %2699 = vmatpush1.bf16.msra.mxu0 %v1888
  %2700 = vmatprep.subr.bf16.mxu0 0
  %2701 = vmatpush1.bf16.msra.mxu0 %v1889
  %2702 = vmatprep.subr.bf16.mxu0 0
  %2703 = vmatpush1.bf16.msra.mxu0 %v1890
  %2704 = vmatprep.subr.bf16.mxu0 0
  %2705 = vmatpush1.bf16.msra.mxu0 %v1891
  %2706 = vmatprep.subr.bf16.mxu0 0
  %2707 = vmatpush1.bf16.msra.mxu0 %v1892
  %2708 = vmatprep.subr.bf16.mxu0 0
  %2709 = vmatpush1.bf16.msra.mxu0 %v1893
  %2710 = vmatprep.mubr.bf16.mxu0 %v623
  %2711 = vmatmul.mubr.bf16.gmra.mrb[0].mxu0 %v622
  %v2712 = vpop.f32.mrb[0].mxu0
  %v2713 = vadd.f32 %v2673, %v2712
  %v2714 = vpop.f32.mrb[0].mxu0
  %v2715 = vpop.f32.mrb[0].mxu0
  %v2716 = vpop.f32.mrb[0].mxu0
  %2717 = vdwg.mxu0
  %2718 = vmatprep.subr.bf16.mxu0 0
  %2719 = vmatpush1.bf16.msra.mxu0 %v1894
  %2720 = vmatprep.subr.bf16.mxu0 0
  %2721 = vmatpush1.bf16.msra.mxu0 %v1895
  %2722 = vmatprep.subr.bf16.mxu0 0
  %2723 = vmatpush1.bf16.msra.mxu0 %v1896
  %2724 = vmatprep.subr.bf16.mxu0 0
  %2725 = vmatpush1.bf16.msra.mxu0 %v1897
  %2726 = vmatprep.subr.bf16.mxu0 0
  %2727 = vmatpush1.bf16.msra.mxu0 %v1898
  %2728 = vmatprep.subr.bf16.mxu0 0
  %2729 = vmatpush1.bf16.msra.mxu0 %v1899
  %2730 = vmatprep.subr.bf16.mxu0 0
  %2731 = vmatpush1.bf16.msra.mxu0 %v1900
  %2732 = vmatprep.subr.bf16.mxu0 0
  %2733 = vmatpush1.bf16.msra.mxu0 %v1901
  %2734 = vmatprep.subr.bf16.mxu0 0
  %2735 = vmatpush1.bf16.msra.mxu0 %v1902
  %2736 = vmatprep.subr.bf16.mxu0 0
  %2737 = vmatpush1.bf16.msra.mxu0 %v1903
  %2738 = vmatprep.subr.bf16.mxu0 0
  %2739 = vmatpush1.bf16.msra.mxu0 %v1904
  %2740 = vmatprep.subr.bf16.mxu0 0
  %2741 = vmatpush1.bf16.msra.mxu0 %v1905
  %2742 = vmatprep.subr.bf16.mxu0 0
  %2743 = vmatpush1.bf16.msra.mxu0 %v1906
  %2744 = vmatprep.subr.bf16.mxu0 0
  %2745 = vmatpush1.bf16.msra.mxu0 %v1907
  %2746 = vmatprep.subr.bf16.mxu0 0
  %2747 = vmatpush1.bf16.msra.mxu0 %v1908
  %2748 = vmatprep.subr.bf16.mxu0 0
  %2749 = vmatpush1.bf16.msra.mxu0 %v1909
  %2750 = vmatprep.mubr.bf16.mxu0 %v625
  %2751 = vmatmul.mubr.bf16.gmra.mrb[0].mxu0 %v624
  %v2752 = vpop.f32.mrb[0].mxu0
  %v2753 = vadd.f32 %v2713, %v2752
  %v2754 = vpop.f32.mrb[0].mxu0
  %v2755 = vpop.f32.mrb[0].mxu0
  %v2756 = vpop.f32.mrb[0].mxu0
  %2757 = vdwg.mxu0
  %2758 = vmatprep.subr.bf16.mxu0 0
  %2759 = vmatpush1.bf16.msra.mxu0 %v1910
  %2760 = vmatprep.subr.bf16.mxu0 0
  %2761 = vmatpush1.bf16.msra.mxu0 %v1911
  %2762 = vmatprep.subr.bf16.mxu0 0
  %2763 = vmatpush1.bf16.msra.mxu0 %v1912
  %2764 = vmatprep.subr.bf16.mxu0 0
  %2765 = vmatpush1.bf16.msra.mxu0 %v1913
  %2766 = vmatprep.subr.bf16.mxu0 0
  %2767 = vmatpush1.bf16.msra.mxu0 %v1914
  %2768 = vmatprep.subr.bf16.mxu0 0
  %2769 = vmatpush1.bf16.msra.mxu0 %v1915
  %2770 = vmatprep.subr.bf16.mxu0 0
  %2771 = vmatpush1.bf16.msra.mxu0 %v1916
  %2772 = vmatprep.subr.bf16.mxu0 0
  %2773 = vmatpush1.bf16.msra.mxu0 %v1917
  %2774 = vmatprep.subr.bf16.mxu0 0
  %2775 = vmatpush1.bf16.msra.mxu0 %v1918
  %2776 = vmatprep.subr.bf16.mxu0 0
  %2777 = vmatpush1.bf16.msra.mxu0 %v1919
  %2778 = vmatprep.subr.bf16.mxu0 0
  %2779 = vmatpush1.bf16.msra.mxu0 %v1920
  %2780 = vmatprep.subr.bf16.mxu0 0
  %2781 = vmatpush1.bf16.msra.mxu0 %v1921
  %2782 = vmatprep.subr.bf16.mxu0 0
  %2783 = vmatpush1.bf16.msra.mxu0 %v1922
  %2784 = vmatprep.subr.bf16.mxu0 0
  %2785 = vmatpush1.bf16.msra.mxu0 %v1923
  %2786 = vmatprep.subr.bf16.mxu0 0
  %2787 = vmatpush1.bf16.msra.mxu0 %v1924
  %2788 = vmatprep.subr.bf16.mxu0 0
  %2789 = vmatpush1.bf16.msra.mxu0 %v1925
  %2790 = vmatprep.mubr.bf16.mxu0 %v627
  %2791 = vmatmul.mubr.bf16.gmra.mrb[0].mxu0 %v626
  %v2792 = vpop.f32.mrb[0].mxu0
  %v2793 = vadd.f32 %v2753, %v2792
  %v2794 = vpop.f32.mrb[0].mxu0
  %v2795 = vpop.f32.mrb[0].mxu0
  %v2796 = vpop.f32.mrb[0].mxu0
  %2797 = vdwg.mxu0
  %2798 = vmatprep.subr.bf16.mxu0 0
  %2799 = vmatpush1.bf16.msra.mxu0 %v1926
  %2800 = vmatprep.subr.bf16.mxu0 0
  %2801 = vmatpush1.bf16.msra.mxu0 %v1927
  %2802 = vmatprep.subr.bf16.mxu0 0
  %2803 = vmatpush1.bf16.msra.mxu0 %v1928
  %2804 = vmatprep.subr.bf16.mxu0 0
  %2805 = vmatpush1.bf16.msra.mxu0 %v1929
  %2806 = vmatprep.subr.bf16.mxu0 0
  %2807 = vmatpush1.bf16.msra.mxu0 %v1930
  %2808 = vmatprep.subr.bf16.mxu0 0
  %2809 = vmatpush1.bf16.msra.mxu0 %v1931
  %2810 = vmatprep.subr.bf16.mxu0 0
  %2811 = vmatpush1.bf16.msra.mxu0 %v1932
  %2812 = vmatprep.subr.bf16.mxu0 0
  %2813 = vmatpush1.bf16.msra.mxu0 %v1933
  %2814 = vmatprep.subr.bf16.mxu0 0
  %2815 = vmatpush1.bf16.msra.mxu0 %v1934
  %2816 = vmatprep.subr.bf16.mxu0 0
  %2817 = vmatpush1.bf16.msra.mxu0 %v1935
  %2818 = vmatprep.subr.bf16.mxu0 0
  %2819 = vmatpush1.bf16.msra.mxu0 %v1936
  %2820 = vmatprep.subr.bf16.mxu0 0
  %2821 = vmatpush1.bf16.msra.mxu0 %v1937
  %2822 = vmatprep.subr.bf16.mxu0 0
  %2823 = vmatpush1.bf16.msra.mxu0 %v1938
  %2824 = vmatprep.subr.bf16.mxu0 0
  %2825 = vmatpush1.bf16.msra.mxu0 %v1939
  %2826 = vmatprep.subr.bf16.mxu0 0
  %2827 = vmatpush1.bf16.msra.mxu0 %v1940
  %2828 = vmatprep.subr.bf16.mxu0 0
  %2829 = vmatpush1.bf16.msra.mxu0 %v1941
  %2830 = vmatprep.mubr.bf16.mxu0 %v629
  %2831 = vmatmul.mubr.bf16.gmra.mrb[0].mxu0 %v628
  %v2832 = vpop.f32.mrb[0].mxu0
  %v2833 = vadd.f32 %v2793, %v2832
  %v2834 = vpop.f32.mrb[0].mxu0
  %v2835 = vpop.f32.mrb[0].mxu0
  %v2836 = vpop.f32.mrb[0].mxu0
  %2837 = vdwg.mxu0
  %v2838 = vsub.f32 0.0, %v2833
  %v2839 = vmul.f32 %v2838, 1.442695
  %v2840 = vpow.pop %v2839
  %v2841 = vadd.f32 %v2840, 1.0
  %v2842 = vrcp.pop %v2841
  %v2843 = vmul.f32 1.0, %v2842
  %2844 = vst [vmem:[%s3] sm:$0xff] %v2843
  // Predicated region
  $region14: #{discriminator_forward.15} parent=0 // pred_check
    _
  $region15: #{discriminator_forward.15} parent=0 // pred_check_branch
    %2846 = sbr.rel (0) target = $region17
  $region16: #{discriminator_forward.15} parent=0 // pred_region
    _
  $region17: #{discriminator_forward.15} parent=0 // pred_fallthru
    _
  // Predicated region
  $region18: #{discriminator_forward.15} parent=0 // pred_check
    _
  $region19: #{discriminator_forward.15} parent=0 // pred_check_branch
    %2848 = sbr.rel (0) target = $region21
  $region20: #{discriminator_forward.15} parent=0 // pred_region
    _
  $region21: #{discriminator_forward.15} parent=0 // pred_fallthru
    _

</llo_original>
